<compile_context>
chip_gen: v7x
topology: tpu7x:2x2x1
jax: 0.10.0
libtpu: 0.0.40
codegen_flags: <defaults>
</compile_context>

<pallas_src>
import functools
import math

import jax
import jax.numpy as jnp
from jax import lax
from jax.experimental import pallas as pl
from jax.experimental.pallas import tpu as pltpu


def _round_up(a, b):
    return ((a + b - 1) // b) * b


def _cdiv(a, b):
    return (a + b - 1) // b


# ----------------------------- Pallas kernel --------------------------------
def _trimip_kernel(coords_ref, tex_ref, out_ref, w_ref, *,
                   n_levels, plane_size, feature_dim):
    # coords block: (8, TILE_N) rows = [u0, v0, u1, v1, u2, v2, lvl, pad]
    # tex block   : (3, F, T_pad) feature-major, per-level 8-padded pyramid
    # out block   : (3*F, TILE_N) plane-major, lane-dense
    # w scratch   : (T_pad, TILE_N) gather-as-matmul weights (reused per plane)
    f = feature_dim
    tn = out_ref.shape[-1]
    lvl = jnp.clip(coords_ref[6:7, :], 0.0, float(n_levels - 1))      # (1, TN)

    # Plane-independent per-level quantities (hoisted out of the plane loop).
    levels = []
    off = 0
    for l in range(n_levels):
        s = plane_size >> l
        tl_pad = _round_up(s * s, 8)
        blend = jnp.maximum(0.0, 1.0 - jnp.abs(lvl - float(l)))       # (1, TN)
        idx = lax.broadcasted_iota(jnp.int32, (s, 1), 0).astype(jnp.float32)
        levels.append((s, off, tl_pad, blend, idx))
        off += tl_pad

    def tap_weights(c, s, idx):
        # Separable clamp-to-edge bilinear taps; texel centers at (i + 0.5)/s.
        tc = c * float(s) - 0.5                                        # (1, TN)
        i0 = jnp.floor(tc)
        frac = tc - i0
        i0c = jnp.clip(i0, 0.0, float(s - 1))
        i1c = jnp.clip(i0 + 1.0, 0.0, float(s - 1))
        return (jnp.where(idx == i0c, 1.0 - frac, 0.0)
                + jnp.where(idx == i1c, frac, 0.0))                    # (s, TN)

    for p in range(3):                                     # static plane loop
        u = coords_ref[2 * p:2 * p + 1, :]                 # (1, TN) in [0, 1]
        v = coords_ref[2 * p + 1:2 * p + 2, :]             # (1, TN)
        for (s, off, tl_pad, blend, idx) in levels:        # static level loop
            wu = tap_weights(u, s, idx) * blend            # (s, TN), blend folded in
            wv = tap_weights(v, s, idx)                    # (s, TN)
            rows = tl_pad // s
            if rows != s:                                  # deepest levels: zero-pad to 8
                wv = jnp.concatenate(
                    [wv, jnp.zeros((rows - s, tn), jnp.float32)], axis=0)
            # texel j = v*s + u  ->  block[j, n] = WV[v, n] * WU[u, n]
            block = (wv[:, None, :] * wu[None, :, :]).reshape(tl_pad, tn)
            w_ref[off:off + tl_pad, :] = block
        # Single fused contraction per plane: (F, T_pad) @ (T_pad, TN).
        # TODO(synk): on v7x, per-level `acc += dot(tex_l, w_l)` (MRB in-place
        # accumulation) would avoid materializing the (T_pad, TN) scratch.
        feats = jnp.dot(tex_ref[p], w_ref[...],
                        preferred_element_type=jnp.float32)            # (F, TN)
        out_ref[p * f:(p + 1) * f, :] = feats


# ------------------------------- glue (JAX) ---------------------------------
def _build_pyramid(fm, n_levels):
    """2x2 box-filter mip pyramid (nvdiffrast-style), levels 0..n_levels-1."""
    pyr = [fm]
    cur = fm
    for _ in range(1, n_levels):
        c, s, _, f = cur.shape
        cur = cur.reshape(c, s // 2, 2, s // 2, 2, f).mean(axis=(2, 4))
        pyr.append(cur)
    return pyr


def trimip_encode(fm, x, level, n_levels, *, tile_n=1024):
    """Pallas implementation of TriMipEncoding.forward(x, level)."""
    n = x.shape[0]
    f = fm.shape[-1]
    if n == 0:
        return jnp.zeros((0, 3 * f), x.dtype)
    plane_size = fm.shape[1]
    assert plane_size > 0 and (plane_size & (plane_size - 1)) == 0, \
        "plane_size must be a power of two"

    max_levels = int(math.log2(plane_size)) + 1
    eff_levels = min(max(int(n_levels), 1), max_levels)
    if n_levels == 0:
        # level=None in torch -> plain bilinear on the base level
        level = jnp.zeros((n, 1), jnp.float32)

    # TODO(synk): at production Tri-MipRF sizes (plane_size 256-512) the dense
    # gather-as-matmul weight matrix is O(N * S^2) and does not fit VMEM; a
    # real 4-tap DMA/dynamic-slice gather per level (and a bf16 texel table
    # with fp32 accumulate) is needed there.
    pyr = _build_pyramid(fm.astype(jnp.float32), eff_levels)
    packed = []
    for lvl_tex in pyr:
        s = lvl_tex.shape[1]
        flat = lvl_tex.reshape(3, s * s, f)
        tl_pad = _round_up(s * s, 8)
        if tl_pad != s * s:
            flat = jnp.pad(flat, ((0, 0), (0, tl_pad - s * s), (0, 0)))
        packed.append(flat)
    tex = jnp.concatenate(packed, axis=1)                  # (3, T_pad, F)
    tex_fm = jnp.transpose(tex, (0, 2, 1))                 # (3, F, T_pad)
    t_pad = tex_fm.shape[-1]

    # decomposed_x: plane0=(x1,x2), plane1=(x0,x2), plane2=(x0,x1)
    xf = x.astype(jnp.float32)
    lvl_row = jnp.reshape(level, (n,)).astype(jnp.float32)
    coords = jnp.stack([xf[:, 1], xf[:, 2],
                        xf[:, 0], xf[:, 2],
                        xf[:, 0], xf[:, 1],
                        lvl_row,
                        jnp.zeros((n,), jnp.float32)], axis=0)          # (8, N)

    # N tile: lane-dense, >=2 grid steps when possible (v7x megacore), capped
    # so the (T_pad, TILE_N) weight scratch stays well under VMEM budget.
    tile = max(128, min(_round_up(int(tile_n), 128),
                        _round_up(_cdiv(n, 2), 128)))
    vmem_cap_tile = max(128, ((24 * 1024 * 1024) // (t_pad * 4)) // 128 * 128)
    tile = min(tile, vmem_cap_tile)
    n_pad = _round_up(n, tile)
    coords = jnp.pad(coords, ((0, 0), (0, n_pad - n)))

    kernel = functools.partial(_trimip_kernel, n_levels=eff_levels,
                               plane_size=plane_size, feature_dim=f)

    def call(single_buffer_tex):
        if single_buffer_tex:
            # texel table: constant block -> stays resident; single-buffered.
            tex_spec = pl.BlockSpec((3, f, t_pad), lambda i: (0, 0, 0),
                                    pipeline_mode=pl.Buffered(1))
        else:
            tex_spec = pl.BlockSpec((3, f, t_pad), lambda i: (0, 0, 0))
        return pl.pallas_call(
            kernel,
            out_shape=jax.ShapeDtypeStruct((3 * f, n_pad), jnp.float32),
            grid_spec=pltpu.PrefetchScalarGridSpec(
                num_scalar_prefetch=0,
                grid=(n_pad // tile,),
                in_specs=[
                    pl.BlockSpec((8, tile), lambda i: (0, i)),   # coords tile
                    tex_spec,
                ],
                out_specs=pl.BlockSpec((3 * f, tile), lambda i: (0, i)),
                scratch_shapes=[pltpu.VMEM((t_pad, tile), jnp.float32)],
            ),
            compiler_params=pltpu.CompilerParams(
                dimension_semantics=("parallel",),
                vmem_limit_bytes=48 * 1024 * 1024),
        )(coords, tex_fm)

    try:
        out = call(True)
    except Exception:
        # pipeline_mode / pl.Buffered(1) unsupported on this jax version:
        # fall back to the default (double-buffered) resident table spec.
        out = call(False)

    # Lane-dense (3F, N) from the kernel; final (N, 3F) transpose in XLA.
    return out[:, :n].T.astype(x.dtype)


# ------------------------------ pure-JAX reference --------------------------
def trimip_reference(fm, x, level, n_levels):
    n = x.shape[0]
    f = fm.shape[-1]
    plane_size = fm.shape[1]
    eff_levels = min(max(int(n_levels), 1), int(math.log2(plane_size)) + 1)
    if n_levels == 0:
        level = jnp.zeros((n, 1), jnp.float32)
    pyr = _build_pyramid(fm.astype(jnp.float32), eff_levels)
    uv = jnp.stack([x[:, [1, 2]], x[:, [0, 2]], x[:, [0, 1]]], axis=0)  # (3,N,2)
    lvl = jnp.clip(jnp.broadcast_to(jnp.reshape(level, (1, n)), (3, n)),
                   0.0, eff_levels - 1.0)
    out = jnp.zeros((3, n, f), jnp.float32)
    pidx = jnp.arange(3)[:, None]
    for l, tex in enumerate(pyr):
        s = tex.shape[1]
        wl = jnp.maximum(0.0, 1.0 - jnp.abs(lvl - float(l)))[..., None]
        tcu = uv[..., 0] * s - 0.5
        tcv = uv[..., 1] * s - 0.5
        iu0 = jnp.floor(tcu)
        iv0 = jnp.floor(tcv)
        fu = (tcu - iu0)[..., None]
        fv = (tcv - iv0)[..., None]
        iu0c = jnp.clip(iu0, 0, s - 1).astype(jnp.int32)
        iu1c = jnp.clip(iu0 + 1, 0, s - 1).astype(jnp.int32)
        iv0c = jnp.clip(iv0, 0, s - 1).astype(jnp.int32)
        iv1c = jnp.clip(iv0 + 1, 0, s - 1).astype(jnp.int32)
        t00 = tex[pidx, iv0c, iu0c]
        t01 = tex[pidx, iv0c, iu1c]
        t10 = tex[pidx, iv1c, iu0c]
        t11 = tex[pidx, iv1c, iu1c]
        bil = (t00 * (1 - fu) * (1 - fv) + t01 * fu * (1 - fv)
               + t10 * (1 - fu) * fv + t11 * fu * fv)
        out = out + wl * bil
    return jnp.transpose(out, (1, 0, 2)).reshape(n, 3 * f)


# ---------------------------------- main -------------------------------------
if __name__ == "__main__":
    # config (small, consistent with TriMipEncoding.__init__)
    n_levels = 4
    plane_size = 16
    feature_dim = 8
    in_channels = 3
    n_samples = 64

    key = jax.random.PRNGKey(0)
    k_fm, k_x, k_lvl = jax.random.split(key, 3)

    # nn.init.uniform_(fm, -0.01, 0.01), shape (3, plane_size, plane_size, F)
    fm = jax.random.uniform(k_fm, (3, plane_size, plane_size, feature_dim),
                            jnp.float32, minval=-0.01, maxval=0.01)
    # coordinates in [0, 1], mip level bias in [0, n_levels-1]
    x = jax.random.uniform(k_x, (n_samples, in_channels), jnp.float32)
    level = jax.random.uniform(k_lvl, (n_samples, 1), jnp.float32,
                               minval=0.0, maxval=float(n_levels - 1))

    enc = trimip_encode(fm, x, level, n_levels)
    enc = jax.block_until_ready(enc)
    assert enc.shape == (n_samples, 3 * feature_dim), enc.shape

    ref = jax.block_until_ready(trimip_reference(fm, x, level, n_levels))
    assert jnp.allclose(enc, ref, atol=1e-5, rtol=1e-5), \
        float(jnp.max(jnp.abs(enc - ref)))

    # TODO(synk): nvdiffrast's CUDA texture() may differ in the last ulp of the
    # bilinear weights; semantics (clamp boundary, mip_level_bias clamped to
    # [0, max_mip_level], linear-mipmap-linear blend) are reproduced here.
    print("KERNEL_OK")
</pallas_src>

<mosaic_0001>
module attributes {stable_mosaic.version = 11 : i64} {
  func.func @_trimip_kernel(%arg0: i32, %arg1: memref<8x128xf32, #tpu.memory_space<vmem>>, %arg2: memref<3x8x344xf32, #tpu.memory_space<vmem>>, %arg3: memref<24x128xf32, #tpu.memory_space<vmem>>, %arg4: memref<344x128xf32, #tpu.memory_space<vmem>>) attributes {dimension_semantics = [#tpu.dimension_semantics<parallel>], iteration_bounds = array<i64: 1>, scalar_prefetch = 0 : i64, scratch_operands = 1 : i64, tpu.core_type = #tpu.core_type<tc>, window_params = [{transform_indices = @transform_0, window_bounds = array<i64: 8, 128>}, {pipeline_mode = #tpu.pipeline_mode<synchronous>, transform_indices = @transform_1, window_bounds = array<i64: 3, 8, 344>}, {transform_indices = @transform_2, window_bounds = array<i64: 24, 128>}]} {
    %c6 = arith.constant 6 : index
    %c0 = arith.constant 0 : index
    %0 = vector.load %arg1[%c6, %c0] : memref<8x128xf32, #tpu.memory_space<vmem>>, vector<1x128xf32>
    %cst = arith.constant 0.000000e+00 : f32
    %cst_0 = arith.constant 3.000000e+00 : f32
    %1 = vector.broadcast %cst : f32 to vector<1x128xf32>
    %2 = arith.maximumf %1, %0 : vector<1x128xf32>
    %3 = vector.broadcast %cst_0 : f32 to vector<1x128xf32>
    %4 = arith.minimumf %3, %2 : vector<1x128xf32>
    %cst_1 = arith.constant 0.000000e+00 : f32
    %5 = vector.broadcast %cst_1 : f32 to vector<1x128xf32>
    %6 = arith.subf %4, %5 : vector<1x128xf32>
    %7 = math.absf %6 : vector<1x128xf32>
    %cst_2 = arith.constant 1.000000e+00 : f32
    %8 = vector.broadcast %cst_2 : f32 to vector<1x128xf32>
    %9 = arith.subf %8, %7 : vector<1x128xf32>
    %cst_3 = arith.constant 0.000000e+00 : f32
    %10 = vector.broadcast %cst_3 : f32 to vector<1x128xf32>
    %11 = arith.maximumf %10, %9 : vector<1x128xf32>
    %12 = tpu.iota {dimensions = array<i32: 0>} : vector<16x1xi32>
    %13 = arith.sitofp %12 : vector<16x1xi32> to vector<16x1xf32>
    %cst_4 = arith.constant 1.000000e+00 : f32
    %14 = vector.broadcast %cst_4 : f32 to vector<1x128xf32>
    %15 = arith.subf %4, %14 : vector<1x128xf32>
    %16 = math.absf %15 : vector<1x128xf32>
    %cst_5 = arith.constant 1.000000e+00 : f32
    %17 = vector.broadcast %cst_5 : f32 to vector<1x128xf32>
    %18 = arith.subf %17, %16 : vector<1x128xf32>
    %cst_6 = arith.constant 0.000000e+00 : f32
    %19 = vector.broadcast %cst_6 : f32 to vector<1x128xf32>
    %20 = arith.maximumf %19, %18 : vector<1x128xf32>
    %21 = tpu.iota {dimensions = array<i32: 0>} : vector<8x1xi32>
    %22 = arith.sitofp %21 : vector<8x1xi32> to vector<8x1xf32>
    %cst_7 = arith.constant 2.000000e+00 : f32
    %23 = vector.broadcast %cst_7 : f32 to vector<1x128xf32>
    %24 = arith.subf %4, %23 : vector<1x128xf32>
    %25 = math.absf %24 : vector<1x128xf32>
    %cst_8 = arith.constant 1.000000e+00 : f32
    %26 = vector.broadcast %cst_8 : f32 to vector<1x128xf32>
    %27 = arith.subf %26, %25 : vector<1x128xf32>
    %cst_9 = arith.constant 0.000000e+00 : f32
    %28 = vector.broadcast %cst_9 : f32 to vector<1x128xf32>
    %29 = arith.maximumf %28, %27 : vector<1x128xf32>
    %30 = tpu.iota {dimensions = array<i32: 0>} : vector<4x1xi32>
    %31 = arith.sitofp %30 : vector<4x1xi32> to vector<4x1xf32>
    %cst_10 = arith.constant 3.000000e+00 : f32
    %32 = vector.broadcast %cst_10 : f32 to vector<1x128xf32>
    %33 = arith.subf %4, %32 : vector<1x128xf32>
    %34 = math.absf %33 : vector<1x128xf32>
    %cst_11 = arith.constant 1.000000e+00 : f32
    %35 = vector.broadcast %cst_11 : f32 to vector<1x128xf32>
    %36 = arith.subf %35, %34 : vector<1x128xf32>
    %cst_12 = arith.constant 0.000000e+00 : f32
    %37 = vector.broadcast %cst_12 : f32 to vector<1x128xf32>
    %38 = arith.maximumf %37, %36 : vector<1x128xf32>
    %39 = tpu.iota {dimensions = array<i32: 0>} : vector<2x1xi32>
    %40 = arith.sitofp %39 : vector<2x1xi32> to vector<2x1xf32>
    %c0_13 = arith.constant 0 : index
    %c0_14 = arith.constant 0 : index
    %41 = vector.load %arg1[%c0_13, %c0_14] : memref<8x128xf32, #tpu.memory_space<vmem>>, vector<1x128xf32>
    %c1 = arith.constant 1 : index
    %c0_15 = arith.constant 0 : index
    %42 = vector.load %arg1[%c1, %c0_15] : memref<8x128xf32, #tpu.memory_space<vmem>>, vector<1x128xf32>
    %cst_16 = arith.constant 1.600000e+01 : f32
    %43 = vector.broadcast %cst_16 : f32 to vector<1x128xf32>
    %44 = arith.mulf %41, %43 : vector<1x128xf32>
    %cst_17 = arith.constant 5.000000e-01 : f32
    %45 = vector.broadcast %cst_17 : f32 to vector<1x128xf32>
    %46 = arith.subf %44, %45 : vector<1x128xf32>
    %47 = math.floor %46 : vector<1x128xf32>
    %48 = arith.subf %46, %47 : vector<1x128xf32>
    %cst_18 = arith.constant 0.000000e+00 : f32
    %cst_19 = arith.constant 1.500000e+01 : f32
    %49 = vector.broadcast %cst_18 : f32 to vector<1x128xf32>
    %50 = arith.maximumf %49, %47 : vector<1x128xf32>
    %51 = vector.broadcast %cst_19 : f32 to vector<1x128xf32>
    %52 = arith.minimumf %51, %50 : vector<1x128xf32>
    %cst_20 = arith.constant 1.000000e+00 : f32
    %53 = vector.broadcast %cst_20 : f32 to vector<1x128xf32>
    %54 = arith.addf %47, %53 : vector<1x128xf32>
    %cst_21 = arith.constant 0.000000e+00 : f32
    %cst_22 = arith.constant 1.500000e+01 : f32
    %55 = vector.broadcast %cst_21 : f32 to vector<1x128xf32>
    %56 = arith.maximumf %55, %54 : vector<1x128xf32>
    %57 = vector.broadcast %cst_22 : f32 to vector<1x128xf32>
    %58 = arith.minimumf %57, %56 : vector<1x128xf32>
    %59 = vector.broadcast %13 : vector<16x1xf32> to vector<16x128xf32>
    %60 = vector.broadcast %52 : vector<1x128xf32> to vector<16x128xf32>
    %61 = arith.cmpf oeq, %59, %60 : vector<16x128xf32>
    %cst_23 = arith.constant 1.000000e+00 : f32
    %62 = vector.broadcast %cst_23 : f32 to vector<1x128xf32>
    %63 = arith.subf %62, %48 : vector<1x128xf32>
    %cst_24 = arith.constant 0.000000e+00 : f32
    %64 = vector.shape_cast %63 : vector<1x128xf32> to vector<1x128xf32>
    %65 = vector.broadcast %64 : vector<1x128xf32> to vector<16x128xf32>
    %66 = vector.broadcast %cst_24 : f32 to vector<16x128xf32>
    %67 = arith.select %61, %65, %66 : vector<16x128xi1>, vector<16x128xf32>
    %68 = vector.broadcast %13 : vector<16x1xf32> to vector<16x128xf32>
    %69 = vector.broadcast %58 : vector<1x128xf32> to vector<16x128xf32>
    %70 = arith.cmpf oeq, %68, %69 : vector<16x128xf32>
    %cst_25 = arith.constant 0.000000e+00 : f32
    %71 = vector.shape_cast %48 : vector<1x128xf32> to vector<1x128xf32>
    %72 = vector.broadcast %71 : vector<1x128xf32> to vector<16x128xf32>
    %73 = vector.broadcast %cst_25 : f32 to vector<16x128xf32>
    %74 = arith.select %70, %72, %73 : vector<16x128xi1>, vector<16x128xf32>
    %75 = arith.addf %67, %74 : vector<16x128xf32>
    %76 = vector.broadcast %11 : vector<1x128xf32> to vector<16x128xf32>
    %77 = arith.mulf %75, %76 : vector<16x128xf32>
    %cst_26 = arith.constant 1.600000e+01 : f32
    %78 = vector.broadcast %cst_26 : f32 to vector<1x128xf32>
    %79 = arith.mulf %42, %78 : vector<1x128xf32>
    %cst_27 = arith.constant 5.000000e-01 : f32
    %80 = vector.broadcast %cst_27 : f32 to vector<1x128xf32>
    %81 = arith.subf %79, %80 : vector<1x128xf32>
    %82 = math.floor %81 : vector<1x128xf32>
    %83 = arith.subf %81, %82 : vector<1x128xf32>
    %cst_28 = arith.constant 0.000000e+00 : f32
    %cst_29 = arith.constant 1.500000e+01 : f32
    %84 = vector.broadcast %cst_28 : f32 to vector<1x128xf32>
    %85 = arith.maximumf %84, %82 : vector<1x128xf32>
    %86 = vector.broadcast %cst_29 : f32 to vector<1x128xf32>
    %87 = arith.minimumf %86, %85 : vector<1x128xf32>
    %cst_30 = arith.constant 1.000000e+00 : f32
    %88 = vector.broadcast %cst_30 : f32 to vector<1x128xf32>
    %89 = arith.addf %82, %88 : vector<1x128xf32>
    %cst_31 = arith.constant 0.000000e+00 : f32
    %cst_32 = arith.constant 1.500000e+01 : f32
    %90 = vector.broadcast %cst_31 : f32 to vector<1x128xf32>
    %91 = arith.maximumf %90, %89 : vector<1x128xf32>
    %92 = vector.broadcast %cst_32 : f32 to vector<1x128xf32>
    %93 = arith.minimumf %92, %91 : vector<1x128xf32>
    %94 = vector.broadcast %13 : vector<16x1xf32> to vector<16x128xf32>
    %95 = vector.broadcast %87 : vector<1x128xf32> to vector<16x128xf32>
    %96 = arith.cmpf oeq, %94, %95 : vector<16x128xf32>
    %cst_33 = arith.constant 1.000000e+00 : f32
    %97 = vector.broadcast %cst_33 : f32 to vector<1x128xf32>
    %98 = arith.subf %97, %83 : vector<1x128xf32>
    %cst_34 = arith.constant 0.000000e+00 : f32
    %99 = vector.shape_cast %98 : vector<1x128xf32> to vector<1x128xf32>
    %100 = vector.broadcast %99 : vector<1x128xf32> to vector<16x128xf32>
    %101 = vector.broadcast %cst_34 : f32 to vector<16x128xf32>
    %102 = arith.select %96, %100, %101 : vector<16x128xi1>, vector<16x128xf32>
    %103 = vector.broadcast %13 : vector<16x1xf32> to vector<16x128xf32>
    %104 = vector.broadcast %93 : vector<1x128xf32> to vector<16x128xf32>
    %105 = arith.cmpf oeq, %103, %104 : vector<16x128xf32>
    %cst_35 = arith.constant 0.000000e+00 : f32
    %106 = vector.shape_cast %83 : vector<1x128xf32> to vector<1x128xf32>
    %107 = vector.broadcast %106 : vector<1x128xf32> to vector<16x128xf32>
    %108 = vector.broadcast %cst_35 : f32 to vector<16x128xf32>
    %109 = arith.select %105, %107, %108 : vector<16x128xi1>, vector<16x128xf32>
    %110 = arith.addf %102, %109 : vector<16x128xf32>
    %111 = vector.shape_cast %110 : vector<16x128xf32> to vector<16x1x128xf32>
    %112 = vector.shape_cast %77 : vector<16x128xf32> to vector<1x16x128xf32>
    %113 = vector.broadcast %111 : vector<16x1x128xf32> to vector<16x16x128xf32>
    %114 = vector.broadcast %112 : vector<1x16x128xf32> to vector<16x16x128xf32>
    %115 = arith.mulf %113, %114 : vector<16x16x128xf32>
    %116 = vector.shape_cast %115 : vector<16x16x128xf32> to vector<256x128xf32>
    %c0_36 = arith.constant 0 : index
    %c0_37 = arith.constant 0 : index
    %117 = vector.load %arg4[%c0_36, %c0_37] : memref<344x128xf32, #tpu.memory_space<vmem>>, vector<256x128xf32>
    tpu.vector_store %arg4[%c0_36, %c0_37], %116 {strides = array<i32>} : memref<344x128xf32, #tpu.memory_space<vmem>>, vector<256x128xf32>,
    %cst_38 = arith.constant 8.000000e+00 : f32
    %118 = vector.broadcast %cst_38 : f32 to vector<1x128xf32>
    %119 = arith.mulf %41, %118 : vector<1x128xf32>
    %cst_39 = arith.constant 5.000000e-01 : f32
    %120 = vector.broadcast %cst_39 : f32 to vector<1x128xf32>
    %121 = arith.subf %119, %120 : vector<1x128xf32>
    %122 = math.floor %121 : vector<1x128xf32>
    %123 = arith.subf %121, %122 : vector<1x128xf32>
    %cst_40 = arith.constant 0.000000e+00 : f32
    %cst_41 = arith.constant 7.000000e+00 : f32
    %124 = vector.broadcast %cst_40 : f32 to vector<1x128xf32>
    %125 = arith.maximumf %124, %122 : vector<1x128xf32>
    %126 = vector.broadcast %cst_41 : f32 to vector<1x128xf32>
    %127 = arith.minimumf %126, %125 : vector<1x128xf32>
    %cst_42 = arith.constant 1.000000e+00 : f32
    %128 = vector.broadcast %cst_42 : f32 to vector<1x128xf32>
    %129 = arith.addf %122, %128 : vector<1x128xf32>
    %cst_43 = arith.constant 0.000000e+00 : f32
    %cst_44 = arith.constant 7.000000e+00 : f32
    %130 = vector.broadcast %cst_43 : f32 to vector<1x128xf32>
    %131 = arith.maximumf %130, %129 : vector<1x128xf32>
    %132 = vector.broadcast %cst_44 : f32 to vector<1x128xf32>
    %133 = arith.minimumf %132, %131 : vector<1x128xf32>
    %134 = vector.broadcast %22 : vector<8x1xf32> to vector<8x128xf32>
    %135 = vector.broadcast %127 : vector<1x128xf32> to vector<8x128xf32>
    %136 = arith.cmpf oeq, %134, %135 : vector<8x128xf32>
    %cst_45 = arith.constant 1.000000e+00 : f32
    %137 = vector.broadcast %cst_45 : f32 to vector<1x128xf32>
    %138 = arith.subf %137, %123 : vector<1x128xf32>
    %cst_46 = arith.constant 0.000000e+00 : f32
    %139 = vector.shape_cast %138 : vector<1x128xf32> to vector<1x128xf32>
    %140 = vector.broadcast %139 : vector<1x128xf32> to vector<8x128xf32>
    %141 = vector.broadcast %cst_46 : f32 to vector<8x128xf32>
    %142 = arith.select %136, %140, %141 : vector<8x128xi1>, vector<8x128xf32>
    %143 = vector.broadcast %22 : vector<8x1xf32> to vector<8x128xf32>
    %144 = vector.broadcast %133 : vector<1x128xf32> to vector<8x128xf32>
    %145 = arith.cmpf oeq, %143, %144 : vector<8x128xf32>
    %cst_47 = arith.constant 0.000000e+00 : f32
    %146 = vector.shape_cast %123 : vector<1x128xf32> to vector<1x128xf32>
    %147 = vector.broadcast %146 : vector<1x128xf32> to vector<8x128xf32>
    %148 = vector.broadcast %cst_47 : f32 to vector<8x128xf32>
    %149 = arith.select %145, %147, %148 : vector<8x128xi1>, vector<8x128xf32>
    %150 = arith.addf %142, %149 : vector<8x128xf32>
    %151 = vector.broadcast %20 : vector<1x128xf32> to vector<8x128xf32>
    %152 = arith.mulf %150, %151 : vector<8x128xf32>
    %cst_48 = arith.constant 8.000000e+00 : f32
    %153 = vector.broadcast %cst_48 : f32 to vector<1x128xf32>
    %154 = arith.mulf %42, %153 : vector<1x128xf32>
    %cst_49 = arith.constant 5.000000e-01 : f32
    %155 = vector.broadcast %cst_49 : f32 to vector<1x128xf32>
    %156 = arith.subf %154, %155 : vector<1x128xf32>
    %157 = math.floor %156 : vector<1x128xf32>
    %158 = arith.subf %156, %157 : vector<1x128xf32>
    %cst_50 = arith.constant 0.000000e+00 : f32
    %cst_51 = arith.constant 7.000000e+00 : f32
    %159 = vector.broadcast %cst_50 : f32 to vector<1x128xf32>
    %160 = arith.maximumf %159, %157 : vector<1x128xf32>
    %161 = vector.broadcast %cst_51 : f32 to vector<1x128xf32>
    %162 = arith.minimumf %161, %160 : vector<1x128xf32>
    %cst_52 = arith.constant 1.000000e+00 : f32
    %163 = vector.broadcast %cst_52 : f32 to vector<1x128xf32>
    %164 = arith.addf %157, %163 : vector<1x128xf32>
    %cst_53 = arith.constant 0.000000e+00 : f32
    %cst_54 = arith.constant 7.000000e+00 : f32
    %165 = vector.broadcast %cst_53 : f32 to vector<1x128xf32>
    %166 = arith.maximumf %165, %164 : vector<1x128xf32>
    %167 = vector.broadcast %cst_54 : f32 to vector<1x128xf32>
    %168 = arith.minimumf %167, %166 : vector<1x128xf32>
    %169 = vector.broadcast %22 : vector<8x1xf32> to vector<8x128xf32>
    %170 = vector.broadcast %162 : vector<1x128xf32> to vector<8x128xf32>
    %171 = arith.cmpf oeq, %169, %170 : vector<8x128xf32>
    %cst_55 = arith.constant 1.000000e+00 : f32
    %172 = vector.broadcast %cst_55 : f32 to vector<1x128xf32>
    %173 = arith.subf %172, %158 : vector<1x128xf32>
    %cst_56 = arith.constant 0.000000e+00 : f32
    %174 = vector.shape_cast %173 : vector<1x128xf32> to vector<1x128xf32>
    %175 = vector.broadcast %174 : vector<1x128xf32> to vector<8x128xf32>
    %176 = vector.broadcast %cst_56 : f32 to vector<8x128xf32>
    %177 = arith.select %171, %175, %176 : vector<8x128xi1>, vector<8x128xf32>
    %178 = vector.broadcast %22 : vector<8x1xf32> to vector<8x128xf32>
    %179 = vector.broadcast %168 : vector<1x128xf32> to vector<8x128xf32>
    %180 = arith.cmpf oeq, %178, %179 : vector<8x128xf32>
    %cst_57 = arith.constant 0.000000e+00 : f32
    %181 = vector.shape_cast %158 : vector<1x128xf32> to vector<1x128xf32>
    %182 = vector.broadcast %181 : vector<1x128xf32> to vector<8x128xf32>
    %183 = vector.broadcast %cst_57 : f32 to vector<8x128xf32>
    %184 = arith.select %180, %182, %183 : vector<8x128xi1>, vector<8x128xf32>
    %185 = arith.addf %177, %184 : vector<8x128xf32>
    %186 = vector.shape_cast %185 : vector<8x128xf32> to vector<8x1x128xf32>
    %187 = vector.shape_cast %152 : vector<8x128xf32> to vector<1x8x128xf32>
    %188 = vector.broadcast %186 : vector<8x1x128xf32> to vector<8x8x128xf32>
    %189 = vector.broadcast %187 : vector<1x8x128xf32> to vector<8x8x128xf32>
    %190 = arith.mulf %188, %189 : vector<8x8x128xf32>
    %191 = vector.shape_cast %190 : vector<8x8x128xf32> to vector<64x128xf32>
    %c256 = arith.constant 256 : index
    %c0_58 = arith.constant 0 : index
    %192 = vector.load %arg4[%c256, %c0_58] : memref<344x128xf32, #tpu.memory_space<vmem>>, vector<64x128xf32>
    tpu.vector_store %arg4[%c256, %c0_58], %191 {strides = array<i32>} : memref<344x128xf32, #tpu.memory_space<vmem>>, vector<64x128xf32>,
    %cst_59 = arith.constant 4.000000e+00 : f32
    %193 = vector.broadcast %cst_59 : f32 to vector<1x128xf32>
    %194 = arith.mulf %41, %193 : vector<1x128xf32>
    %cst_60 = arith.constant 5.000000e-01 : f32
    %195 = vector.broadcast %cst_60 : f32 to vector<1x128xf32>
    %196 = arith.subf %194, %195 : vector<1x128xf32>
    %197 = math.floor %196 : vector<1x128xf32>
    %198 = arith.subf %196, %197 : vector<1x128xf32>
    %cst_61 = arith.constant 0.000000e+00 : f32
    %cst_62 = arith.constant 3.000000e+00 : f32
    %199 = vector.broadcast %cst_61 : f32 to vector<1x128xf32>
    %200 = arith.maximumf %199, %197 : vector<1x128xf32>
    %201 = vector.broadcast %cst_62 : f32 to vector<1x128xf32>
    %202 = arith.minimumf %201, %200 : vector<1x128xf32>
    %cst_63 = arith.constant 1.000000e+00 : f32
    %203 = vector.broadcast %cst_63 : f32 to vector<1x128xf32>
    %204 = arith.addf %197, %203 : vector<1x128xf32>
    %cst_64 = arith.constant 0.000000e+00 : f32
    %cst_65 = arith.constant 3.000000e+00 : f32
    %205 = vector.broadcast %cst_64 : f32 to vector<1x128xf32>
    %206 = arith.maximumf %205, %204 : vector<1x128xf32>
    %207 = vector.broadcast %cst_65 : f32 to vector<1x128xf32>
    %208 = arith.minimumf %207, %206 : vector<1x128xf32>
    %209 = vector.broadcast %31 : vector<4x1xf32> to vector<4x128xf32>
    %210 = vector.broadcast %202 : vector<1x128xf32> to vector<4x128xf32>
    %211 = arith.cmpf oeq, %209, %210 : vector<4x128xf32>
    %cst_66 = arith.constant 1.000000e+00 : f32
    %212 = vector.broadcast %cst_66 : f32 to vector<1x128xf32>
    %213 = arith.subf %212, %198 : vector<1x128xf32>
    %cst_67 = arith.constant 0.000000e+00 : f32
    %214 = vector.shape_cast %213 : vector<1x128xf32> to vector<1x128xf32>
    %215 = vector.broadcast %214 : vector<1x128xf32> to vector<4x128xf32>
    %216 = vector.broadcast %cst_67 : f32 to vector<4x128xf32>
    %217 = arith.select %211, %215, %216 : vector<4x128xi1>, vector<4x128xf32>
    %218 = vector.broadcast %31 : vector<4x1xf32> to vector<4x128xf32>
    %219 = vector.broadcast %208 : vector<1x128xf32> to vector<4x128xf32>
    %220 = arith.cmpf oeq, %218, %219 : vector<4x128xf32>
    %cst_68 = arith.constant 0.000000e+00 : f32
    %221 = vector.shape_cast %198 : vector<1x128xf32> to vector<1x128xf32>
    %222 = vector.broadcast %221 : vector<1x128xf32> to vector<4x128xf32>
    %223 = vector.broadcast %cst_68 : f32 to vector<4x128xf32>
    %224 = arith.select %220, %222, %223 : vector<4x128xi1>, vector<4x128xf32>
    %225 = arith.addf %217, %224 : vector<4x128xf32>
    %226 = vector.broadcast %29 : vector<1x128xf32> to vector<4x128xf32>
    %227 = arith.mulf %225, %226 : vector<4x128xf32>
    %cst_69 = arith.constant 4.000000e+00 : f32
    %228 = vector.broadcast %cst_69 : f32 to vector<1x128xf32>
    %229 = arith.mulf %42, %228 : vector<1x128xf32>
    %cst_70 = arith.constant 5.000000e-01 : f32
    %230 = vector.broadcast %cst_70 : f32 to vector<1x128xf32>
    %231 = arith.subf %229, %230 : vector<1x128xf32>
    %232 = math.floor %231 : vector<1x128xf32>
    %233 = arith.subf %231, %232 : vector<1x128xf32>
    %cst_71 = arith.constant 0.000000e+00 : f32
    %cst_72 = arith.constant 3.000000e+00 : f32
    %234 = vector.broadcast %cst_71 : f32 to vector<1x128xf32>
    %235 = arith.maximumf %234, %232 : vector<1x128xf32>
    %236 = vector.broadcast %cst_72 : f32 to vector<1x128xf32>
    %237 = arith.minimumf %236, %235 : vector<1x128xf32>
    %cst_73 = arith.constant 1.000000e+00 : f32
    %238 = vector.broadcast %cst_73 : f32 to vector<1x128xf32>
    %239 = arith.addf %232, %238 : vector<1x128xf32>
    %cst_74 = arith.constant 0.000000e+00 : f32
    %cst_75 = arith.constant 3.000000e+00 : f32
    %240 = vector.broadcast %cst_74 : f32 to vector<1x128xf32>
    %241 = arith.maximumf %240, %239 : vector<1x128xf32>
    %242 = vector.broadcast %cst_75 : f32 to vector<1x128xf32>
    %243 = arith.minimumf %242, %241 : vector<1x128xf32>
    %244 = vector.broadcast %31 : vector<4x1xf32> to vector<4x128xf32>
    %245 = vector.broadcast %237 : vector<1x128xf32> to vector<4x128xf32>
    %246 = arith.cmpf oeq, %244, %245 : vector<4x128xf32>
    %cst_76 = arith.constant 1.000000e+00 : f32
    %247 = vector.broadcast %cst_76 : f32 to vector<1x128xf32>
    %248 = arith.subf %247, %233 : vector<1x128xf32>
    %cst_77 = arith.constant 0.000000e+00 : f32
    %249 = vector.shape_cast %248 : vector<1x128xf32> to vector<1x128xf32>
    %250 = vector.broadcast %249 : vector<1x128xf32> to vector<4x128xf32>
    %251 = vector.broadcast %cst_77 : f32 to vector<4x128xf32>
    %252 = arith.select %246, %250, %251 : vector<4x128xi1>, vector<4x128xf32>
    %253 = vector.broadcast %31 : vector<4x1xf32> to vector<4x128xf32>
    %254 = vector.broadcast %243 : vector<1x128xf32> to vector<4x128xf32>
    %255 = arith.cmpf oeq, %253, %254 : vector<4x128xf32>
    %cst_78 = arith.constant 0.000000e+00 : f32
    %256 = vector.shape_cast %233 : vector<1x128xf32> to vector<1x128xf32>
    %257 = vector.broadcast %256 : vector<1x128xf32> to vector<4x128xf32>
    %258 = vector.broadcast %cst_78 : f32 to vector<4x128xf32>
    %259 = arith.select %255, %257, %258 : vector<4x128xi1>, vector<4x128xf32>
    %260 = arith.addf %252, %259 : vector<4x128xf32>
    %261 = vector.shape_cast %260 : vector<4x128xf32> to vector<4x1x128xf32>
    %262 = vector.shape_cast %227 : vector<4x128xf32> to vector<1x4x128xf32>
    %263 = vector.broadcast %261 : vector<4x1x128xf32> to vector<4x4x128xf32>
    %264 = vector.broadcast %262 : vector<1x4x128xf32> to vector<4x4x128xf32>
    %265 = arith.mulf %263, %264 : vector<4x4x128xf32>
    %266 = vector.shape_cast %265 : vector<4x4x128xf32> to vector<16x128xf32>
    %c320 = arith.constant 320 : index
    %c0_79 = arith.constant 0 : index
    %267 = vector.load %arg4[%c320, %c0_79] : memref<344x128xf32, #tpu.memory_space<vmem>>, vector<16x128xf32>
    tpu.vector_store %arg4[%c320, %c0_79], %266 {strides = array<i32>} : memref<344x128xf32, #tpu.memory_space<vmem>>, vector<16x128xf32>,
    %cst_80 = arith.constant 2.000000e+00 : f32
    %268 = vector.broadcast %cst_80 : f32 to vector<1x128xf32>
    %269 = arith.mulf %41, %268 : vector<1x128xf32>
    %cst_81 = arith.constant 5.000000e-01 : f32
    %270 = vector.broadcast %cst_81 : f32 to vector<1x128xf32>
    %271 = arith.subf %269, %270 : vector<1x128xf32>
    %272 = math.floor %271 : vector<1x128xf32>
    %273 = arith.subf %271, %272 : vector<1x128xf32>
    %cst_82 = arith.constant 0.000000e+00 : f32
    %cst_83 = arith.constant 1.000000e+00 : f32
    %274 = vector.broadcast %cst_82 : f32 to vector<1x128xf32>
    %275 = arith.maximumf %274, %272 : vector<1x128xf32>
    %276 = vector.broadcast %cst_83 : f32 to vector<1x128xf32>
    %277 = arith.minimumf %276, %275 : vector<1x128xf32>
    %cst_84 = arith.constant 1.000000e+00 : f32
    %278 = vector.broadcast %cst_84 : f32 to vector<1x128xf32>
    %279 = arith.addf %272, %278 : vector<1x128xf32>
    %cst_85 = arith.constant 0.000000e+00 : f32
    %cst_86 = arith.constant 1.000000e+00 : f32
    %280 = vector.broadcast %cst_85 : f32 to vector<1x128xf32>
    %281 = arith.maximumf %280, %279 : vector<1x128xf32>
    %282 = vector.broadcast %cst_86 : f32 to vector<1x128xf32>
    %283 = arith.minimumf %282, %281 : vector<1x128xf32>
    %284 = vector.broadcast %40 : vector<2x1xf32> to vector<2x128xf32>
    %285 = vector.broadcast %277 : vector<1x128xf32> to vector<2x128xf32>
    %286 = arith.cmpf oeq, %284, %285 : vector<2x128xf32>
    %cst_87 = arith.constant 1.000000e+00 : f32
    %287 = vector.broadcast %cst_87 : f32 to vector<1x128xf32>
    %288 = arith.subf %287, %273 : vector<1x128xf32>
    %cst_88 = arith.constant 0.000000e+00 : f32
    %289 = vector.shape_cast %288 : vector<1x128xf32> to vector<1x128xf32>
    %290 = vector.broadcast %289 : vector<1x128xf32> to vector<2x128xf32>
    %291 = vector.broadcast %cst_88 : f32 to vector<2x128xf32>
    %292 = arith.select %286, %290, %291 : vector<2x128xi1>, vector<2x128xf32>
    %293 = vector.broadcast %40 : vector<2x1xf32> to vector<2x128xf32>
    %294 = vector.broadcast %283 : vector<1x128xf32> to vector<2x128xf32>
    %295 = arith.cmpf oeq, %293, %294 : vector<2x128xf32>
    %cst_89 = arith.constant 0.000000e+00 : f32
    %296 = vector.shape_cast %273 : vector<1x128xf32> to vector<1x128xf32>
    %297 = vector.broadcast %296 : vector<1x128xf32> to vector<2x128xf32>
    %298 = vector.broadcast %cst_89 : f32 to vector<2x128xf32>
    %299 = arith.select %295, %297, %298 : vector<2x128xi1>, vector<2x128xf32>
    %300 = arith.addf %292, %299 : vector<2x128xf32>
    %301 = vector.broadcast %38 : vector<1x128xf32> to vector<2x128xf32>
    %302 = arith.mulf %300, %301 : vector<2x128xf32>
    %cst_90 = arith.constant 2.000000e+00 : f32
    %303 = vector.broadcast %cst_90 : f32 to vector<1x128xf32>
    %304 = arith.mulf %42, %303 : vector<1x128xf32>
    %cst_91 = arith.constant 5.000000e-01 : f32
    %305 = vector.broadcast %cst_91 : f32 to vector<1x128xf32>
    %306 = arith.subf %304, %305 : vector<1x128xf32>
    %307 = math.floor %306 : vector<1x128xf32>
    %308 = arith.subf %306, %307 : vector<1x128xf32>
    %cst_92 = arith.constant 0.000000e+00 : f32
    %cst_93 = arith.constant 1.000000e+00 : f32
    %309 = vector.broadcast %cst_92 : f32 to vector<1x128xf32>
    %310 = arith.maximumf %309, %307 : vector<1x128xf32>
    %311 = vector.broadcast %cst_93 : f32 to vector<1x128xf32>
    %312 = arith.minimumf %311, %310 : vector<1x128xf32>
    %cst_94 = arith.constant 1.000000e+00 : f32
    %313 = vector.broadcast %cst_94 : f32 to vector<1x128xf32>
    %314 = arith.addf %307, %313 : vector<1x128xf32>
    %cst_95 = arith.constant 0.000000e+00 : f32
    %cst_96 = arith.constant 1.000000e+00 : f32
    %315 = vector.broadcast %cst_95 : f32 to vector<1x128xf32>
    %316 = arith.maximumf %315, %314 : vector<1x128xf32>
    %317 = vector.broadcast %cst_96 : f32 to vector<1x128xf32>
    %318 = arith.minimumf %317, %316 : vector<1x128xf32>
    %319 = vector.broadcast %40 : vector<2x1xf32> to vector<2x128xf32>
    %320 = vector.broadcast %312 : vector<1x128xf32> to vector<2x128xf32>
    %321 = arith.cmpf oeq, %319, %320 : vector<2x128xf32>
    %cst_97 = arith.constant 1.000000e+00 : f32
    %322 = vector.broadcast %cst_97 : f32 to vector<1x128xf32>
    %323 = arith.subf %322, %308 : vector<1x128xf32>
    %cst_98 = arith.constant 0.000000e+00 : f32
    %324 = vector.shape_cast %323 : vector<1x128xf32> to vector<1x128xf32>
    %325 = vector.broadcast %324 : vector<1x128xf32> to vector<2x128xf32>
    %326 = vector.broadcast %cst_98 : f32 to vector<2x128xf32>
    %327 = arith.select %321, %325, %326 : vector<2x128xi1>, vector<2x128xf32>
    %328 = vector.broadcast %40 : vector<2x1xf32> to vector<2x128xf32>
    %329 = vector.broadcast %318 : vector<1x128xf32> to vector<2x128xf32>
    %330 = arith.cmpf oeq, %328, %329 : vector<2x128xf32>
    %cst_99 = arith.constant 0.000000e+00 : f32
    %331 = vector.shape_cast %308 : vector<1x128xf32> to vector<1x128xf32>
    %332 = vector.broadcast %331 : vector<1x128xf32> to vector<2x128xf32>
    %333 = vector.broadcast %cst_99 : f32 to vector<2x128xf32>
    %334 = arith.select %330, %332, %333 : vector<2x128xi1>, vector<2x128xf32>
    %335 = arith.addf %327, %334 : vector<2x128xf32>
    %cst_100 = arith.constant 0.000000e+00 : f32
    %336 = vector.broadcast %cst_100 : f32 to vector<2x128xf32>
    %337 = tpu.concatenate %335, %336 in 0 : vector<2x128xf32>, vector<2x128xf32> -> vector<4x128xf32>
    %338 = vector.shape_cast %337 : vector<4x128xf32> to vector<4x1x128xf32>
    %339 = vector.shape_cast %302 : vector<2x128xf32> to vector<1x2x128xf32>
    %340 = vector.broadcast %338 : vector<4x1x128xf32> to vector<4x2x128xf32>
    %341 = vector.broadcast %339 : vector<1x2x128xf32> to vector<4x2x128xf32>
    %342 = arith.mulf %340, %341 : vector<4x2x128xf32>
    %343 = vector.shape_cast %342 : vector<4x2x128xf32> to vector<8x128xf32>
    %c336 = arith.constant 336 : index
    %c0_101 = arith.constant 0 : index
    %344 = vector.load %arg4[%c336, %c0_101] : memref<344x128xf32, #tpu.memory_space<vmem>>, vector<8x128xf32>
    tpu.vector_store %arg4[%c336, %c0_101], %343 {strides = array<i32>} : memref<344x128xf32, #tpu.memory_space<vmem>>, vector<8x128xf32>,
    %c0_102 = arith.constant 0 : index
    %c0_103 = arith.constant 0 : index
    %c0_104 = arith.constant 0 : index
    %345 = vector.load %arg2[%c0_102, %c0_103, %c0_104] : memref<3x8x344xf32, #tpu.memory_space<vmem>>, vector<1x8x344xf32>
    %346 = vector.shape_cast %345 : vector<1x8x344xf32> to vector<8x344xf32>
    %c0_105 = arith.constant 0 : index
    %c0_106 = arith.constant 0 : index
    %347 = vector.load %arg4[%c0_105, %c0_106] : memref<344x128xf32, #tpu.memory_space<vmem>>, vector<344x128xf32>
    %cst_107 = arith.constant dense<0.000000e+00> : vector<8x128xf32>
    %348 = tpu.matmul %346, %347, %cst_107 {dimension_numbers = #tpu.dot_dimension_numbers<[1], [0], [0], [1], [0, 0, 1, 1], [], []>} : vector<8x344xf32>, vector<344x128xf32>, vector<8x128xf32> -> vector<8x128xf32>
    %c0_108 = arith.constant 0 : index
    %c0_109 = arith.constant 0 : index
    %349 = vector.load %arg3[%c0_108, %c0_109] : memref<24x128xf32, #tpu.memory_space<vmem>>, vector<8x128xf32>
    tpu.vector_store %arg3[%c0_108, %c0_109], %348 {strides = array<i32>} : memref<24x128xf32, #tpu.memory_space<vmem>>, vector<8x128xf32>,
    %c2 = arith.constant 2 : index
    %c0_110 = arith.constant 0 : index
    %350 = vector.load %arg1[%c2, %c0_110] : memref<8x128xf32, #tpu.memory_space<vmem>>, vector<1x128xf32>
    %c3 = arith.constant 3 : index
    %c0_111 = arith.constant 0 : index
    %351 = vector.load %arg1[%c3, %c0_111] : memref<8x128xf32, #tpu.memory_space<vmem>>, vector<1x128xf32>
    %cst_112 = arith.constant 1.600000e+01 : f32
    %352 = vector.broadcast %cst_112 : f32 to vector<1x128xf32>
    %353 = arith.mulf %350, %352 : vector<1x128xf32>
    %cst_113 = arith.constant 5.000000e-01 : f32
    %354 = vector.broadcast %cst_113 : f32 to vector<1x128xf32>
    %355 = arith.subf %353, %354 : vector<1x128xf32>
    %356 = math.floor %355 : vector<1x128xf32>
    %357 = arith.subf %355, %356 : vector<1x128xf32>
    %cst_114 = arith.constant 0.000000e+00 : f32
    %cst_115 = arith.constant 1.500000e+01 : f32
    %358 = vector.broadcast %cst_114 : f32 to vector<1x128xf32>
    %359 = arith.maximumf %358, %356 : vector<1x128xf32>
    %360 = vector.broadcast %cst_115 : f32 to vector<1x128xf32>
    %361 = arith.minimumf %360, %359 : vector<1x128xf32>
    %cst_116 = arith.constant 1.000000e+00 : f32
    %362 = vector.broadcast %cst_116 : f32 to vector<1x128xf32>
    %363 = arith.addf %356, %362 : vector<1x128xf32>
    %cst_117 = arith.constant 0.000000e+00 : f32
    %cst_118 = arith.constant 1.500000e+01 : f32
    %364 = vector.broadcast %cst_117 : f32 to vector<1x128xf32>
    %365 = arith.maximumf %364, %363 : vector<1x128xf32>
    %366 = vector.broadcast %cst_118 : f32 to vector<1x128xf32>
    %367 = arith.minimumf %366, %365 : vector<1x128xf32>
    %368 = vector.broadcast %13 : vector<16x1xf32> to vector<16x128xf32>
    %369 = vector.broadcast %361 : vector<1x128xf32> to vector<16x128xf32>
    %370 = arith.cmpf oeq, %368, %369 : vector<16x128xf32>
    %cst_119 = arith.constant 1.000000e+00 : f32
    %371 = vector.broadcast %cst_119 : f32 to vector<1x128xf32>
    %372 = arith.subf %371, %357 : vector<1x128xf32>
    %cst_120 = arith.constant 0.000000e+00 : f32
    %373 = vector.shape_cast %372 : vector<1x128xf32> to vector<1x128xf32>
    %374 = vector.broadcast %373 : vector<1x128xf32> to vector<16x128xf32>
    %375 = vector.broadcast %cst_120 : f32 to vector<16x128xf32>
    %376 = arith.select %370, %374, %375 : vector<16x128xi1>, vector<16x128xf32>
    %377 = vector.broadcast %13 : vector<16x1xf32> to vector<16x128xf32>
    %378 = vector.broadcast %367 : vector<1x128xf32> to vector<16x128xf32>
    %379 = arith.cmpf oeq, %377, %378 : vector<16x128xf32>
    %cst_121 = arith.constant 0.000000e+00 : f32
    %380 = vector.shape_cast %357 : vector<1x128xf32> to vector<1x128xf32>
    %381 = vector.broadcast %380 : vector<1x128xf32> to vector<16x128xf32>
    %382 = vector.broadcast %cst_121 : f32 to vector<16x128xf32>
    %383 = arith.select %379, %381, %382 : vector<16x128xi1>, vector<16x128xf32>
    %384 = arith.addf %376, %383 : vector<16x128xf32>
    %385 = vector.broadcast %11 : vector<1x128xf32> to vector<16x128xf32>
    %386 = arith.mulf %384, %385 : vector<16x128xf32>
    %cst_122 = arith.constant 1.600000e+01 : f32
    %387 = vector.broadcast %cst_122 : f32 to vector<1x128xf32>
    %388 = arith.mulf %351, %387 : vector<1x128xf32>
    %cst_123 = arith.constant 5.000000e-01 : f32
    %389 = vector.broadcast %cst_123 : f32 to vector<1x128xf32>
    %390 = arith.subf %388, %389 : vector<1x128xf32>
    %391 = math.floor %390 : vector<1x128xf32>
    %392 = arith.subf %390, %391 : vector<1x128xf32>
    %cst_124 = arith.constant 0.000000e+00 : f32
    %cst_125 = arith.constant 1.500000e+01 : f32
    %393 = vector.broadcast %cst_124 : f32 to vector<1x128xf32>
    %394 = arith.maximumf %393, %391 : vector<1x128xf32>
    %395 = vector.broadcast %cst_125 : f32 to vector<1x128xf32>
    %396 = arith.minimumf %395, %394 : vector<1x128xf32>
    %cst_126 = arith.constant 1.000000e+00 : f32
    %397 = vector.broadcast %cst_126 : f32 to vector<1x128xf32>
    %398 = arith.addf %391, %397 : vector<1x128xf32>
    %cst_127 = arith.constant 0.000000e+00 : f32
    %cst_128 = arith.constant 1.500000e+01 : f32
    %399 = vector.broadcast %cst_127 : f32 to vector<1x128xf32>
    %400 = arith.maximumf %399, %398 : vector<1x128xf32>
    %401 = vector.broadcast %cst_128 : f32 to vector<1x128xf32>
    %402 = arith.minimumf %401, %400 : vector<1x128xf32>
    %403 = vector.broadcast %13 : vector<16x1xf32> to vector<16x128xf32>
    %404 = vector.broadcast %396 : vector<1x128xf32> to vector<16x128xf32>
    %405 = arith.cmpf oeq, %403, %404 : vector<16x128xf32>
    %cst_129 = arith.constant 1.000000e+00 : f32
    %406 = vector.broadcast %cst_129 : f32 to vector<1x128xf32>
    %407 = arith.subf %406, %392 : vector<1x128xf32>
    %cst_130 = arith.constant 0.000000e+00 : f32
    %408 = vector.shape_cast %407 : vector<1x128xf32> to vector<1x128xf32>
    %409 = vector.broadcast %408 : vector<1x128xf32> to vector<16x128xf32>
    %410 = vector.broadcast %cst_130 : f32 to vector<16x128xf32>
    %411 = arith.select %405, %409, %410 : vector<16x128xi1>, vector<16x128xf32>
    %412 = vector.broadcast %13 : vector<16x1xf32> to vector<16x128xf32>
    %413 = vector.broadcast %402 : vector<1x128xf32> to vector<16x128xf32>
    %414 = arith.cmpf oeq, %412, %413 : vector<16x128xf32>
    %cst_131 = arith.constant 0.000000e+00 : f32
    %415 = vector.shape_cast %392 : vector<1x128xf32> to vector<1x128xf32>
    %416 = vector.broadcast %415 : vector<1x128xf32> to vector<16x128xf32>
    %417 = vector.broadcast %cst_131 : f32 to vector<16x128xf32>
    %418 = arith.select %414, %416, %417 : vector<16x128xi1>, vector<16x128xf32>
    %419 = arith.addf %411, %418 : vector<16x128xf32>
    %420 = vector.shape_cast %419 : vector<16x128xf32> to vector<16x1x128xf32>
    %421 = vector.shape_cast %386 : vector<16x128xf32> to vector<1x16x128xf32>
    %422 = vector.broadcast %420 : vector<16x1x128xf32> to vector<16x16x128xf32>
    %423 = vector.broadcast %421 : vector<1x16x128xf32> to vector<16x16x128xf32>
    %424 = arith.mulf %422, %423 : vector<16x16x128xf32>
    %425 = vector.shape_cast %424 : vector<16x16x128xf32> to vector<256x128xf32>
    %c0_132 = arith.constant 0 : index
    %c0_133 = arith.constant 0 : index
    %426 = vector.load %arg4[%c0_132, %c0_133] : memref<344x128xf32, #tpu.memory_space<vmem>>, vector<256x128xf32>
    tpu.vector_store %arg4[%c0_132, %c0_133], %425 {strides = array<i32>} : memref<344x128xf32, #tpu.memory_space<vmem>>, vector<256x128xf32>,
    %cst_134 = arith.constant 8.000000e+00 : f32
    %427 = vector.broadcast %cst_134 : f32 to vector<1x128xf32>
    %428 = arith.mulf %350, %427 : vector<1x128xf32>
    %cst_135 = arith.constant 5.000000e-01 : f32
    %429 = vector.broadcast %cst_135 : f32 to vector<1x128xf32>
    %430 = arith.subf %428, %429 : vector<1x128xf32>
    %431 = math.floor %430 : vector<1x128xf32>
    %432 = arith.subf %430, %431 : vector<1x128xf32>
    %cst_136 = arith.constant 0.000000e+00 : f32
    %cst_137 = arith.constant 7.000000e+00 : f32
    %433 = vector.broadcast %cst_136 : f32 to vector<1x128xf32>
    %434 = arith.maximumf %433, %431 : vector<1x128xf32>
    %435 = vector.broadcast %cst_137 : f32 to vector<1x128xf32>
    %436 = arith.minimumf %435, %434 : vector<1x128xf32>
    %cst_138 = arith.constant 1.000000e+00 : f32
    %437 = vector.broadcast %cst_138 : f32 to vector<1x128xf32>
    %438 = arith.addf %431, %437 : vector<1x128xf32>
    %cst_139 = arith.constant 0.000000e+00 : f32
    %cst_140 = arith.constant 7.000000e+00 : f32
    %439 = vector.broadcast %cst_139 : f32 to vector<1x128xf32>
    %440 = arith.maximumf %439, %438 : vector<1x128xf32>
    %441 = vector.broadcast %cst_140 : f32 to vector<1x128xf32>
    %442 = arith.minimumf %441, %440 : vector<1x128xf32>
    %443 = vector.broadcast %22 : vector<8x1xf32> to vector<8x128xf32>
    %444 = vector.broadcast %436 : vector<1x128xf32> to vector<8x128xf32>
    %445 = arith.cmpf oeq, %443, %444 : vector<8x128xf32>
    %cst_141 = arith.constant 1.000000e+00 : f32
    %446 = vector.broadcast %cst_141 : f32 to vector<1x128xf32>
    %447 = arith.subf %446, %432 : vector<1x128xf32>
    %cst_142 = arith.constant 0.000000e+00 : f32
    %448 = vector.shape_cast %447 : vector<1x128xf32> to vector<1x128xf32>
    %449 = vector.broadcast %448 : vector<1x128xf32> to vector<8x128xf32>
    %450 = vector.broadcast %cst_142 : f32 to vector<8x128xf32>
    %451 = arith.select %445, %449, %450 : vector<8x128xi1>, vector<8x128xf32>
    %452 = vector.broadcast %22 : vector<8x1xf32> to vector<8x128xf32>
    %453 = vector.broadcast %442 : vector<1x128xf32> to vector<8x128xf32>
    %454 = arith.cmpf oeq, %452, %453 : vector<8x128xf32>
    %cst_143 = arith.constant 0.000000e+00 : f32
    %455 = vector.shape_cast %432 : vector<1x128xf32> to vector<1x128xf32>
    %456 = vector.broadcast %455 : vector<1x128xf32> to vector<8x128xf32>
    %457 = vector.broadcast %cst_143 : f32 to vector<8x128xf32>
    %458 = arith.select %454, %456, %457 : vector<8x128xi1>, vector<8x128xf32>
    %459 = arith.addf %451, %458 : vector<8x128xf32>
    %460 = vector.broadcast %20 : vector<1x128xf32> to vector<8x128xf32>
    %461 = arith.mulf %459, %460 : vector<8x128xf32>
    %cst_144 = arith.constant 8.000000e+00 : f32
    %462 = vector.broadcast %cst_144 : f32 to vector<1x128xf32>
    %463 = arith.mulf %351, %462 : vector<1x128xf32>
    %cst_145 = arith.constant 5.000000e-01 : f32
    %464 = vector.broadcast %cst_145 : f32 to vector<1x128xf32>
    %465 = arith.subf %463, %464 : vector<1x128xf32>
    %466 = math.floor %465 : vector<1x128xf32>
    %467 = arith.subf %465, %466 : vector<1x128xf32>
    %cst_146 = arith.constant 0.000000e+00 : f32
    %cst_147 = arith.constant 7.000000e+00 : f32
    %468 = vector.broadcast %cst_146 : f32 to vector<1x128xf32>
    %469 = arith.maximumf %468, %466 : vector<1x128xf32>
    %470 = vector.broadcast %cst_147 : f32 to vector<1x128xf32>
    %471 = arith.minimumf %470, %469 : vector<1x128xf32>
    %cst_148 = arith.constant 1.000000e+00 : f32
    %472 = vector.broadcast %cst_148 : f32 to vector<1x128xf32>
    %473 = arith.addf %466, %472 : vector<1x128xf32>
    %cst_149 = arith.constant 0.000000e+00 : f32
    %cst_150 = arith.constant 7.000000e+00 : f32
    %474 = vector.broadcast %cst_149 : f32 to vector<1x128xf32>
    %475 = arith.maximumf %474, %473 : vector<1x128xf32>
    %476 = vector.broadcast %cst_150 : f32 to vector<1x128xf32>
    %477 = arith.minimumf %476, %475 : vector<1x128xf32>
    %478 = vector.broadcast %22 : vector<8x1xf32> to vector<8x128xf32>
    %479 = vector.broadcast %471 : vector<1x128xf32> to vector<8x128xf32>
    %480 = arith.cmpf oeq, %478, %479 : vector<8x128xf32>
    %cst_151 = arith.constant 1.000000e+00 : f32
    %481 = vector.broadcast %cst_151 : f32 to vector<1x128xf32>
    %482 = arith.subf %481, %467 : vector<1x128xf32>
    %cst_152 = arith.constant 0.000000e+00 : f32
    %483 = vector.shape_cast %482 : vector<1x128xf32> to vector<1x128xf32>
    %484 = vector.broadcast %483 : vector<1x128xf32> to vector<8x128xf32>
    %485 = vector.broadcast %cst_152 : f32 to vector<8x128xf32>
    %486 = arith.select %480, %484, %485 : vector<8x128xi1>, vector<8x128xf32>
    %487 = vector.broadcast %22 : vector<8x1xf32> to vector<8x128xf32>
    %488 = vector.broadcast %477 : vector<1x128xf32> to vector<8x128xf32>
    %489 = arith.cmpf oeq, %487, %488 : vector<8x128xf32>
    %cst_153 = arith.constant 0.000000e+00 : f32
    %490 = vector.shape_cast %467 : vector<1x128xf32> to vector<1x128xf32>
    %491 = vector.broadcast %490 : vector<1x128xf32> to vector<8x128xf32>
    %492 = vector.broadcast %cst_153 : f32 to vector<8x128xf32>
    %493 = arith.select %489, %491, %492 : vector<8x128xi1>, vector<8x128xf32>
    %494 = arith.addf %486, %493 : vector<8x128xf32>
    %495 = vector.shape_cast %494 : vector<8x128xf32> to vector<8x1x128xf32>
    %496 = vector.shape_cast %461 : vector<8x128xf32> to vector<1x8x128xf32>
    %497 = vector.broadcast %495 : vector<8x1x128xf32> to vector<8x8x128xf32>
    %498 = vector.broadcast %496 : vector<1x8x128xf32> to vector<8x8x128xf32>
    %499 = arith.mulf %497, %498 : vector<8x8x128xf32>
    %500 = vector.shape_cast %499 : vector<8x8x128xf32> to vector<64x128xf32>
    %c256_154 = arith.constant 256 : index
    %c0_155 = arith.constant 0 : index
    %501 = vector.load %arg4[%c256_154, %c0_155] : memref<344x128xf32, #tpu.memory_space<vmem>>, vector<64x128xf32>
    tpu.vector_store %arg4[%c256_154, %c0_155], %500 {strides = array<i32>} : memref<344x128xf32, #tpu.memory_space<vmem>>, vector<64x128xf32>,
    %cst_156 = arith.constant 4.000000e+00 : f32
    %502 = vector.broadcast %cst_156 : f32 to vector<1x128xf32>
    %503 = arith.mulf %350, %502 : vector<1x128xf32>
    %cst_157 = arith.constant 5.000000e-01 : f32
    %504 = vector.broadcast %cst_157 : f32 to vector<1x128xf32>
    %505 = arith.subf %503, %504 : vector<1x128xf32>
    %506 = math.floor %505 : vector<1x128xf32>
    %507 = arith.subf %505, %506 : vector<1x128xf32>
    %cst_158 = arith.constant 0.000000e+00 : f32
    %cst_159 = arith.constant 3.000000e+00 : f32
    %508 = vector.broadcast %cst_158 : f32 to vector<1x128xf32>
    %509 = arith.maximumf %508, %506 : vector<1x128xf32>
    %510 = vector.broadcast %cst_159 : f32 to vector<1x128xf32>
    %511 = arith.minimumf %510, %509 : vector<1x128xf32>
    %cst_160 = arith.constant 1.000000e+00 : f32
    %512 = vector.broadcast %cst_160 : f32 to vector<1x128xf32>
    %513 = arith.addf %506, %512 : vector<1x128xf32>
    %cst_161 = arith.constant 0.000000e+00 : f32
    %cst_162 = arith.constant 3.000000e+00 : f32
    %514 = vector.broadcast %cst_161 : f32 to vector<1x128xf32>
    %515 = arith.maximumf %514, %513 : vector<1x128xf32>
    %516 = vector.broadcast %cst_162 : f32 to vector<1x128xf32>
    %517 = arith.minimumf %516, %515 : vector<1x128xf32>
    %518 = vector.broadcast %31 : vector<4x1xf32> to vector<4x128xf32>
    %519 = vector.broadcast %511 : vector<1x128xf32> to vector<4x128xf32>
    %520 = arith.cmpf oeq, %518, %519 : vector<4x128xf32>
    %cst_163 = arith.constant 1.000000e+00 : f32
    %521 = vector.broadcast %cst_163 : f32 to vector<1x128xf32>
    %522 = arith.subf %521, %507 : vector<1x128xf32>
    %cst_164 = arith.constant 0.000000e+00 : f32
    %523 = vector.shape_cast %522 : vector<1x128xf32> to vector<1x128xf32>
    %524 = vector.broadcast %523 : vector<1x128xf32> to vector<4x128xf32>
    %525 = vector.broadcast %cst_164 : f32 to vector<4x128xf32>
    %526 = arith.select %520, %524, %525 : vector<4x128xi1>, vector<4x128xf32>
    %527 = vector.broadcast %31 : vector<4x1xf32> to vector<4x128xf32>
    %528 = vector.broadcast %517 : vector<1x128xf32> to vector<4x128xf32>
    %529 = arith.cmpf oeq, %527, %528 : vector<4x128xf32>
    %cst_165 = arith.constant 0.000000e+00 : f32
    %530 = vector.shape_cast %507 : vector<1x128xf32> to vector<1x128xf32>
    %531 = vector.broadcast %530 : vector<1x128xf32> to vector<4x128xf32>
    %532 = vector.broadcast %cst_165 : f32 to vector<4x128xf32>
    %533 = arith.select %529, %531, %532 : vector<4x128xi1>, vector<4x128xf32>
    %534 = arith.addf %526, %533 : vector<4x128xf32>
    %535 = vector.broadcast %29 : vector<1x128xf32> to vector<4x128xf32>
    %536 = arith.mulf %534, %535 : vector<4x128xf32>
    %cst_166 = arith.constant 4.000000e+00 : f32
    %537 = vector.broadcast %cst_166 : f32 to vector<1x128xf32>
    %538 = arith.mulf %351, %537 : vector<1x128xf32>
    %cst_167 = arith.constant 5.000000e-01 : f32
    %539 = vector.broadcast %cst_167 : f32 to vector<1x128xf32>
    %540 = arith.subf %538, %539 : vector<1x128xf32>
    %541 = math.floor %540 : vector<1x128xf32>
    %542 = arith.subf %540, %541 : vector<1x128xf32>
    %cst_168 = arith.constant 0.000000e+00 : f32
    %cst_169 = arith.constant 3.000000e+00 : f32
    %543 = vector.broadcast %cst_168 : f32 to vector<1x128xf32>
    %544 = arith.maximumf %543, %541 : vector<1x128xf32>
    %545 = vector.broadcast %cst_169 : f32 to vector<1x128xf32>
    %546 = arith.minimumf %545, %544 : vector<1x128xf32>
    %cst_170 = arith.constant 1.000000e+00 : f32
    %547 = vector.broadcast %cst_170 : f32 to vector<1x128xf32>
    %548 = arith.addf %541, %547 : vector<1x128xf32>
    %cst_171 = arith.constant 0.000000e+00 : f32
    %cst_172 = arith.constant 3.000000e+00 : f32
    %549 = vector.broadcast %cst_171 : f32 to vector<1x128xf32>
    %550 = arith.maximumf %549, %548 : vector<1x128xf32>
    %551 = vector.broadcast %cst_172 : f32 to vector<1x128xf32>
    %552 = arith.minimumf %551, %550 : vector<1x128xf32>
    %553 = vector.broadcast %31 : vector<4x1xf32> to vector<4x128xf32>
    %554 = vector.broadcast %546 : vector<1x128xf32> to vector<4x128xf32>
    %555 = arith.cmpf oeq, %553, %554 : vector<4x128xf32>
    %cst_173 = arith.constant 1.000000e+00 : f32
    %556 = vector.broadcast %cst_173 : f32 to vector<1x128xf32>
    %557 = arith.subf %556, %542 : vector<1x128xf32>
    %cst_174 = arith.constant 0.000000e+00 : f32
    %558 = vector.shape_cast %557 : vector<1x128xf32> to vector<1x128xf32>
    %559 = vector.broadcast %558 : vector<1x128xf32> to vector<4x128xf32>
    %560 = vector.broadcast %cst_174 : f32 to vector<4x128xf32>
    %561 = arith.select %555, %559, %560 : vector<4x128xi1>, vector<4x128xf32>
    %562 = vector.broadcast %31 : vector<4x1xf32> to vector<4x128xf32>
    %563 = vector.broadcast %552 : vector<1x128xf32> to vector<4x128xf32>
    %564 = arith.cmpf oeq, %562, %563 : vector<4x128xf32>
    %cst_175 = arith.constant 0.000000e+00 : f32
    %565 = vector.shape_cast %542 : vector<1x128xf32> to vector<1x128xf32>
    %566 = vector.broadcast %565 : vector<1x128xf32> to vector<4x128xf32>
    %567 = vector.broadcast %cst_175 : f32 to vector<4x128xf32>
    %568 = arith.select %564, %566, %567 : vector<4x128xi1>, vector<4x128xf32>
    %569 = arith.addf %561, %568 : vector<4x128xf32>
    %570 = vector.shape_cast %569 : vector<4x128xf32> to vector<4x1x128xf32>
    %571 = vector.shape_cast %536 : vector<4x128xf32> to vector<1x4x128xf32>
    %572 = vector.broadcast %570 : vector<4x1x128xf32> to vector<4x4x128xf32>
    %573 = vector.broadcast %571 : vector<1x4x128xf32> to vector<4x4x128xf32>
    %574 = arith.mulf %572, %573 : vector<4x4x128xf32>
    %575 = vector.shape_cast %574 : vector<4x4x128xf32> to vector<16x128xf32>
    %c320_176 = arith.constant 320 : index
    %c0_177 = arith.constant 0 : index
    %576 = vector.load %arg4[%c320_176, %c0_177] : memref<344x128xf32, #tpu.memory_space<vmem>>, vector<16x128xf32>
    tpu.vector_store %arg4[%c320_176, %c0_177], %575 {strides = array<i32>} : memref<344x128xf32, #tpu.memory_space<vmem>>, vector<16x128xf32>,
    %cst_178 = arith.constant 2.000000e+00 : f32
    %577 = vector.broadcast %cst_178 : f32 to vector<1x128xf32>
    %578 = arith.mulf %350, %577 : vector<1x128xf32>
    %cst_179 = arith.constant 5.000000e-01 : f32
    %579 = vector.broadcast %cst_179 : f32 to vector<1x128xf32>
    %580 = arith.subf %578, %579 : vector<1x128xf32>
    %581 = math.floor %580 : vector<1x128xf32>
    %582 = arith.subf %580, %581 : vector<1x128xf32>
    %cst_180 = arith.constant 0.000000e+00 : f32
    %cst_181 = arith.constant 1.000000e+00 : f32
    %583 = vector.broadcast %cst_180 : f32 to vector<1x128xf32>
    %584 = arith.maximumf %583, %581 : vector<1x128xf32>
    %585 = vector.broadcast %cst_181 : f32 to vector<1x128xf32>
    %586 = arith.minimumf %585, %584 : vector<1x128xf32>
    %cst_182 = arith.constant 1.000000e+00 : f32
    %587 = vector.broadcast %cst_182 : f32 to vector<1x128xf32>
    %588 = arith.addf %581, %587 : vector<1x128xf32>
    %cst_183 = arith.constant 0.000000e+00 : f32
    %cst_184 = arith.constant 1.000000e+00 : f32
    %589 = vector.broadcast %cst_183 : f32 to vector<1x128xf32>
    %590 = arith.maximumf %589, %588 : vector<1x128xf32>
    %591 = vector.broadcast %cst_184 : f32 to vector<1x128xf32>
    %592 = arith.minimumf %591, %590 : vector<1x128xf32>
    %593 = vector.broadcast %40 : vector<2x1xf32> to vector<2x128xf32>
    %594 = vector.broadcast %586 : vector<1x128xf32> to vector<2x128xf32>
    %595 = arith.cmpf oeq, %593, %594 : vector<2x128xf32>
    %cst_185 = arith.constant 1.000000e+00 : f32
    %596 = vector.broadcast %cst_185 : f32 to vector<1x128xf32>
    %597 = arith.subf %596, %582 : vector<1x128xf32>
    %cst_186 = arith.constant 0.000000e+00 : f32
    %598 = vector.shape_cast %597 : vector<1x128xf32> to vector<1x128xf32>
    %599 = vector.broadcast %598 : vector<1x128xf32> to vector<2x128xf32>
    %600 = vector.broadcast %cst_186 : f32 to vector<2x128xf32>
    %601 = arith.select %595, %599, %600 : vector<2x128xi1>, vector<2x128xf32>
    %602 = vector.broadcast %40 : vector<2x1xf32> to vector<2x128xf32>
    %603 = vector.broadcast %592 : vector<1x128xf32> to vector<2x128xf32>
    %604 = arith.cmpf oeq, %602, %603 : vector<2x128xf32>
    %cst_187 = arith.constant 0.000000e+00 : f32
    %605 = vector.shape_cast %582 : vector<1x128xf32> to vector<1x128xf32>
    %606 = vector.broadcast %605 : vector<1x128xf32> to vector<2x128xf32>
    %607 = vector.broadcast %cst_187 : f32 to vector<2x128xf32>
    %608 = arith.select %604, %606, %607 : vector<2x128xi1>, vector<2x128xf32>
    %609 = arith.addf %601, %608 : vector<2x128xf32>
    %610 = vector.broadcast %38 : vector<1x128xf32> to vector<2x128xf32>
    %611 = arith.mulf %609, %610 : vector<2x128xf32>
    %cst_188 = arith.constant 2.000000e+00 : f32
    %612 = vector.broadcast %cst_188 : f32 to vector<1x128xf32>
    %613 = arith.mulf %351, %612 : vector<1x128xf32>
    %cst_189 = arith.constant 5.000000e-01 : f32
    %614 = vector.broadcast %cst_189 : f32 to vector<1x128xf32>
    %615 = arith.subf %613, %614 : vector<1x128xf32>
    %616 = math.floor %615 : vector<1x128xf32>
    %617 = arith.subf %615, %616 : vector<1x128xf32>
    %cst_190 = arith.constant 0.000000e+00 : f32
    %cst_191 = arith.constant 1.000000e+00 : f32
    %618 = vector.broadcast %cst_190 : f32 to vector<1x128xf32>
    %619 = arith.maximumf %618, %616 : vector<1x128xf32>
    %620 = vector.broadcast %cst_191 : f32 to vector<1x128xf32>
    %621 = arith.minimumf %620, %619 : vector<1x128xf32>
    %cst_192 = arith.constant 1.000000e+00 : f32
    %622 = vector.broadcast %cst_192 : f32 to vector<1x128xf32>
    %623 = arith.addf %616, %622 : vector<1x128xf32>
    %cst_193 = arith.constant 0.000000e+00 : f32
    %cst_194 = arith.constant 1.000000e+00 : f32
    %624 = vector.broadcast %cst_193 : f32 to vector<1x128xf32>
    %625 = arith.maximumf %624, %623 : vector<1x128xf32>
    %626 = vector.broadcast %cst_194 : f32 to vector<1x128xf32>
    %627 = arith.minimumf %626, %625 : vector<1x128xf32>
    %628 = vector.broadcast %40 : vector<2x1xf32> to vector<2x128xf32>
    %629 = vector.broadcast %621 : vector<1x128xf32> to vector<2x128xf32>
    %630 = arith.cmpf oeq, %628, %629 : vector<2x128xf32>
    %cst_195 = arith.constant 1.000000e+00 : f32
    %631 = vector.broadcast %cst_195 : f32 to vector<1x128xf32>
    %632 = arith.subf %631, %617 : vector<1x128xf32>
    %cst_196 = arith.constant 0.000000e+00 : f32
    %633 = vector.shape_cast %632 : vector<1x128xf32> to vector<1x128xf32>
    %634 = vector.broadcast %633 : vector<1x128xf32> to vector<2x128xf32>
    %635 = vector.broadcast %cst_196 : f32 to vector<2x128xf32>
    %636 = arith.select %630, %634, %635 : vector<2x128xi1>, vector<2x128xf32>
    %637 = vector.broadcast %40 : vector<2x1xf32> to vector<2x128xf32>
    %638 = vector.broadcast %627 : vector<1x128xf32> to vector<2x128xf32>
    %639 = arith.cmpf oeq, %637, %638 : vector<2x128xf32>
    %cst_197 = arith.constant 0.000000e+00 : f32
    %640 = vector.shape_cast %617 : vector<1x128xf32> to vector<1x128xf32>
    %641 = vector.broadcast %640 : vector<1x128xf32> to vector<2x128xf32>
    %642 = vector.broadcast %cst_197 : f32 to vector<2x128xf32>
    %643 = arith.select %639, %641, %642 : vector<2x128xi1>, vector<2x128xf32>
    %644 = arith.addf %636, %643 : vector<2x128xf32>
    %cst_198 = arith.constant 0.000000e+00 : f32
    %645 = vector.broadcast %cst_198 : f32 to vector<2x128xf32>
    %646 = tpu.concatenate %644, %645 in 0 : vector<2x128xf32>, vector<2x128xf32> -> vector<4x128xf32>
    %647 = vector.shape_cast %646 : vector<4x128xf32> to vector<4x1x128xf32>
    %648 = vector.shape_cast %611 : vector<2x128xf32> to vector<1x2x128xf32>
    %649 = vector.broadcast %647 : vector<4x1x128xf32> to vector<4x2x128xf32>
    %650 = vector.broadcast %648 : vector<1x2x128xf32> to vector<4x2x128xf32>
    %651 = arith.mulf %649, %650 : vector<4x2x128xf32>
    %652 = vector.shape_cast %651 : vector<4x2x128xf32> to vector<8x128xf32>
    %c336_199 = arith.constant 336 : index
    %c0_200 = arith.constant 0 : index
    %653 = vector.load %arg4[%c336_199, %c0_200] : memref<344x128xf32, #tpu.memory_space<vmem>>, vector<8x128xf32>
    tpu.vector_store %arg4[%c336_199, %c0_200], %652 {strides = array<i32>} : memref<344x128xf32, #tpu.memory_space<vmem>>, vector<8x128xf32>,
    %c1_201 = arith.constant 1 : index
    %c0_202 = arith.constant 0 : index
    %c0_203 = arith.constant 0 : index
    %654 = vector.load %arg2[%c1_201, %c0_202, %c0_203] : memref<3x8x344xf32, #tpu.memory_space<vmem>>, vector<1x8x344xf32>
    %655 = vector.shape_cast %654 : vector<1x8x344xf32> to vector<8x344xf32>
    %c0_204 = arith.constant 0 : index
    %c0_205 = arith.constant 0 : index
    %656 = vector.load %arg4[%c0_204, %c0_205] : memref<344x128xf32, #tpu.memory_space<vmem>>, vector<344x128xf32>
    %cst_206 = arith.constant dense<0.000000e+00> : vector<8x128xf32>
    %657 = tpu.matmul %655, %656, %cst_206 {dimension_numbers = #tpu.dot_dimension_numbers<[1], [0], [0], [1], [0, 0, 1, 1], [], []>} : vector<8x344xf32>, vector<344x128xf32>, vector<8x128xf32> -> vector<8x128xf32>
    %c8 = arith.constant 8 : index
    %c0_207 = arith.constant 0 : index
    %658 = vector.load %arg3[%c8, %c0_207] : memref<24x128xf32, #tpu.memory_space<vmem>>, vector<8x128xf32>
    tpu.vector_store %arg3[%c8, %c0_207], %657 {strides = array<i32>} : memref<24x128xf32, #tpu.memory_space<vmem>>, vector<8x128xf32>,
    %c4 = arith.constant 4 : index
    %c0_208 = arith.constant 0 : index
    %659 = vector.load %arg1[%c4, %c0_208] : memref<8x128xf32, #tpu.memory_space<vmem>>, vector<1x128xf32>
    %c5 = arith.constant 5 : index
    %c0_209 = arith.constant 0 : index
    %660 = vector.load %arg1[%c5, %c0_209] : memref<8x128xf32, #tpu.memory_space<vmem>>, vector<1x128xf32>
    %cst_210 = arith.constant 1.600000e+01 : f32
    %661 = vector.broadcast %cst_210 : f32 to vector<1x128xf32>
    %662 = arith.mulf %659, %661 : vector<1x128xf32>
    %cst_211 = arith.constant 5.000000e-01 : f32
    %663 = vector.broadcast %cst_211 : f32 to vector<1x128xf32>
    %664 = arith.subf %662, %663 : vector<1x128xf32>
    %665 = math.floor %664 : vector<1x128xf32>
    %666 = arith.subf %664, %665 : vector<1x128xf32>
    %cst_212 = arith.constant 0.000000e+00 : f32
    %cst_213 = arith.constant 1.500000e+01 : f32
    %667 = vector.broadcast %cst_212 : f32 to vector<1x128xf32>
    %668 = arith.maximumf %667, %665 : vector<1x128xf32>
    %669 = vector.broadcast %cst_213 : f32 to vector<1x128xf32>
    %670 = arith.minimumf %669, %668 : vector<1x128xf32>
    %cst_214 = arith.constant 1.000000e+00 : f32
    %671 = vector.broadcast %cst_214 : f32 to vector<1x128xf32>
    %672 = arith.addf %665, %671 : vector<1x128xf32>
    %cst_215 = arith.constant 0.000000e+00 : f32
    %cst_216 = arith.constant 1.500000e+01 : f32
    %673 = vector.broadcast %cst_215 : f32 to vector<1x128xf32>
    %674 = arith.maximumf %673, %672 : vector<1x128xf32>
    %675 = vector.broadcast %cst_216 : f32 to vector<1x128xf32>
    %676 = arith.minimumf %675, %674 : vector<1x128xf32>
    %677 = vector.broadcast %13 : vector<16x1xf32> to vector<16x128xf32>
    %678 = vector.broadcast %670 : vector<1x128xf32> to vector<16x128xf32>
    %679 = arith.cmpf oeq, %677, %678 : vector<16x128xf32>
    %cst_217 = arith.constant 1.000000e+00 : f32
    %680 = vector.broadcast %cst_217 : f32 to vector<1x128xf32>
    %681 = arith.subf %680, %666 : vector<1x128xf32>
    %cst_218 = arith.constant 0.000000e+00 : f32
    %682 = vector.shape_cast %681 : vector<1x128xf32> to vector<1x128xf32>
    %683 = vector.broadcast %682 : vector<1x128xf32> to vector<16x128xf32>
    %684 = vector.broadcast %cst_218 : f32 to vector<16x128xf32>
    %685 = arith.select %679, %683, %684 : vector<16x128xi1>, vector<16x128xf32>
    %686 = vector.broadcast %13 : vector<16x1xf32> to vector<16x128xf32>
    %687 = vector.broadcast %676 : vector<1x128xf32> to vector<16x128xf32>
    %688 = arith.cmpf oeq, %686, %687 : vector<16x128xf32>
    %cst_219 = arith.constant 0.000000e+00 : f32
    %689 = vector.shape_cast %666 : vector<1x128xf32> to vector<1x128xf32>
    %690 = vector.broadcast %689 : vector<1x128xf32> to vector<16x128xf32>
    %691 = vector.broadcast %cst_219 : f32 to vector<16x128xf32>
    %692 = arith.select %688, %690, %691 : vector<16x128xi1>, vector<16x128xf32>
    %693 = arith.addf %685, %692 : vector<16x128xf32>
    %694 = vector.broadcast %11 : vector<1x128xf32> to vector<16x128xf32>
    %695 = arith.mulf %693, %694 : vector<16x128xf32>
    %cst_220 = arith.constant 1.600000e+01 : f32
    %696 = vector.broadcast %cst_220 : f32 to vector<1x128xf32>
    %697 = arith.mulf %660, %696 : vector<1x128xf32>
    %cst_221 = arith.constant 5.000000e-01 : f32
    %698 = vector.broadcast %cst_221 : f32 to vector<1x128xf32>
    %699 = arith.subf %697, %698 : vector<1x128xf32>
    %700 = math.floor %699 : vector<1x128xf32>
    %701 = arith.subf %699, %700 : vector<1x128xf32>
    %cst_222 = arith.constant 0.000000e+00 : f32
    %cst_223 = arith.constant 1.500000e+01 : f32
    %702 = vector.broadcast %cst_222 : f32 to vector<1x128xf32>
    %703 = arith.maximumf %702, %700 : vector<1x128xf32>
    %704 = vector.broadcast %cst_223 : f32 to vector<1x128xf32>
    %705 = arith.minimumf %704, %703 : vector<1x128xf32>
    %cst_224 = arith.constant 1.000000e+00 : f32
    %706 = vector.broadcast %cst_224 : f32 to vector<1x128xf32>
    %707 = arith.addf %700, %706 : vector<1x128xf32>
    %cst_225 = arith.constant 0.000000e+00 : f32
    %cst_226 = arith.constant 1.500000e+01 : f32
    %708 = vector.broadcast %cst_225 : f32 to vector<1x128xf32>
    %709 = arith.maximumf %708, %707 : vector<1x128xf32>
    %710 = vector.broadcast %cst_226 : f32 to vector<1x128xf32>
    %711 = arith.minimumf %710, %709 : vector<1x128xf32>
    %712 = vector.broadcast %13 : vector<16x1xf32> to vector<16x128xf32>
    %713 = vector.broadcast %705 : vector<1x128xf32> to vector<16x128xf32>
    %714 = arith.cmpf oeq, %712, %713 : vector<16x128xf32>
    %cst_227 = arith.constant 1.000000e+00 : f32
    %715 = vector.broadcast %cst_227 : f32 to vector<1x128xf32>
    %716 = arith.subf %715, %701 : vector<1x128xf32>
    %cst_228 = arith.constant 0.000000e+00 : f32
    %717 = vector.shape_cast %716 : vector<1x128xf32> to vector<1x128xf32>
    %718 = vector.broadcast %717 : vector<1x128xf32> to vector<16x128xf32>
    %719 = vector.broadcast %cst_228 : f32 to vector<16x128xf32>
    %720 = arith.select %714, %718, %719 : vector<16x128xi1>, vector<16x128xf32>
    %721 = vector.broadcast %13 : vector<16x1xf32> to vector<16x128xf32>
    %722 = vector.broadcast %711 : vector<1x128xf32> to vector<16x128xf32>
    %723 = arith.cmpf oeq, %721, %722 : vector<16x128xf32>
    %cst_229 = arith.constant 0.000000e+00 : f32
    %724 = vector.shape_cast %701 : vector<1x128xf32> to vector<1x128xf32>
    %725 = vector.broadcast %724 : vector<1x128xf32> to vector<16x128xf32>
    %726 = vector.broadcast %cst_229 : f32 to vector<16x128xf32>
    %727 = arith.select %723, %725, %726 : vector<16x128xi1>, vector<16x128xf32>
    %728 = arith.addf %720, %727 : vector<16x128xf32>
    %729 = vector.shape_cast %728 : vector<16x128xf32> to vector<16x1x128xf32>
    %730 = vector.shape_cast %695 : vector<16x128xf32> to vector<1x16x128xf32>
    %731 = vector.broadcast %729 : vector<16x1x128xf32> to vector<16x16x128xf32>
    %732 = vector.broadcast %730 : vector<1x16x128xf32> to vector<16x16x128xf32>
    %733 = arith.mulf %731, %732 : vector<16x16x128xf32>
    %734 = vector.shape_cast %733 : vector<16x16x128xf32> to vector<256x128xf32>
    %c0_230 = arith.constant 0 : index
    %c0_231 = arith.constant 0 : index
    %735 = vector.load %arg4[%c0_230, %c0_231] : memref<344x128xf32, #tpu.memory_space<vmem>>, vector<256x128xf32>
    tpu.vector_store %arg4[%c0_230, %c0_231], %734 {strides = array<i32>} : memref<344x128xf32, #tpu.memory_space<vmem>>, vector<256x128xf32>,
    %cst_232 = arith.constant 8.000000e+00 : f32
    %736 = vector.broadcast %cst_232 : f32 to vector<1x128xf32>
    %737 = arith.mulf %659, %736 : vector<1x128xf32>
    %cst_233 = arith.constant 5.000000e-01 : f32
    %738 = vector.broadcast %cst_233 : f32 to vector<1x128xf32>
    %739 = arith.subf %737, %738 : vector<1x128xf32>
    %740 = math.floor %739 : vector<1x128xf32>
    %741 = arith.subf %739, %740 : vector<1x128xf32>
    %cst_234 = arith.constant 0.000000e+00 : f32
    %cst_235 = arith.constant 7.000000e+00 : f32
    %742 = vector.broadcast %cst_234 : f32 to vector<1x128xf32>
    %743 = arith.maximumf %742, %740 : vector<1x128xf32>
    %744 = vector.broadcast %cst_235 : f32 to vector<1x128xf32>
    %745 = arith.minimumf %744, %743 : vector<1x128xf32>
    %cst_236 = arith.constant 1.000000e+00 : f32
    %746 = vector.broadcast %cst_236 : f32 to vector<1x128xf32>
    %747 = arith.addf %740, %746 : vector<1x128xf32>
    %cst_237 = arith.constant 0.000000e+00 : f32
    %cst_238 = arith.constant 7.000000e+00 : f32
    %748 = vector.broadcast %cst_237 : f32 to vector<1x128xf32>
    %749 = arith.maximumf %748, %747 : vector<1x128xf32>
    %750 = vector.broadcast %cst_238 : f32 to vector<1x128xf32>
    %751 = arith.minimumf %750, %749 : vector<1x128xf32>
    %752 = vector.broadcast %22 : vector<8x1xf32> to vector<8x128xf32>
    %753 = vector.broadcast %745 : vector<1x128xf32> to vector<8x128xf32>
    %754 = arith.cmpf oeq, %752, %753 : vector<8x128xf32>
    %cst_239 = arith.constant 1.000000e+00 : f32
    %755 = vector.broadcast %cst_239 : f32 to vector<1x128xf32>
    %756 = arith.subf %755, %741 : vector<1x128xf32>
    %cst_240 = arith.constant 0.000000e+00 : f32
    %757 = vector.shape_cast %756 : vector<1x128xf32> to vector<1x128xf32>
    %758 = vector.broadcast %757 : vector<1x128xf32> to vector<8x128xf32>
    %759 = vector.broadcast %cst_240 : f32 to vector<8x128xf32>
    %760 = arith.select %754, %758, %759 : vector<8x128xi1>, vector<8x128xf32>
    %761 = vector.broadcast %22 : vector<8x1xf32> to vector<8x128xf32>
    %762 = vector.broadcast %751 : vector<1x128xf32> to vector<8x128xf32>
    %763 = arith.cmpf oeq, %761, %762 : vector<8x128xf32>
    %cst_241 = arith.constant 0.000000e+00 : f32
    %764 = vector.shape_cast %741 : vector<1x128xf32> to vector<1x128xf32>
    %765 = vector.broadcast %764 : vector<1x128xf32> to vector<8x128xf32>
    %766 = vector.broadcast %cst_241 : f32 to vector<8x128xf32>
    %767 = arith.select %763, %765, %766 : vector<8x128xi1>, vector<8x128xf32>
    %768 = arith.addf %760, %767 : vector<8x128xf32>
    %769 = vector.broadcast %20 : vector<1x128xf32> to vector<8x128xf32>
    %770 = arith.mulf %768, %769 : vector<8x128xf32>
    %cst_242 = arith.constant 8.000000e+00 : f32
    %771 = vector.broadcast %cst_242 : f32 to vector<1x128xf32>
    %772 = arith.mulf %660, %771 : vector<1x128xf32>
    %cst_243 = arith.constant 5.000000e-01 : f32
    %773 = vector.broadcast %cst_243 : f32 to vector<1x128xf32>
    %774 = arith.subf %772, %773 : vector<1x128xf32>
    %775 = math.floor %774 : vector<1x128xf32>
    %776 = arith.subf %774, %775 : vector<1x128xf32>
    %cst_244 = arith.constant 0.000000e+00 : f32
    %cst_245 = arith.constant 7.000000e+00 : f32
    %777 = vector.broadcast %cst_244 : f32 to vector<1x128xf32>
    %778 = arith.maximumf %777, %775 : vector<1x128xf32>
    %779 = vector.broadcast %cst_245 : f32 to vector<1x128xf32>
    %780 = arith.minimumf %779, %778 : vector<1x128xf32>
    %cst_246 = arith.constant 1.000000e+00 : f32
    %781 = vector.broadcast %cst_246 : f32 to vector<1x128xf32>
    %782 = arith.addf %775, %781 : vector<1x128xf32>
    %cst_247 = arith.constant 0.000000e+00 : f32
    %cst_248 = arith.constant 7.000000e+00 : f32
    %783 = vector.broadcast %cst_247 : f32 to vector<1x128xf32>
    %784 = arith.maximumf %783, %782 : vector<1x128xf32>
    %785 = vector.broadcast %cst_248 : f32 to vector<1x128xf32>
    %786 = arith.minimumf %785, %784 : vector<1x128xf32>
    %787 = vector.broadcast %22 : vector<8x1xf32> to vector<8x128xf32>
    %788 = vector.broadcast %780 : vector<1x128xf32> to vector<8x128xf32>
    %789 = arith.cmpf oeq, %787, %788 : vector<8x128xf32>
    %cst_249 = arith.constant 1.000000e+00 : f32
    %790 = vector.broadcast %cst_249 : f32 to vector<1x128xf32>
    %791 = arith.subf %790, %776 : vector<1x128xf32>
    %cst_250 = arith.constant 0.000000e+00 : f32
    %792 = vector.shape_cast %791 : vector<1x128xf32> to vector<1x128xf32>
    %793 = vector.broadcast %792 : vector<1x128xf32> to vector<8x128xf32>
    %794 = vector.broadcast %cst_250 : f32 to vector<8x128xf32>
    %795 = arith.select %789, %793, %794 : vector<8x128xi1>, vector<8x128xf32>
    %796 = vector.broadcast %22 : vector<8x1xf32> to vector<8x128xf32>
    %797 = vector.broadcast %786 : vector<1x128xf32> to vector<8x128xf32>
    %798 = arith.cmpf oeq, %796, %797 : vector<8x128xf32>
    %cst_251 = arith.constant 0.000000e+00 : f32
    %799 = vector.shape_cast %776 : vector<1x128xf32> to vector<1x128xf32>
    %800 = vector.broadcast %799 : vector<1x128xf32> to vector<8x128xf32>
    %801 = vector.broadcast %cst_251 : f32 to vector<8x128xf32>
    %802 = arith.select %798, %800, %801 : vector<8x128xi1>, vector<8x128xf32>
    %803 = arith.addf %795, %802 : vector<8x128xf32>
    %804 = vector.shape_cast %803 : vector<8x128xf32> to vector<8x1x128xf32>
    %805 = vector.shape_cast %770 : vector<8x128xf32> to vector<1x8x128xf32>
    %806 = vector.broadcast %804 : vector<8x1x128xf32> to vector<8x8x128xf32>
    %807 = vector.broadcast %805 : vector<1x8x128xf32> to vector<8x8x128xf32>
    %808 = arith.mulf %806, %807 : vector<8x8x128xf32>
    %809 = vector.shape_cast %808 : vector<8x8x128xf32> to vector<64x128xf32>
    %c256_252 = arith.constant 256 : index
    %c0_253 = arith.constant 0 : index
    %810 = vector.load %arg4[%c256_252, %c0_253] : memref<344x128xf32, #tpu.memory_space<vmem>>, vector<64x128xf32>
    tpu.vector_store %arg4[%c256_252, %c0_253], %809 {strides = array<i32>} : memref<344x128xf32, #tpu.memory_space<vmem>>, vector<64x128xf32>,
    %cst_254 = arith.constant 4.000000e+00 : f32
    %811 = vector.broadcast %cst_254 : f32 to vector<1x128xf32>
    %812 = arith.mulf %659, %811 : vector<1x128xf32>
    %cst_255 = arith.constant 5.000000e-01 : f32
    %813 = vector.broadcast %cst_255 : f32 to vector<1x128xf32>
    %814 = arith.subf %812, %813 : vector<1x128xf32>
    %815 = math.floor %814 : vector<1x128xf32>
    %816 = arith.subf %814, %815 : vector<1x128xf32>
    %cst_256 = arith.constant 0.000000e+00 : f32
    %cst_257 = arith.constant 3.000000e+00 : f32
    %817 = vector.broadcast %cst_256 : f32 to vector<1x128xf32>
    %818 = arith.maximumf %817, %815 : vector<1x128xf32>
    %819 = vector.broadcast %cst_257 : f32 to vector<1x128xf32>
    %820 = arith.minimumf %819, %818 : vector<1x128xf32>
    %cst_258 = arith.constant 1.000000e+00 : f32
    %821 = vector.broadcast %cst_258 : f32 to vector<1x128xf32>
    %822 = arith.addf %815, %821 : vector<1x128xf32>
    %cst_259 = arith.constant 0.000000e+00 : f32
    %cst_260 = arith.constant 3.000000e+00 : f32
    %823 = vector.broadcast %cst_259 : f32 to vector<1x128xf32>
    %824 = arith.maximumf %823, %822 : vector<1x128xf32>
    %825 = vector.broadcast %cst_260 : f32 to vector<1x128xf32>
    %826 = arith.minimumf %825, %824 : vector<1x128xf32>
    %827 = vector.broadcast %31 : vector<4x1xf32> to vector<4x128xf32>
    %828 = vector.broadcast %820 : vector<1x128xf32> to vector<4x128xf32>
    %829 = arith.cmpf oeq, %827, %828 : vector<4x128xf32>
    %cst_261 = arith.constant 1.000000e+00 : f32
    %830 = vector.broadcast %cst_261 : f32 to vector<1x128xf32>
    %831 = arith.subf %830, %816 : vector<1x128xf32>
    %cst_262 = arith.constant 0.000000e+00 : f32
    %832 = vector.shape_cast %831 : vector<1x128xf32> to vector<1x128xf32>
    %833 = vector.broadcast %832 : vector<1x128xf32> to vector<4x128xf32>
    %834 = vector.broadcast %cst_262 : f32 to vector<4x128xf32>
    %835 = arith.select %829, %833, %834 : vector<4x128xi1>, vector<4x128xf32>
    %836 = vector.broadcast %31 : vector<4x1xf32> to vector<4x128xf32>
    %837 = vector.broadcast %826 : vector<1x128xf32> to vector<4x128xf32>
    %838 = arith.cmpf oeq, %836, %837 : vector<4x128xf32>
    %cst_263 = arith.constant 0.000000e+00 : f32
    %839 = vector.shape_cast %816 : vector<1x128xf32> to vector<1x128xf32>
    %840 = vector.broadcast %839 : vector<1x128xf32> to vector<4x128xf32>
    %841 = vector.broadcast %cst_263 : f32 to vector<4x128xf32>
    %842 = arith.select %838, %840, %841 : vector<4x128xi1>, vector<4x128xf32>
    %843 = arith.addf %835, %842 : vector<4x128xf32>
    %844 = vector.broadcast %29 : vector<1x128xf32> to vector<4x128xf32>
    %845 = arith.mulf %843, %844 : vector<4x128xf32>
    %cst_264 = arith.constant 4.000000e+00 : f32
    %846 = vector.broadcast %cst_264 : f32 to vector<1x128xf32>
    %847 = arith.mulf %660, %846 : vector<1x128xf32>
    %cst_265 = arith.constant 5.000000e-01 : f32
    %848 = vector.broadcast %cst_265 : f32 to vector<1x128xf32>
    %849 = arith.subf %847, %848 : vector<1x128xf32>
    %850 = math.floor %849 : vector<1x128xf32>
    %851 = arith.subf %849, %850 : vector<1x128xf32>
    %cst_266 = arith.constant 0.000000e+00 : f32
    %cst_267 = arith.constant 3.000000e+00 : f32
    %852 = vector.broadcast %cst_266 : f32 to vector<1x128xf32>
    %853 = arith.maximumf %852, %850 : vector<1x128xf32>
    %854 = vector.broadcast %cst_267 : f32 to vector<1x128xf32>
    %855 = arith.minimumf %854, %853 : vector<1x128xf32>
    %cst_268 = arith.constant 1.000000e+00 : f32
    %856 = vector.broadcast %cst_268 : f32 to vector<1x128xf32>
    %857 = arith.addf %850, %856 : vector<1x128xf32>
    %cst_269 = arith.constant 0.000000e+00 : f32
    %cst_270 = arith.constant 3.000000e+00 : f32
    %858 = vector.broadcast %cst_269 : f32 to vector<1x128xf32>
    %859 = arith.maximumf %858, %857 : vector<1x128xf32>
    %860 = vector.broadcast %cst_270 : f32 to vector<1x128xf32>
    %861 = arith.minimumf %860, %859 : vector<1x128xf32>
    %862 = vector.broadcast %31 : vector<4x1xf32> to vector<4x128xf32>
    %863 = vector.broadcast %855 : vector<1x128xf32> to vector<4x128xf32>
    %864 = arith.cmpf oeq, %862, %863 : vector<4x128xf32>
    %cst_271 = arith.constant 1.000000e+00 : f32
    %865 = vector.broadcast %cst_271 : f32 to vector<1x128xf32>
    %866 = arith.subf %865, %851 : vector<1x128xf32>
    %cst_272 = arith.constant 0.000000e+00 : f32
    %867 = vector.shape_cast %866 : vector<1x128xf32> to vector<1x128xf32>
    %868 = vector.broadcast %867 : vector<1x128xf32> to vector<4x128xf32>
    %869 = vector.broadcast %cst_272 : f32 to vector<4x128xf32>
    %870 = arith.select %864, %868, %869 : vector<4x128xi1>, vector<4x128xf32>
    %871 = vector.broadcast %31 : vector<4x1xf32> to vector<4x128xf32>
    %872 = vector.broadcast %861 : vector<1x128xf32> to vector<4x128xf32>
    %873 = arith.cmpf oeq, %871, %872 : vector<4x128xf32>
    %cst_273 = arith.constant 0.000000e+00 : f32
    %874 = vector.shape_cast %851 : vector<1x128xf32> to vector<1x128xf32>
    %875 = vector.broadcast %874 : vector<1x128xf32> to vector<4x128xf32>
    %876 = vector.broadcast %cst_273 : f32 to vector<4x128xf32>
    %877 = arith.select %873, %875, %876 : vector<4x128xi1>, vector<4x128xf32>
    %878 = arith.addf %870, %877 : vector<4x128xf32>
    %879 = vector.shape_cast %878 : vector<4x128xf32> to vector<4x1x128xf32>
    %880 = vector.shape_cast %845 : vector<4x128xf32> to vector<1x4x128xf32>
    %881 = vector.broadcast %879 : vector<4x1x128xf32> to vector<4x4x128xf32>
    %882 = vector.broadcast %880 : vector<1x4x128xf32> to vector<4x4x128xf32>
    %883 = arith.mulf %881, %882 : vector<4x4x128xf32>
    %884 = vector.shape_cast %883 : vector<4x4x128xf32> to vector<16x128xf32>
    %c320_274 = arith.constant 320 : index
    %c0_275 = arith.constant 0 : index
    %885 = vector.load %arg4[%c320_274, %c0_275] : memref<344x128xf32, #tpu.memory_space<vmem>>, vector<16x128xf32>
    tpu.vector_store %arg4[%c320_274, %c0_275], %884 {strides = array<i32>} : memref<344x128xf32, #tpu.memory_space<vmem>>, vector<16x128xf32>,
    %cst_276 = arith.constant 2.000000e+00 : f32
    %886 = vector.broadcast %cst_276 : f32 to vector<1x128xf32>
    %887 = arith.mulf %659, %886 : vector<1x128xf32>
    %cst_277 = arith.constant 5.000000e-01 : f32
    %888 = vector.broadcast %cst_277 : f32 to vector<1x128xf32>
    %889 = arith.subf %887, %888 : vector<1x128xf32>
    %890 = math.floor %889 : vector<1x128xf32>
    %891 = arith.subf %889, %890 : vector<1x128xf32>
    %cst_278 = arith.constant 0.000000e+00 : f32
    %cst_279 = arith.constant 1.000000e+00 : f32
    %892 = vector.broadcast %cst_278 : f32 to vector<1x128xf32>
    %893 = arith.maximumf %892, %890 : vector<1x128xf32>
    %894 = vector.broadcast %cst_279 : f32 to vector<1x128xf32>
    %895 = arith.minimumf %894, %893 : vector<1x128xf32>
    %cst_280 = arith.constant 1.000000e+00 : f32
    %896 = vector.broadcast %cst_280 : f32 to vector<1x128xf32>
    %897 = arith.addf %890, %896 : vector<1x128xf32>
    %cst_281 = arith.constant 0.000000e+00 : f32
    %cst_282 = arith.constant 1.000000e+00 : f32
    %898 = vector.broadcast %cst_281 : f32 to vector<1x128xf32>
    %899 = arith.maximumf %898, %897 : vector<1x128xf32>
    %900 = vector.broadcast %cst_282 : f32 to vector<1x128xf32>
    %901 = arith.minimumf %900, %899 : vector<1x128xf32>
    %902 = vector.broadcast %40 : vector<2x1xf32> to vector<2x128xf32>
    %903 = vector.broadcast %895 : vector<1x128xf32> to vector<2x128xf32>
    %904 = arith.cmpf oeq, %902, %903 : vector<2x128xf32>
    %cst_283 = arith.constant 1.000000e+00 : f32
    %905 = vector.broadcast %cst_283 : f32 to vector<1x128xf32>
    %906 = arith.subf %905, %891 : vector<1x128xf32>
    %cst_284 = arith.constant 0.000000e+00 : f32
    %907 = vector.shape_cast %906 : vector<1x128xf32> to vector<1x128xf32>
    %908 = vector.broadcast %907 : vector<1x128xf32> to vector<2x128xf32>
    %909 = vector.broadcast %cst_284 : f32 to vector<2x128xf32>
    %910 = arith.select %904, %908, %909 : vector<2x128xi1>, vector<2x128xf32>
    %911 = vector.broadcast %40 : vector<2x1xf32> to vector<2x128xf32>
    %912 = vector.broadcast %901 : vector<1x128xf32> to vector<2x128xf32>
    %913 = arith.cmpf oeq, %911, %912 : vector<2x128xf32>
    %cst_285 = arith.constant 0.000000e+00 : f32
    %914 = vector.shape_cast %891 : vector<1x128xf32> to vector<1x128xf32>
    %915 = vector.broadcast %914 : vector<1x128xf32> to vector<2x128xf32>
    %916 = vector.broadcast %cst_285 : f32 to vector<2x128xf32>
    %917 = arith.select %913, %915, %916 : vector<2x128xi1>, vector<2x128xf32>
    %918 = arith.addf %910, %917 : vector<2x128xf32>
    %919 = vector.broadcast %38 : vector<1x128xf32> to vector<2x128xf32>
    %920 = arith.mulf %918, %919 : vector<2x128xf32>
    %cst_286 = arith.constant 2.000000e+00 : f32
    %921 = vector.broadcast %cst_286 : f32 to vector<1x128xf32>
    %922 = arith.mulf %660, %921 : vector<1x128xf32>
    %cst_287 = arith.constant 5.000000e-01 : f32
    %923 = vector.broadcast %cst_287 : f32 to vector<1x128xf32>
    %924 = arith.subf %922, %923 : vector<1x128xf32>
    %925 = math.floor %924 : vector<1x128xf32>
    %926 = arith.subf %924, %925 : vector<1x128xf32>
    %cst_288 = arith.constant 0.000000e+00 : f32
    %cst_289 = arith.constant 1.000000e+00 : f32
    %927 = vector.broadcast %cst_288 : f32 to vector<1x128xf32>
    %928 = arith.maximumf %927, %925 : vector<1x128xf32>
    %929 = vector.broadcast %cst_289 : f32 to vector<1x128xf32>
    %930 = arith.minimumf %929, %928 : vector<1x128xf32>
    %cst_290 = arith.constant 1.000000e+00 : f32
    %931 = vector.broadcast %cst_290 : f32 to vector<1x128xf32>
    %932 = arith.addf %925, %931 : vector<1x128xf32>
    %cst_291 = arith.constant 0.000000e+00 : f32
    %cst_292 = arith.constant 1.000000e+00 : f32
    %933 = vector.broadcast %cst_291 : f32 to vector<1x128xf32>
    %934 = arith.maximumf %933, %932 : vector<1x128xf32>
    %935 = vector.broadcast %cst_292 : f32 to vector<1x128xf32>
    %936 = arith.minimumf %935, %934 : vector<1x128xf32>
    %937 = vector.broadcast %40 : vector<2x1xf32> to vector<2x128xf32>
    %938 = vector.broadcast %930 : vector<1x128xf32> to vector<2x128xf32>
    %939 = arith.cmpf oeq, %937, %938 : vector<2x128xf32>
    %cst_293 = arith.constant 1.000000e+00 : f32
    %940 = vector.broadcast %cst_293 : f32 to vector<1x128xf32>
    %941 = arith.subf %940, %926 : vector<1x128xf32>
    %cst_294 = arith.constant 0.000000e+00 : f32
    %942 = vector.shape_cast %941 : vector<1x128xf32> to vector<1x128xf32>
    %943 = vector.broadcast %942 : vector<1x128xf32> to vector<2x128xf32>
    %944 = vector.broadcast %cst_294 : f32 to vector<2x128xf32>
    %945 = arith.select %939, %943, %944 : vector<2x128xi1>, vector<2x128xf32>
    %946 = vector.broadcast %40 : vector<2x1xf32> to vector<2x128xf32>
    %947 = vector.broadcast %936 : vector<1x128xf32> to vector<2x128xf32>
    %948 = arith.cmpf oeq, %946, %947 : vector<2x128xf32>
    %cst_295 = arith.constant 0.000000e+00 : f32
    %949 = vector.shape_cast %926 : vector<1x128xf32> to vector<1x128xf32>
    %950 = vector.broadcast %949 : vector<1x128xf32> to vector<2x128xf32>
    %951 = vector.broadcast %cst_295 : f32 to vector<2x128xf32>
    %952 = arith.select %948, %950, %951 : vector<2x128xi1>, vector<2x128xf32>
    %953 = arith.addf %945, %952 : vector<2x128xf32>
    %cst_296 = arith.constant 0.000000e+00 : f32
    %954 = vector.broadcast %cst_296 : f32 to vector<2x128xf32>
    %955 = tpu.concatenate %953, %954 in 0 : vector<2x128xf32>, vector<2x128xf32> -> vector<4x128xf32>
    %956 = vector.shape_cast %955 : vector<4x128xf32> to vector<4x1x128xf32>
    %957 = vector.shape_cast %920 : vector<2x128xf32> to vector<1x2x128xf32>
    %958 = vector.broadcast %956 : vector<4x1x128xf32> to vector<4x2x128xf32>
    %959 = vector.broadcast %957 : vector<1x2x128xf32> to vector<4x2x128xf32>
    %960 = arith.mulf %958, %959 : vector<4x2x128xf32>
    %961 = vector.shape_cast %960 : vector<4x2x128xf32> to vector<8x128xf32>
    %c336_297 = arith.constant 336 : index
    %c0_298 = arith.constant 0 : index
    %962 = vector.load %arg4[%c336_297, %c0_298] : memref<344x128xf32, #tpu.memory_space<vmem>>, vector<8x128xf32>
    tpu.vector_store %arg4[%c336_297, %c0_298], %961 {strides = array<i32>} : memref<344x128xf32, #tpu.memory_space<vmem>>, vector<8x128xf32>,
    %c2_299 = arith.constant 2 : index
    %c0_300 = arith.constant 0 : index
    %c0_301 = arith.constant 0 : index
    %963 = vector.load %arg2[%c2_299, %c0_300, %c0_301] : memref<3x8x344xf32, #tpu.memory_space<vmem>>, vector<1x8x344xf32>
    %964 = vector.shape_cast %963 : vector<1x8x344xf32> to vector<8x344xf32>
    %c0_302 = arith.constant 0 : index
    %c0_303 = arith.constant 0 : index
    %965 = vector.load %arg4[%c0_302, %c0_303] : memref<344x128xf32, #tpu.memory_space<vmem>>, vector<344x128xf32>
    %cst_304 = arith.constant dense<0.000000e+00> : vector<8x128xf32>
    %966 = tpu.matmul %964, %965, %cst_304 {dimension_numbers = #tpu.dot_dimension_numbers<[1], [0], [0], [1], [0, 0, 1, 1], [], []>} : vector<8x344xf32>, vector<344x128xf32>, vector<8x128xf32> -> vector<8x128xf32>
    %c16 = arith.constant 16 : index
    %c0_305 = arith.constant 0 : index
    %967 = vector.load %arg3[%c16, %c0_305] : memref<24x128xf32, #tpu.memory_space<vmem>>, vector<8x128xf32>
    tpu.vector_store %arg3[%c16, %c0_305], %966 {strides = array<i32>} : memref<24x128xf32, #tpu.memory_space<vmem>>, vector<8x128xf32>,
    return
  }
  func.func @transform_0(%arg0: i32) -> (i32, i32) {
    %c0_i32 = arith.constant 0 : i32
    %c0_i32_0 = arith.constant 0 : i32
    return %c0_i32, %arg0 : i32, i32
  }
  func.func @transform_1(%arg0: i32) -> (i32, i32, i32) {
    %c0_i32 = arith.constant 0 : i32
    %c0_i32_0 = arith.constant 0 : i32
    %c0_i32_1 = arith.constant 0 : i32
    %c0_i32_2 = arith.constant 0 : i32
    return %c0_i32, %c0_i32_0, %c0_i32_1 : i32, i32, i32
  }
  func.func @transform_2(%arg0: i32) -> (i32, i32) {
    %c0_i32 = arith.constant 0 : i32
    %c0_i32_0 = arith.constant 0 : i32
    return %c0_i32, %arg0 : i32, i32
  }
}

module attributes {stable_mosaic.version = 11 : i64} {
  func.func @_trimip_kernel(%arg0: i32, %arg1: memref<8x128xf32, #tpu.memory_space<vmem>>, %arg2: memref<3x8x344xf32, #tpu.memory_space<vmem>>, %arg3: memref<24x128xf32, #tpu.memory_space<vmem>>, %arg4: memref<344x128xf32, #tpu.memory_space<vmem>>) attributes {dimension_semantics = [#tpu.dimension_semantics<parallel>], iteration_bounds = array<i64: 1>, scalar_prefetch = 0 : i64, scratch_operands = 1 : i64, tpu.core_type = #tpu.core_type<tc>, window_params = [{transform_indices = @transform_0, window_bounds = array<i64: 8, 128>}, {pipeline_mode = #tpu.pipeline_mode<synchronous>, transform_indices = @transform_1, window_bounds = array<i64: 3, 8, 344>}, {transform_indices = @transform_2, window_bounds = array<i64: 24, 128>}]} {
    %c6 = arith.constant 6 : index
    %c0 = arith.constant 0 : index
    %0 = vector.load %arg1[%c6, %c0] : memref<8x128xf32, #tpu.memory_space<vmem>>, vector<1x128xf32>
    %cst = arith.constant 0.000000e+00 : f32
    %cst_0 = arith.constant 3.000000e+00 : f32
    %1 = vector.broadcast %cst : f32 to vector<1x128xf32>
    %2 = arith.maximumf %1, %0 : vector<1x128xf32>
    %3 = vector.broadcast %cst_0 : f32 to vector<1x128xf32>
    %4 = arith.minimumf %3, %2 : vector<1x128xf32>
    %cst_1 = arith.constant 0.000000e+00 : f32
    %5 = vector.broadcast %cst_1 : f32 to vector<1x128xf32>
    %6 = arith.subf %4, %5 : vector<1x128xf32>
    %7 = math.absf %6 : vector<1x128xf32>
    %cst_2 = arith.constant 1.000000e+00 : f32
    %8 = vector.broadcast %cst_2 : f32 to vector<1x128xf32>
    %9 = arith.subf %8, %7 : vector<1x128xf32>
    %cst_3 = arith.constant 0.000000e+00 : f32
    %10 = vector.broadcast %cst_3 : f32 to vector<1x128xf32>
    %11 = arith.maximumf %10, %9 : vector<1x128xf32>
    %12 = tpu.iota {dimensions = array<i32: 0>} : vector<16x1xi32>
    %13 = arith.sitofp %12 : vector<16x1xi32> to vector<16x1xf32>
    %cst_4 = arith.constant 1.000000e+00 : f32
    %14 = vector.broadcast %cst_4 : f32 to vector<1x128xf32>
    %15 = arith.subf %4, %14 : vector<1x128xf32>
    %16 = math.absf %15 : vector<1x128xf32>
    %cst_5 = arith.constant 1.000000e+00 : f32
    %17 = vector.broadcast %cst_5 : f32 to vector<1x128xf32>
    %18 = arith.subf %17, %16 : vector<1x128xf32>
    %cst_6 = arith.constant 0.000000e+00 : f32
    %19 = vector.broadcast %cst_6 : f32 to vector<1x128xf32>
    %20 = arith.maximumf %19, %18 : vector<1x128xf32>
    %21 = tpu.iota {dimensions = array<i32: 0>} : vector<8x1xi32>
    %22 = arith.sitofp %21 : vector<8x1xi32> to vector<8x1xf32>
    %cst_7 = arith.constant 2.000000e+00 : f32
    %23 = vector.broadcast %cst_7 : f32 to vector<1x128xf32>
    %24 = arith.subf %4, %23 : vector<1x128xf32>
    %25 = math.absf %24 : vector<1x128xf32>
    %cst_8 = arith.constant 1.000000e+00 : f32
    %26 = vector.broadcast %cst_8 : f32 to vector<1x128xf32>
    %27 = arith.subf %26, %25 : vector<1x128xf32>
    %cst_9 = arith.constant 0.000000e+00 : f32
    %28 = vector.broadcast %cst_9 : f32 to vector<1x128xf32>
    %29 = arith.maximumf %28, %27 : vector<1x128xf32>
    %30 = tpu.iota {dimensions = array<i32: 0>} : vector<4x1xi32>
    %31 = arith.sitofp %30 : vector<4x1xi32> to vector<4x1xf32>
    %cst_10 = arith.constant 3.000000e+00 : f32
    %32 = vector.broadcast %cst_10 : f32 to vector<1x128xf32>
    %33 = arith.subf %4, %32 : vector<1x128xf32>
    %34 = math.absf %33 : vector<1x128xf32>
    %cst_11 = arith.constant 1.000000e+00 : f32
    %35 = vector.broadcast %cst_11 : f32 to vector<1x128xf32>
    %36 = arith.subf %35, %34 : vector<1x128xf32>
    %cst_12 = arith.constant 0.000000e+00 : f32
    %37 = vector.broadcast %cst_12 : f32 to vector<1x128xf32>
    %38 = arith.maximumf %37, %36 : vector<1x128xf32>
    %39 = tpu.iota {dimensions = array<i32: 0>} : vector<2x1xi32>
    %40 = arith.sitofp %39 : vector<2x1xi32> to vector<2x1xf32>
    %c0_13 = arith.constant 0 : index
    %c0_14 = arith.constant 0 : index
    %41 = vector.load %arg1[%c0_13, %c0_14] : memref<8x128xf32, #tpu.memory_space<vmem>>, vector<1x128xf32>
    %c1 = arith.constant 1 : index
    %c0_15 = arith.constant 0 : index
    %42 = vector.load %arg1[%c1, %c0_15] : memref<8x128xf32, #tpu.memory_space<vmem>>, vector<1x128xf32>
    %cst_16 = arith.constant 1.600000e+01 : f32
    %43 = vector.broadcast %cst_16 : f32 to vector<1x128xf32>
    %44 = arith.mulf %41, %43 : vector<1x128xf32>
    %cst_17 = arith.constant 5.000000e-01 : f32
    %45 = vector.broadcast %cst_17 : f32 to vector<1x128xf32>
    %46 = arith.subf %44, %45 : vector<1x128xf32>
    %47 = math.floor %46 : vector<1x128xf32>
    %48 = arith.subf %46, %47 : vector<1x128xf32>
    %cst_18 = arith.constant 0.000000e+00 : f32
    %cst_19 = arith.constant 1.500000e+01 : f32
    %49 = vector.broadcast %cst_18 : f32 to vector<1x128xf32>
    %50 = arith.maximumf %49, %47 : vector<1x128xf32>
    %51 = vector.broadcast %cst_19 : f32 to vector<1x128xf32>
    %52 = arith.minimumf %51, %50 : vector<1x128xf32>
    %cst_20 = arith.constant 1.000000e+00 : f32
    %53 = vector.broadcast %cst_20 : f32 to vector<1x128xf32>
    %54 = arith.addf %47, %53 : vector<1x128xf32>
    %cst_21 = arith.constant 0.000000e+00 : f32
    %cst_22 = arith.constant 1.500000e+01 : f32
    %55 = vector.broadcast %cst_21 : f32 to vector<1x128xf32>
    %56 = arith.maximumf %55, %54 : vector<1x128xf32>
    %57 = vector.broadcast %cst_22 : f32 to vector<1x128xf32>
    %58 = arith.minimumf %57, %56 : vector<1x128xf32>
    %59 = vector.broadcast %13 : vector<16x1xf32> to vector<16x128xf32>
    %60 = vector.broadcast %52 : vector<1x128xf32> to vector<16x128xf32>
    %61 = arith.cmpf oeq, %59, %60 : vector<16x128xf32>
    %cst_23 = arith.constant 1.000000e+00 : f32
    %62 = vector.broadcast %cst_23 : f32 to vector<1x128xf32>
    %63 = arith.subf %62, %48 : vector<1x128xf32>
    %cst_24 = arith.constant 0.000000e+00 : f32
    %64 = vector.shape_cast %63 : vector<1x128xf32> to vector<1x128xf32>
    %65 = vector.broadcast %64 : vector<1x128xf32> to vector<16x128xf32>
    %66 = vector.broadcast %cst_24 : f32 to vector<16x128xf32>
    %67 = arith.select %61, %65, %66 : vector<16x128xi1>, vector<16x128xf32>
    %68 = vector.broadcast %13 : vector<16x1xf32> to vector<16x128xf32>
    %69 = vector.broadcast %58 : vector<1x128xf32> to vector<16x128xf32>
    %70 = arith.cmpf oeq, %68, %69 : vector<16x128xf32>
    %cst_25 = arith.constant 0.000000e+00 : f32
    %71 = vector.shape_cast %48 : vector<1x128xf32> to vector<1x128xf32>
    %72 = vector.broadcast %71 : vector<1x128xf32> to vector<16x128xf32>
    %73 = vector.broadcast %cst_25 : f32 to vector<16x128xf32>
    %74 = arith.select %70, %72, %73 : vector<16x128xi1>, vector<16x128xf32>
    %75 = arith.addf %67, %74 : vector<16x128xf32>
    %76 = vector.broadcast %11 : vector<1x128xf32> to vector<16x128xf32>
    %77 = arith.mulf %75, %76 : vector<16x128xf32>
    %cst_26 = arith.constant 1.600000e+01 : f32
    %78 = vector.broadcast %cst_26 : f32 to vector<1x128xf32>
    %79 = arith.mulf %42, %78 : vector<1x128xf32>
    %cst_27 = arith.constant 5.000000e-01 : f32
    %80 = vector.broadcast %cst_27 : f32 to vector<1x128xf32>
    %81 = arith.subf %79, %80 : vector<1x128xf32>
    %82 = math.floor %81 : vector<1x128xf32>
    %83 = arith.subf %81, %82 : vector<1x128xf32>
    %cst_28 = arith.constant 0.000000e+00 : f32
    %cst_29 = arith.constant 1.500000e+01 : f32
    %84 = vector.broadcast %cst_28 : f32 to vector<1x128xf32>
    %85 = arith.maximumf %84, %82 : vector<1x128xf32>
    %86 = vector.broadcast %cst_29 : f32 to vector<1x128xf32>
    %87 = arith.minimumf %86, %85 : vector<1x128xf32>
    %cst_30 = arith.constant 1.000000e+00 : f32
    %88 = vector.broadcast %cst_30 : f32 to vector<1x128xf32>
    %89 = arith.addf %82, %88 : vector<1x128xf32>
    %cst_31 = arith.constant 0.000000e+00 : f32
    %cst_32 = arith.constant 1.500000e+01 : f32
    %90 = vector.broadcast %cst_31 : f32 to vector<1x128xf32>
    %91 = arith.maximumf %90, %89 : vector<1x128xf32>
    %92 = vector.broadcast %cst_32 : f32 to vector<1x128xf32>
    %93 = arith.minimumf %92, %91 : vector<1x128xf32>
    %94 = vector.broadcast %13 : vector<16x1xf32> to vector<16x128xf32>
    %95 = vector.broadcast %87 : vector<1x128xf32> to vector<16x128xf32>
    %96 = arith.cmpf oeq, %94, %95 : vector<16x128xf32>
    %cst_33 = arith.constant 1.000000e+00 : f32
    %97 = vector.broadcast %cst_33 : f32 to vector<1x128xf32>
    %98 = arith.subf %97, %83 : vector<1x128xf32>
    %cst_34 = arith.constant 0.000000e+00 : f32
    %99 = vector.shape_cast %98 : vector<1x128xf32> to vector<1x128xf32>
    %100 = vector.broadcast %99 : vector<1x128xf32> to vector<16x128xf32>
    %101 = vector.broadcast %cst_34 : f32 to vector<16x128xf32>
    %102 = arith.select %96, %100, %101 : vector<16x128xi1>, vector<16x128xf32>
    %103 = vector.broadcast %13 : vector<16x1xf32> to vector<16x128xf32>
    %104 = vector.broadcast %93 : vector<1x128xf32> to vector<16x128xf32>
    %105 = arith.cmpf oeq, %103, %104 : vector<16x128xf32>
    %cst_35 = arith.constant 0.000000e+00 : f32
    %106 = vector.shape_cast %83 : vector<1x128xf32> to vector<1x128xf32>
    %107 = vector.broadcast %106 : vector<1x128xf32> to vector<16x128xf32>
    %108 = vector.broadcast %cst_35 : f32 to vector<16x128xf32>
    %109 = arith.select %105, %107, %108 : vector<16x128xi1>, vector<16x128xf32>
    %110 = arith.addf %102, %109 : vector<16x128xf32>
    %111 = vector.shape_cast %110 : vector<16x128xf32> to vector<16x1x128xf32>
    %112 = vector.shape_cast %77 : vector<16x128xf32> to vector<1x16x128xf32>
    %113 = vector.broadcast %111 : vector<16x1x128xf32> to vector<16x16x128xf32>
    %114 = vector.broadcast %112 : vector<1x16x128xf32> to vector<16x16x128xf32>
    %115 = arith.mulf %113, %114 : vector<16x16x128xf32>
    %116 = vector.shape_cast %115 : vector<16x16x128xf32> to vector<256x128xf32>
    %c0_36 = arith.constant 0 : index
    %c0_37 = arith.constant 0 : index
    %117 = vector.load %arg4[%c0_36, %c0_37] : memref<344x128xf32, #tpu.memory_space<vmem>>, vector<256x128xf32>
    tpu.vector_store %arg4[%c0_36, %c0_37], %116 {strides = array<i32>} : memref<344x128xf32, #tpu.memory_space<vmem>>, vector<256x128xf32>,
    %cst_38 = arith.constant 8.000000e+00 : f32
    %118 = vector.broadcast %cst_38 : f32 to vector<1x128xf32>
    %119 = arith.mulf %41, %118 : vector<1x128xf32>
    %cst_39 = arith.constant 5.000000e-01 : f32
    %120 = vector.broadcast %cst_39 : f32 to vector<1x128xf32>
    %121 = arith.subf %119, %120 : vector<1x128xf32>
    %122 = math.floor %121 : vector<1x128xf32>
    %123 = arith.subf %121, %122 : vector<1x128xf32>
    %cst_40 = arith.constant 0.000000e+00 : f32
    %cst_41 = arith.constant 7.000000e+00 : f32
    %124 = vector.broadcast %cst_40 : f32 to vector<1x128xf32>
    %125 = arith.maximumf %124, %122 : vector<1x128xf32>
    %126 = vector.broadcast %cst_41 : f32 to vector<1x128xf32>
    %127 = arith.minimumf %126, %125 : vector<1x128xf32>
    %cst_42 = arith.constant 1.000000e+00 : f32
    %128 = vector.broadcast %cst_42 : f32 to vector<1x128xf32>
    %129 = arith.addf %122, %128 : vector<1x128xf32>
    %cst_43 = arith.constant 0.000000e+00 : f32
    %cst_44 = arith.constant 7.000000e+00 : f32
    %130 = vector.broadcast %cst_43 : f32 to vector<1x128xf32>
    %131 = arith.maximumf %130, %129 : vector<1x128xf32>
    %132 = vector.broadcast %cst_44 : f32 to vector<1x128xf32>
    %133 = arith.minimumf %132, %131 : vector<1x128xf32>
    %134 = vector.broadcast %22 : vector<8x1xf32> to vector<8x128xf32>
    %135 = vector.broadcast %127 : vector<1x128xf32> to vector<8x128xf32>
    %136 = arith.cmpf oeq, %134, %135 : vector<8x128xf32>
    %cst_45 = arith.constant 1.000000e+00 : f32
    %137 = vector.broadcast %cst_45 : f32 to vector<1x128xf32>
    %138 = arith.subf %137, %123 : vector<1x128xf32>
    %cst_46 = arith.constant 0.000000e+00 : f32
    %139 = vector.shape_cast %138 : vector<1x128xf32> to vector<1x128xf32>
    %140 = vector.broadcast %139 : vector<1x128xf32> to vector<8x128xf32>
    %141 = vector.broadcast %cst_46 : f32 to vector<8x128xf32>
    %142 = arith.select %136, %140, %141 : vector<8x128xi1>, vector<8x128xf32>
    %143 = vector.broadcast %22 : vector<8x1xf32> to vector<8x128xf32>
    %144 = vector.broadcast %133 : vector<1x128xf32> to vector<8x128xf32>
    %145 = arith.cmpf oeq, %143, %144 : vector<8x128xf32>
    %cst_47 = arith.constant 0.000000e+00 : f32
    %146 = vector.shape_cast %123 : vector<1x128xf32> to vector<1x128xf32>
    %147 = vector.broadcast %146 : vector<1x128xf32> to vector<8x128xf32>
    %148 = vector.broadcast %cst_47 : f32 to vector<8x128xf32>
    %149 = arith.select %145, %147, %148 : vector<8x128xi1>, vector<8x128xf32>
    %150 = arith.addf %142, %149 : vector<8x128xf32>
    %151 = vector.broadcast %20 : vector<1x128xf32> to vector<8x128xf32>
    %152 = arith.mulf %150, %151 : vector<8x128xf32>
    %cst_48 = arith.constant 8.000000e+00 : f32
    %153 = vector.broadcast %cst_48 : f32 to vector<1x128xf32>
    %154 = arith.mulf %42, %153 : vector<1x128xf32>
    %cst_49 = arith.constant 5.000000e-01 : f32
    %155 = vector.broadcast %cst_49 : f32 to vector<1x128xf32>
    %156 = arith.subf %154, %155 : vector<1x128xf32>
    %157 = math.floor %156 : vector<1x128xf32>
    %158 = arith.subf %156, %157 : vector<1x128xf32>
    %cst_50 = arith.constant 0.000000e+00 : f32
    %cst_51 = arith.constant 7.000000e+00 : f32
    %159 = vector.broadcast %cst_50 : f32 to vector<1x128xf32>
    %160 = arith.maximumf %159, %157 : vector<1x128xf32>
    %161 = vector.broadcast %cst_51 : f32 to vector<1x128xf32>
    %162 = arith.minimumf %161, %160 : vector<1x128xf32>
    %cst_52 = arith.constant 1.000000e+00 : f32
    %163 = vector.broadcast %cst_52 : f32 to vector<1x128xf32>
    %164 = arith.addf %157, %163 : vector<1x128xf32>
    %cst_53 = arith.constant 0.000000e+00 : f32
    %cst_54 = arith.constant 7.000000e+00 : f32
    %165 = vector.broadcast %cst_53 : f32 to vector<1x128xf32>
    %166 = arith.maximumf %165, %164 : vector<1x128xf32>
    %167 = vector.broadcast %cst_54 : f32 to vector<1x128xf32>
    %168 = arith.minimumf %167, %166 : vector<1x128xf32>
    %169 = vector.broadcast %22 : vector<8x1xf32> to vector<8x128xf32>
    %170 = vector.broadcast %162 : vector<1x128xf32> to vector<8x128xf32>
    %171 = arith.cmpf oeq, %169, %170 : vector<8x128xf32>
    %cst_55 = arith.constant 1.000000e+00 : f32
    %172 = vector.broadcast %cst_55 : f32 to vector<1x128xf32>
    %173 = arith.subf %172, %158 : vector<1x128xf32>
    %cst_56 = arith.constant 0.000000e+00 : f32
    %174 = vector.shape_cast %173 : vector<1x128xf32> to vector<1x128xf32>
    %175 = vector.broadcast %174 : vector<1x128xf32> to vector<8x128xf32>
    %176 = vector.broadcast %cst_56 : f32 to vector<8x128xf32>
    %177 = arith.select %171, %175, %176 : vector<8x128xi1>, vector<8x128xf32>
    %178 = vector.broadcast %22 : vector<8x1xf32> to vector<8x128xf32>
    %179 = vector.broadcast %168 : vector<1x128xf32> to vector<8x128xf32>
    %180 = arith.cmpf oeq, %178, %179 : vector<8x128xf32>
    %cst_57 = arith.constant 0.000000e+00 : f32
    %181 = vector.shape_cast %158 : vector<1x128xf32> to vector<1x128xf32>
    %182 = vector.broadcast %181 : vector<1x128xf32> to vector<8x128xf32>
    %183 = vector.broadcast %cst_57 : f32 to vector<8x128xf32>
    %184 = arith.select %180, %182, %183 : vector<8x128xi1>, vector<8x128xf32>
    %185 = arith.addf %177, %184 : vector<8x128xf32>
    %186 = vector.shape_cast %185 : vector<8x128xf32> to vector<8x1x128xf32>
    %187 = vector.shape_cast %152 : vector<8x128xf32> to vector<1x8x128xf32>
    %188 = vector.broadcast %186 : vector<8x1x128xf32> to vector<8x8x128xf32>
    %189 = vector.broadcast %187 : vector<1x8x128xf32> to vector<8x8x128xf32>
    %190 = arith.mulf %188, %189 : vector<8x8x128xf32>
    %191 = vector.shape_cast %190 : vector<8x8x128xf32> to vector<64x128xf32>
    %c256 = arith.constant 256 : index
    %c0_58 = arith.constant 0 : index
    %192 = vector.load %arg4[%c256, %c0_58] : memref<344x128xf32, #tpu.memory_space<vmem>>, vector<64x128xf32>
    tpu.vector_store %arg4[%c256, %c0_58], %191 {strides = array<i32>} : memref<344x128xf32, #tpu.memory_space<vmem>>, vector<64x128xf32>,
    %cst_59 = arith.constant 4.000000e+00 : f32
    %193 = vector.broadcast %cst_59 : f32 to vector<1x128xf32>
    %194 = arith.mulf %41, %193 : vector<1x128xf32>
    %cst_60 = arith.constant 5.000000e-01 : f32
    %195 = vector.broadcast %cst_60 : f32 to vector<1x128xf32>
    %196 = arith.subf %194, %195 : vector<1x128xf32>
    %197 = math.floor %196 : vector<1x128xf32>
    %198 = arith.subf %196, %197 : vector<1x128xf32>
    %cst_61 = arith.constant 0.000000e+00 : f32
    %cst_62 = arith.constant 3.000000e+00 : f32
    %199 = vector.broadcast %cst_61 : f32 to vector<1x128xf32>
    %200 = arith.maximumf %199, %197 : vector<1x128xf32>
    %201 = vector.broadcast %cst_62 : f32 to vector<1x128xf32>
    %202 = arith.minimumf %201, %200 : vector<1x128xf32>
    %cst_63 = arith.constant 1.000000e+00 : f32
    %203 = vector.broadcast %cst_63 : f32 to vector<1x128xf32>
    %204 = arith.addf %197, %203 : vector<1x128xf32>
    %cst_64 = arith.constant 0.000000e+00 : f32
    %cst_65 = arith.constant 3.000000e+00 : f32
    %205 = vector.broadcast %cst_64 : f32 to vector<1x128xf32>
    %206 = arith.maximumf %205, %204 : vector<1x128xf32>
    %207 = vector.broadcast %cst_65 : f32 to vector<1x128xf32>
    %208 = arith.minimumf %207, %206 : vector<1x128xf32>
    %209 = vector.broadcast %31 : vector<4x1xf32> to vector<4x128xf32>
    %210 = vector.broadcast %202 : vector<1x128xf32> to vector<4x128xf32>
    %211 = arith.cmpf oeq, %209, %210 : vector<4x128xf32>
    %cst_66 = arith.constant 1.000000e+00 : f32
    %212 = vector.broadcast %cst_66 : f32 to vector<1x128xf32>
    %213 = arith.subf %212, %198 : vector<1x128xf32>
    %cst_67 = arith.constant 0.000000e+00 : f32
    %214 = vector.shape_cast %213 : vector<1x128xf32> to vector<1x128xf32>
    %215 = vector.broadcast %214 : vector<1x128xf32> to vector<4x128xf32>
    %216 = vector.broadcast %cst_67 : f32 to vector<4x128xf32>
    %217 = arith.select %211, %215, %216 : vector<4x128xi1>, vector<4x128xf32>
    %218 = vector.broadcast %31 : vector<4x1xf32> to vector<4x128xf32>
    %219 = vector.broadcast %208 : vector<1x128xf32> to vector<4x128xf32>
    %220 = arith.cmpf oeq, %218, %219 : vector<4x128xf32>
    %cst_68 = arith.constant 0.000000e+00 : f32
    %221 = vector.shape_cast %198 : vector<1x128xf32> to vector<1x128xf32>
    %222 = vector.broadcast %221 : vector<1x128xf32> to vector<4x128xf32>
    %223 = vector.broadcast %cst_68 : f32 to vector<4x128xf32>
    %224 = arith.select %220, %222, %223 : vector<4x128xi1>, vector<4x128xf32>
    %225 = arith.addf %217, %224 : vector<4x128xf32>
    %226 = vector.broadcast %29 : vector<1x128xf32> to vector<4x128xf32>
    %227 = arith.mulf %225, %226 : vector<4x128xf32>
    %cst_69 = arith.constant 4.000000e+00 : f32
    %228 = vector.broadcast %cst_69 : f32 to vector<1x128xf32>
    %229 = arith.mulf %42, %228 : vector<1x128xf32>
    %cst_70 = arith.constant 5.000000e-01 : f32
    %230 = vector.broadcast %cst_70 : f32 to vector<1x128xf32>
    %231 = arith.subf %229, %230 : vector<1x128xf32>
    %232 = math.floor %231 : vector<1x128xf32>
    %233 = arith.subf %231, %232 : vector<1x128xf32>
    %cst_71 = arith.constant 0.000000e+00 : f32
    %cst_72 = arith.constant 3.000000e+00 : f32
    %234 = vector.broadcast %cst_71 : f32 to vector<1x128xf32>
    %235 = arith.maximumf %234, %232 : vector<1x128xf32>
    %236 = vector.broadcast %cst_72 : f32 to vector<1x128xf32>
    %237 = arith.minimumf %236, %235 : vector<1x128xf32>
    %cst_73 = arith.constant 1.000000e+00 : f32
    %238 = vector.broadcast %cst_73 : f32 to vector<1x128xf32>
    %239 = arith.addf %232, %238 : vector<1x128xf32>
    %cst_74 = arith.constant 0.000000e+00 : f32
    %cst_75 = arith.constant 3.000000e+00 : f32
    %240 = vector.broadcast %cst_74 : f32 to vector<1x128xf32>
    %241 = arith.maximumf %240, %239 : vector<1x128xf32>
    %242 = vector.broadcast %cst_75 : f32 to vector<1x128xf32>
    %243 = arith.minimumf %242, %241 : vector<1x128xf32>
    %244 = vector.broadcast %31 : vector<4x1xf32> to vector<4x128xf32>
    %245 = vector.broadcast %237 : vector<1x128xf32> to vector<4x128xf32>
    %246 = arith.cmpf oeq, %244, %245 : vector<4x128xf32>
    %cst_76 = arith.constant 1.000000e+00 : f32
    %247 = vector.broadcast %cst_76 : f32 to vector<1x128xf32>
    %248 = arith.subf %247, %233 : vector<1x128xf32>
    %cst_77 = arith.constant 0.000000e+00 : f32
    %249 = vector.shape_cast %248 : vector<1x128xf32> to vector<1x128xf32>
    %250 = vector.broadcast %249 : vector<1x128xf32> to vector<4x128xf32>
    %251 = vector.broadcast %cst_77 : f32 to vector<4x128xf32>
    %252 = arith.select %246, %250, %251 : vector<4x128xi1>, vector<4x128xf32>
    %253 = vector.broadcast %31 : vector<4x1xf32> to vector<4x128xf32>
    %254 = vector.broadcast %243 : vector<1x128xf32> to vector<4x128xf32>
    %255 = arith.cmpf oeq, %253, %254 : vector<4x128xf32>
    %cst_78 = arith.constant 0.000000e+00 : f32
    %256 = vector.shape_cast %233 : vector<1x128xf32> to vector<1x128xf32>
    %257 = vector.broadcast %256 : vector<1x128xf32> to vector<4x128xf32>
    %258 = vector.broadcast %cst_78 : f32 to vector<4x128xf32>
    %259 = arith.select %255, %257, %258 : vector<4x128xi1>, vector<4x128xf32>
    %260 = arith.addf %252, %259 : vector<4x128xf32>
    %261 = vector.shape_cast %260 : vector<4x128xf32> to vector<4x1x128xf32>
    %262 = vector.shape_cast %227 : vector<4x128xf32> to vector<1x4x128xf32>
    %263 = vector.broadcast %261 : vector<4x1x128xf32> to vector<4x4x128xf32>
    %264 = vector.broadcast %262 : vector<1x4x128xf32> to vector<4x4x128xf32>
    %265 = arith.mulf %263, %264 : vector<4x4x128xf32>
    %266 = vector.shape_cast %265 : vector<4x4x128xf32> to vector<16x128xf32>
    %c320 = arith.constant 320 : index
    %c0_79 = arith.constant 0 : index
    %267 = vector.load %arg4[%c320, %c0_79] : memref<344x128xf32, #tpu.memory_space<vmem>>, vector<16x128xf32>
    tpu.vector_store %arg4[%c320, %c0_79], %266 {strides = array<i32>} : memref<344x128xf32, #tpu.memory_space<vmem>>, vector<16x128xf32>,
    %cst_80 = arith.constant 2.000000e+00 : f32
    %268 = vector.broadcast %cst_80 : f32 to vector<1x128xf32>
    %269 = arith.mulf %41, %268 : vector<1x128xf32>
    %cst_81 = arith.constant 5.000000e-01 : f32
    %270 = vector.broadcast %cst_81 : f32 to vector<1x128xf32>
    %271 = arith.subf %269, %270 : vector<1x128xf32>
    %272 = math.floor %271 : vector<1x128xf32>
    %273 = arith.subf %271, %272 : vector<1x128xf32>
    %cst_82 = arith.constant 0.000000e+00 : f32
    %cst_83 = arith.constant 1.000000e+00 : f32
    %274 = vector.broadcast %cst_82 : f32 to vector<1x128xf32>
    %275 = arith.maximumf %274, %272 : vector<1x128xf32>
    %276 = vector.broadcast %cst_83 : f32 to vector<1x128xf32>
    %277 = arith.minimumf %276, %275 : vector<1x128xf32>
    %cst_84 = arith.constant 1.000000e+00 : f32
    %278 = vector.broadcast %cst_84 : f32 to vector<1x128xf32>
    %279 = arith.addf %272, %278 : vector<1x128xf32>
    %cst_85 = arith.constant 0.000000e+00 : f32
    %cst_86 = arith.constant 1.000000e+00 : f32
    %280 = vector.broadcast %cst_85 : f32 to vector<1x128xf32>
    %281 = arith.maximumf %280, %279 : vector<1x128xf32>
    %282 = vector.broadcast %cst_86 : f32 to vector<1x128xf32>
    %283 = arith.minimumf %282, %281 : vector<1x128xf32>
    %284 = vector.broadcast %40 : vector<2x1xf32> to vector<2x128xf32>
    %285 = vector.broadcast %277 : vector<1x128xf32> to vector<2x128xf32>
    %286 = arith.cmpf oeq, %284, %285 : vector<2x128xf32>
    %cst_87 = arith.constant 1.000000e+00 : f32
    %287 = vector.broadcast %cst_87 : f32 to vector<1x128xf32>
    %288 = arith.subf %287, %273 : vector<1x128xf32>
    %cst_88 = arith.constant 0.000000e+00 : f32
    %289 = vector.shape_cast %288 : vector<1x128xf32> to vector<1x128xf32>
    %290 = vector.broadcast %289 : vector<1x128xf32> to vector<2x128xf32>
    %291 = vector.broadcast %cst_88 : f32 to vector<2x128xf32>
    %292 = arith.select %286, %290, %291 : vector<2x128xi1>, vector<2x128xf32>
    %293 = vector.broadcast %40 : vector<2x1xf32> to vector<2x128xf32>
    %294 = vector.broadcast %283 : vector<1x128xf32> to vector<2x128xf32>
    %295 = arith.cmpf oeq, %293, %294 : vector<2x128xf32>
    %cst_89 = arith.constant 0.000000e+00 : f32
    %296 = vector.shape_cast %273 : vector<1x128xf32> to vector<1x128xf32>
    %297 = vector.broadcast %296 : vector<1x128xf32> to vector<2x128xf32>
    %298 = vector.broadcast %cst_89 : f32 to vector<2x128xf32>
    %299 = arith.select %295, %297, %298 : vector<2x128xi1>, vector<2x128xf32>
    %300 = arith.addf %292, %299 : vector<2x128xf32>
    %301 = vector.broadcast %38 : vector<1x128xf32> to vector<2x128xf32>
    %302 = arith.mulf %300, %301 : vector<2x128xf32>
    %cst_90 = arith.constant 2.000000e+00 : f32
    %303 = vector.broadcast %cst_90 : f32 to vector<1x128xf32>
    %304 = arith.mulf %42, %303 : vector<1x128xf32>
    %cst_91 = arith.constant 5.000000e-01 : f32
    %305 = vector.broadcast %cst_91 : f32 to vector<1x128xf32>
    %306 = arith.subf %304, %305 : vector<1x128xf32>
    %307 = math.floor %306 : vector<1x128xf32>
    %308 = arith.subf %306, %307 : vector<1x128xf32>
    %cst_92 = arith.constant 0.000000e+00 : f32
    %cst_93 = arith.constant 1.000000e+00 : f32
    %309 = vector.broadcast %cst_92 : f32 to vector<1x128xf32>
    %310 = arith.maximumf %309, %307 : vector<1x128xf32>
    %311 = vector.broadcast %cst_93 : f32 to vector<1x128xf32>
    %312 = arith.minimumf %311, %310 : vector<1x128xf32>
    %cst_94 = arith.constant 1.000000e+00 : f32
    %313 = vector.broadcast %cst_94 : f32 to vector<1x128xf32>
    %314 = arith.addf %307, %313 : vector<1x128xf32>
    %cst_95 = arith.constant 0.000000e+00 : f32
    %cst_96 = arith.constant 1.000000e+00 : f32
    %315 = vector.broadcast %cst_95 : f32 to vector<1x128xf32>
    %316 = arith.maximumf %315, %314 : vector<1x128xf32>
    %317 = vector.broadcast %cst_96 : f32 to vector<1x128xf32>
    %318 = arith.minimumf %317, %316 : vector<1x128xf32>
    %319 = vector.broadcast %40 : vector<2x1xf32> to vector<2x128xf32>
    %320 = vector.broadcast %312 : vector<1x128xf32> to vector<2x128xf32>
    %321 = arith.cmpf oeq, %319, %320 : vector<2x128xf32>
    %cst_97 = arith.constant 1.000000e+00 : f32
    %322 = vector.broadcast %cst_97 : f32 to vector<1x128xf32>
    %323 = arith.subf %322, %308 : vector<1x128xf32>
    %cst_98 = arith.constant 0.000000e+00 : f32
    %324 = vector.shape_cast %323 : vector<1x128xf32> to vector<1x128xf32>
    %325 = vector.broadcast %324 : vector<1x128xf32> to vector<2x128xf32>
    %326 = vector.broadcast %cst_98 : f32 to vector<2x128xf32>
    %327 = arith.select %321, %325, %326 : vector<2x128xi1>, vector<2x128xf32>
    %328 = vector.broadcast %40 : vector<2x1xf32> to vector<2x128xf32>
    %329 = vector.broadcast %318 : vector<1x128xf32> to vector<2x128xf32>
    %330 = arith.cmpf oeq, %328, %329 : vector<2x128xf32>
    %cst_99 = arith.constant 0.000000e+00 : f32
    %331 = vector.shape_cast %308 : vector<1x128xf32> to vector<1x128xf32>
    %332 = vector.broadcast %331 : vector<1x128xf32> to vector<2x128xf32>
    %333 = vector.broadcast %cst_99 : f32 to vector<2x128xf32>
    %334 = arith.select %330, %332, %333 : vector<2x128xi1>, vector<2x128xf32>
    %335 = arith.addf %327, %334 : vector<2x128xf32>
    %cst_100 = arith.constant 0.000000e+00 : f32
    %336 = vector.broadcast %cst_100 : f32 to vector<2x128xf32>
    %337 = tpu.concatenate %335, %336 in 0 : vector<2x128xf32>, vector<2x128xf32> -> vector<4x128xf32>
    %338 = vector.shape_cast %337 : vector<4x128xf32> to vector<4x1x128xf32>
    %339 = vector.shape_cast %302 : vector<2x128xf32> to vector<1x2x128xf32>
    %340 = vector.broadcast %338 : vector<4x1x128xf32> to vector<4x2x128xf32>
    %341 = vector.broadcast %339 : vector<1x2x128xf32> to vector<4x2x128xf32>
    %342 = arith.mulf %340, %341 : vector<4x2x128xf32>
    %343 = vector.shape_cast %342 : vector<4x2x128xf32> to vector<8x128xf32>
    %c336 = arith.constant 336 : index
    %c0_101 = arith.constant 0 : index
    %344 = vector.load %arg4[%c336, %c0_101] : memref<344x128xf32, #tpu.memory_space<vmem>>, vector<8x128xf32>
    tpu.vector_store %arg4[%c336, %c0_101], %343 {strides = array<i32>} : memref<344x128xf32, #tpu.memory_space<vmem>>, vector<8x128xf32>,
    %c0_102 = arith.constant 0 : index
    %c0_103 = arith.constant 0 : index
    %c0_104 = arith.constant 0 : index
    %345 = vector.load %arg2[%c0_102, %c0_103, %c0_104] : memref<3x8x344xf32, #tpu.memory_space<vmem>>, vector<1x8x344xf32>
    %346 = vector.shape_cast %345 : vector<1x8x344xf32> to vector<8x344xf32>
    %c0_105 = arith.constant 0 : index
    %c0_106 = arith.constant 0 : index
    %347 = vector.load %arg4[%c0_105, %c0_106] : memref<344x128xf32, #tpu.memory_space<vmem>>, vector<344x128xf32>
    %cst_107 = arith.constant dense<0.000000e+00> : vector<8x128xf32>
    %348 = tpu.matmul %346, %347, %cst_107 {dimension_numbers = #tpu.dot_dimension_numbers<[1], [0], [0], [1], [0, 0, 1, 1], [], []>} : vector<8x344xf32>, vector<344x128xf32>, vector<8x128xf32> -> vector<8x128xf32>
    %c0_108 = arith.constant 0 : index
    %c0_109 = arith.constant 0 : index
    %349 = vector.load %arg3[%c0_108, %c0_109] : memref<24x128xf32, #tpu.memory_space<vmem>>, vector<8x128xf32>
    tpu.vector_store %arg3[%c0_108, %c0_109], %348 {strides = array<i32>} : memref<24x128xf32, #tpu.memory_space<vmem>>, vector<8x128xf32>,
    %c2 = arith.constant 2 : index
    %c0_110 = arith.constant 0 : index
    %350 = vector.load %arg1[%c2, %c0_110] : memref<8x128xf32, #tpu.memory_space<vmem>>, vector<1x128xf32>
    %c3 = arith.constant 3 : index
    %c0_111 = arith.constant 0 : index
    %351 = vector.load %arg1[%c3, %c0_111] : memref<8x128xf32, #tpu.memory_space<vmem>>, vector<1x128xf32>
    %cst_112 = arith.constant 1.600000e+01 : f32
    %352 = vector.broadcast %cst_112 : f32 to vector<1x128xf32>
    %353 = arith.mulf %350, %352 : vector<1x128xf32>
    %cst_113 = arith.constant 5.000000e-01 : f32
    %354 = vector.broadcast %cst_113 : f32 to vector<1x128xf32>
    %355 = arith.subf %353, %354 : vector<1x128xf32>
    %356 = math.floor %355 : vector<1x128xf32>
    %357 = arith.subf %355, %356 : vector<1x128xf32>
    %cst_114 = arith.constant 0.000000e+00 : f32
    %cst_115 = arith.constant 1.500000e+01 : f32
    %358 = vector.broadcast %cst_114 : f32 to vector<1x128xf32>
    %359 = arith.maximumf %358, %356 : vector<1x128xf32>
    %360 = vector.broadcast %cst_115 : f32 to vector<1x128xf32>
    %361 = arith.minimumf %360, %359 : vector<1x128xf32>
    %cst_116 = arith.constant 1.000000e+00 : f32
    %362 = vector.broadcast %cst_116 : f32 to vector<1x128xf32>
    %363 = arith.addf %356, %362 : vector<1x128xf32>
    %cst_117 = arith.constant 0.000000e+00 : f32
    %cst_118 = arith.constant 1.500000e+01 : f32
    %364 = vector.broadcast %cst_117 : f32 to vector<1x128xf32>
    %365 = arith.maximumf %364, %363 : vector<1x128xf32>
    %366 = vector.broadcast %cst_118 : f32 to vector<1x128xf32>
    %367 = arith.minimumf %366, %365 : vector<1x128xf32>
    %368 = vector.broadcast %13 : vector<16x1xf32> to vector<16x128xf32>
    %369 = vector.broadcast %361 : vector<1x128xf32> to vector<16x128xf32>
    %370 = arith.cmpf oeq, %368, %369 : vector<16x128xf32>
    %cst_119 = arith.constant 1.000000e+00 : f32
    %371 = vector.broadcast %cst_119 : f32 to vector<1x128xf32>
    %372 = arith.subf %371, %357 : vector<1x128xf32>
    %cst_120 = arith.constant 0.000000e+00 : f32
    %373 = vector.shape_cast %372 : vector<1x128xf32> to vector<1x128xf32>
    %374 = vector.broadcast %373 : vector<1x128xf32> to vector<16x128xf32>
    %375 = vector.broadcast %cst_120 : f32 to vector<16x128xf32>
    %376 = arith.select %370, %374, %375 : vector<16x128xi1>, vector<16x128xf32>
    %377 = vector.broadcast %13 : vector<16x1xf32> to vector<16x128xf32>
    %378 = vector.broadcast %367 : vector<1x128xf32> to vector<16x128xf32>
    %379 = arith.cmpf oeq, %377, %378 : vector<16x128xf32>
    %cst_121 = arith.constant 0.000000e+00 : f32
    %380 = vector.shape_cast %357 : vector<1x128xf32> to vector<1x128xf32>
    %381 = vector.broadcast %380 : vector<1x128xf32> to vector<16x128xf32>
    %382 = vector.broadcast %cst_121 : f32 to vector<16x128xf32>
    %383 = arith.select %379, %381, %382 : vector<16x128xi1>, vector<16x128xf32>
    %384 = arith.addf %376, %383 : vector<16x128xf32>
    %385 = vector.broadcast %11 : vector<1x128xf32> to vector<16x128xf32>
    %386 = arith.mulf %384, %385 : vector<16x128xf32>
    %cst_122 = arith.constant 1.600000e+01 : f32
    %387 = vector.broadcast %cst_122 : f32 to vector<1x128xf32>
    %388 = arith.mulf %351, %387 : vector<1x128xf32>
    %cst_123 = arith.constant 5.000000e-01 : f32
    %389 = vector.broadcast %cst_123 : f32 to vector<1x128xf32>
    %390 = arith.subf %388, %389 : vector<1x128xf32>
    %391 = math.floor %390 : vector<1x128xf32>
    %392 = arith.subf %390, %391 : vector<1x128xf32>
    %cst_124 = arith.constant 0.000000e+00 : f32
    %cst_125 = arith.constant 1.500000e+01 : f32
    %393 = vector.broadcast %cst_124 : f32 to vector<1x128xf32>
    %394 = arith.maximumf %393, %391 : vector<1x128xf32>
    %395 = vector.broadcast %cst_125 : f32 to vector<1x128xf32>
    %396 = arith.minimumf %395, %394 : vector<1x128xf32>
    %cst_126 = arith.constant 1.000000e+00 : f32
    %397 = vector.broadcast %cst_126 : f32 to vector<1x128xf32>
    %398 = arith.addf %391, %397 : vector<1x128xf32>
    %cst_127 = arith.constant 0.000000e+00 : f32
    %cst_128 = arith.constant 1.500000e+01 : f32
    %399 = vector.broadcast %cst_127 : f32 to vector<1x128xf32>
    %400 = arith.maximumf %399, %398 : vector<1x128xf32>
    %401 = vector.broadcast %cst_128 : f32 to vector<1x128xf32>
    %402 = arith.minimumf %401, %400 : vector<1x128xf32>
    %403 = vector.broadcast %13 : vector<16x1xf32> to vector<16x128xf32>
    %404 = vector.broadcast %396 : vector<1x128xf32> to vector<16x128xf32>
    %405 = arith.cmpf oeq, %403, %404 : vector<16x128xf32>
    %cst_129 = arith.constant 1.000000e+00 : f32
    %406 = vector.broadcast %cst_129 : f32 to vector<1x128xf32>
    %407 = arith.subf %406, %392 : vector<1x128xf32>
    %cst_130 = arith.constant 0.000000e+00 : f32
    %408 = vector.shape_cast %407 : vector<1x128xf32> to vector<1x128xf32>
    %409 = vector.broadcast %408 : vector<1x128xf32> to vector<16x128xf32>
    %410 = vector.broadcast %cst_130 : f32 to vector<16x128xf32>
    %411 = arith.select %405, %409, %410 : vector<16x128xi1>, vector<16x128xf32>
    %412 = vector.broadcast %13 : vector<16x1xf32> to vector<16x128xf32>
    %413 = vector.broadcast %402 : vector<1x128xf32> to vector<16x128xf32>
    %414 = arith.cmpf oeq, %412, %413 : vector<16x128xf32>
    %cst_131 = arith.constant 0.000000e+00 : f32
    %415 = vector.shape_cast %392 : vector<1x128xf32> to vector<1x128xf32>
    %416 = vector.broadcast %415 : vector<1x128xf32> to vector<16x128xf32>
    %417 = vector.broadcast %cst_131 : f32 to vector<16x128xf32>
    %418 = arith.select %414, %416, %417 : vector<16x128xi1>, vector<16x128xf32>
    %419 = arith.addf %411, %418 : vector<16x128xf32>
    %420 = vector.shape_cast %419 : vector<16x128xf32> to vector<16x1x128xf32>
    %421 = vector.shape_cast %386 : vector<16x128xf32> to vector<1x16x128xf32>
    %422 = vector.broadcast %420 : vector<16x1x128xf32> to vector<16x16x128xf32>
    %423 = vector.broadcast %421 : vector<1x16x128xf32> to vector<16x16x128xf32>
    %424 = arith.mulf %422, %423 : vector<16x16x128xf32>
    %425 = vector.shape_cast %424 : vector<16x16x128xf32> to vector<256x128xf32>
    %c0_132 = arith.constant 0 : index
    %c0_133 = arith.constant 0 : index
    %426 = vector.load %arg4[%c0_132, %c0_133] : memref<344x128xf32, #tpu.memory_space<vmem>>, vector<256x128xf32>
    tpu.vector_store %arg4[%c0_132, %c0_133], %425 {strides = array<i32>} : memref<344x128xf32, #tpu.memory_space<vmem>>, vector<256x128xf32>,
    %cst_134 = arith.constant 8.000000e+00 : f32
    %427 = vector.broadcast %cst_134 : f32 to vector<1x128xf32>
    %428 = arith.mulf %350, %427 : vector<1x128xf32>
    %cst_135 = arith.constant 5.000000e-01 : f32
    %429 = vector.broadcast %cst_135 : f32 to vector<1x128xf32>
    %430 = arith.subf %428, %429 : vector<1x128xf32>
    %431 = math.floor %430 : vector<1x128xf32>
    %432 = arith.subf %430, %431 : vector<1x128xf32>
    %cst_136 = arith.constant 0.000000e+00 : f32
    %cst_137 = arith.constant 7.000000e+00 : f32
    %433 = vector.broadcast %cst_136 : f32 to vector<1x128xf32>
    %434 = arith.maximumf %433, %431 : vector<1x128xf32>
    %435 = vector.broadcast %cst_137 : f32 to vector<1x128xf32>
    %436 = arith.minimumf %435, %434 : vector<1x128xf32>
    %cst_138 = arith.constant 1.000000e+00 : f32
    %437 = vector.broadcast %cst_138 : f32 to vector<1x128xf32>
    %438 = arith.addf %431, %437 : vector<1x128xf32>
    %cst_139 = arith.constant 0.000000e+00 : f32
    %cst_140 = arith.constant 7.000000e+00 : f32
    %439 = vector.broadcast %cst_139 : f32 to vector<1x128xf32>
    %440 = arith.maximumf %439, %438 : vector<1x128xf32>
    %441 = vector.broadcast %cst_140 : f32 to vector<1x128xf32>
    %442 = arith.minimumf %441, %440 : vector<1x128xf32>
    %443 = vector.broadcast %22 : vector<8x1xf32> to vector<8x128xf32>
    %444 = vector.broadcast %436 : vector<1x128xf32> to vector<8x128xf32>
    %445 = arith.cmpf oeq, %443, %444 : vector<8x128xf32>
    %cst_141 = arith.constant 1.000000e+00 : f32
    %446 = vector.broadcast %cst_141 : f32 to vector<1x128xf32>
    %447 = arith.subf %446, %432 : vector<1x128xf32>
    %cst_142 = arith.constant 0.000000e+00 : f32
    %448 = vector.shape_cast %447 : vector<1x128xf32> to vector<1x128xf32>
    %449 = vector.broadcast %448 : vector<1x128xf32> to vector<8x128xf32>
    %450 = vector.broadcast %cst_142 : f32 to vector<8x128xf32>
    %451 = arith.select %445, %449, %450 : vector<8x128xi1>, vector<8x128xf32>
    %452 = vector.broadcast %22 : vector<8x1xf32> to vector<8x128xf32>
    %453 = vector.broadcast %442 : vector<1x128xf32> to vector<8x128xf32>
    %454 = arith.cmpf oeq, %452, %453 : vector<8x128xf32>
    %cst_143 = arith.constant 0.000000e+00 : f32
    %455 = vector.shape_cast %432 : vector<1x128xf32> to vector<1x128xf32>
    %456 = vector.broadcast %455 : vector<1x128xf32> to vector<8x128xf32>
    %457 = vector.broadcast %cst_143 : f32 to vector<8x128xf32>
    %458 = arith.select %454, %456, %457 : vector<8x128xi1>, vector<8x128xf32>
    %459 = arith.addf %451, %458 : vector<8x128xf32>
    %460 = vector.broadcast %20 : vector<1x128xf32> to vector<8x128xf32>
    %461 = arith.mulf %459, %460 : vector<8x128xf32>
    %cst_144 = arith.constant 8.000000e+00 : f32
    %462 = vector.broadcast %cst_144 : f32 to vector<1x128xf32>
    %463 = arith.mulf %351, %462 : vector<1x128xf32>
    %cst_145 = arith.constant 5.000000e-01 : f32
    %464 = vector.broadcast %cst_145 : f32 to vector<1x128xf32>
    %465 = arith.subf %463, %464 : vector<1x128xf32>
    %466 = math.floor %465 : vector<1x128xf32>
    %467 = arith.subf %465, %466 : vector<1x128xf32>
    %cst_146 = arith.constant 0.000000e+00 : f32
    %cst_147 = arith.constant 7.000000e+00 : f32
    %468 = vector.broadcast %cst_146 : f32 to vector<1x128xf32>
    %469 = arith.maximumf %468, %466 : vector<1x128xf32>
    %470 = vector.broadcast %cst_147 : f32 to vector<1x128xf32>
    %471 = arith.minimumf %470, %469 : vector<1x128xf32>
    %cst_148 = arith.constant 1.000000e+00 : f32
    %472 = vector.broadcast %cst_148 : f32 to vector<1x128xf32>
    %473 = arith.addf %466, %472 : vector<1x128xf32>
    %cst_149 = arith.constant 0.000000e+00 : f32
    %cst_150 = arith.constant 7.000000e+00 : f32
    %474 = vector.broadcast %cst_149 : f32 to vector<1x128xf32>
    %475 = arith.maximumf %474, %473 : vector<1x128xf32>
    %476 = vector.broadcast %cst_150 : f32 to vector<1x128xf32>
    %477 = arith.minimumf %476, %475 : vector<1x128xf32>
    %478 = vector.broadcast %22 : vector<8x1xf32> to vector<8x128xf32>
    %479 = vector.broadcast %471 : vector<1x128xf32> to vector<8x128xf32>
    %480 = arith.cmpf oeq, %478, %479 : vector<8x128xf32>
    %cst_151 = arith.constant 1.000000e+00 : f32
    %481 = vector.broadcast %cst_151 : f32 to vector<1x128xf32>
    %482 = arith.subf %481, %467 : vector<1x128xf32>
    %cst_152 = arith.constant 0.000000e+00 : f32
    %483 = vector.shape_cast %482 : vector<1x128xf32> to vector<1x128xf32>
    %484 = vector.broadcast %483 : vector<1x128xf32> to vector<8x128xf32>
    %485 = vector.broadcast %cst_152 : f32 to vector<8x128xf32>
    %486 = arith.select %480, %484, %485 : vector<8x128xi1>, vector<8x128xf32>
    %487 = vector.broadcast %22 : vector<8x1xf32> to vector<8x128xf32>
    %488 = vector.broadcast %477 : vector<1x128xf32> to vector<8x128xf32>
    %489 = arith.cmpf oeq, %487, %488 : vector<8x128xf32>
    %cst_153 = arith.constant 0.000000e+00 : f32
    %490 = vector.shape_cast %467 : vector<1x128xf32> to vector<1x128xf32>
    %491 = vector.broadcast %490 : vector<1x128xf32> to vector<8x128xf32>
    %492 = vector.broadcast %cst_153 : f32 to vector<8x128xf32>
    %493 = arith.select %489, %491, %492 : vector<8x128xi1>, vector<8x128xf32>
    %494 = arith.addf %486, %493 : vector<8x128xf32>
    %495 = vector.shape_cast %494 : vector<8x128xf32> to vector<8x1x128xf32>
    %496 = vector.shape_cast %461 : vector<8x128xf32> to vector<1x8x128xf32>
    %497 = vector.broadcast %495 : vector<8x1x128xf32> to vector<8x8x128xf32>
    %498 = vector.broadcast %496 : vector<1x8x128xf32> to vector<8x8x128xf32>
    %499 = arith.mulf %497, %498 : vector<8x8x128xf32>
    %500 = vector.shape_cast %499 : vector<8x8x128xf32> to vector<64x128xf32>
    %c256_154 = arith.constant 256 : index
    %c0_155 = arith.constant 0 : index
    %501 = vector.load %arg4[%c256_154, %c0_155] : memref<344x128xf32, #tpu.memory_space<vmem>>, vector<64x128xf32>
    tpu.vector_store %arg4[%c256_154, %c0_155], %500 {strides = array<i32>} : memref<344x128xf32, #tpu.memory_space<vmem>>, vector<64x128xf32>,
    %cst_156 = arith.constant 4.000000e+00 : f32
    %502 = vector.broadcast %cst_156 : f32 to vector<1x128xf32>
    %503 = arith.mulf %350, %502 : vector<1x128xf32>
    %cst_157 = arith.constant 5.000000e-01 : f32
    %504 = vector.broadcast %cst_157 : f32 to vector<1x128xf32>
    %505 = arith.subf %503, %504 : vector<1x128xf32>
    %506 = math.floor %505 : vector<1x128xf32>
    %507 = arith.subf %505, %506 : vector<1x128xf32>
    %cst_158 = arith.constant 0.000000e+00 : f32
    %cst_159 = arith.constant 3.000000e+00 : f32
    %508 = vector.broadcast %cst_158 : f32 to vector<1x128xf32>
    %509 = arith.maximumf %508, %506 : vector<1x128xf32>
    %510 = vector.broadcast %cst_159 : f32 to vector<1x128xf32>
    %511 = arith.minimumf %510, %509 : vector<1x128xf32>
    %cst_160 = arith.constant 1.000000e+00 : f32
    %512 = vector.broadcast %cst_160 : f32 to vector<1x128xf32>
    %513 = arith.addf %506, %512 : vector<1x128xf32>
    %cst_161 = arith.constant 0.000000e+00 : f32
    %cst_162 = arith.constant 3.000000e+00 : f32
    %514 = vector.broadcast %cst_161 : f32 to vector<1x128xf32>
    %515 = arith.maximumf %514, %513 : vector<1x128xf32>
    %516 = vector.broadcast %cst_162 : f32 to vector<1x128xf32>
    %517 = arith.minimumf %516, %515 : vector<1x128xf32>
    %518 = vector.broadcast %31 : vector<4x1xf32> to vector<4x128xf32>
    %519 = vector.broadcast %511 : vector<1x128xf32> to vector<4x128xf32>
    %520 = arith.cmpf oeq, %518, %519 : vector<4x128xf32>
    %cst_163 = arith.constant 1.000000e+00 : f32
    %521 = vector.broadcast %cst_163 : f32 to vector<1x128xf32>
    %522 = arith.subf %521, %507 : vector<1x128xf32>
    %cst_164 = arith.constant 0.000000e+00 : f32
    %523 = vector.shape_cast %522 : vector<1x128xf32> to vector<1x128xf32>
    %524 = vector.broadcast %523 : vector<1x128xf32> to vector<4x128xf32>
    %525 = vector.broadcast %cst_164 : f32 to vector<4x128xf32>
    %526 = arith.select %520, %524, %525 : vector<4x128xi1>, vector<4x128xf32>
    %527 = vector.broadcast %31 : vector<4x1xf32> to vector<4x128xf32>
    %528 = vector.broadcast %517 : vector<1x128xf32> to vector<4x128xf32>
    %529 = arith.cmpf oeq, %527, %528 : vector<4x128xf32>
    %cst_165 = arith.constant 0.000000e+00 : f32
    %530 = vector.shape_cast %507 : vector<1x128xf32> to vector<1x128xf32>
    %531 = vector.broadcast %530 : vector<1x128xf32> to vector<4x128xf32>
    %532 = vector.broadcast %cst_165 : f32 to vector<4x128xf32>
    %533 = arith.select %529, %531, %532 : vector<4x128xi1>, vector<4x128xf32>
    %534 = arith.addf %526, %533 : vector<4x128xf32>
    %535 = vector.broadcast %29 : vector<1x128xf32> to vector<4x128xf32>
    %536 = arith.mulf %534, %535 : vector<4x128xf32>
    %cst_166 = arith.constant 4.000000e+00 : f32
    %537 = vector.broadcast %cst_166 : f32 to vector<1x128xf32>
    %538 = arith.mulf %351, %537 : vector<1x128xf32>
    %cst_167 = arith.constant 5.000000e-01 : f32
    %539 = vector.broadcast %cst_167 : f32 to vector<1x128xf32>
    %540 = arith.subf %538, %539 : vector<1x128xf32>
    %541 = math.floor %540 : vector<1x128xf32>
    %542 = arith.subf %540, %541 : vector<1x128xf32>
    %cst_168 = arith.constant 0.000000e+00 : f32
    %cst_169 = arith.constant 3.000000e+00 : f32
    %543 = vector.broadcast %cst_168 : f32 to vector<1x128xf32>
    %544 = arith.maximumf %543, %541 : vector<1x128xf32>
    %545 = vector.broadcast %cst_169 : f32 to vector<1x128xf32>
    %546 = arith.minimumf %545, %544 : vector<1x128xf32>
    %cst_170 = arith.constant 1.000000e+00 : f32
    %547 = vector.broadcast %cst_170 : f32 to vector<1x128xf32>
    %548 = arith.addf %541, %547 : vector<1x128xf32>
    %cst_171 = arith.constant 0.000000e+00 : f32
    %cst_172 = arith.constant 3.000000e+00 : f32
    %549 = vector.broadcast %cst_171 : f32 to vector<1x128xf32>
    %550 = arith.maximumf %549, %548 : vector<1x128xf32>
    %551 = vector.broadcast %cst_172 : f32 to vector<1x128xf32>
    %552 = arith.minimumf %551, %550 : vector<1x128xf32>
    %553 = vector.broadcast %31 : vector<4x1xf32> to vector<4x128xf32>
    %554 = vector.broadcast %546 : vector<1x128xf32> to vector<4x128xf32>
    %555 = arith.cmpf oeq, %553, %554 : vector<4x128xf32>
    %cst_173 = arith.constant 1.000000e+00 : f32
    %556 = vector.broadcast %cst_173 : f32 to vector<1x128xf32>
    %557 = arith.subf %556, %542 : vector<1x128xf32>
    %cst_174 = arith.constant 0.000000e+00 : f32
    %558 = vector.shape_cast %557 : vector<1x128xf32> to vector<1x128xf32>
    %559 = vector.broadcast %558 : vector<1x128xf32> to vector<4x128xf32>
    %560 = vector.broadcast %cst_174 : f32 to vector<4x128xf32>
    %561 = arith.select %555, %559, %560 : vector<4x128xi1>, vector<4x128xf32>
    %562 = vector.broadcast %31 : vector<4x1xf32> to vector<4x128xf32>
    %563 = vector.broadcast %552 : vector<1x128xf32> to vector<4x128xf32>
    %564 = arith.cmpf oeq, %562, %563 : vector<4x128xf32>
    %cst_175 = arith.constant 0.000000e+00 : f32
    %565 = vector.shape_cast %542 : vector<1x128xf32> to vector<1x128xf32>
    %566 = vector.broadcast %565 : vector<1x128xf32> to vector<4x128xf32>
    %567 = vector.broadcast %cst_175 : f32 to vector<4x128xf32>
    %568 = arith.select %564, %566, %567 : vector<4x128xi1>, vector<4x128xf32>
    %569 = arith.addf %561, %568 : vector<4x128xf32>
    %570 = vector.shape_cast %569 : vector<4x128xf32> to vector<4x1x128xf32>
    %571 = vector.shape_cast %536 : vector<4x128xf32> to vector<1x4x128xf32>
    %572 = vector.broadcast %570 : vector<4x1x128xf32> to vector<4x4x128xf32>
    %573 = vector.broadcast %571 : vector<1x4x128xf32> to vector<4x4x128xf32>
    %574 = arith.mulf %572, %573 : vector<4x4x128xf32>
    %575 = vector.shape_cast %574 : vector<4x4x128xf32> to vector<16x128xf32>
    %c320_176 = arith.constant 320 : index
    %c0_177 = arith.constant 0 : index
    %576 = vector.load %arg4[%c320_176, %c0_177] : memref<344x128xf32, #tpu.memory_space<vmem>>, vector<16x128xf32>
    tpu.vector_store %arg4[%c320_176, %c0_177], %575 {strides = array<i32>} : memref<344x128xf32, #tpu.memory_space<vmem>>, vector<16x128xf32>,
    %cst_178 = arith.constant 2.000000e+00 : f32
    %577 = vector.broadcast %cst_178 : f32 to vector<1x128xf32>
    %578 = arith.mulf %350, %577 : vector<1x128xf32>
    %cst_179 = arith.constant 5.000000e-01 : f32
    %579 = vector.broadcast %cst_179 : f32 to vector<1x128xf32>
    %580 = arith.subf %578, %579 : vector<1x128xf32>
    %581 = math.floor %580 : vector<1x128xf32>
    %582 = arith.subf %580, %581 : vector<1x128xf32>
    %cst_180 = arith.constant 0.000000e+00 : f32
    %cst_181 = arith.constant 1.000000e+00 : f32
    %583 = vector.broadcast %cst_180 : f32 to vector<1x128xf32>
    %584 = arith.maximumf %583, %581 : vector<1x128xf32>
    %585 = vector.broadcast %cst_181 : f32 to vector<1x128xf32>
    %586 = arith.minimumf %585, %584 : vector<1x128xf32>
    %cst_182 = arith.constant 1.000000e+00 : f32
    %587 = vector.broadcast %cst_182 : f32 to vector<1x128xf32>
    %588 = arith.addf %581, %587 : vector<1x128xf32>
    %cst_183 = arith.constant 0.000000e+00 : f32
    %cst_184 = arith.constant 1.000000e+00 : f32
    %589 = vector.broadcast %cst_183 : f32 to vector<1x128xf32>
    %590 = arith.maximumf %589, %588 : vector<1x128xf32>
    %591 = vector.broadcast %cst_184 : f32 to vector<1x128xf32>
    %592 = arith.minimumf %591, %590 : vector<1x128xf32>
    %593 = vector.broadcast %40 : vector<2x1xf32> to vector<2x128xf32>
    %594 = vector.broadcast %586 : vector<1x128xf32> to vector<2x128xf32>
    %595 = arith.cmpf oeq, %593, %594 : vector<2x128xf32>
    %cst_185 = arith.constant 1.000000e+00 : f32
    %596 = vector.broadcast %cst_185 : f32 to vector<1x128xf32>
    %597 = arith.subf %596, %582 : vector<1x128xf32>
    %cst_186 = arith.constant 0.000000e+00 : f32
    %598 = vector.shape_cast %597 : vector<1x128xf32> to vector<1x128xf32>
    %599 = vector.broadcast %598 : vector<1x128xf32> to vector<2x128xf32>
    %600 = vector.broadcast %cst_186 : f32 to vector<2x128xf32>
    %601 = arith.select %595, %599, %600 : vector<2x128xi1>, vector<2x128xf32>
    %602 = vector.broadcast %40 : vector<2x1xf32> to vector<2x128xf32>
    %603 = vector.broadcast %592 : vector<1x128xf32> to vector<2x128xf32>
    %604 = arith.cmpf oeq, %602, %603 : vector<2x128xf32>
    %cst_187 = arith.constant 0.000000e+00 : f32
    %605 = vector.shape_cast %582 : vector<1x128xf32> to vector<1x128xf32>
    %606 = vector.broadcast %605 : vector<1x128xf32> to vector<2x128xf32>
    %607 = vector.broadcast %cst_187 : f32 to vector<2x128xf32>
    %608 = arith.select %604, %606, %607 : vector<2x128xi1>, vector<2x128xf32>
    %609 = arith.addf %601, %608 : vector<2x128xf32>
    %610 = vector.broadcast %38 : vector<1x128xf32> to vector<2x128xf32>
    %611 = arith.mulf %609, %610 : vector<2x128xf32>
    %cst_188 = arith.constant 2.000000e+00 : f32
    %612 = vector.broadcast %cst_188 : f32 to vector<1x128xf32>
    %613 = arith.mulf %351, %612 : vector<1x128xf32>
    %cst_189 = arith.constant 5.000000e-01 : f32
    %614 = vector.broadcast %cst_189 : f32 to vector<1x128xf32>
    %615 = arith.subf %613, %614 : vector<1x128xf32>
    %616 = math.floor %615 : vector<1x128xf32>
    %617 = arith.subf %615, %616 : vector<1x128xf32>
    %cst_190 = arith.constant 0.000000e+00 : f32
    %cst_191 = arith.constant 1.000000e+00 : f32
    %618 = vector.broadcast %cst_190 : f32 to vector<1x128xf32>
    %619 = arith.maximumf %618, %616 : vector<1x128xf32>
    %620 = vector.broadcast %cst_191 : f32 to vector<1x128xf32>
    %621 = arith.minimumf %620, %619 : vector<1x128xf32>
    %cst_192 = arith.constant 1.000000e+00 : f32
    %622 = vector.broadcast %cst_192 : f32 to vector<1x128xf32>
    %623 = arith.addf %616, %622 : vector<1x128xf32>
    %cst_193 = arith.constant 0.000000e+00 : f32
    %cst_194 = arith.constant 1.000000e+00 : f32
    %624 = vector.broadcast %cst_193 : f32 to vector<1x128xf32>
    %625 = arith.maximumf %624, %623 : vector<1x128xf32>
    %626 = vector.broadcast %cst_194 : f32 to vector<1x128xf32>
    %627 = arith.minimumf %626, %625 : vector<1x128xf32>
    %628 = vector.broadcast %40 : vector<2x1xf32> to vector<2x128xf32>
    %629 = vector.broadcast %621 : vector<1x128xf32> to vector<2x128xf32>
    %630 = arith.cmpf oeq, %628, %629 : vector<2x128xf32>
    %cst_195 = arith.constant 1.000000e+00 : f32
    %631 = vector.broadcast %cst_195 : f32 to vector<1x128xf32>
    %632 = arith.subf %631, %617 : vector<1x128xf32>
    %cst_196 = arith.constant 0.000000e+00 : f32
    %633 = vector.shape_cast %632 : vector<1x128xf32> to vector<1x128xf32>
    %634 = vector.broadcast %633 : vector<1x128xf32> to vector<2x128xf32>
    %635 = vector.broadcast %cst_196 : f32 to vector<2x128xf32>
    %636 = arith.select %630, %634, %635 : vector<2x128xi1>, vector<2x128xf32>
    %637 = vector.broadcast %40 : vector<2x1xf32> to vector<2x128xf32>
    %638 = vector.broadcast %627 : vector<1x128xf32> to vector<2x128xf32>
    %639 = arith.cmpf oeq, %637, %638 : vector<2x128xf32>
    %cst_197 = arith.constant 0.000000e+00 : f32
    %640 = vector.shape_cast %617 : vector<1x128xf32> to vector<1x128xf32>
    %641 = vector.broadcast %640 : vector<1x128xf32> to vector<2x128xf32>
    %642 = vector.broadcast %cst_197 : f32 to vector<2x128xf32>
    %643 = arith.select %639, %641, %642 : vector<2x128xi1>, vector<2x128xf32>
    %644 = arith.addf %636, %643 : vector<2x128xf32>
    %cst_198 = arith.constant 0.000000e+00 : f32
    %645 = vector.broadcast %cst_198 : f32 to vector<2x128xf32>
    %646 = tpu.concatenate %644, %645 in 0 : vector<2x128xf32>, vector<2x128xf32> -> vector<4x128xf32>
    %647 = vector.shape_cast %646 : vector<4x128xf32> to vector<4x1x128xf32>
    %648 = vector.shape_cast %611 : vector<2x128xf32> to vector<1x2x128xf32>
    %649 = vector.broadcast %647 : vector<4x1x128xf32> to vector<4x2x128xf32>
    %650 = vector.broadcast %648 : vector<1x2x128xf32> to vector<4x2x128xf32>
    %651 = arith.mulf %649, %650 : vector<4x2x128xf32>
    %652 = vector.shape_cast %651 : vector<4x2x128xf32> to vector<8x128xf32>
    %c336_199 = arith.constant 336 : index
    %c0_200 = arith.constant 0 : index
    %653 = vector.load %arg4[%c336_199, %c0_200] : memref<344x128xf32, #tpu.memory_space<vmem>>, vector<8x128xf32>
    tpu.vector_store %arg4[%c336_199, %c0_200], %652 {strides = array<i32>} : memref<344x128xf32, #tpu.memory_space<vmem>>, vector<8x128xf32>,
    %c1_201 = arith.constant 1 : index
    %c0_202 = arith.constant 0 : index
    %c0_203 = arith.constant 0 : index
    %654 = vector.load %arg2[%c1_201, %c0_202, %c0_203] : memref<3x8x344xf32, #tpu.memory_space<vmem>>, vector<1x8x344xf32>
    %655 = vector.shape_cast %654 : vector<1x8x344xf32> to vector<8x344xf32>
    %c0_204 = arith.constant 0 : index
    %c0_205 = arith.constant 0 : index
    %656 = vector.load %arg4[%c0_204, %c0_205] : memref<344x128xf32, #tpu.memory_space<vmem>>, vector<344x128xf32>
    %cst_206 = arith.constant dense<0.000000e+00> : vector<8x128xf32>
    %657 = tpu.matmul %655, %656, %cst_206 {dimension_numbers = #tpu.dot_dimension_numbers<[1], [0], [0], [1], [0, 0, 1, 1], [], []>} : vector<8x344xf32>, vector<344x128xf32>, vector<8x128xf32> -> vector<8x128xf32>
    %c8 = arith.constant 8 : index
    %c0_207 = arith.constant 0 : index
    %658 = vector.load %arg3[%c8, %c0_207] : memref<24x128xf32, #tpu.memory_space<vmem>>, vector<8x128xf32>
    tpu.vector_store %arg3[%c8, %c0_207], %657 {strides = array<i32>} : memref<24x128xf32, #tpu.memory_space<vmem>>, vector<8x128xf32>,
    %c4 = arith.constant 4 : index
    %c0_208 = arith.constant 0 : index
    %659 = vector.load %arg1[%c4, %c0_208] : memref<8x128xf32, #tpu.memory_space<vmem>>, vector<1x128xf32>
    %c5 = arith.constant 5 : index
    %c0_209 = arith.constant 0 : index
    %660 = vector.load %arg1[%c5, %c0_209] : memref<8x128xf32, #tpu.memory_space<vmem>>, vector<1x128xf32>
    %cst_210 = arith.constant 1.600000e+01 : f32
    %661 = vector.broadcast %cst_210 : f32 to vector<1x128xf32>
    %662 = arith.mulf %659, %661 : vector<1x128xf32>
    %cst_211 = arith.constant 5.000000e-01 : f32
    %663 = vector.broadcast %cst_211 : f32 to vector<1x128xf32>
    %664 = arith.subf %662, %663 : vector<1x128xf32>
    %665 = math.floor %664 : vector<1x128xf32>
    %666 = arith.subf %664, %665 : vector<1x128xf32>
    %cst_212 = arith.constant 0.000000e+00 : f32
    %cst_213 = arith.constant 1.500000e+01 : f32
    %667 = vector.broadcast %cst_212 : f32 to vector<1x128xf32>
    %668 = arith.maximumf %667, %665 : vector<1x128xf32>
    %669 = vector.broadcast %cst_213 : f32 to vector<1x128xf32>
    %670 = arith.minimumf %669, %668 : vector<1x128xf32>
    %cst_214 = arith.constant 1.000000e+00 : f32
    %671 = vector.broadcast %cst_214 : f32 to vector<1x128xf32>
    %672 = arith.addf %665, %671 : vector<1x128xf32>
    %cst_215 = arith.constant 0.000000e+00 : f32
    %cst_216 = arith.constant 1.500000e+01 : f32
    %673 = vector.broadcast %cst_215 : f32 to vector<1x128xf32>
    %674 = arith.maximumf %673, %672 : vector<1x128xf32>
    %675 = vector.broadcast %cst_216 : f32 to vector<1x128xf32>
    %676 = arith.minimumf %675, %674 : vector<1x128xf32>
    %677 = vector.broadcast %13 : vector<16x1xf32> to vector<16x128xf32>
    %678 = vector.broadcast %670 : vector<1x128xf32> to vector<16x128xf32>
    %679 = arith.cmpf oeq, %677, %678 : vector<16x128xf32>
    %cst_217 = arith.constant 1.000000e+00 : f32
    %680 = vector.broadcast %cst_217 : f32 to vector<1x128xf32>
    %681 = arith.subf %680, %666 : vector<1x128xf32>
    %cst_218 = arith.constant 0.000000e+00 : f32
    %682 = vector.shape_cast %681 : vector<1x128xf32> to vector<1x128xf32>
    %683 = vector.broadcast %682 : vector<1x128xf32> to vector<16x128xf32>
    %684 = vector.broadcast %cst_218 : f32 to vector<16x128xf32>
    %685 = arith.select %679, %683, %684 : vector<16x128xi1>, vector<16x128xf32>
    %686 = vector.broadcast %13 : vector<16x1xf32> to vector<16x128xf32>
    %687 = vector.broadcast %676 : vector<1x128xf32> to vector<16x128xf32>
    %688 = arith.cmpf oeq, %686, %687 : vector<16x128xf32>
    %cst_219 = arith.constant 0.000000e+00 : f32
    %689 = vector.shape_cast %666 : vector<1x128xf32> to vector<1x128xf32>
    %690 = vector.broadcast %689 : vector<1x128xf32> to vector<16x128xf32>
    %691 = vector.broadcast %cst_219 : f32 to vector<16x128xf32>
    %692 = arith.select %688, %690, %691 : vector<16x128xi1>, vector<16x128xf32>
    %693 = arith.addf %685, %692 : vector<16x128xf32>
    %694 = vector.broadcast %11 : vector<1x128xf32> to vector<16x128xf32>
    %695 = arith.mulf %693, %694 : vector<16x128xf32>
    %cst_220 = arith.constant 1.600000e+01 : f32
    %696 = vector.broadcast %cst_220 : f32 to vector<1x128xf32>
    %697 = arith.mulf %660, %696 : vector<1x128xf32>
    %cst_221 = arith.constant 5.000000e-01 : f32
    %698 = vector.broadcast %cst_221 : f32 to vector<1x128xf32>
    %699 = arith.subf %697, %698 : vector<1x128xf32>
    %700 = math.floor %699 : vector<1x128xf32>
    %701 = arith.subf %699, %700 : vector<1x128xf32>
    %cst_222 = arith.constant 0.000000e+00 : f32
    %cst_223 = arith.constant 1.500000e+01 : f32
    %702 = vector.broadcast %cst_222 : f32 to vector<1x128xf32>
    %703 = arith.maximumf %702, %700 : vector<1x128xf32>
    %704 = vector.broadcast %cst_223 : f32 to vector<1x128xf32>
    %705 = arith.minimumf %704, %703 : vector<1x128xf32>
    %cst_224 = arith.constant 1.000000e+00 : f32
    %706 = vector.broadcast %cst_224 : f32 to vector<1x128xf32>
    %707 = arith.addf %700, %706 : vector<1x128xf32>
    %cst_225 = arith.constant 0.000000e+00 : f32
    %cst_226 = arith.constant 1.500000e+01 : f32
    %708 = vector.broadcast %cst_225 : f32 to vector<1x128xf32>
    %709 = arith.maximumf %708, %707 : vector<1x128xf32>
    %710 = vector.broadcast %cst_226 : f32 to vector<1x128xf32>
    %711 = arith.minimumf %710, %709 : vector<1x128xf32>
    %712 = vector.broadcast %13 : vector<16x1xf32> to vector<16x128xf32>
    %713 = vector.broadcast %705 : vector<1x128xf32> to vector<16x128xf32>
    %714 = arith.cmpf oeq, %712, %713 : vector<16x128xf32>
    %cst_227 = arith.constant 1.000000e+00 : f32
    %715 = vector.broadcast %cst_227 : f32 to vector<1x128xf32>
    %716 = arith.subf %715, %701 : vector<1x128xf32>
    %cst_228 = arith.constant 0.000000e+00 : f32
    %717 = vector.shape_cast %716 : vector<1x128xf32> to vector<1x128xf32>
    %718 = vector.broadcast %717 : vector<1x128xf32> to vector<16x128xf32>
    %719 = vector.broadcast %cst_228 : f32 to vector<16x128xf32>
    %720 = arith.select %714, %718, %719 : vector<16x128xi1>, vector<16x128xf32>
    %721 = vector.broadcast %13 : vector<16x1xf32> to vector<16x128xf32>
    %722 = vector.broadcast %711 : vector<1x128xf32> to vector<16x128xf32>
    %723 = arith.cmpf oeq, %721, %722 : vector<16x128xf32>
    %cst_229 = arith.constant 0.000000e+00 : f32
    %724 = vector.shape_cast %701 : vector<1x128xf32> to vector<1x128xf32>
    %725 = vector.broadcast %724 : vector<1x128xf32> to vector<16x128xf32>
    %726 = vector.broadcast %cst_229 : f32 to vector<16x128xf32>
    %727 = arith.select %723, %725, %726 : vector<16x128xi1>, vector<16x128xf32>
    %728 = arith.addf %720, %727 : vector<16x128xf32>
    %729 = vector.shape_cast %728 : vector<16x128xf32> to vector<16x1x128xf32>
    %730 = vector.shape_cast %695 : vector<16x128xf32> to vector<1x16x128xf32>
    %731 = vector.broadcast %729 : vector<16x1x128xf32> to vector<16x16x128xf32>
    %732 = vector.broadcast %730 : vector<1x16x128xf32> to vector<16x16x128xf32>
    %733 = arith.mulf %731, %732 : vector<16x16x128xf32>
    %734 = vector.shape_cast %733 : vector<16x16x128xf32> to vector<256x128xf32>
    %c0_230 = arith.constant 0 : index
    %c0_231 = arith.constant 0 : index
    %735 = vector.load %arg4[%c0_230, %c0_231] : memref<344x128xf32, #tpu.memory_space<vmem>>, vector<256x128xf32>
    tpu.vector_store %arg4[%c0_230, %c0_231], %734 {strides = array<i32>} : memref<344x128xf32, #tpu.memory_space<vmem>>, vector<256x128xf32>,
    %cst_232 = arith.constant 8.000000e+00 : f32
    %736 = vector.broadcast %cst_232 : f32 to vector<1x128xf32>
    %737 = arith.mulf %659, %736 : vector<1x128xf32>
    %cst_233 = arith.constant 5.000000e-01 : f32
    %738 = vector.broadcast %cst_233 : f32 to vector<1x128xf32>
    %739 = arith.subf %737, %738 : vector<1x128xf32>
    %740 = math.floor %739 : vector<1x128xf32>
    %741 = arith.subf %739, %740 : vector<1x128xf32>
    %cst_234 = arith.constant 0.000000e+00 : f32
    %cst_235 = arith.constant 7.000000e+00 : f32
    %742 = vector.broadcast %cst_234 : f32 to vector<1x128xf32>
    %743 = arith.maximumf %742, %740 : vector<1x128xf32>
    %744 = vector.broadcast %cst_235 : f32 to vector<1x128xf32>
    %745 = arith.minimumf %744, %743 : vector<1x128xf32>
    %cst_236 = arith.constant 1.000000e+00 : f32
    %746 = vector.broadcast %cst_236 : f32 to vector<1x128xf32>
    %747 = arith.addf %740, %746 : vector<1x128xf32>
    %cst_237 = arith.constant 0.000000e+00 : f32
    %cst_238 = arith.constant 7.000000e+00 : f32
    %748 = vector.broadcast %cst_237 : f32 to vector<1x128xf32>
    %749 = arith.maximumf %748, %747 : vector<1x128xf32>
    %750 = vector.broadcast %cst_238 : f32 to vector<1x128xf32>
    %751 = arith.minimumf %750, %749 : vector<1x128xf32>
    %752 = vector.broadcast %22 : vector<8x1xf32> to vector<8x128xf32>
    %753 = vector.broadcast %745 : vector<1x128xf32> to vector<8x128xf32>
    %754 = arith.cmpf oeq, %752, %753 : vector<8x128xf32>
    %cst_239 = arith.constant 1.000000e+00 : f32
    %755 = vector.broadcast %cst_239 : f32 to vector<1x128xf32>
    %756 = arith.subf %755, %741 : vector<1x128xf32>
    %cst_240 = arith.constant 0.000000e+00 : f32
    %757 = vector.shape_cast %756 : vector<1x128xf32> to vector<1x128xf32>
    %758 = vector.broadcast %757 : vector<1x128xf32> to vector<8x128xf32>
    %759 = vector.broadcast %cst_240 : f32 to vector<8x128xf32>
    %760 = arith.select %754, %758, %759 : vector<8x128xi1>, vector<8x128xf32>
    %761 = vector.broadcast %22 : vector<8x1xf32> to vector<8x128xf32>
    %762 = vector.broadcast %751 : vector<1x128xf32> to vector<8x128xf32>
    %763 = arith.cmpf oeq, %761, %762 : vector<8x128xf32>
    %cst_241 = arith.constant 0.000000e+00 : f32
    %764 = vector.shape_cast %741 : vector<1x128xf32> to vector<1x128xf32>
    %765 = vector.broadcast %764 : vector<1x128xf32> to vector<8x128xf32>
    %766 = vector.broadcast %cst_241 : f32 to vector<8x128xf32>
    %767 = arith.select %763, %765, %766 : vector<8x128xi1>, vector<8x128xf32>
    %768 = arith.addf %760, %767 : vector<8x128xf32>
    %769 = vector.broadcast %20 : vector<1x128xf32> to vector<8x128xf32>
    %770 = arith.mulf %768, %769 : vector<8x128xf32>
    %cst_242 = arith.constant 8.000000e+00 : f32
    %771 = vector.broadcast %cst_242 : f32 to vector<1x128xf32>
    %772 = arith.mulf %660, %771 : vector<1x128xf32>
    %cst_243 = arith.constant 5.000000e-01 : f32
    %773 = vector.broadcast %cst_243 : f32 to vector<1x128xf32>
    %774 = arith.subf %772, %773 : vector<1x128xf32>
    %775 = math.floor %774 : vector<1x128xf32>
    %776 = arith.subf %774, %775 : vector<1x128xf32>
    %cst_244 = arith.constant 0.000000e+00 : f32
    %cst_245 = arith.constant 7.000000e+00 : f32
    %777 = vector.broadcast %cst_244 : f32 to vector<1x128xf32>
    %778 = arith.maximumf %777, %775 : vector<1x128xf32>
    %779 = vector.broadcast %cst_245 : f32 to vector<1x128xf32>
    %780 = arith.minimumf %779, %778 : vector<1x128xf32>
    %cst_246 = arith.constant 1.000000e+00 : f32
    %781 = vector.broadcast %cst_246 : f32 to vector<1x128xf32>
    %782 = arith.addf %775, %781 : vector<1x128xf32>
    %cst_247 = arith.constant 0.000000e+00 : f32
    %cst_248 = arith.constant 7.000000e+00 : f32
    %783 = vector.broadcast %cst_247 : f32 to vector<1x128xf32>
    %784 = arith.maximumf %783, %782 : vector<1x128xf32>
    %785 = vector.broadcast %cst_248 : f32 to vector<1x128xf32>
    %786 = arith.minimumf %785, %784 : vector<1x128xf32>
    %787 = vector.broadcast %22 : vector<8x1xf32> to vector<8x128xf32>
    %788 = vector.broadcast %780 : vector<1x128xf32> to vector<8x128xf32>
    %789 = arith.cmpf oeq, %787, %788 : vector<8x128xf32>
    %cst_249 = arith.constant 1.000000e+00 : f32
    %790 = vector.broadcast %cst_249 : f32 to vector<1x128xf32>
    %791 = arith.subf %790, %776 : vector<1x128xf32>
    %cst_250 = arith.constant 0.000000e+00 : f32
    %792 = vector.shape_cast %791 : vector<1x128xf32> to vector<1x128xf32>
    %793 = vector.broadcast %792 : vector<1x128xf32> to vector<8x128xf32>
    %794 = vector.broadcast %cst_250 : f32 to vector<8x128xf32>
    %795 = arith.select %789, %793, %794 : vector<8x128xi1>, vector<8x128xf32>
    %796 = vector.broadcast %22 : vector<8x1xf32> to vector<8x128xf32>
    %797 = vector.broadcast %786 : vector<1x128xf32> to vector<8x128xf32>
    %798 = arith.cmpf oeq, %796, %797 : vector<8x128xf32>
    %cst_251 = arith.constant 0.000000e+00 : f32
    %799 = vector.shape_cast %776 : vector<1x128xf32> to vector<1x128xf32>
    %800 = vector.broadcast %799 : vector<1x128xf32> to vector<8x128xf32>
    %801 = vector.broadcast %cst_251 : f32 to vector<8x128xf32>
    %802 = arith.select %798, %800, %801 : vector<8x128xi1>, vector<8x128xf32>
    %803 = arith.addf %795, %802 : vector<8x128xf32>
    %804 = vector.shape_cast %803 : vector<8x128xf32> to vector<8x1x128xf32>
    %805 = vector.shape_cast %770 : vector<8x128xf32> to vector<1x8x128xf32>
    %806 = vector.broadcast %804 : vector<8x1x128xf32> to vector<8x8x128xf32>
    %807 = vector.broadcast %805 : vector<1x8x128xf32> to vector<8x8x128xf32>
    %808 = arith.mulf %806, %807 : vector<8x8x128xf32>
    %809 = vector.shape_cast %808 : vector<8x8x128xf32> to vector<64x128xf32>
    %c256_252 = arith.constant 256 : index
    %c0_253 = arith.constant 0 : index
    %810 = vector.load %arg4[%c256_252, %c0_253] : memref<344x128xf32, #tpu.memory_space<vmem>>, vector<64x128xf32>
    tpu.vector_store %arg4[%c256_252, %c0_253], %809 {strides = array<i32>} : memref<344x128xf32, #tpu.memory_space<vmem>>, vector<64x128xf32>,
    %cst_254 = arith.constant 4.000000e+00 : f32
    %811 = vector.broadcast %cst_254 : f32 to vector<1x128xf32>
    %812 = arith.mulf %659, %811 : vector<1x128xf32>
    %cst_255 = arith.constant 5.000000e-01 : f32
    %813 = vector.broadcast %cst_255 : f32 to vector<1x128xf32>
    %814 = arith.subf %812, %813 : vector<1x128xf32>
    %815 = math.floor %814 : vector<1x128xf32>
    %816 = arith.subf %814, %815 : vector<1x128xf32>
    %cst_256 = arith.constant 0.000000e+00 : f32
    %cst_257 = arith.constant 3.000000e+00 : f32
    %817 = vector.broadcast %cst_256 : f32 to vector<1x128xf32>
    %818 = arith.maximumf %817, %815 : vector<1x128xf32>
    %819 = vector.broadcast %cst_257 : f32 to vector<1x128xf32>
    %820 = arith.minimumf %819, %818 : vector<1x128xf32>
    %cst_258 = arith.constant 1.000000e+00 : f32
    %821 = vector.broadcast %cst_258 : f32 to vector<1x128xf32>
    %822 = arith.addf %815, %821 : vector<1x128xf32>
    %cst_259 = arith.constant 0.000000e+00 : f32
    %cst_260 = arith.constant 3.000000e+00 : f32
    %823 = vector.broadcast %cst_259 : f32 to vector<1x128xf32>
    %824 = arith.maximumf %823, %822 : vector<1x128xf32>
    %825 = vector.broadcast %cst_260 : f32 to vector<1x128xf32>
    %826 = arith.minimumf %825, %824 : vector<1x128xf32>
    %827 = vector.broadcast %31 : vector<4x1xf32> to vector<4x128xf32>
    %828 = vector.broadcast %820 : vector<1x128xf32> to vector<4x128xf32>
    %829 = arith.cmpf oeq, %827, %828 : vector<4x128xf32>
    %cst_261 = arith.constant 1.000000e+00 : f32
    %830 = vector.broadcast %cst_261 : f32 to vector<1x128xf32>
    %831 = arith.subf %830, %816 : vector<1x128xf32>
    %cst_262 = arith.constant 0.000000e+00 : f32
    %832 = vector.shape_cast %831 : vector<1x128xf32> to vector<1x128xf32>
    %833 = vector.broadcast %832 : vector<1x128xf32> to vector<4x128xf32>
    %834 = vector.broadcast %cst_262 : f32 to vector<4x128xf32>
    %835 = arith.select %829, %833, %834 : vector<4x128xi1>, vector<4x128xf32>
    %836 = vector.broadcast %31 : vector<4x1xf32> to vector<4x128xf32>
    %837 = vector.broadcast %826 : vector<1x128xf32> to vector<4x128xf32>
    %838 = arith.cmpf oeq, %836, %837 : vector<4x128xf32>
    %cst_263 = arith.constant 0.000000e+00 : f32
    %839 = vector.shape_cast %816 : vector<1x128xf32> to vector<1x128xf32>
    %840 = vector.broadcast %839 : vector<1x128xf32> to vector<4x128xf32>
    %841 = vector.broadcast %cst_263 : f32 to vector<4x128xf32>
    %842 = arith.select %838, %840, %841 : vector<4x128xi1>, vector<4x128xf32>
    %843 = arith.addf %835, %842 : vector<4x128xf32>
    %844 = vector.broadcast %29 : vector<1x128xf32> to vector<4x128xf32>
    %845 = arith.mulf %843, %844 : vector<4x128xf32>
    %cst_264 = arith.constant 4.000000e+00 : f32
    %846 = vector.broadcast %cst_264 : f32 to vector<1x128xf32>
    %847 = arith.mulf %660, %846 : vector<1x128xf32>
    %cst_265 = arith.constant 5.000000e-01 : f32
    %848 = vector.broadcast %cst_265 : f32 to vector<1x128xf32>
    %849 = arith.subf %847, %848 : vector<1x128xf32>
    %850 = math.floor %849 : vector<1x128xf32>
    %851 = arith.subf %849, %850 : vector<1x128xf32>
    %cst_266 = arith.constant 0.000000e+00 : f32
    %cst_267 = arith.constant 3.000000e+00 : f32
    %852 = vector.broadcast %cst_266 : f32 to vector<1x128xf32>
    %853 = arith.maximumf %852, %850 : vector<1x128xf32>
    %854 = vector.broadcast %cst_267 : f32 to vector<1x128xf32>
    %855 = arith.minimumf %854, %853 : vector<1x128xf32>
    %cst_268 = arith.constant 1.000000e+00 : f32
    %856 = vector.broadcast %cst_268 : f32 to vector<1x128xf32>
    %857 = arith.addf %850, %856 : vector<1x128xf32>
    %cst_269 = arith.constant 0.000000e+00 : f32
    %cst_270 = arith.constant 3.000000e+00 : f32
    %858 = vector.broadcast %cst_269 : f32 to vector<1x128xf32>
    %859 = arith.maximumf %858, %857 : vector<1x128xf32>
    %860 = vector.broadcast %cst_270 : f32 to vector<1x128xf32>
    %861 = arith.minimumf %860, %859 : vector<1x128xf32>
    %862 = vector.broadcast %31 : vector<4x1xf32> to vector<4x128xf32>
    %863 = vector.broadcast %855 : vector<1x128xf32> to vector<4x128xf32>
    %864 = arith.cmpf oeq, %862, %863 : vector<4x128xf32>
    %cst_271 = arith.constant 1.000000e+00 : f32
    %865 = vector.broadcast %cst_271 : f32 to vector<1x128xf32>
    %866 = arith.subf %865, %851 : vector<1x128xf32>
    %cst_272 = arith.constant 0.000000e+00 : f32
    %867 = vector.shape_cast %866 : vector<1x128xf32> to vector<1x128xf32>
    %868 = vector.broadcast %867 : vector<1x128xf32> to vector<4x128xf32>
    %869 = vector.broadcast %cst_272 : f32 to vector<4x128xf32>
    %870 = arith.select %864, %868, %869 : vector<4x128xi1>, vector<4x128xf32>
    %871 = vector.broadcast %31 : vector<4x1xf32> to vector<4x128xf32>
    %872 = vector.broadcast %861 : vector<1x128xf32> to vector<4x128xf32>
    %873 = arith.cmpf oeq, %871, %872 : vector<4x128xf32>
    %cst_273 = arith.constant 0.000000e+00 : f32
    %874 = vector.shape_cast %851 : vector<1x128xf32> to vector<1x128xf32>
    %875 = vector.broadcast %874 : vector<1x128xf32> to vector<4x128xf32>
    %876 = vector.broadcast %cst_273 : f32 to vector<4x128xf32>
    %877 = arith.select %873, %875, %876 : vector<4x128xi1>, vector<4x128xf32>
    %878 = arith.addf %870, %877 : vector<4x128xf32>
    %879 = vector.shape_cast %878 : vector<4x128xf32> to vector<4x1x128xf32>
    %880 = vector.shape_cast %845 : vector<4x128xf32> to vector<1x4x128xf32>
    %881 = vector.broadcast %879 : vector<4x1x128xf32> to vector<4x4x128xf32>
    %882 = vector.broadcast %880 : vector<1x4x128xf32> to vector<4x4x128xf32>
    %883 = arith.mulf %881, %882 : vector<4x4x128xf32>
    %884 = vector.shape_cast %883 : vector<4x4x128xf32> to vector<16x128xf32>
    %c320_274 = arith.constant 320 : index
    %c0_275 = arith.constant 0 : index
    %885 = vector.load %arg4[%c320_274, %c0_275] : memref<344x128xf32, #tpu.memory_space<vmem>>, vector<16x128xf32>
    tpu.vector_store %arg4[%c320_274, %c0_275], %884 {strides = array<i32>} : memref<344x128xf32, #tpu.memory_space<vmem>>, vector<16x128xf32>,
    %cst_276 = arith.constant 2.000000e+00 : f32
    %886 = vector.broadcast %cst_276 : f32 to vector<1x128xf32>
    %887 = arith.mulf %659, %886 : vector<1x128xf32>
    %cst_277 = arith.constant 5.000000e-01 : f32
    %888 = vector.broadcast %cst_277 : f32 to vector<1x128xf32>
    %889 = arith.subf %887, %888 : vector<1x128xf32>
    %890 = math.floor %889 : vector<1x128xf32>
    %891 = arith.subf %889, %890 : vector<1x128xf32>
    %cst_278 = arith.constant 0.000000e+00 : f32
    %cst_279 = arith.constant 1.000000e+00 : f32
    %892 = vector.broadcast %cst_278 : f32 to vector<1x128xf32>
    %893 = arith.maximumf %892, %890 : vector<1x128xf32>
    %894 = vector.broadcast %cst_279 : f32 to vector<1x128xf32>
    %895 = arith.minimumf %894, %893 : vector<1x128xf32>
    %cst_280 = arith.constant 1.000000e+00 : f32
    %896 = vector.broadcast %cst_280 : f32 to vector<1x128xf32>
    %897 = arith.addf %890, %896 : vector<1x128xf32>
    %cst_281 = arith.constant 0.000000e+00 : f32
    %cst_282 = arith.constant 1.000000e+00 : f32
    %898 = vector.broadcast %cst_281 : f32 to vector<1x128xf32>
    %899 = arith.maximumf %898, %897 : vector<1x128xf32>
    %900 = vector.broadcast %cst_282 : f32 to vector<1x128xf32>
    %901 = arith.minimumf %900, %899 : vector<1x128xf32>
    %902 = vector.broadcast %40 : vector<2x1xf32> to vector<2x128xf32>
    %903 = vector.broadcast %895 : vector<1x128xf32> to vector<2x128xf32>
    %904 = arith.cmpf oeq, %902, %903 : vector<2x128xf32>
    %cst_283 = arith.constant 1.000000e+00 : f32
    %905 = vector.broadcast %cst_283 : f32 to vector<1x128xf32>
    %906 = arith.subf %905, %891 : vector<1x128xf32>
    %cst_284 = arith.constant 0.000000e+00 : f32
    %907 = vector.shape_cast %906 : vector<1x128xf32> to vector<1x128xf32>
    %908 = vector.broadcast %907 : vector<1x128xf32> to vector<2x128xf32>
    %909 = vector.broadcast %cst_284 : f32 to vector<2x128xf32>
    %910 = arith.select %904, %908, %909 : vector<2x128xi1>, vector<2x128xf32>
    %911 = vector.broadcast %40 : vector<2x1xf32> to vector<2x128xf32>
    %912 = vector.broadcast %901 : vector<1x128xf32> to vector<2x128xf32>
    %913 = arith.cmpf oeq, %911, %912 : vector<2x128xf32>
    %cst_285 = arith.constant 0.000000e+00 : f32
    %914 = vector.shape_cast %891 : vector<1x128xf32> to vector<1x128xf32>
    %915 = vector.broadcast %914 : vector<1x128xf32> to vector<2x128xf32>
    %916 = vector.broadcast %cst_285 : f32 to vector<2x128xf32>
    %917 = arith.select %913, %915, %916 : vector<2x128xi1>, vector<2x128xf32>
    %918 = arith.addf %910, %917 : vector<2x128xf32>
    %919 = vector.broadcast %38 : vector<1x128xf32> to vector<2x128xf32>
    %920 = arith.mulf %918, %919 : vector<2x128xf32>
    %cst_286 = arith.constant 2.000000e+00 : f32
    %921 = vector.broadcast %cst_286 : f32 to vector<1x128xf32>
    %922 = arith.mulf %660, %921 : vector<1x128xf32>
    %cst_287 = arith.constant 5.000000e-01 : f32
    %923 = vector.broadcast %cst_287 : f32 to vector<1x128xf32>
    %924 = arith.subf %922, %923 : vector<1x128xf32>
    %925 = math.floor %924 : vector<1x128xf32>
    %926 = arith.subf %924, %925 : vector<1x128xf32>
    %cst_288 = arith.constant 0.000000e+00 : f32
    %cst_289 = arith.constant 1.000000e+00 : f32
    %927 = vector.broadcast %cst_288 : f32 to vector<1x128xf32>
    %928 = arith.maximumf %927, %925 : vector<1x128xf32>
    %929 = vector.broadcast %cst_289 : f32 to vector<1x128xf32>
    %930 = arith.minimumf %929, %928 : vector<1x128xf32>
    %cst_290 = arith.constant 1.000000e+00 : f32
    %931 = vector.broadcast %cst_290 : f32 to vector<1x128xf32>
    %932 = arith.addf %925, %931 : vector<1x128xf32>
    %cst_291 = arith.constant 0.000000e+00 : f32
    %cst_292 = arith.constant 1.000000e+00 : f32
    %933 = vector.broadcast %cst_291 : f32 to vector<1x128xf32>
    %934 = arith.maximumf %933, %932 : vector<1x128xf32>
    %935 = vector.broadcast %cst_292 : f32 to vector<1x128xf32>
    %936 = arith.minimumf %935, %934 : vector<1x128xf32>
    %937 = vector.broadcast %40 : vector<2x1xf32> to vector<2x128xf32>
    %938 = vector.broadcast %930 : vector<1x128xf32> to vector<2x128xf32>
    %939 = arith.cmpf oeq, %937, %938 : vector<2x128xf32>
    %cst_293 = arith.constant 1.000000e+00 : f32
    %940 = vector.broadcast %cst_293 : f32 to vector<1x128xf32>
    %941 = arith.subf %940, %926 : vector<1x128xf32>
    %cst_294 = arith.constant 0.000000e+00 : f32
    %942 = vector.shape_cast %941 : vector<1x128xf32> to vector<1x128xf32>
    %943 = vector.broadcast %942 : vector<1x128xf32> to vector<2x128xf32>
    %944 = vector.broadcast %cst_294 : f32 to vector<2x128xf32>
    %945 = arith.select %939, %943, %944 : vector<2x128xi1>, vector<2x128xf32>
    %946 = vector.broadcast %40 : vector<2x1xf32> to vector<2x128xf32>
    %947 = vector.broadcast %936 : vector<1x128xf32> to vector<2x128xf32>
    %948 = arith.cmpf oeq, %946, %947 : vector<2x128xf32>
    %cst_295 = arith.constant 0.000000e+00 : f32
    %949 = vector.shape_cast %926 : vector<1x128xf32> to vector<1x128xf32>
    %950 = vector.broadcast %949 : vector<1x128xf32> to vector<2x128xf32>
    %951 = vector.broadcast %cst_295 : f32 to vector<2x128xf32>
    %952 = arith.select %948, %950, %951 : vector<2x128xi1>, vector<2x128xf32>
    %953 = arith.addf %945, %952 : vector<2x128xf32>
    %cst_296 = arith.constant 0.000000e+00 : f32
    %954 = vector.broadcast %cst_296 : f32 to vector<2x128xf32>
    %955 = tpu.concatenate %953, %954 in 0 : vector<2x128xf32>, vector<2x128xf32> -> vector<4x128xf32>
    %956 = vector.shape_cast %955 : vector<4x128xf32> to vector<4x1x128xf32>
    %957 = vector.shape_cast %920 : vector<2x128xf32> to vector<1x2x128xf32>
    %958 = vector.broadcast %956 : vector<4x1x128xf32> to vector<4x2x128xf32>
    %959 = vector.broadcast %957 : vector<1x2x128xf32> to vector<4x2x128xf32>
    %960 = arith.mulf %958, %959 : vector<4x2x128xf32>
    %961 = vector.shape_cast %960 : vector<4x2x128xf32> to vector<8x128xf32>
    %c336_297 = arith.constant 336 : index
    %c0_298 = arith.constant 0 : index
    %962 = vector.load %arg4[%c336_297, %c0_298] : memref<344x128xf32, #tpu.memory_space<vmem>>, vector<8x128xf32>
    tpu.vector_store %arg4[%c336_297, %c0_298], %961 {strides = array<i32>} : memref<344x128xf32, #tpu.memory_space<vmem>>, vector<8x128xf32>,
    %c2_299 = arith.constant 2 : index
    %c0_300 = arith.constant 0 : index
    %c0_301 = arith.constant 0 : index
    %963 = vector.load %arg2[%c2_299, %c0_300, %c0_301] : memref<3x8x344xf32, #tpu.memory_space<vmem>>, vector<1x8x344xf32>
    %964 = vector.shape_cast %963 : vector<1x8x344xf32> to vector<8x344xf32>
    %c0_302 = arith.constant 0 : index
    %c0_303 = arith.constant 0 : index
    %965 = vector.load %arg4[%c0_302, %c0_303] : memref<344x128xf32, #tpu.memory_space<vmem>>, vector<344x128xf32>
    %cst_304 = arith.constant dense<0.000000e+00> : vector<8x128xf32>
    %966 = tpu.matmul %964, %965, %cst_304 {dimension_numbers = #tpu.dot_dimension_numbers<[1], [0], [0], [1], [0, 0, 1, 1], [], []>} : vector<8x344xf32>, vector<344x128xf32>, vector<8x128xf32> -> vector<8x128xf32>
    %c16 = arith.constant 16 : index
    %c0_305 = arith.constant 0 : index
    %967 = vector.load %arg3[%c16, %c0_305] : memref<24x128xf32, #tpu.memory_space<vmem>>, vector<8x128xf32>
    tpu.vector_store %arg3[%c16, %c0_305], %966 {strides = array<i32>} : memref<24x128xf32, #tpu.memory_space<vmem>>, vector<8x128xf32>,
    return
  }
  func.func @transform_0(%arg0: i32) -> (i32, i32) {
    %c0_i32 = arith.constant 0 : i32
    %c0_i32_0 = arith.constant 0 : i32
    return %c0_i32, %arg0 : i32, i32
  }
  func.func @transform_1(%arg0: i32) -> (i32, i32, i32) {
    %c0_i32 = arith.constant 0 : i32
    %c0_i32_0 = arith.constant 0 : i32
    %c0_i32_1 = arith.constant 0 : i32
    %c0_i32_2 = arith.constant 0 : i32
    return %c0_i32, %c0_i32_0, %c0_i32_1 : i32, i32, i32
  }
  func.func @transform_2(%arg0: i32) -> (i32, i32) {
    %c0_i32 = arith.constant 0 : i32
    %c0_i32_0 = arith.constant 0 : i32
    return %c0_i32, %arg0 : i32, i32
  }
}

</mosaic_0001>

<llo_original>
// kernel: tpu_custom_call.1
$region0: #{tpu_custom_call.1}
  #allocation0 [shape = 'u32[]', space=smem, size = 0x4, offset = 0x4, fixed_abs, tag = 'smem constant byte address 0x4 - core index']
  #allocation1 [shape = 'u32[144,128]{1,0:T(1,128)}', space=vmem, size = 0x12000, scoped, tag = 'internal scratch']
  #allocation2 [shape = 'f32[344,128]{1,0:T(8,128)}', space=vmem, size = 0x2b000, scoped, tag = 'scratch operand']
  %s0 = inlined_call_operand.hbm [shape: f32[8,128], index: 0, kind: input, shape index: {}]
  %s1 = inlined_call_operand.hbm [shape: f32[3,8,344], index: 1, kind: input, shape index: {}]
  %s2 = inlined_call_operand.hbm [shape: f32[24,128], index: 2, kind: output, shape index: {}]
  %s3 = sld [smem:[#allocation0]]
  $region26: #{tpu_custom_call.1} parent=0
    _
  %s5 = ssub.s32 1, %s3
  %s6 = scalar_select 0, %s5, %s3
  $region1: #{tpu_custom_call.1} parent=0
    #allocation3 [shape = 'u8[4096]{0}', space=vmem, size = 0x1000, scoped, tag = 'input window, operand 0, single buffered']
    #allocation4 [shape = 's32[1]{0}', space=sflag, size = 0x4, scoped, tag = 'scoped memory for tpu_custom_call.1']
    #allocation5 [shape = 's32[1]{0}', space=sflag, size = 0x4, scoped, tag = 'scoped memory for tpu_custom_call.1']
    #allocation6 [shape = 'u8[36864]{0}', space=vmem, size = 0x9000, scoped, tag = 'input window, operand 1, single buffered']
    #allocation7 [shape = 's32[1]{0}', space=sflag, size = 0x4, scoped, tag = 'scoped memory for tpu_custom_call.1']
    #allocation8 [shape = 'u8[12288]{0}', space=vmem, size = 0x3000, scoped, tag = 'output window, operand 0, single buffered']
    %7 = vsyncpa [#allocation4], 0
    %8 = vsyncpa [#allocation7], 0
    %9 = vsyncpa [#allocation5], 0
    // Predicated region
    $region2: #{tpu_custom_call.1} parent=1 // pred_check
      _
    $region3: #{tpu_custom_call.1} parent=1 // pred_check_branch
      %11 = sbr.rel (0) target = $region5
    $region4: #{tpu_custom_call.1} parent=1 // pred_region
      %s13 = ssub.s32 128, 128
      %14 = vsyncadd [#allocation4], %s13
      %s16 = sshll.u32 [#allocation3], 4
      %s17 = int_to_ptr.vmem [resolvable:$true] %s16
      %19 = dma.hbm_to_vmem [thread:$0]  %s0, 128, %s17, [#allocation4]
    $region5: #{tpu_custom_call.1} parent=1 // pred_fallthru
      _
    // Predicated region
    $region6: #{tpu_custom_call.1} parent=1 // pred_check
      _
    $region7: #{tpu_custom_call.1} parent=1 // pred_check_branch
      %21 = sbr.rel (0) target = $region9
    $region8: #{tpu_custom_call.1} parent=1 // pred_region
      %s23 = ssub.s32 1152, 1152
      %24 = vsyncadd [#allocation7], %s23
      %s25 = sshll.u32 [#allocation6], 4
      %s26 = int_to_ptr.vmem [resolvable:$true] %s25
      %31 = dma.hbm_to_vmem [thread:$0]  %s1, 1152, %s26, [#allocation7], 384, 384, 24
    $region9: #{tpu_custom_call.1} parent=1 // pred_fallthru
      _
    // Predicated region
    $region10: #{tpu_custom_call.1} parent=1 // pred_check
      _
    $region11: #{tpu_custom_call.1} parent=1 // pred_check_branch
      %33 = sbr.rel (0) target = $region13
    $region12: #{tpu_custom_call.1} parent=1 // pred_region
      %34 = dma.done [#allocation4], 128
    $region13: #{tpu_custom_call.1} parent=1 // pred_fallthru
      _
    // Predicated region
    $region14: #{tpu_custom_call.1} parent=1 // pred_check
      _
    $region15: #{tpu_custom_call.1} parent=1 // pred_check_branch
      %36 = sbr.rel (0) target = $region17
    $region16: #{tpu_custom_call.1} parent=1 // pred_region
      %37 = dma.done [#allocation7], 1152
    $region17: #{tpu_custom_call.1} parent=1 // pred_fallthru
      _
    %v38 = vld [vmem:[#allocation3 + $0x6] sm:$0x1]
    %v39 = vmax.f32 %v38, 0.0
    %v40 = vmin.f32 %v39, 3.0
    %v41 = vand.u32 2147483647, %v40
    %v42 = vsub.f32 1.0, %v41
    %v43 = vmax.f32 %v42, 0.0
    %v44 = vlaneseq
    %v45 = vshrl.u32 %v44, 7
    %v46 = vadd.s32 %v45, 8
    %v47 = vcvt.s32.f32 %v45
    %v48 = vcvt.s32.f32 %v46
    %v49 = vsub.f32 %v40, 1.0
    %v50 = vand.u32 2147483647, %v49
    %v51 = vsub.f32 1.0, %v50
    %v52 = vmax.f32 %v51, 0.0
    %v53 = vsub.f32 %v40, 2.0
    %v54 = vand.u32 2147483647, %v53
    %v55 = vsub.f32 1.0, %v54
    %v56 = vmax.f32 %v55, 0.0
    %v57 = vsub.f32 %v40, 3.0
    %v58 = vand.u32 2147483647, %v57
    %v59 = vsub.f32 1.0, %v58
    %v60 = vmax.f32 %v59, 0.0
    %v61 = vld [vmem:[#allocation3] sm:$0x1]
    %v62 = vld [vmem:[#allocation3 + $0x1] sm:$0x1]
    %v63 = vmul.f32 %v61, 16.0
    %v64 = vsub.f32 %v63, 0.5
    %v65 = vfloor.f32 %v64
    %v66 = vsub.f32 %v64, %v65
    %v67 = vmax.f32 %v65, 0.0
    %v68 = vmin.f32 %v67, 15.0
    %v69 = vadd.f32 %v65, 1.0
    %v70 = vmax.f32 %v69, 0.0
    %v71 = vmin.f32 %v70, 15.0
    %v72 = vlaneseq
    %v73 = vshrl.u32 %v72, 7
    %v74 = vsub.s32 0, %v73
    %v75 = vrot.slane %v68, %v74
    %vm76 = vcmp.eq.f32.partialorder %v47, %v75
    %vm77 = vcmp.eq.f32.partialorder %v48, %v75
    %v78 = vsub.f32 1.0, %v66
    %v79 = vlaneseq
    %v80 = vshrl.u32 %v79, 7
    %v81 = vsub.s32 0, %v80
    %v82 = vrot.slane %v78, %v81
    %v83 = vsel %vm76, %v82, 0.0
    %v84 = vsel %vm77, %v82, 0.0
    %v85 = vlaneseq
    %v86 = vshrl.u32 %v85, 7
    %v87 = vsub.s32 0, %v86
    %v88 = vrot.slane %v71, %v87
    %vm89 = vcmp.eq.f32.partialorder %v47, %v88
    %vm90 = vcmp.eq.f32.partialorder %v48, %v88
    %v91 = vlaneseq
    %v92 = vshrl.u32 %v91, 7
    %v93 = vsub.s32 0, %v92
    %v94 = vrot.slane %v66, %v93
    %v95 = vsel %vm89, %v94, 0.0
    %v96 = vsel %vm90, %v94, 0.0
    %v97 = vadd.f32 %v83, %v95
    %v98 = vadd.f32 %v84, %v96
    %v99 = vlaneseq
    %v100 = vshrl.u32 %v99, 7
    %v101 = vsub.s32 0, %v100
    %v102 = vrot.slane %v43, %v101
    %v103 = vmul.f32 %v97, %v102
    %v104 = vmul.f32 %v98, %v102
    %v105 = vmul.f32 %v62, 16.0
    %v106 = vsub.f32 %v105, 0.5
    %v107 = vfloor.f32 %v106
    %v108 = vsub.f32 %v106, %v107
    %v109 = vmax.f32 %v107, 0.0
    %v110 = vmin.f32 %v109, 15.0
    %v111 = vadd.f32 %v107, 1.0
    %v112 = vmax.f32 %v111, 0.0
    %v113 = vmin.f32 %v112, 15.0
    %v114 = vlaneseq
    %v115 = vshrl.u32 %v114, 7
    %v116 = vsub.s32 0, %v115
    %v117 = vrot.slane %v110, %v116
    %vm118 = vcmp.eq.f32.partialorder %v47, %v117
    %vm119 = vcmp.eq.f32.partialorder %v48, %v117
    %v120 = vsub.f32 1.0, %v108
    %v121 = vlaneseq
    %v122 = vshrl.u32 %v121, 7
    %v123 = vsub.s32 0, %v122
    %v124 = vrot.slane %v120, %v123
    %v125 = vsel %vm118, %v124, 0.0
    %v126 = vsel %vm119, %v124, 0.0
    %v127 = vlaneseq
    %v128 = vshrl.u32 %v127, 7
    %v129 = vsub.s32 0, %v128
    %v130 = vrot.slane %v113, %v129
    %vm131 = vcmp.eq.f32.partialorder %v47, %v130
    %vm132 = vcmp.eq.f32.partialorder %v48, %v130
    %v133 = vlaneseq
    %v134 = vshrl.u32 %v133, 7
    %v135 = vsub.s32 0, %v134
    %v136 = vrot.slane %v108, %v135
    %v137 = vsel %vm131, %v136, 0.0
    %v138 = vsel %vm132, %v136, 0.0
    %v139 = vadd.f32 %v125, %v137
    %v140 = vadd.f32 %v126, %v138
    %v143 = vcombine.high %v139, %v139
    %v145 = vunpack.c.l.s4 1966171168
    %v146 = vunpack.c.0.s8 %v145
    %v147 = vlaneseq
    %v148 = vshrl.u32 %v147, 7
    %v149 = vsub.s32 %v146, %v148
    %v150 = vrot.slane %v139, %v149
    %v152 = vunpack.c.l.s4 1966171168
    %v153 = vunpack.c.0.s8 %v152
    %v154 = vlaneseq
    %v155 = vshrl.u32 %v154, 7
    %v156 = vsub.s32 %v153, %v155
    %v157 = vrot.slane %v143, %v156
    %v158 = vcombine.high %v150, %v150
    %v159 = vcombine.high %v157, %v157
    %v161 = vunpack.c.l.s4 1966171168
    %v162 = vunpack.c.0.s8 %v161
    %v163 = vlaneseq
    %v164 = vshrl.u32 %v163, 7
    %v165 = vsub.s32 %v162, %v164
    %v166 = vrot.slane %v150, %v165
    %v168 = vunpack.c.l.s4 1966171168
    %v169 = vunpack.c.0.s8 %v168
    %v170 = vlaneseq
    %v171 = vshrl.u32 %v170, 7
    %v172 = vsub.s32 %v169, %v171
    %v173 = vrot.slane %v157, %v172
    %v175 = vunpack.c.l.s4 1966171168
    %v176 = vunpack.c.0.s8 %v175
    %v177 = vlaneseq
    %v178 = vshrl.u32 %v177, 7
    %v179 = vsub.s32 %v176, %v178
    %v180 = vrot.slane %v158, %v179
    %v182 = vunpack.c.l.s4 1966171168
    %v183 = vunpack.c.0.s8 %v182
    %v184 = vlaneseq
    %v185 = vshrl.u32 %v184, 7
    %v186 = vsub.s32 %v183, %v185
    %v187 = vrot.slane %v159, %v186
    %v188 = vcombine.high %v166, %v166
    %v189 = vcombine.high %v173, %v173
    %v190 = vcombine.high %v180, %v180
    %v191 = vcombine.high %v187, %v187
    %v192 = vcombine.high %v140, %v140
    %v194 = vunpack.c.l.s4 1966171168
    %v195 = vunpack.c.0.s8 %v194
    %v196 = vlaneseq
    %v197 = vshrl.u32 %v196, 7
    %v198 = vsub.s32 %v195, %v197
    %v199 = vrot.slane %v140, %v198
    %v201 = vunpack.c.l.s4 1966171168
    %v202 = vunpack.c.0.s8 %v201
    %v203 = vlaneseq
    %v204 = vshrl.u32 %v203, 7
    %v205 = vsub.s32 %v202, %v204
    %v206 = vrot.slane %v192, %v205
    %v207 = vcombine.high %v199, %v199
    %v208 = vcombine.high %v206, %v206
    %v210 = vunpack.c.l.s4 1966171168
    %v211 = vunpack.c.0.s8 %v210
    %v212 = vlaneseq
    %v213 = vshrl.u32 %v212, 7
    %v214 = vsub.s32 %v211, %v213
    %v215 = vrot.slane %v199, %v214
    %v217 = vunpack.c.l.s4 1966171168
    %v218 = vunpack.c.0.s8 %v217
    %v219 = vlaneseq
    %v220 = vshrl.u32 %v219, 7
    %v221 = vsub.s32 %v218, %v220
    %v222 = vrot.slane %v206, %v221
    %v224 = vunpack.c.l.s4 1966171168
    %v225 = vunpack.c.0.s8 %v224
    %v226 = vlaneseq
    %v227 = vshrl.u32 %v226, 7
    %v228 = vsub.s32 %v225, %v227
    %v229 = vrot.slane %v207, %v228
    %v231 = vunpack.c.l.s4 1966171168
    %v232 = vunpack.c.0.s8 %v231
    %v233 = vlaneseq
    %v234 = vshrl.u32 %v233, 7
    %v235 = vsub.s32 %v232, %v234
    %v236 = vrot.slane %v208, %v235
    %v237 = vcombine.high %v215, %v215
    %v238 = vcombine.high %v222, %v222
    %v239 = vcombine.high %v229, %v229
    %v240 = vcombine.high %v236, %v236
    %v241 = vlaneseq
    %v242 = vshrl.u32 %v241, 7
    %v243 = vsub.s32 0, %v242
    %v244 = vrot.slane %v166, %v243
    %v245 = vlaneseq
    %v246 = vshrl.u32 %v245, 7
    %v247 = vsub.s32 0, %v246
    %v248 = vrot.slane %v180, %v247
    %v249 = vlaneseq
    %v250 = vshrl.u32 %v249, 7
    %v251 = vsub.s32 0, %v250
    %v252 = vrot.slane %v188, %v251
    %v253 = vlaneseq
    %v254 = vshrl.u32 %v253, 7
    %v255 = vsub.s32 0, %v254
    %v256 = vrot.slane %v190, %v255
    %v257 = vlaneseq
    %v258 = vshrl.u32 %v257, 7
    %v259 = vsub.s32 0, %v258
    %v260 = vrot.slane %v173, %v259
    %v261 = vlaneseq
    %v262 = vshrl.u32 %v261, 7
    %v263 = vsub.s32 0, %v262
    %v264 = vrot.slane %v187, %v263
    %v265 = vlaneseq
    %v266 = vshrl.u32 %v265, 7
    %v267 = vsub.s32 0, %v266
    %v268 = vrot.slane %v189, %v267
    %v269 = vlaneseq
    %v270 = vshrl.u32 %v269, 7
    %v271 = vsub.s32 0, %v270
    %v272 = vrot.slane %v191, %v271
    %v273 = vlaneseq
    %v274 = vshrl.u32 %v273, 7
    %v275 = vsub.s32 0, %v274
    %v276 = vrot.slane %v215, %v275
    %v277 = vlaneseq
    %v278 = vshrl.u32 %v277, 7
    %v279 = vsub.s32 0, %v278
    %v280 = vrot.slane %v229, %v279
    %v281 = vlaneseq
    %v282 = vshrl.u32 %v281, 7
    %v283 = vsub.s32 0, %v282
    %v284 = vrot.slane %v237, %v283
    %v285 = vlaneseq
    %v286 = vshrl.u32 %v285, 7
    %v287 = vsub.s32 0, %v286
    %v288 = vrot.slane %v239, %v287
    %v289 = vlaneseq
    %v290 = vshrl.u32 %v289, 7
    %v291 = vsub.s32 0, %v290
    %v292 = vrot.slane %v222, %v291
    %v293 = vlaneseq
    %v294 = vshrl.u32 %v293, 7
    %v295 = vsub.s32 0, %v294
    %v296 = vrot.slane %v236, %v295
    %v297 = vlaneseq
    %v298 = vshrl.u32 %v297, 7
    %v299 = vsub.s32 0, %v298
    %v300 = vrot.slane %v238, %v299
    %v301 = vlaneseq
    %v302 = vshrl.u32 %v301, 7
    %v303 = vsub.s32 0, %v302
    %v304 = vrot.slane %v240, %v303
    %v321 = vmul.f32 %v244, %v103
    %v322 = vmul.f32 %v244, %v104
    %v323 = vmul.f32 %v248, %v103
    %v324 = vmul.f32 %v248, %v104
    %v325 = vmul.f32 %v252, %v103
    %v326 = vmul.f32 %v252, %v104
    %v327 = vmul.f32 %v256, %v103
    %v328 = vmul.f32 %v256, %v104
    %v329 = vmul.f32 %v260, %v103
    %v330 = vmul.f32 %v260, %v104
    %v331 = vmul.f32 %v264, %v103
    %v332 = vmul.f32 %v264, %v104
    %v333 = vmul.f32 %v268, %v103
    %v334 = vmul.f32 %v268, %v104
    %v335 = vmul.f32 %v272, %v103
    %v336 = vmul.f32 %v272, %v104
    %v337 = vmul.f32 %v276, %v103
    %v338 = vmul.f32 %v276, %v104
    %v339 = vmul.f32 %v280, %v103
    %v340 = vmul.f32 %v280, %v104
    %v341 = vmul.f32 %v284, %v103
    %v342 = vmul.f32 %v284, %v104
    %v343 = vmul.f32 %v288, %v103
    %v344 = vmul.f32 %v288, %v104
    %v345 = vmul.f32 %v292, %v103
    %v346 = vmul.f32 %v292, %v104
    %v347 = vmul.f32 %v296, %v103
    %v348 = vmul.f32 %v296, %v104
    %v349 = vmul.f32 %v300, %v103
    %v350 = vmul.f32 %v300, %v104
    %v351 = vmul.f32 %v304, %v103
    %v352 = vmul.f32 %v304, %v104
    %353 = vst [vmem:[#allocation2] sm:$0xff] %v321
    %354 = vst [vmem:[#allocation2 + $0x8] sm:$0xff] %v322
    %355 = vst [vmem:[#allocation2 + $0x10] sm:$0xff] %v323
    %356 = vst [vmem:[#allocation2 + $0x18] sm:$0xff] %v324
    %357 = vst [vmem:[#allocation2 + $0x20] sm:$0xff] %v325
    %358 = vst [vmem:[#allocation2 + $0x28] sm:$0xff] %v326
    %359 = vst [vmem:[#allocation2 + $0x30] sm:$0xff] %v327
    %360 = vst [vmem:[#allocation2 + $0x38] sm:$0xff] %v328
    %361 = vst [vmem:[#allocation2 + $0x40] sm:$0xff] %v329
    %362 = vst [vmem:[#allocation2 + $0x48] sm:$0xff] %v330
    %363 = vst [vmem:[#allocation2 + $0x50] sm:$0xff] %v331
    %364 = vst [vmem:[#allocation2 + $0x58] sm:$0xff] %v332
    %365 = vst [vmem:[#allocation2 + $0x60] sm:$0xff] %v333
    %366 = vst [vmem:[#allocation2 + $0x68] sm:$0xff] %v334
    %367 = vst [vmem:[#allocation2 + $0x70] sm:$0xff] %v335
    %368 = vst [vmem:[#allocation2 + $0x78] sm:$0xff] %v336
    %369 = vst [vmem:[#allocation2 + $0x80] sm:$0xff] %v337
    %370 = vst [vmem:[#allocation2 + $0x88] sm:$0xff] %v338
    %371 = vst [vmem:[#allocation2 + $0x90] sm:$0xff] %v339
    %372 = vst [vmem:[#allocation2 + $0x98] sm:$0xff] %v340
    %373 = vst [vmem:[#allocation2 + $0xa0] sm:$0xff] %v341
    %374 = vst [vmem:[#allocation2 + $0xa8] sm:$0xff] %v342
    %375 = vst [vmem:[#allocation2 + $0xb0] sm:$0xff] %v343
    %376 = vst [vmem:[#allocation2 + $0xb8] sm:$0xff] %v344
    %377 = vst [vmem:[#allocation2 + $0xc0] sm:$0xff] %v345
    %378 = vst [vmem:[#allocation2 + $0xc8] sm:$0xff] %v346
    %379 = vst [vmem:[#allocation2 + $0xd0] sm:$0xff] %v347
    %380 = vst [vmem:[#allocation2 + $0xd8] sm:$0xff] %v348
    %381 = vst [vmem:[#allocation2 + $0xe0] sm:$0xff] %v349
    %382 = vst [vmem:[#allocation2 + $0xe8] sm:$0xff] %v350
    %383 = vst [vmem:[#allocation2 + $0xf0] sm:$0xff] %v351
    %384 = vst [vmem:[#allocation2 + $0xf8] sm:$0xff] %v352
    %v385 = vmul.f32 %v61, 8.0
    %v386 = vsub.f32 %v385, 0.5
    %v387 = vfloor.f32 %v386
    %v388 = vsub.f32 %v386, %v387
    %v389 = vmax.f32 %v387, 0.0
    %v390 = vmin.f32 %v389, 7.0
    %v391 = vadd.f32 %v387, 1.0
    %v392 = vmax.f32 %v391, 0.0
    %v393 = vmin.f32 %v392, 7.0
    %v394 = vlaneseq
    %v395 = vshrl.u32 %v394, 7
    %v396 = vsub.s32 0, %v395
    %v397 = vrot.slane %v390, %v396
    %vm398 = vcmp.eq.f32.partialorder %v47, %v397
    %v399 = vsub.f32 1.0, %v388
    %v400 = vlaneseq
    %v401 = vshrl.u32 %v400, 7
    %v402 = vsub.s32 0, %v401
    %v403 = vrot.slane %v399, %v402
    %v404 = vsel %vm398, %v403, 0.0
    %v405 = vlaneseq
    %v406 = vshrl.u32 %v405, 7
    %v407 = vsub.s32 0, %v406
    %v408 = vrot.slane %v393, %v407
    %vm409 = vcmp.eq.f32.partialorder %v47, %v408
    %v410 = vlaneseq
    %v411 = vshrl.u32 %v410, 7
    %v412 = vsub.s32 0, %v411
    %v413 = vrot.slane %v388, %v412
    %v414 = vsel %vm409, %v413, 0.0
    %v415 = vadd.f32 %v404, %v414
    %v416 = vlaneseq
    %v417 = vshrl.u32 %v416, 7
    %v418 = vsub.s32 0, %v417
    %v419 = vrot.slane %v52, %v418
    %v420 = vmul.f32 %v415, %v419
    %v421 = vmul.f32 %v62, 8.0
    %v422 = vsub.f32 %v421, 0.5
    %v423 = vfloor.f32 %v422
    %v424 = vsub.f32 %v422, %v423
    %v425 = vmax.f32 %v423, 0.0
    %v426 = vmin.f32 %v425, 7.0
    %v427 = vadd.f32 %v423, 1.0
    %v428 = vmax.f32 %v427, 0.0
    %v429 = vmin.f32 %v428, 7.0
    %v430 = vlaneseq
    %v431 = vshrl.u32 %v430, 7
    %v432 = vsub.s32 0, %v431
    %v433 = vrot.slane %v426, %v432
    %vm434 = vcmp.eq.f32.partialorder %v47, %v433
    %v435 = vsub.f32 1.0, %v424
    %v436 = vlaneseq
    %v437 = vshrl.u32 %v436, 7
    %v438 = vsub.s32 0, %v437
    %v439 = vrot.slane %v435, %v438
    %v440 = vsel %vm434, %v439, 0.0
    %v441 = vlaneseq
    %v442 = vshrl.u32 %v441, 7
    %v443 = vsub.s32 0, %v442
    %v444 = vrot.slane %v429, %v443
    %vm445 = vcmp.eq.f32.partialorder %v47, %v444
    %v446 = vlaneseq
    %v447 = vshrl.u32 %v446, 7
    %v448 = vsub.s32 0, %v447
    %v449 = vrot.slane %v424, %v448
    %v450 = vsel %vm445, %v449, 0.0
    %v451 = vadd.f32 %v440, %v450
    %v453 = vcombine.high %v451, %v451
    %v455 = vunpack.c.l.s4 1966171168
    %v456 = vunpack.c.0.s8 %v455
    %v457 = vlaneseq
    %v458 = vshrl.u32 %v457, 7
    %v459 = vsub.s32 %v456, %v458
    %v460 = vrot.slane %v451, %v459
    %v462 = vunpack.c.l.s4 1966171168
    %v463 = vunpack.c.0.s8 %v462
    %v464 = vlaneseq
    %v465 = vshrl.u32 %v464, 7
    %v466 = vsub.s32 %v463, %v465
    %v467 = vrot.slane %v453, %v466
    %v468 = vcombine.high %v460, %v460
    %v469 = vcombine.high %v467, %v467
    %v471 = vunpack.c.l.s4 1966171168
    %v472 = vunpack.c.0.s8 %v471
    %v473 = vlaneseq
    %v474 = vshrl.u32 %v473, 7
    %v475 = vsub.s32 %v472, %v474
    %v476 = vrot.slane %v460, %v475
    %v478 = vunpack.c.l.s4 1966171168
    %v479 = vunpack.c.0.s8 %v478
    %v480 = vlaneseq
    %v481 = vshrl.u32 %v480, 7
    %v482 = vsub.s32 %v479, %v481
    %v483 = vrot.slane %v467, %v482
    %v485 = vunpack.c.l.s4 1966171168
    %v486 = vunpack.c.0.s8 %v485
    %v487 = vlaneseq
    %v488 = vshrl.u32 %v487, 7
    %v489 = vsub.s32 %v486, %v488
    %v490 = vrot.slane %v468, %v489
    %v492 = vunpack.c.l.s4 1966171168
    %v493 = vunpack.c.0.s8 %v492
    %v494 = vlaneseq
    %v495 = vshrl.u32 %v494, 7
    %v496 = vsub.s32 %v493, %v495
    %v497 = vrot.slane %v469, %v496
    %v498 = vcombine.high %v476, %v476
    %v499 = vcombine.high %v483, %v483
    %v500 = vcombine.high %v490, %v490
    %v501 = vcombine.high %v497, %v497
    %v502 = vlaneseq
    %v503 = vshrl.u32 %v502, 7
    %v504 = vsub.s32 0, %v503
    %v505 = vrot.slane %v476, %v504
    %v506 = vlaneseq
    %v507 = vshrl.u32 %v506, 7
    %v508 = vsub.s32 0, %v507
    %v509 = vrot.slane %v490, %v508
    %v510 = vlaneseq
    %v511 = vshrl.u32 %v510, 7
    %v512 = vsub.s32 0, %v511
    %v513 = vrot.slane %v498, %v512
    %v514 = vlaneseq
    %v515 = vshrl.u32 %v514, 7
    %v516 = vsub.s32 0, %v515
    %v517 = vrot.slane %v500, %v516
    %v518 = vlaneseq
    %v519 = vshrl.u32 %v518, 7
    %v520 = vsub.s32 0, %v519
    %v521 = vrot.slane %v483, %v520
    %v522 = vlaneseq
    %v523 = vshrl.u32 %v522, 7
    %v524 = vsub.s32 0, %v523
    %v525 = vrot.slane %v497, %v524
    %v526 = vlaneseq
    %v527 = vshrl.u32 %v526, 7
    %v528 = vsub.s32 0, %v527
    %v529 = vrot.slane %v499, %v528
    %v530 = vlaneseq
    %v531 = vshrl.u32 %v530, 7
    %v532 = vsub.s32 0, %v531
    %v533 = vrot.slane %v501, %v532
    %v542 = vmul.f32 %v505, %v420
    %v543 = vmul.f32 %v509, %v420
    %v544 = vmul.f32 %v513, %v420
    %v545 = vmul.f32 %v517, %v420
    %v546 = vmul.f32 %v521, %v420
    %v547 = vmul.f32 %v525, %v420
    %v548 = vmul.f32 %v529, %v420
    %v549 = vmul.f32 %v533, %v420
    %550 = vst [vmem:[#allocation2 + $0x100] sm:$0xff] %v542
    %551 = vst [vmem:[#allocation2 + $0x108] sm:$0xff] %v543
    %552 = vst [vmem:[#allocation2 + $0x110] sm:$0xff] %v544
    %553 = vst [vmem:[#allocation2 + $0x118] sm:$0xff] %v545
    %554 = vst [vmem:[#allocation2 + $0x120] sm:$0xff] %v546
    %555 = vst [vmem:[#allocation2 + $0x128] sm:$0xff] %v547
    %556 = vst [vmem:[#allocation2 + $0x130] sm:$0xff] %v548
    %557 = vst [vmem:[#allocation2 + $0x138] sm:$0xff] %v549
    %v558 = vmul.f32 %v61, 4.0
    %v559 = vsub.f32 %v558, 0.5
    %v560 = vfloor.f32 %v559
    %v561 = vsub.f32 %v559, %v560
    %v562 = vmax.f32 %v560, 0.0
    %v563 = vmin.f32 %v562, 3.0
    %v564 = vadd.f32 %v560, 1.0
    %v565 = vmax.f32 %v564, 0.0
    %v566 = vmin.f32 %v565, 3.0
    %v567 = vlaneseq
    %v568 = vshrl.u32 %v567, 7
    %v569 = vsub.s32 0, %v568
    %v570 = vrot.slane %v563, %v569
    %vm571 = vcmp.eq.f32.partialorder %v47, %v570
    %v572 = vsub.f32 1.0, %v561
    %v573 = vlaneseq
    %v574 = vshrl.u32 %v573, 7
    %v575 = vsub.s32 0, %v574
    %v576 = vrot.slane %v572, %v575
    %v577 = vsel %vm571, %v576, 0.0
    %v578 = vlaneseq
    %v579 = vshrl.u32 %v578, 7
    %v580 = vsub.s32 0, %v579
    %v581 = vrot.slane %v566, %v580
    %vm582 = vcmp.eq.f32.partialorder %v47, %v581
    %v583 = vlaneseq
    %v584 = vshrl.u32 %v583, 7
    %v585 = vsub.s32 0, %v584
    %v586 = vrot.slane %v561, %v585
    %v587 = vsel %vm582, %v586, 0.0
    %v588 = vadd.f32 %v577, %v587
    %v589 = vlaneseq
    %v590 = vshrl.u32 %v589, 7
    %v591 = vsub.s32 0, %v590
    %v592 = vrot.slane %v56, %v591
    %v593 = vmul.f32 %v588, %v592
    %v594 = vmul.f32 %v62, 4.0
    %v595 = vsub.f32 %v594, 0.5
    %v596 = vfloor.f32 %v595
    %v597 = vsub.f32 %v595, %v596
    %v598 = vmax.f32 %v596, 0.0
    %v599 = vmin.f32 %v598, 3.0
    %v600 = vadd.f32 %v596, 1.0
    %v601 = vmax.f32 %v600, 0.0
    %v602 = vmin.f32 %v601, 3.0
    %v603 = vlaneseq
    %v604 = vshrl.u32 %v603, 7
    %v605 = vsub.s32 0, %v604
    %v606 = vrot.slane %v599, %v605
    %vm607 = vcmp.eq.f32.partialorder %v47, %v606
    %v608 = vsub.f32 1.0, %v597
    %v609 = vlaneseq
    %v610 = vshrl.u32 %v609, 7
    %v611 = vsub.s32 0, %v610
    %v612 = vrot.slane %v608, %v611
    %v613 = vsel %vm607, %v612, 0.0
    %v614 = vlaneseq
    %v615 = vshrl.u32 %v614, 7
    %v616 = vsub.s32 0, %v615
    %v617 = vrot.slane %v602, %v616
    %vm618 = vcmp.eq.f32.partialorder %v47, %v617
    %v619 = vlaneseq
    %v620 = vshrl.u32 %v619, 7
    %v621 = vsub.s32 0, %v620
    %v622 = vrot.slane %v597, %v621
    %v623 = vsel %vm618, %v622, 0.0
    %v624 = vadd.f32 %v613, %v623
    %v627 = vunpack.c.l.s4 1966171168
    %v628 = vunpack.c.0.s8 %v627
    %v629 = vlaneseq
    %v630 = vshrl.u32 %v629, 7
    %v631 = vsub.s32 %v628, %v630
    %v632 = vrot.slane %v624, %v631
    %v633 = vcombine.high %v632, %v632
    %v635 = vunpack.c.l.s4 1966171168
    %v636 = vunpack.c.0.s8 %v635
    %v637 = vlaneseq
    %v638 = vshrl.u32 %v637, 7
    %v639 = vsub.s32 %v636, %v638
    %v640 = vrot.slane %v632, %v639
    %v642 = vunpack.c.l.s4 1966171168
    %v643 = vunpack.c.0.s8 %v642
    %v644 = vlaneseq
    %v645 = vshrl.u32 %v644, 7
    %v646 = vsub.s32 %v643, %v645
    %v647 = vrot.slane %v633, %v646
    %v648 = vcombine.high %v640, %v640
    %v649 = vcombine.high %v647, %v647
    %v650 = vlaneseq
    %v651 = vshrl.u32 %v650, 7
    %v652 = vsub.s32 0, %v651
    %v653 = vrot.slane %v640, %v652
    %v654 = vlaneseq
    %v655 = vshrl.u32 %v654, 7
    %v656 = vsub.s32 0, %v655
    %v657 = vrot.slane %v647, %v656
    %v658 = vlaneseq
    %v659 = vshrl.u32 %v658, 7
    %v660 = vsub.s32 0, %v659
    %v661 = vrot.slane %v648, %v660
    %v662 = vlaneseq
    %v663 = vshrl.u32 %v662, 7
    %v664 = vsub.s32 0, %v663
    %v665 = vrot.slane %v649, %v664
    %v670 = vmul.f32 %v653, %v593
    %v671 = vmul.f32 %v657, %v593
    %v672 = vmul.f32 %v661, %v593
    %v673 = vmul.f32 %v665, %v593
    %v678 = vcombine.low %v670, %v671
    %v679 = vcombine.low %v672, %v673
    %682 = vst [vmem:[#allocation2 + $0x140] sm:$0xff] %v678
    %683 = vst [vmem:[#allocation2 + $0x148] sm:$0xff] %v679
    %v684 = vmul.f32 %v61, 2.0
    %v685 = vsub.f32 %v684, 0.5
    %v686 = vfloor.f32 %v685
    %v687 = vsub.f32 %v685, %v686
    %v688 = vmax.f32 %v686, 0.0
    %v689 = vmin.f32 %v688, 1.0
    %v690 = vadd.f32 %v686, 1.0
    %v691 = vmax.f32 %v690, 0.0
    %v692 = vmin.f32 %v691, 1.0
    %v693 = vlaneseq
    %v694 = vshrl.u32 %v693, 7
    %v695 = vsub.s32 0, %v694
    %v696 = vrot.slane %v689, %v695
    %vm697 = vcmp.eq.f32.partialorder %v47, %v696
    %v698 = vsub.f32 1.0, %v687
    %v699 = vlaneseq
    %v700 = vshrl.u32 %v699, 7
    %v701 = vsub.s32 0, %v700
    %v702 = vrot.slane %v698, %v701
    %v703 = vsel %vm697, %v702, 0.0
    %v704 = vlaneseq
    %v705 = vshrl.u32 %v704, 7
    %v706 = vsub.s32 0, %v705
    %v707 = vrot.slane %v692, %v706
    %vm708 = vcmp.eq.f32.partialorder %v47, %v707
    %v709 = vlaneseq
    %v710 = vshrl.u32 %v709, 7
    %v711 = vsub.s32 0, %v710
    %v712 = vrot.slane %v687, %v711
    %v713 = vsel %vm708, %v712, 0.0
    %v714 = vadd.f32 %v703, %v713
    %v715 = vlaneseq
    %v716 = vshrl.u32 %v715, 7
    %v717 = vsub.s32 0, %v716
    %v718 = vrot.slane %v60, %v717
    %v719 = vmul.f32 %v714, %v718
    %v720 = vmul.f32 %v62, 2.0
    %v721 = vsub.f32 %v720, 0.5
    %v722 = vfloor.f32 %v721
    %v723 = vsub.f32 %v721, %v722
    %v724 = vmax.f32 %v722, 0.0
    %v725 = vmin.f32 %v724, 1.0
    %v726 = vadd.f32 %v722, 1.0
    %v727 = vmax.f32 %v726, 0.0
    %v728 = vmin.f32 %v727, 1.0
    %v729 = vlaneseq
    %v730 = vshrl.u32 %v729, 7
    %v731 = vsub.s32 0, %v730
    %v732 = vrot.slane %v725, %v731
    %vm733 = vcmp.eq.f32.partialorder %v47, %v732
    %v734 = vsub.f32 1.0, %v723
    %v735 = vlaneseq
    %v736 = vshrl.u32 %v735, 7
    %v737 = vsub.s32 0, %v736
    %v738 = vrot.slane %v734, %v737
    %v739 = vsel %vm733, %v738, 0.0
    %v740 = vlaneseq
    %v741 = vshrl.u32 %v740, 7
    %v742 = vsub.s32 0, %v741
    %v743 = vrot.slane %v728, %v742
    %vm744 = vcmp.eq.f32.partialorder %v47, %v743
    %v745 = vlaneseq
    %v746 = vshrl.u32 %v745, 7
    %v747 = vsub.s32 0, %v746
    %v748 = vrot.slane %v723, %v747
    %v749 = vsel %vm744, %v748, 0.0
    %v750 = vadd.f32 %v739, %v749
    %vm751 = vcmask 1041408
    %v752 = vsel %vm751, %v750, 0.0
    %v755 = vunpack.c.l.s4 1966171168
    %v756 = vunpack.c.0.s8 %v755
    %v757 = vlaneseq
    %v758 = vshrl.u32 %v757, 7
    %v759 = vsub.s32 %v756, %v758
    %v760 = vrot.slane %v752, %v759
    %v761 = vcombine.high %v760, %v760
    %v763 = vunpack.c.l.s4 1966171168
    %v764 = vunpack.c.0.s8 %v763
    %v765 = vlaneseq
    %v766 = vshrl.u32 %v765, 7
    %v767 = vsub.s32 %v764, %v766
    %v768 = vrot.slane %v760, %v767
    %v770 = vunpack.c.l.s4 1966171168
    %v771 = vunpack.c.0.s8 %v770
    %v772 = vlaneseq
    %v773 = vshrl.u32 %v772, 7
    %v774 = vsub.s32 %v771, %v773
    %v775 = vrot.slane %v761, %v774
    %v776 = vcombine.high %v768, %v768
    %v777 = vcombine.high %v775, %v775
    %v778 = vlaneseq
    %v779 = vshrl.u32 %v778, 7
    %v780 = vsub.s32 0, %v779
    %v781 = vrot.slane %v768, %v780
    %v782 = vlaneseq
    %v783 = vshrl.u32 %v782, 7
    %v784 = vsub.s32 0, %v783
    %v785 = vrot.slane %v775, %v784
    %v786 = vlaneseq
    %v787 = vshrl.u32 %v786, 7
    %v788 = vsub.s32 0, %v787
    %v789 = vrot.slane %v776, %v788
    %v790 = vlaneseq
    %v791 = vshrl.u32 %v790, 7
    %v792 = vsub.s32 0, %v791
    %v793 = vrot.slane %v777, %v792
    %v798 = vmul.f32 %v781, %v719
    %v799 = vmul.f32 %v785, %v719
    %v800 = vmul.f32 %v789, %v719
    %v801 = vmul.f32 %v793, %v719
    %v806 = vcombine.low %v798, %v799
    %v807 = vcombine.low %v800, %v801
    %v809 = vunpack.c.l.s4 1983009808
    %v810 = vunpack.c.0.s8 %v809
    %v811 = vlaneseq
    %v812 = vshrl.u32 %v811, 7
    %v813 = vsub.s32 %v810, %v812
    %v814 = vrot.slane %v806, %v813
    %v816 = vunpack.c.l.s4 1983009808
    %v817 = vunpack.c.0.s8 %v816
    %v818 = vlaneseq
    %v819 = vshrl.u32 %v818, 7
    %v820 = vsub.s32 %v817, %v819
    %v821 = vrot.slane %v807, %v820
    %v822 = vcombine.low %v814, %v821
    %824 = vst [vmem:[#allocation2 + $0x150] sm:$0xff] %v822
    %v825 = vld [vmem:[#allocation6] sm:$0xff]
    %v826 = vld [vmem:[#allocation6 + $0x8] sm:$0xff]
    %v827 = vld [vmem:[#allocation6 + $0x10] sm:$0xff]
    %v828 = vld [vmem:[#allocation2] sm:$0xff]
    %v829 = vld [vmem:[#allocation2 + $0x8] sm:$0xff]
    %v830 = vld [vmem:[#allocation2 + $0x10] sm:$0xff]
    %v831 = vld [vmem:[#allocation2 + $0x18] sm:$0xff]
    %v832 = vld [vmem:[#allocation2 + $0x20] sm:$0xff]
    %v833 = vld [vmem:[#allocation2 + $0x28] sm:$0xff]
    %v834 = vld [vmem:[#allocation2 + $0x30] sm:$0xff]
    %v835 = vld [vmem:[#allocation2 + $0x38] sm:$0xff]
    %v836 = vld [vmem:[#allocation2 + $0x40] sm:$0xff]
    %v837 = vld [vmem:[#allocation2 + $0x48] sm:$0xff]
    %v838 = vld [vmem:[#allocation2 + $0x50] sm:$0xff]
    %v839 = vld [vmem:[#allocation2 + $0x58] sm:$0xff]
    %v840 = vld [vmem:[#allocation2 + $0x60] sm:$0xff]
    %v841 = vld [vmem:[#allocation2 + $0x68] sm:$0xff]
    %v842 = vld [vmem:[#allocation2 + $0x70] sm:$0xff]
    %v843 = vld [vmem:[#allocation2 + $0x78] sm:$0xff]
    %v844 = vld [vmem:[#allocation2 + $0x80] sm:$0xff]
    %v845 = vld [vmem:[#allocation2 + $0x88] sm:$0xff]
    %v846 = vld [vmem:[#allocation2 + $0x90] sm:$0xff]
    %v847 = vld [vmem:[#allocation2 + $0x98] sm:$0xff]
    %v848 = vld [vmem:[#allocation2 + $0xa0] sm:$0xff]
    %v849 = vld [vmem:[#allocation2 + $0xa8] sm:$0xff]
    %v850 = vld [vmem:[#allocation2 + $0xb0] sm:$0xff]
    %v851 = vld [vmem:[#allocation2 + $0xb8] sm:$0xff]
    %v852 = vld [vmem:[#allocation2 + $0xc0] sm:$0xff]
    %v853 = vld [vmem:[#allocation2 + $0xc8] sm:$0xff]
    %v854 = vld [vmem:[#allocation2 + $0xd0] sm:$0xff]
    %v855 = vld [vmem:[#allocation2 + $0xd8] sm:$0xff]
    %v856 = vld [vmem:[#allocation2 + $0xe0] sm:$0xff]
    %v857 = vld [vmem:[#allocation2 + $0xe8] sm:$0xff]
    %v858 = vld [vmem:[#allocation2 + $0xf0] sm:$0xff]
    %v859 = vld [vmem:[#allocation2 + $0xf8] sm:$0xff]
    %v860 = vld [vmem:[#allocation2 + $0x100] sm:$0xff]
    %v861 = vld [vmem:[#allocation2 + $0x108] sm:$0xff]
    %v862 = vld [vmem:[#allocation2 + $0x110] sm:$0xff]
    %v863 = vld [vmem:[#allocation2 + $0x118] sm:$0xff]
    %v864 = vld [vmem:[#allocation2 + $0x120] sm:$0xff]
    %v865 = vld [vmem:[#allocation2 + $0x128] sm:$0xff]
    %v866 = vld [vmem:[#allocation2 + $0x130] sm:$0xff]
    %v867 = vld [vmem:[#allocation2 + $0x138] sm:$0xff]
    %v868 = vld [vmem:[#allocation2 + $0x140] sm:$0xff]
    %v869 = vld [vmem:[#allocation2 + $0x148] sm:$0xff]
    %v870 = vld [vmem:[#allocation2 + $0x150] sm:$0xff]
    %vm871 = vcmask 719872
    %v873 = vsel %vm871, %v827, 0
    %875 = vmatprep.subr.mxu0 0.0
    %876 = vmatpush1.msra.mxu0 %v828
    %877 = vmatprep.subr.mxu0 0.0
    %878 = vmatpush1.msra.mxu0 %v829
    %879 = vmatprep.subr.mxu0 0.0
    %880 = vmatpush1.msra.mxu0 %v830
    %881 = vmatprep.subr.mxu0 0.0
    %882 = vmatpush1.msra.mxu0 %v831
    %883 = vmatprep.subr.mxu0 0.0
    %884 = vmatpush1.msra.mxu0 %v832
    %885 = vmatprep.subr.mxu0 0.0
    %886 = vmatpush1.msra.mxu0 %v833
    %887 = vmatprep.subr.mxu0 0.0
    %888 = vmatpush1.msra.mxu0 %v834
    %889 = vmatprep.subr.mxu0 0.0
    %890 = vmatpush1.msra.mxu0 %v835
    %891 = vmatprep.subr.mxu0 0.0
    %892 = vmatpush1.msra.mxu0 %v836
    %893 = vmatprep.subr.mxu0 0.0
    %894 = vmatpush1.msra.mxu0 %v837
    %895 = vmatprep.subr.mxu0 0.0
    %896 = vmatpush1.msra.mxu0 %v838
    %897 = vmatprep.subr.mxu0 0.0
    %898 = vmatpush1.msra.mxu0 %v839
    %899 = vmatprep.subr.mxu0 0.0
    %900 = vmatpush1.msra.mxu0 %v840
    %901 = vmatprep.subr.mxu0 0.0
    %902 = vmatpush1.msra.mxu0 %v841
    %903 = vmatprep.subr.mxu0 0.0
    %904 = vmatpush1.msra.mxu0 %v842
    %905 = vmatprep.subr.mxu0 0.0
    %906 = vmatpush1.msra.mxu0 %v843
    %907 = vmatprep.subr.mxu0 0.0
    %908 = vmatpush1.msra.mxu0 %v844
    %909 = vmatprep.subr.mxu0 0.0
    %910 = vmatpush1.msra.mxu0 %v845
    %911 = vmatprep.subr.mxu0 0.0
    %912 = vmatpush1.msra.mxu0 %v846
    %913 = vmatprep.subr.mxu0 0.0
    %914 = vmatpush1.msra.mxu0 %v847
    %915 = vmatprep.subr.mxu0 0.0
    %916 = vmatpush1.msra.mxu0 %v848
    %917 = vmatprep.subr.mxu0 0.0
    %918 = vmatpush1.msra.mxu0 %v849
    %919 = vmatprep.subr.mxu0 0.0
    %920 = vmatpush1.msra.mxu0 %v850
    %921 = vmatprep.subr.mxu0 0.0
    %922 = vmatpush1.msra.mxu0 %v851
    %923 = vmatprep.subr.mxu0 0.0
    %924 = vmatpush1.msra.mxu0 %v852
    %925 = vmatprep.subr.mxu0 0.0
    %926 = vmatpush1.msra.mxu0 %v853
    %927 = vmatprep.subr.mxu0 0.0
    %928 = vmatpush1.msra.mxu0 %v854
    %929 = vmatprep.subr.mxu0 0.0
    %930 = vmatpush1.msra.mxu0 %v855
    %931 = vmatprep.subr.mxu0 0.0
    %932 = vmatpush1.msra.mxu0 %v856
    %933 = vmatprep.subr.mxu0 0.0
    %934 = vmatpush1.msra.mxu0 %v857
    %935 = vmatprep.subr.mxu0 0.0
    %936 = vmatpush1.msra.mxu0 %v858
    %937 = vmatprep.subr.mxu0 0.0
    %938 = vmatpush1.msra.mxu0 %v859
    %939 = vmatprep.mubr.f32.mxu0 %v826
    %940 = vmatmul.mubr.f32.gmra.mrb[0].mxu0 %v825
    %v941 = vpop.f32.mrb[0].mxu0
    %v942 = vadd.f32 0.0, %v941
    %v943 = vpop.f32.mrb[0].mxu0
    %944 = vdwg.mxu0
    %945 = vmatprep.subr.mxu0 0.0
    %946 = vmatpush1.msra.mxu0 %v860
    %947 = vmatprep.subr.mxu0 0.0
    %948 = vmatpush1.msra.mxu0 %v861
    %949 = vmatprep.subr.mxu0 0.0
    %950 = vmatpush1.msra.mxu0 %v862
    %951 = vmatprep.subr.mxu0 0.0
    %952 = vmatpush1.msra.mxu0 %v863
    %953 = vmatprep.subr.mxu0 0.0
    %954 = vmatpush1.msra.mxu0 %v864
    %955 = vmatprep.subr.mxu0 0.0
    %956 = vmatpush1.msra.mxu0 %v865
    %957 = vmatprep.subr.mxu0 0.0
    %958 = vmatpush1.msra.mxu0 %v866
    %959 = vmatprep.subr.mxu0 0.0
    %960 = vmatpush1.msra.mxu0 %v867
    %961 = vmatprep.subr.mxu0 0.0
    %962 = vmatpush1.msra.mxu0 %v868
    %963 = vmatprep.subr.mxu0 0.0
    %964 = vmatpush1.msra.mxu0 %v869
    %965 = vmatprep.subr.mxu0 0.0
    %966 = vmatpush1.msra.mxu0 %v870
    %967 = vmatprep.subr.mxu0 0.0
    %968 = vmatpush1.msra.mxu0 0.0
    %969 = vmatprep.subr.mxu0 0.0
    %970 = vmatpush1.msra.mxu0 0.0
    %971 = vmatprep.subr.mxu0 0.0
    %972 = vmatpush1.msra.mxu0 0.0
    %973 = vmatprep.subr.mxu0 0.0
    %974 = vmatpush1.msra.mxu0 0.0
    %975 = vmatprep.subr.mxu0 0.0
    %976 = vmatpush1.msra.mxu0 0.0
    %977 = vmatprep.subr.mxu0 0.0
    %978 = vmatpush1.msra.mxu0 0.0
    %979 = vmatprep.subr.mxu0 0.0
    %980 = vmatpush1.msra.mxu0 0.0
    %981 = vmatprep.subr.mxu0 0.0
    %982 = vmatpush1.msra.mxu0 0.0
    %983 = vmatprep.subr.mxu0 0.0
    %984 = vmatpush1.msra.mxu0 0.0
    %985 = vmatprep.subr.mxu0 0.0
    %986 = vmatpush1.msra.mxu0 0.0
    %987 = vmatprep.subr.mxu0 0.0
    %988 = vmatpush1.msra.mxu0 0.0
    %989 = vmatprep.subr.mxu0 0.0
    %990 = vmatpush1.msra.mxu0 0.0
    %991 = vmatprep.subr.mxu0 0.0
    %992 = vmatpush1.msra.mxu0 0.0
    %993 = vmatprep.subr.mxu0 0.0
    %994 = vmatpush1.msra.mxu0 0.0
    %995 = vmatprep.subr.mxu0 0.0
    %996 = vmatpush1.msra.mxu0 0.0
    %997 = vmatprep.subr.mxu0 0.0
    %998 = vmatpush1.msra.mxu0 0.0
    %999 = vmatprep.subr.mxu0 0.0
    %1000 = vmatpush1.msra.mxu0 0.0
    %1001 = vmatprep.subr.mxu0 0.0
    %1002 = vmatpush1.msra.mxu0 0.0
    %1003 = vmatprep.subr.mxu0 0.0
    %1004 = vmatpush1.msra.mxu0 0.0
    %1005 = vmatprep.subr.mxu0 0.0
    %1006 = vmatpush1.msra.mxu0 0.0
    %1007 = vmatprep.subr.mxu0 0.0
    %1008 = vmatpush1.msra.mxu0 0.0
    %1009 = vmatprep.mubr.f32.mxu0 0.0
    %1010 = vmatmul.mubr.f32.gmra.mrb[0].mxu0 %v873
    %v1011 = vpop.f32.mrb[0].mxu0
    %v1012 = vadd.f32 %v942, %v1011
    %v1013 = vpop.f32.mrb[0].mxu0
    %1014 = vdwg.mxu0
    %1015 = vst [vmem:[#allocation8] sm:$0xff] %v1012
    %v1016 = vld [vmem:[#allocation3 + $0x2] sm:$0x1]
    %v1017 = vld [vmem:[#allocation3 + $0x3] sm:$0x1]
    %v1018 = vmul.f32 %v1016, 16.0
    %v1019 = vsub.f32 %v1018, 0.5
    %v1020 = vfloor.f32 %v1019
    %v1021 = vsub.f32 %v1019, %v1020
    %v1022 = vmax.f32 %v1020, 0.0
    %v1023 = vmin.f32 %v1022, 15.0
    %v1024 = vadd.f32 %v1020, 1.0
    %v1025 = vmax.f32 %v1024, 0.0
    %v1026 = vmin.f32 %v1025, 15.0
    %v1027 = vlaneseq
    %v1028 = vshrl.u32 %v1027, 7
    %v1029 = vsub.s32 0, %v1028
    %v1030 = vrot.slane %v1023, %v1029
    %vm1031 = vcmp.eq.f32.partialorder %v47, %v1030
    %vm1032 = vcmp.eq.f32.partialorder %v48, %v1030
    %v1033 = vsub.f32 1.0, %v1021
    %v1034 = vlaneseq
    %v1035 = vshrl.u32 %v1034, 7
    %v1036 = vsub.s32 0, %v1035
    %v1037 = vrot.slane %v1033, %v1036
    %v1038 = vsel %vm1031, %v1037, 0.0
    %v1039 = vsel %vm1032, %v1037, 0.0
    %v1040 = vlaneseq
    %v1041 = vshrl.u32 %v1040, 7
    %v1042 = vsub.s32 0, %v1041
    %v1043 = vrot.slane %v1026, %v1042
    %vm1044 = vcmp.eq.f32.partialorder %v47, %v1043
    %vm1045 = vcmp.eq.f32.partialorder %v48, %v1043
    %v1046 = vlaneseq
    %v1047 = vshrl.u32 %v1046, 7
    %v1048 = vsub.s32 0, %v1047
    %v1049 = vrot.slane %v1021, %v1048
    %v1050 = vsel %vm1044, %v1049, 0.0
    %v1051 = vsel %vm1045, %v1049, 0.0
    %v1052 = vadd.f32 %v1038, %v1050
    %v1053 = vadd.f32 %v1039, %v1051
    %v1054 = vmul.f32 %v1052, %v102
    %v1055 = vmul.f32 %v1053, %v102
    %v1056 = vmul.f32 %v1017, 16.0
    %v1057 = vsub.f32 %v1056, 0.5
    %v1058 = vfloor.f32 %v1057
    %v1059 = vsub.f32 %v1057, %v1058
    %v1060 = vmax.f32 %v1058, 0.0
    %v1061 = vmin.f32 %v1060, 15.0
    %v1062 = vadd.f32 %v1058, 1.0
    %v1063 = vmax.f32 %v1062, 0.0
    %v1064 = vmin.f32 %v1063, 15.0
    %v1065 = vlaneseq
    %v1066 = vshrl.u32 %v1065, 7
    %v1067 = vsub.s32 0, %v1066
    %v1068 = vrot.slane %v1061, %v1067
    %vm1069 = vcmp.eq.f32.partialorder %v47, %v1068
    %vm1070 = vcmp.eq.f32.partialorder %v48, %v1068
    %v1071 = vsub.f32 1.0, %v1059
    %v1072 = vlaneseq
    %v1073 = vshrl.u32 %v1072, 7
    %v1074 = vsub.s32 0, %v1073
    %v1075 = vrot.slane %v1071, %v1074
    %v1076 = vsel %vm1069, %v1075, 0.0
    %v1077 = vsel %vm1070, %v1075, 0.0
    %v1078 = vlaneseq
    %v1079 = vshrl.u32 %v1078, 7
    %v1080 = vsub.s32 0, %v1079
    %v1081 = vrot.slane %v1064, %v1080
    %vm1082 = vcmp.eq.f32.partialorder %v47, %v1081
    %vm1083 = vcmp.eq.f32.partialorder %v48, %v1081
    %v1084 = vlaneseq
    %v1085 = vshrl.u32 %v1084, 7
    %v1086 = vsub.s32 0, %v1085
    %v1087 = vrot.slane %v1059, %v1086
    %v1088 = vsel %vm1082, %v1087, 0.0
    %v1089 = vsel %vm1083, %v1087, 0.0
    %v1090 = vadd.f32 %v1076, %v1088
    %v1091 = vadd.f32 %v1077, %v1089
    %v1094 = vcombine.high %v1090, %v1090
    %v1096 = vunpack.c.l.s4 1966171168
    %v1097 = vunpack.c.0.s8 %v1096
    %v1098 = vlaneseq
    %v1099 = vshrl.u32 %v1098, 7
    %v1100 = vsub.s32 %v1097, %v1099
    %v1101 = vrot.slane %v1090, %v1100
    %v1103 = vunpack.c.l.s4 1966171168
    %v1104 = vunpack.c.0.s8 %v1103
    %v1105 = vlaneseq
    %v1106 = vshrl.u32 %v1105, 7
    %v1107 = vsub.s32 %v1104, %v1106
    %v1108 = vrot.slane %v1094, %v1107
    %v1109 = vcombine.high %v1101, %v1101
    %v1110 = vcombine.high %v1108, %v1108
    %v1112 = vunpack.c.l.s4 1966171168
    %v1113 = vunpack.c.0.s8 %v1112
    %v1114 = vlaneseq
    %v1115 = vshrl.u32 %v1114, 7
    %v1116 = vsub.s32 %v1113, %v1115
    %v1117 = vrot.slane %v1101, %v1116
    %v1119 = vunpack.c.l.s4 1966171168
    %v1120 = vunpack.c.0.s8 %v1119
    %v1121 = vlaneseq
    %v1122 = vshrl.u32 %v1121, 7
    %v1123 = vsub.s32 %v1120, %v1122
    %v1124 = vrot.slane %v1108, %v1123
    %v1126 = vunpack.c.l.s4 1966171168
    %v1127 = vunpack.c.0.s8 %v1126
    %v1128 = vlaneseq
    %v1129 = vshrl.u32 %v1128, 7
    %v1130 = vsub.s32 %v1127, %v1129
    %v1131 = vrot.slane %v1109, %v1130
    %v1133 = vunpack.c.l.s4 1966171168
    %v1134 = vunpack.c.0.s8 %v1133
    %v1135 = vlaneseq
    %v1136 = vshrl.u32 %v1135, 7
    %v1137 = vsub.s32 %v1134, %v1136
    %v1138 = vrot.slane %v1110, %v1137
    %v1139 = vcombine.high %v1117, %v1117
    %v1140 = vcombine.high %v1124, %v1124
    %v1141 = vcombine.high %v1131, %v1131
    %v1142 = vcombine.high %v1138, %v1138
    %v1143 = vcombine.high %v1091, %v1091
    %v1145 = vunpack.c.l.s4 1966171168
    %v1146 = vunpack.c.0.s8 %v1145
    %v1147 = vlaneseq
    %v1148 = vshrl.u32 %v1147, 7
    %v1149 = vsub.s32 %v1146, %v1148
    %v1150 = vrot.slane %v1091, %v1149
    %v1152 = vunpack.c.l.s4 1966171168
    %v1153 = vunpack.c.0.s8 %v1152
    %v1154 = vlaneseq
    %v1155 = vshrl.u32 %v1154, 7
    %v1156 = vsub.s32 %v1153, %v1155
    %v1157 = vrot.slane %v1143, %v1156
    %v1158 = vcombine.high %v1150, %v1150
    %v1159 = vcombine.high %v1157, %v1157
    %v1161 = vunpack.c.l.s4 1966171168
    %v1162 = vunpack.c.0.s8 %v1161
    %v1163 = vlaneseq
    %v1164 = vshrl.u32 %v1163, 7
    %v1165 = vsub.s32 %v1162, %v1164
    %v1166 = vrot.slane %v1150, %v1165
    %v1168 = vunpack.c.l.s4 1966171168
    %v1169 = vunpack.c.0.s8 %v1168
    %v1170 = vlaneseq
    %v1171 = vshrl.u32 %v1170, 7
    %v1172 = vsub.s32 %v1169, %v1171
    %v1173 = vrot.slane %v1157, %v1172
    %v1175 = vunpack.c.l.s4 1966171168
    %v1176 = vunpack.c.0.s8 %v1175
    %v1177 = vlaneseq
    %v1178 = vshrl.u32 %v1177, 7
    %v1179 = vsub.s32 %v1176, %v1178
    %v1180 = vrot.slane %v1158, %v1179
    %v1182 = vunpack.c.l.s4 1966171168
    %v1183 = vunpack.c.0.s8 %v1182
    %v1184 = vlaneseq
    %v1185 = vshrl.u32 %v1184, 7
    %v1186 = vsub.s32 %v1183, %v1185
    %v1187 = vrot.slane %v1159, %v1186
    %v1188 = vcombine.high %v1166, %v1166
    %v1189 = vcombine.high %v1173, %v1173
    %v1190 = vcombine.high %v1180, %v1180
    %v1191 = vcombine.high %v1187, %v1187
    %v1192 = vlaneseq
    %v1193 = vshrl.u32 %v1192, 7
    %v1194 = vsub.s32 0, %v1193
    %v1195 = vrot.slane %v1117, %v1194
    %v1196 = vlaneseq
    %v1197 = vshrl.u32 %v1196, 7
    %v1198 = vsub.s32 0, %v1197
    %v1199 = vrot.slane %v1131, %v1198
    %v1200 = vlaneseq
    %v1201 = vshrl.u32 %v1200, 7
    %v1202 = vsub.s32 0, %v1201
    %v1203 = vrot.slane %v1139, %v1202
    %v1204 = vlaneseq
    %v1205 = vshrl.u32 %v1204, 7
    %v1206 = vsub.s32 0, %v1205
    %v1207 = vrot.slane %v1141, %v1206
    %v1208 = vlaneseq
    %v1209 = vshrl.u32 %v1208, 7
    %v1210 = vsub.s32 0, %v1209
    %v1211 = vrot.slane %v1124, %v1210
    %v1212 = vlaneseq
    %v1213 = vshrl.u32 %v1212, 7
    %v1214 = vsub.s32 0, %v1213
    %v1215 = vrot.slane %v1138, %v1214
    %v1216 = vlaneseq
    %v1217 = vshrl.u32 %v1216, 7
    %v1218 = vsub.s32 0, %v1217
    %v1219 = vrot.slane %v1140, %v1218
    %v1220 = vlaneseq
    %v1221 = vshrl.u32 %v1220, 7
    %v1222 = vsub.s32 0, %v1221
    %v1223 = vrot.slane %v1142, %v1222
    %v1224 = vlaneseq
    %v1225 = vshrl.u32 %v1224, 7
    %v1226 = vsub.s32 0, %v1225
    %v1227 = vrot.slane %v1166, %v1226
    %v1228 = vlaneseq
    %v1229 = vshrl.u32 %v1228, 7
    %v1230 = vsub.s32 0, %v1229
    %v1231 = vrot.slane %v1180, %v1230
    %v1232 = vlaneseq
    %v1233 = vshrl.u32 %v1232, 7
    %v1234 = vsub.s32 0, %v1233
    %v1235 = vrot.slane %v1188, %v1234
    %v1236 = vlaneseq
    %v1237 = vshrl.u32 %v1236, 7
    %v1238 = vsub.s32 0, %v1237
    %v1239 = vrot.slane %v1190, %v1238
    %v1240 = vlaneseq
    %v1241 = vshrl.u32 %v1240, 7
    %v1242 = vsub.s32 0, %v1241
    %v1243 = vrot.slane %v1173, %v1242
    %v1244 = vlaneseq
    %v1245 = vshrl.u32 %v1244, 7
    %v1246 = vsub.s32 0, %v1245
    %v1247 = vrot.slane %v1187, %v1246
    %v1248 = vlaneseq
    %v1249 = vshrl.u32 %v1248, 7
    %v1250 = vsub.s32 0, %v1249
    %v1251 = vrot.slane %v1189, %v1250
    %v1252 = vlaneseq
    %v1253 = vshrl.u32 %v1252, 7
    %v1254 = vsub.s32 0, %v1253
    %v1255 = vrot.slane %v1191, %v1254
    %v1272 = vmul.f32 %v1195, %v1054
    %v1273 = vmul.f32 %v1195, %v1055
    %v1274 = vmul.f32 %v1199, %v1054
    %v1275 = vmul.f32 %v1199, %v1055
    %v1276 = vmul.f32 %v1203, %v1054
    %v1277 = vmul.f32 %v1203, %v1055
    %v1278 = vmul.f32 %v1207, %v1054
    %v1279 = vmul.f32 %v1207, %v1055
    %v1280 = vmul.f32 %v1211, %v1054
    %v1281 = vmul.f32 %v1211, %v1055
    %v1282 = vmul.f32 %v1215, %v1054
    %v1283 = vmul.f32 %v1215, %v1055
    %v1284 = vmul.f32 %v1219, %v1054
    %v1285 = vmul.f32 %v1219, %v1055
    %v1286 = vmul.f32 %v1223, %v1054
    %v1287 = vmul.f32 %v1223, %v1055
    %v1288 = vmul.f32 %v1227, %v1054
    %v1289 = vmul.f32 %v1227, %v1055
    %v1290 = vmul.f32 %v1231, %v1054
    %v1291 = vmul.f32 %v1231, %v1055
    %v1292 = vmul.f32 %v1235, %v1054
    %v1293 = vmul.f32 %v1235, %v1055
    %v1294 = vmul.f32 %v1239, %v1054
    %v1295 = vmul.f32 %v1239, %v1055
    %v1296 = vmul.f32 %v1243, %v1054
    %v1297 = vmul.f32 %v1243, %v1055
    %v1298 = vmul.f32 %v1247, %v1054
    %v1299 = vmul.f32 %v1247, %v1055
    %v1300 = vmul.f32 %v1251, %v1054
    %v1301 = vmul.f32 %v1251, %v1055
    %v1302 = vmul.f32 %v1255, %v1054
    %v1303 = vmul.f32 %v1255, %v1055
    %1304 = vst [vmem:[#allocation2] sm:$0xff] %v1272
    %1305 = vst [vmem:[#allocation2 + $0x8] sm:$0xff] %v1273
    %1306 = vst [vmem:[#allocation2 + $0x10] sm:$0xff] %v1274
    %1307 = vst [vmem:[#allocation2 + $0x18] sm:$0xff] %v1275
    %1308 = vst [vmem:[#allocation2 + $0x20] sm:$0xff] %v1276
    %1309 = vst [vmem:[#allocation2 + $0x28] sm:$0xff] %v1277
    %1310 = vst [vmem:[#allocation2 + $0x30] sm:$0xff] %v1278
    %1311 = vst [vmem:[#allocation2 + $0x38] sm:$0xff] %v1279
    %1312 = vst [vmem:[#allocation2 + $0x40] sm:$0xff] %v1280
    %1313 = vst [vmem:[#allocation2 + $0x48] sm:$0xff] %v1281
    %1314 = vst [vmem:[#allocation2 + $0x50] sm:$0xff] %v1282
    %1315 = vst [vmem:[#allocation2 + $0x58] sm:$0xff] %v1283
    %1316 = vst [vmem:[#allocation2 + $0x60] sm:$0xff] %v1284
    %1317 = vst [vmem:[#allocation2 + $0x68] sm:$0xff] %v1285
    %1318 = vst [vmem:[#allocation2 + $0x70] sm:$0xff] %v1286
    %1319 = vst [vmem:[#allocation2 + $0x78] sm:$0xff] %v1287
    %1320 = vst [vmem:[#allocation2 + $0x80] sm:$0xff] %v1288
    %1321 = vst [vmem:[#allocation2 + $0x88] sm:$0xff] %v1289
    %1322 = vst [vmem:[#allocation2 + $0x90] sm:$0xff] %v1290
    %1323 = vst [vmem:[#allocation2 + $0x98] sm:$0xff] %v1291
    %1324 = vst [vmem:[#allocation2 + $0xa0] sm:$0xff] %v1292
    %1325 = vst [vmem:[#allocation2 + $0xa8] sm:$0xff] %v1293
    %1326 = vst [vmem:[#allocation2 + $0xb0] sm:$0xff] %v1294
    %1327 = vst [vmem:[#allocation2 + $0xb8] sm:$0xff] %v1295
    %1328 = vst [vmem:[#allocation2 + $0xc0] sm:$0xff] %v1296
    %1329 = vst [vmem:[#allocation2 + $0xc8] sm:$0xff] %v1297
    %1330 = vst [vmem:[#allocation2 + $0xd0] sm:$0xff] %v1298
    %1331 = vst [vmem:[#allocation2 + $0xd8] sm:$0xff] %v1299
    %1332 = vst [vmem:[#allocation2 + $0xe0] sm:$0xff] %v1300
    %1333 = vst [vmem:[#allocation2 + $0xe8] sm:$0xff] %v1301
    %1334 = vst [vmem:[#allocation2 + $0xf0] sm:$0xff] %v1302
    %1335 = vst [vmem:[#allocation2 + $0xf8] sm:$0xff] %v1303
    %v1336 = vmul.f32 %v1016, 8.0
    %v1337 = vsub.f32 %v1336, 0.5
    %v1338 = vfloor.f32 %v1337
    %v1339 = vsub.f32 %v1337, %v1338
    %v1340 = vmax.f32 %v1338, 0.0
    %v1341 = vmin.f32 %v1340, 7.0
    %v1342 = vadd.f32 %v1338, 1.0
    %v1343 = vmax.f32 %v1342, 0.0
    %v1344 = vmin.f32 %v1343, 7.0
    %v1345 = vlaneseq
    %v1346 = vshrl.u32 %v1345, 7
    %v1347 = vsub.s32 0, %v1346
    %v1348 = vrot.slane %v1341, %v1347
    %vm1349 = vcmp.eq.f32.partialorder %v47, %v1348
    %v1350 = vsub.f32 1.0, %v1339
    %v1351 = vlaneseq
    %v1352 = vshrl.u32 %v1351, 7
    %v1353 = vsub.s32 0, %v1352
    %v1354 = vrot.slane %v1350, %v1353
    %v1355 = vsel %vm1349, %v1354, 0.0
    %v1356 = vlaneseq
    %v1357 = vshrl.u32 %v1356, 7
    %v1358 = vsub.s32 0, %v1357
    %v1359 = vrot.slane %v1344, %v1358
    %vm1360 = vcmp.eq.f32.partialorder %v47, %v1359
    %v1361 = vlaneseq
    %v1362 = vshrl.u32 %v1361, 7
    %v1363 = vsub.s32 0, %v1362
    %v1364 = vrot.slane %v1339, %v1363
    %v1365 = vsel %vm1360, %v1364, 0.0
    %v1366 = vadd.f32 %v1355, %v1365
    %v1367 = vmul.f32 %v1366, %v419
    %v1368 = vmul.f32 %v1017, 8.0
    %v1369 = vsub.f32 %v1368, 0.5
    %v1370 = vfloor.f32 %v1369
    %v1371 = vsub.f32 %v1369, %v1370
    %v1372 = vmax.f32 %v1370, 0.0
    %v1373 = vmin.f32 %v1372, 7.0
    %v1374 = vadd.f32 %v1370, 1.0
    %v1375 = vmax.f32 %v1374, 0.0
    %v1376 = vmin.f32 %v1375, 7.0
    %v1377 = vlaneseq
    %v1378 = vshrl.u32 %v1377, 7
    %v1379 = vsub.s32 0, %v1378
    %v1380 = vrot.slane %v1373, %v1379
    %vm1381 = vcmp.eq.f32.partialorder %v47, %v1380
    %v1382 = vsub.f32 1.0, %v1371
    %v1383 = vlaneseq
    %v1384 = vshrl.u32 %v1383, 7
    %v1385 = vsub.s32 0, %v1384
    %v1386 = vrot.slane %v1382, %v1385
    %v1387 = vsel %vm1381, %v1386, 0.0
    %v1388 = vlaneseq
    %v1389 = vshrl.u32 %v1388, 7
    %v1390 = vsub.s32 0, %v1389
    %v1391 = vrot.slane %v1376, %v1390
    %vm1392 = vcmp.eq.f32.partialorder %v47, %v1391
    %v1393 = vlaneseq
    %v1394 = vshrl.u32 %v1393, 7
    %v1395 = vsub.s32 0, %v1394
    %v1396 = vrot.slane %v1371, %v1395
    %v1397 = vsel %vm1392, %v1396, 0.0
    %v1398 = vadd.f32 %v1387, %v1397
    %v1400 = vcombine.high %v1398, %v1398
    %v1402 = vunpack.c.l.s4 1966171168
    %v1403 = vunpack.c.0.s8 %v1402
    %v1404 = vlaneseq
    %v1405 = vshrl.u32 %v1404, 7
    %v1406 = vsub.s32 %v1403, %v1405
    %v1407 = vrot.slane %v1398, %v1406
    %v1409 = vunpack.c.l.s4 1966171168
    %v1410 = vunpack.c.0.s8 %v1409
    %v1411 = vlaneseq
    %v1412 = vshrl.u32 %v1411, 7
    %v1413 = vsub.s32 %v1410, %v1412
    %v1414 = vrot.slane %v1400, %v1413
    %v1415 = vcombine.high %v1407, %v1407
    %v1416 = vcombine.high %v1414, %v1414
    %v1418 = vunpack.c.l.s4 1966171168
    %v1419 = vunpack.c.0.s8 %v1418
    %v1420 = vlaneseq
    %v1421 = vshrl.u32 %v1420, 7
    %v1422 = vsub.s32 %v1419, %v1421
    %v1423 = vrot.slane %v1407, %v1422
    %v1425 = vunpack.c.l.s4 1966171168
    %v1426 = vunpack.c.0.s8 %v1425
    %v1427 = vlaneseq
    %v1428 = vshrl.u32 %v1427, 7
    %v1429 = vsub.s32 %v1426, %v1428
    %v1430 = vrot.slane %v1414, %v1429
    %v1432 = vunpack.c.l.s4 1966171168
    %v1433 = vunpack.c.0.s8 %v1432
    %v1434 = vlaneseq
    %v1435 = vshrl.u32 %v1434, 7
    %v1436 = vsub.s32 %v1433, %v1435
    %v1437 = vrot.slane %v1415, %v1436
    %v1439 = vunpack.c.l.s4 1966171168
    %v1440 = vunpack.c.0.s8 %v1439
    %v1441 = vlaneseq
    %v1442 = vshrl.u32 %v1441, 7
    %v1443 = vsub.s32 %v1440, %v1442
    %v1444 = vrot.slane %v1416, %v1443
    %v1445 = vcombine.high %v1423, %v1423
    %v1446 = vcombine.high %v1430, %v1430
    %v1447 = vcombine.high %v1437, %v1437
    %v1448 = vcombine.high %v1444, %v1444
    %v1449 = vlaneseq
    %v1450 = vshrl.u32 %v1449, 7
    %v1451 = vsub.s32 0, %v1450
    %v1452 = vrot.slane %v1423, %v1451
    %v1453 = vlaneseq
    %v1454 = vshrl.u32 %v1453, 7
    %v1455 = vsub.s32 0, %v1454
    %v1456 = vrot.slane %v1437, %v1455
    %v1457 = vlaneseq
    %v1458 = vshrl.u32 %v1457, 7
    %v1459 = vsub.s32 0, %v1458
    %v1460 = vrot.slane %v1445, %v1459
    %v1461 = vlaneseq
    %v1462 = vshrl.u32 %v1461, 7
    %v1463 = vsub.s32 0, %v1462
    %v1464 = vrot.slane %v1447, %v1463
    %v1465 = vlaneseq
    %v1466 = vshrl.u32 %v1465, 7
    %v1467 = vsub.s32 0, %v1466
    %v1468 = vrot.slane %v1430, %v1467
    %v1469 = vlaneseq
    %v1470 = vshrl.u32 %v1469, 7
    %v1471 = vsub.s32 0, %v1470
    %v1472 = vrot.slane %v1444, %v1471
    %v1473 = vlaneseq
    %v1474 = vshrl.u32 %v1473, 7
    %v1475 = vsub.s32 0, %v1474
    %v1476 = vrot.slane %v1446, %v1475
    %v1477 = vlaneseq
    %v1478 = vshrl.u32 %v1477, 7
    %v1479 = vsub.s32 0, %v1478
    %v1480 = vrot.slane %v1448, %v1479
    %v1489 = vmul.f32 %v1452, %v1367
    %v1490 = vmul.f32 %v1456, %v1367
    %v1491 = vmul.f32 %v1460, %v1367
    %v1492 = vmul.f32 %v1464, %v1367
    %v1493 = vmul.f32 %v1468, %v1367
    %v1494 = vmul.f32 %v1472, %v1367
    %v1495 = vmul.f32 %v1476, %v1367
    %v1496 = vmul.f32 %v1480, %v1367
    %1497 = vst [vmem:[#allocation2 + $0x100] sm:$0xff] %v1489
    %1498 = vst [vmem:[#allocation2 + $0x108] sm:$0xff] %v1490
    %1499 = vst [vmem:[#allocation2 + $0x110] sm:$0xff] %v1491
    %1500 = vst [vmem:[#allocation2 + $0x118] sm:$0xff] %v1492
    %1501 = vst [vmem:[#allocation2 + $0x120] sm:$0xff] %v1493
    %1502 = vst [vmem:[#allocation2 + $0x128] sm:$0xff] %v1494
    %1503 = vst [vmem:[#allocation2 + $0x130] sm:$0xff] %v1495
    %1504 = vst [vmem:[#allocation2 + $0x138] sm:$0xff] %v1496
    %v1505 = vmul.f32 %v1016, 4.0
    %v1506 = vsub.f32 %v1505, 0.5
    %v1507 = vfloor.f32 %v1506
    %v1508 = vsub.f32 %v1506, %v1507
    %v1509 = vmax.f32 %v1507, 0.0
    %v1510 = vmin.f32 %v1509, 3.0
    %v1511 = vadd.f32 %v1507, 1.0
    %v1512 = vmax.f32 %v1511, 0.0
    %v1513 = vmin.f32 %v1512, 3.0
    %v1514 = vlaneseq
    %v1515 = vshrl.u32 %v1514, 7
    %v1516 = vsub.s32 0, %v1515
    %v1517 = vrot.slane %v1510, %v1516
    %vm1518 = vcmp.eq.f32.partialorder %v47, %v1517
    %v1519 = vsub.f32 1.0, %v1508
    %v1520 = vlaneseq
    %v1521 = vshrl.u32 %v1520, 7
    %v1522 = vsub.s32 0, %v1521
    %v1523 = vrot.slane %v1519, %v1522
    %v1524 = vsel %vm1518, %v1523, 0.0
    %v1525 = vlaneseq
    %v1526 = vshrl.u32 %v1525, 7
    %v1527 = vsub.s32 0, %v1526
    %v1528 = vrot.slane %v1513, %v1527
    %vm1529 = vcmp.eq.f32.partialorder %v47, %v1528
    %v1530 = vlaneseq
    %v1531 = vshrl.u32 %v1530, 7
    %v1532 = vsub.s32 0, %v1531
    %v1533 = vrot.slane %v1508, %v1532
    %v1534 = vsel %vm1529, %v1533, 0.0
    %v1535 = vadd.f32 %v1524, %v1534
    %v1536 = vmul.f32 %v1535, %v592
    %v1537 = vmul.f32 %v1017, 4.0
    %v1538 = vsub.f32 %v1537, 0.5
    %v1539 = vfloor.f32 %v1538
    %v1540 = vsub.f32 %v1538, %v1539
    %v1541 = vmax.f32 %v1539, 0.0
    %v1542 = vmin.f32 %v1541, 3.0
    %v1543 = vadd.f32 %v1539, 1.0
    %v1544 = vmax.f32 %v1543, 0.0
    %v1545 = vmin.f32 %v1544, 3.0
    %v1546 = vlaneseq
    %v1547 = vshrl.u32 %v1546, 7
    %v1548 = vsub.s32 0, %v1547
    %v1549 = vrot.slane %v1542, %v1548
    %vm1550 = vcmp.eq.f32.partialorder %v47, %v1549
    %v1551 = vsub.f32 1.0, %v1540
    %v1552 = vlaneseq
    %v1553 = vshrl.u32 %v1552, 7
    %v1554 = vsub.s32 0, %v1553
    %v1555 = vrot.slane %v1551, %v1554
    %v1556 = vsel %vm1550, %v1555, 0.0
    %v1557 = vlaneseq
    %v1558 = vshrl.u32 %v1557, 7
    %v1559 = vsub.s32 0, %v1558
    %v1560 = vrot.slane %v1545, %v1559
    %vm1561 = vcmp.eq.f32.partialorder %v47, %v1560
    %v1562 = vlaneseq
    %v1563 = vshrl.u32 %v1562, 7
    %v1564 = vsub.s32 0, %v1563
    %v1565 = vrot.slane %v1540, %v1564
    %v1566 = vsel %vm1561, %v1565, 0.0
    %v1567 = vadd.f32 %v1556, %v1566
    %v1570 = vunpack.c.l.s4 1966171168
    %v1571 = vunpack.c.0.s8 %v1570
    %v1572 = vlaneseq
    %v1573 = vshrl.u32 %v1572, 7
    %v1574 = vsub.s32 %v1571, %v1573
    %v1575 = vrot.slane %v1567, %v1574
    %v1576 = vcombine.high %v1575, %v1575
    %v1578 = vunpack.c.l.s4 1966171168
    %v1579 = vunpack.c.0.s8 %v1578
    %v1580 = vlaneseq
    %v1581 = vshrl.u32 %v1580, 7
    %v1582 = vsub.s32 %v1579, %v1581
    %v1583 = vrot.slane %v1575, %v1582
    %v1585 = vunpack.c.l.s4 1966171168
    %v1586 = vunpack.c.0.s8 %v1585
    %v1587 = vlaneseq
    %v1588 = vshrl.u32 %v1587, 7
    %v1589 = vsub.s32 %v1586, %v1588
    %v1590 = vrot.slane %v1576, %v1589
    %v1591 = vcombine.high %v1583, %v1583
    %v1592 = vcombine.high %v1590, %v1590
    %v1593 = vlaneseq
    %v1594 = vshrl.u32 %v1593, 7
    %v1595 = vsub.s32 0, %v1594
    %v1596 = vrot.slane %v1583, %v1595
    %v1597 = vlaneseq
    %v1598 = vshrl.u32 %v1597, 7
    %v1599 = vsub.s32 0, %v1598
    %v1600 = vrot.slane %v1590, %v1599
    %v1601 = vlaneseq
    %v1602 = vshrl.u32 %v1601, 7
    %v1603 = vsub.s32 0, %v1602
    %v1604 = vrot.slane %v1591, %v1603
    %v1605 = vlaneseq
    %v1606 = vshrl.u32 %v1605, 7
    %v1607 = vsub.s32 0, %v1606
    %v1608 = vrot.slane %v1592, %v1607
    %v1613 = vmul.f32 %v1596, %v1536
    %v1614 = vmul.f32 %v1600, %v1536
    %v1615 = vmul.f32 %v1604, %v1536
    %v1616 = vmul.f32 %v1608, %v1536
    %v1621 = vcombine.low %v1613, %v1614
    %v1622 = vcombine.low %v1615, %v1616
    %1625 = vst [vmem:[#allocation2 + $0x140] sm:$0xff] %v1621
    %1626 = vst [vmem:[#allocation2 + $0x148] sm:$0xff] %v1622
    %v1627 = vmul.f32 %v1016, 2.0
    %v1628 = vsub.f32 %v1627, 0.5
    %v1629 = vfloor.f32 %v1628
    %v1630 = vsub.f32 %v1628, %v1629
    %v1631 = vmax.f32 %v1629, 0.0
    %v1632 = vmin.f32 %v1631, 1.0
    %v1633 = vadd.f32 %v1629, 1.0
    %v1634 = vmax.f32 %v1633, 0.0
    %v1635 = vmin.f32 %v1634, 1.0
    %v1636 = vlaneseq
    %v1637 = vshrl.u32 %v1636, 7
    %v1638 = vsub.s32 0, %v1637
    %v1639 = vrot.slane %v1632, %v1638
    %vm1640 = vcmp.eq.f32.partialorder %v47, %v1639
    %v1641 = vsub.f32 1.0, %v1630
    %v1642 = vlaneseq
    %v1643 = vshrl.u32 %v1642, 7
    %v1644 = vsub.s32 0, %v1643
    %v1645 = vrot.slane %v1641, %v1644
    %v1646 = vsel %vm1640, %v1645, 0.0
    %v1647 = vlaneseq
    %v1648 = vshrl.u32 %v1647, 7
    %v1649 = vsub.s32 0, %v1648
    %v1650 = vrot.slane %v1635, %v1649
    %vm1651 = vcmp.eq.f32.partialorder %v47, %v1650
    %v1652 = vlaneseq
    %v1653 = vshrl.u32 %v1652, 7
    %v1654 = vsub.s32 0, %v1653
    %v1655 = vrot.slane %v1630, %v1654
    %v1656 = vsel %vm1651, %v1655, 0.0
    %v1657 = vadd.f32 %v1646, %v1656
    %v1658 = vmul.f32 %v1657, %v718
    %v1659 = vmul.f32 %v1017, 2.0
    %v1660 = vsub.f32 %v1659, 0.5
    %v1661 = vfloor.f32 %v1660
    %v1662 = vsub.f32 %v1660, %v1661
    %v1663 = vmax.f32 %v1661, 0.0
    %v1664 = vmin.f32 %v1663, 1.0
    %v1665 = vadd.f32 %v1661, 1.0
    %v1666 = vmax.f32 %v1665, 0.0
    %v1667 = vmin.f32 %v1666, 1.0
    %v1668 = vlaneseq
    %v1669 = vshrl.u32 %v1668, 7
    %v1670 = vsub.s32 0, %v1669
    %v1671 = vrot.slane %v1664, %v1670
    %vm1672 = vcmp.eq.f32.partialorder %v47, %v1671
    %v1673 = vsub.f32 1.0, %v1662
    %v1674 = vlaneseq
    %v1675 = vshrl.u32 %v1674, 7
    %v1676 = vsub.s32 0, %v1675
    %v1677 = vrot.slane %v1673, %v1676
    %v1678 = vsel %vm1672, %v1677, 0.0
    %v1679 = vlaneseq
    %v1680 = vshrl.u32 %v1679, 7
    %v1681 = vsub.s32 0, %v1680
    %v1682 = vrot.slane %v1667, %v1681
    %vm1683 = vcmp.eq.f32.partialorder %v47, %v1682
    %v1684 = vlaneseq
    %v1685 = vshrl.u32 %v1684, 7
    %v1686 = vsub.s32 0, %v1685
    %v1687 = vrot.slane %v1662, %v1686
    %v1688 = vsel %vm1683, %v1687, 0.0
    %v1689 = vadd.f32 %v1678, %v1688
    %v1690 = vsel %vm751, %v1689, 0.0
    %v1693 = vunpack.c.l.s4 1966171168
    %v1694 = vunpack.c.0.s8 %v1693
    %v1695 = vlaneseq
    %v1696 = vshrl.u32 %v1695, 7
    %v1697 = vsub.s32 %v1694, %v1696
    %v1698 = vrot.slane %v1690, %v1697
    %v1699 = vcombine.high %v1698, %v1698
    %v1701 = vunpack.c.l.s4 1966171168
    %v1702 = vunpack.c.0.s8 %v1701
    %v1703 = vlaneseq
    %v1704 = vshrl.u32 %v1703, 7
    %v1705 = vsub.s32 %v1702, %v1704
    %v1706 = vrot.slane %v1698, %v1705
    %v1708 = vunpack.c.l.s4 1966171168
    %v1709 = vunpack.c.0.s8 %v1708
    %v1710 = vlaneseq
    %v1711 = vshrl.u32 %v1710, 7
    %v1712 = vsub.s32 %v1709, %v1711
    %v1713 = vrot.slane %v1699, %v1712
    %v1714 = vcombine.high %v1706, %v1706
    %v1715 = vcombine.high %v1713, %v1713
    %v1716 = vlaneseq
    %v1717 = vshrl.u32 %v1716, 7
    %v1718 = vsub.s32 0, %v1717
    %v1719 = vrot.slane %v1706, %v1718
    %v1720 = vlaneseq
    %v1721 = vshrl.u32 %v1720, 7
    %v1722 = vsub.s32 0, %v1721
    %v1723 = vrot.slane %v1713, %v1722
    %v1724 = vlaneseq
    %v1725 = vshrl.u32 %v1724, 7
    %v1726 = vsub.s32 0, %v1725
    %v1727 = vrot.slane %v1714, %v1726
    %v1728 = vlaneseq
    %v1729 = vshrl.u32 %v1728, 7
    %v1730 = vsub.s32 0, %v1729
    %v1731 = vrot.slane %v1715, %v1730
    %v1736 = vmul.f32 %v1719, %v1658
    %v1737 = vmul.f32 %v1723, %v1658
    %v1738 = vmul.f32 %v1727, %v1658
    %v1739 = vmul.f32 %v1731, %v1658
    %v1744 = vcombine.low %v1736, %v1737
    %v1745 = vcombine.low %v1738, %v1739
    %v1747 = vunpack.c.l.s4 1983009808
    %v1748 = vunpack.c.0.s8 %v1747
    %v1749 = vlaneseq
    %v1750 = vshrl.u32 %v1749, 7
    %v1751 = vsub.s32 %v1748, %v1750
    %v1752 = vrot.slane %v1744, %v1751
    %v1754 = vunpack.c.l.s4 1983009808
    %v1755 = vunpack.c.0.s8 %v1754
    %v1756 = vlaneseq
    %v1757 = vshrl.u32 %v1756, 7
    %v1758 = vsub.s32 %v1755, %v1757
    %v1759 = vrot.slane %v1745, %v1758
    %v1760 = vcombine.low %v1752, %v1759
    %1762 = vst [vmem:[#allocation2 + $0x150] sm:$0xff] %v1760
    %s1763 = scalar_lea.vmem [#allocation6], 24
    %v1764 = vld [vmem:[%s1763] sm:$0xff]
    %v1765 = vld [vmem:[%s1763 + $0x8] sm:$0xff]
    %v1766 = vld [vmem:[%s1763 + $0x10] sm:$0xff]
    %v1767 = vld [vmem:[#allocation2] sm:$0xff]
    %v1768 = vld [vmem:[#allocation2 + $0x8] sm:$0xff]
    %v1769 = vld [vmem:[#allocation2 + $0x10] sm:$0xff]
    %v1770 = vld [vmem:[#allocation2 + $0x18] sm:$0xff]
    %v1771 = vld [vmem:[#allocation2 + $0x20] sm:$0xff]
    %v1772 = vld [vmem:[#allocation2 + $0x28] sm:$0xff]
    %v1773 = vld [vmem:[#allocation2 + $0x30] sm:$0xff]
    %v1774 = vld [vmem:[#allocation2 + $0x38] sm:$0xff]
    %v1775 = vld [vmem:[#allocation2 + $0x40] sm:$0xff]
    %v1776 = vld [vmem:[#allocation2 + $0x48] sm:$0xff]
    %v1777 = vld [vmem:[#allocation2 + $0x50] sm:$0xff]
    %v1778 = vld [vmem:[#allocation2 + $0x58] sm:$0xff]
    %v1779 = vld [vmem:[#allocation2 + $0x60] sm:$0xff]
    %v1780 = vld [vmem:[#allocation2 + $0x68] sm:$0xff]
    %v1781 = vld [vmem:[#allocation2 + $0x70] sm:$0xff]
    %v1782 = vld [vmem:[#allocation2 + $0x78] sm:$0xff]
    %v1783 = vld [vmem:[#allocation2 + $0x80] sm:$0xff]
    %v1784 = vld [vmem:[#allocation2 + $0x88] sm:$0xff]
    %v1785 = vld [vmem:[#allocation2 + $0x90] sm:$0xff]
    %v1786 = vld [vmem:[#allocation2 + $0x98] sm:$0xff]
    %v1787 = vld [vmem:[#allocation2 + $0xa0] sm:$0xff]
    %v1788 = vld [vmem:[#allocation2 + $0xa8] sm:$0xff]
    %v1789 = vld [vmem:[#allocation2 + $0xb0] sm:$0xff]
    %v1790 = vld [vmem:[#allocation2 + $0xb8] sm:$0xff]
    %v1791 = vld [vmem:[#allocation2 + $0xc0] sm:$0xff]
    %v1792 = vld [vmem:[#allocation2 + $0xc8] sm:$0xff]
    %v1793 = vld [vmem:[#allocation2 + $0xd0] sm:$0xff]
    %v1794 = vld [vmem:[#allocation2 + $0xd8] sm:$0xff]
    %v1795 = vld [vmem:[#allocation2 + $0xe0] sm:$0xff]
    %v1796 = vld [vmem:[#allocation2 + $0xe8] sm:$0xff]
    %v1797 = vld [vmem:[#allocation2 + $0xf0] sm:$0xff]
    %v1798 = vld [vmem:[#allocation2 + $0xf8] sm:$0xff]
    %v1799 = vld [vmem:[#allocation2 + $0x100] sm:$0xff]
    %v1800 = vld [vmem:[#allocation2 + $0x108] sm:$0xff]
    %v1801 = vld [vmem:[#allocation2 + $0x110] sm:$0xff]
    %v1802 = vld [vmem:[#allocation2 + $0x118] sm:$0xff]
    %v1803 = vld [vmem:[#allocation2 + $0x120] sm:$0xff]
    %v1804 = vld [vmem:[#allocation2 + $0x128] sm:$0xff]
    %v1805 = vld [vmem:[#allocation2 + $0x130] sm:$0xff]
    %v1806 = vld [vmem:[#allocation2 + $0x138] sm:$0xff]
    %v1807 = vld [vmem:[#allocation2 + $0x140] sm:$0xff]
    %v1808 = vld [vmem:[#allocation2 + $0x148] sm:$0xff]
    %v1809 = vld [vmem:[#allocation2 + $0x150] sm:$0xff]
    %v1811 = vsel %vm871, %v1766, 0
    %1813 = vmatprep.subr.mxu0 0.0
    %1814 = vmatpush1.msra.mxu0 %v1767
    %1815 = vmatprep.subr.mxu0 0.0
    %1816 = vmatpush1.msra.mxu0 %v1768
    %1817 = vmatprep.subr.mxu0 0.0
    %1818 = vmatpush1.msra.mxu0 %v1769
    %1819 = vmatprep.subr.mxu0 0.0
    %1820 = vmatpush1.msra.mxu0 %v1770
    %1821 = vmatprep.subr.mxu0 0.0
    %1822 = vmatpush1.msra.mxu0 %v1771
    %1823 = vmatprep.subr.mxu0 0.0
    %1824 = vmatpush1.msra.mxu0 %v1772
    %1825 = vmatprep.subr.mxu0 0.0
    %1826 = vmatpush1.msra.mxu0 %v1773
    %1827 = vmatprep.subr.mxu0 0.0
    %1828 = vmatpush1.msra.mxu0 %v1774
    %1829 = vmatprep.subr.mxu0 0.0
    %1830 = vmatpush1.msra.mxu0 %v1775
    %1831 = vmatprep.subr.mxu0 0.0
    %1832 = vmatpush1.msra.mxu0 %v1776
    %1833 = vmatprep.subr.mxu0 0.0
    %1834 = vmatpush1.msra.mxu0 %v1777
    %1835 = vmatprep.subr.mxu0 0.0
    %1836 = vmatpush1.msra.mxu0 %v1778
    %1837 = vmatprep.subr.mxu0 0.0
    %1838 = vmatpush1.msra.mxu0 %v1779
    %1839 = vmatprep.subr.mxu0 0.0
    %1840 = vmatpush1.msra.mxu0 %v1780
    %1841 = vmatprep.subr.mxu0 0.0
    %1842 = vmatpush1.msra.mxu0 %v1781
    %1843 = vmatprep.subr.mxu0 0.0
    %1844 = vmatpush1.msra.mxu0 %v1782
    %1845 = vmatprep.subr.mxu0 0.0
    %1846 = vmatpush1.msra.mxu0 %v1783
    %1847 = vmatprep.subr.mxu0 0.0
    %1848 = vmatpush1.msra.mxu0 %v1784
    %1849 = vmatprep.subr.mxu0 0.0
    %1850 = vmatpush1.msra.mxu0 %v1785
    %1851 = vmatprep.subr.mxu0 0.0
    %1852 = vmatpush1.msra.mxu0 %v1786
    %1853 = vmatprep.subr.mxu0 0.0
    %1854 = vmatpush1.msra.mxu0 %v1787
    %1855 = vmatprep.subr.mxu0 0.0
    %1856 = vmatpush1.msra.mxu0 %v1788
    %1857 = vmatprep.subr.mxu0 0.0
    %1858 = vmatpush1.msra.mxu0 %v1789
    %1859 = vmatprep.subr.mxu0 0.0
    %1860 = vmatpush1.msra.mxu0 %v1790
    %1861 = vmatprep.subr.mxu0 0.0
    %1862 = vmatpush1.msra.mxu0 %v1791
    %1863 = vmatprep.subr.mxu0 0.0
    %1864 = vmatpush1.msra.mxu0 %v1792
    %1865 = vmatprep.subr.mxu0 0.0
    %1866 = vmatpush1.msra.mxu0 %v1793
    %1867 = vmatprep.subr.mxu0 0.0
    %1868 = vmatpush1.msra.mxu0 %v1794
    %1869 = vmatprep.subr.mxu0 0.0
    %1870 = vmatpush1.msra.mxu0 %v1795
    %1871 = vmatprep.subr.mxu0 0.0
    %1872 = vmatpush1.msra.mxu0 %v1796
    %1873 = vmatprep.subr.mxu0 0.0
    %1874 = vmatpush1.msra.mxu0 %v1797
    %1875 = vmatprep.subr.mxu0 0.0
    %1876 = vmatpush1.msra.mxu0 %v1798
    %1877 = vmatprep.mubr.f32.mxu0 %v1765
    %1878 = vmatmul.mubr.f32.gmra.mrb[0].mxu0 %v1764
    %v1879 = vpop.f32.mrb[0].mxu0
    %v1880 = vadd.f32 0.0, %v1879
    %v1881 = vpop.f32.mrb[0].mxu0
    %1882 = vdwg.mxu0
    %1883 = vmatprep.subr.mxu0 0.0
    %1884 = vmatpush1.msra.mxu0 %v1799
    %1885 = vmatprep.subr.mxu0 0.0
    %1886 = vmatpush1.msra.mxu0 %v1800
    %1887 = vmatprep.subr.mxu0 0.0
    %1888 = vmatpush1.msra.mxu0 %v1801
    %1889 = vmatprep.subr.mxu0 0.0
    %1890 = vmatpush1.msra.mxu0 %v1802
    %1891 = vmatprep.subr.mxu0 0.0
    %1892 = vmatpush1.msra.mxu0 %v1803
    %1893 = vmatprep.subr.mxu0 0.0
    %1894 = vmatpush1.msra.mxu0 %v1804
    %1895 = vmatprep.subr.mxu0 0.0
    %1896 = vmatpush1.msra.mxu0 %v1805
    %1897 = vmatprep.subr.mxu0 0.0
    %1898 = vmatpush1.msra.mxu0 %v1806
    %1899 = vmatprep.subr.mxu0 0.0
    %1900 = vmatpush1.msra.mxu0 %v1807
    %1901 = vmatprep.subr.mxu0 0.0
    %1902 = vmatpush1.msra.mxu0 %v1808
    %1903 = vmatprep.subr.mxu0 0.0
    %1904 = vmatpush1.msra.mxu0 %v1809
    %1905 = vmatprep.subr.mxu0 0.0
    %1906 = vmatpush1.msra.mxu0 0.0
    %1907 = vmatprep.subr.mxu0 0.0
    %1908 = vmatpush1.msra.mxu0 0.0
    %1909 = vmatprep.subr.mxu0 0.0
    %1910 = vmatpush1.msra.mxu0 0.0
    %1911 = vmatprep.subr.mxu0 0.0
    %1912 = vmatpush1.msra.mxu0 0.0
    %1913 = vmatprep.subr.mxu0 0.0
    %1914 = vmatpush1.msra.mxu0 0.0
    %1915 = vmatprep.subr.mxu0 0.0
    %1916 = vmatpush1.msra.mxu0 0.0
    %1917 = vmatprep.subr.mxu0 0.0
    %1918 = vmatpush1.msra.mxu0 0.0
    %1919 = vmatprep.subr.mxu0 0.0
    %1920 = vmatpush1.msra.mxu0 0.0
    %1921 = vmatprep.subr.mxu0 0.0
    %1922 = vmatpush1.msra.mxu0 0.0
    %1923 = vmatprep.subr.mxu0 0.0
    %1924 = vmatpush1.msra.mxu0 0.0
    %1925 = vmatprep.subr.mxu0 0.0
    %1926 = vmatpush1.msra.mxu0 0.0
    %1927 = vmatprep.subr.mxu0 0.0
    %1928 = vmatpush1.msra.mxu0 0.0
    %1929 = vmatprep.subr.mxu0 0.0
    %1930 = vmatpush1.msra.mxu0 0.0
    %1931 = vmatprep.subr.mxu0 0.0
    %1932 = vmatpush1.msra.mxu0 0.0
    %1933 = vmatprep.subr.mxu0 0.0
    %1934 = vmatpush1.msra.mxu0 0.0
    %1935 = vmatprep.subr.mxu0 0.0
    %1936 = vmatpush1.msra.mxu0 0.0
    %1937 = vmatprep.subr.mxu0 0.0
    %1938 = vmatpush1.msra.mxu0 0.0
    %1939 = vmatprep.subr.mxu0 0.0
    %1940 = vmatpush1.msra.mxu0 0.0
    %1941 = vmatprep.subr.mxu0 0.0
    %1942 = vmatpush1.msra.mxu0 0.0
    %1943 = vmatprep.subr.mxu0 0.0
    %1944 = vmatpush1.msra.mxu0 0.0
    %1945 = vmatprep.subr.mxu0 0.0
    %1946 = vmatpush1.msra.mxu0 0.0
    %1947 = vmatprep.mubr.f32.mxu0 0.0
    %1948 = vmatmul.mubr.f32.gmra.mrb[0].mxu0 %v1811
    %v1949 = vpop.f32.mrb[0].mxu0
    %v1950 = vadd.f32 %v1880, %v1949
    %v1951 = vpop.f32.mrb[0].mxu0
    %1952 = vdwg.mxu0
    %1953 = vst [vmem:[#allocation8 + $0x8] sm:$0xff] %v1950
    %v1954 = vld [vmem:[#allocation3 + $0x4] sm:$0x1]
    %v1955 = vld [vmem:[#allocation3 + $0x5] sm:$0x1]
    %v1956 = vmul.f32 %v1954, 16.0
    %v1957 = vsub.f32 %v1956, 0.5
    %v1958 = vfloor.f32 %v1957
    %v1959 = vsub.f32 %v1957, %v1958
    %v1960 = vmax.f32 %v1958, 0.0
    %v1961 = vmin.f32 %v1960, 15.0
    %v1962 = vadd.f32 %v1958, 1.0
    %v1963 = vmax.f32 %v1962, 0.0
    %v1964 = vmin.f32 %v1963, 15.0
    %v1965 = vlaneseq
    %v1966 = vshrl.u32 %v1965, 7
    %v1967 = vsub.s32 0, %v1966
    %v1968 = vrot.slane %v1961, %v1967
    %vm1969 = vcmp.eq.f32.partialorder %v47, %v1968
    %vm1970 = vcmp.eq.f32.partialorder %v48, %v1968
    %v1971 = vsub.f32 1.0, %v1959
    %v1972 = vlaneseq
    %v1973 = vshrl.u32 %v1972, 7
    %v1974 = vsub.s32 0, %v1973
    %v1975 = vrot.slane %v1971, %v1974
    %v1976 = vsel %vm1969, %v1975, 0.0
    %v1977 = vsel %vm1970, %v1975, 0.0
    %v1978 = vlaneseq
    %v1979 = vshrl.u32 %v1978, 7
    %v1980 = vsub.s32 0, %v1979
    %v1981 = vrot.slane %v1964, %v1980
    %vm1982 = vcmp.eq.f32.partialorder %v47, %v1981
    %vm1983 = vcmp.eq.f32.partialorder %v48, %v1981
    %v1984 = vlaneseq
    %v1985 = vshrl.u32 %v1984, 7
    %v1986 = vsub.s32 0, %v1985
    %v1987 = vrot.slane %v1959, %v1986
    %v1988 = vsel %vm1982, %v1987, 0.0
    %v1989 = vsel %vm1983, %v1987, 0.0
    %v1990 = vadd.f32 %v1976, %v1988
    %v1991 = vadd.f32 %v1977, %v1989
    %v1992 = vmul.f32 %v1990, %v102
    %v1993 = vmul.f32 %v1991, %v102
    %v1994 = vmul.f32 %v1955, 16.0
    %v1995 = vsub.f32 %v1994, 0.5
    %v1996 = vfloor.f32 %v1995
    %v1997 = vsub.f32 %v1995, %v1996
    %v1998 = vmax.f32 %v1996, 0.0
    %v1999 = vmin.f32 %v1998, 15.0
    %v2000 = vadd.f32 %v1996, 1.0
    %v2001 = vmax.f32 %v2000, 0.0
    %v2002 = vmin.f32 %v2001, 15.0
    %v2003 = vlaneseq
    %v2004 = vshrl.u32 %v2003, 7
    %v2005 = vsub.s32 0, %v2004
    %v2006 = vrot.slane %v1999, %v2005
    %vm2007 = vcmp.eq.f32.partialorder %v47, %v2006
    %vm2008 = vcmp.eq.f32.partialorder %v48, %v2006
    %v2009 = vsub.f32 1.0, %v1997
    %v2010 = vlaneseq
    %v2011 = vshrl.u32 %v2010, 7
    %v2012 = vsub.s32 0, %v2011
    %v2013 = vrot.slane %v2009, %v2012
    %v2014 = vsel %vm2007, %v2013, 0.0
    %v2015 = vsel %vm2008, %v2013, 0.0
    %v2016 = vlaneseq
    %v2017 = vshrl.u32 %v2016, 7
    %v2018 = vsub.s32 0, %v2017
    %v2019 = vrot.slane %v2002, %v2018
    %vm2020 = vcmp.eq.f32.partialorder %v47, %v2019
    %vm2021 = vcmp.eq.f32.partialorder %v48, %v2019
    %v2022 = vlaneseq
    %v2023 = vshrl.u32 %v2022, 7
    %v2024 = vsub.s32 0, %v2023
    %v2025 = vrot.slane %v1997, %v2024
    %v2026 = vsel %vm2020, %v2025, 0.0
    %v2027 = vsel %vm2021, %v2025, 0.0
    %v2028 = vadd.f32 %v2014, %v2026
    %v2029 = vadd.f32 %v2015, %v2027
    %v2032 = vcombine.high %v2028, %v2028
    %v2034 = vunpack.c.l.s4 1966171168
    %v2035 = vunpack.c.0.s8 %v2034
    %v2036 = vlaneseq
    %v2037 = vshrl.u32 %v2036, 7
    %v2038 = vsub.s32 %v2035, %v2037
    %v2039 = vrot.slane %v2028, %v2038
    %v2041 = vunpack.c.l.s4 1966171168
    %v2042 = vunpack.c.0.s8 %v2041
    %v2043 = vlaneseq
    %v2044 = vshrl.u32 %v2043, 7
    %v2045 = vsub.s32 %v2042, %v2044
    %v2046 = vrot.slane %v2032, %v2045
    %v2047 = vcombine.high %v2039, %v2039
    %v2048 = vcombine.high %v2046, %v2046
    %v2050 = vunpack.c.l.s4 1966171168
    %v2051 = vunpack.c.0.s8 %v2050
    %v2052 = vlaneseq
    %v2053 = vshrl.u32 %v2052, 7
    %v2054 = vsub.s32 %v2051, %v2053
    %v2055 = vrot.slane %v2039, %v2054
    %v2057 = vunpack.c.l.s4 1966171168
    %v2058 = vunpack.c.0.s8 %v2057
    %v2059 = vlaneseq
    %v2060 = vshrl.u32 %v2059, 7
    %v2061 = vsub.s32 %v2058, %v2060
    %v2062 = vrot.slane %v2046, %v2061
    %v2064 = vunpack.c.l.s4 1966171168
    %v2065 = vunpack.c.0.s8 %v2064
    %v2066 = vlaneseq
    %v2067 = vshrl.u32 %v2066, 7
    %v2068 = vsub.s32 %v2065, %v2067
    %v2069 = vrot.slane %v2047, %v2068
    %v2071 = vunpack.c.l.s4 1966171168
    %v2072 = vunpack.c.0.s8 %v2071
    %v2073 = vlaneseq
    %v2074 = vshrl.u32 %v2073, 7
    %v2075 = vsub.s32 %v2072, %v2074
    %v2076 = vrot.slane %v2048, %v2075
    %v2077 = vcombine.high %v2055, %v2055
    %v2078 = vcombine.high %v2062, %v2062
    %v2079 = vcombine.high %v2069, %v2069
    %v2080 = vcombine.high %v2076, %v2076
    %v2081 = vcombine.high %v2029, %v2029
    %v2083 = vunpack.c.l.s4 1966171168
    %v2084 = vunpack.c.0.s8 %v2083
    %v2085 = vlaneseq
    %v2086 = vshrl.u32 %v2085, 7
    %v2087 = vsub.s32 %v2084, %v2086
    %v2088 = vrot.slane %v2029, %v2087
    %v2090 = vunpack.c.l.s4 1966171168
    %v2091 = vunpack.c.0.s8 %v2090
    %v2092 = vlaneseq
    %v2093 = vshrl.u32 %v2092, 7
    %v2094 = vsub.s32 %v2091, %v2093
    %v2095 = vrot.slane %v2081, %v2094
    %v2096 = vcombine.high %v2088, %v2088
    %v2097 = vcombine.high %v2095, %v2095
    %v2099 = vunpack.c.l.s4 1966171168
    %v2100 = vunpack.c.0.s8 %v2099
    %v2101 = vlaneseq
    %v2102 = vshrl.u32 %v2101, 7
    %v2103 = vsub.s32 %v2100, %v2102
    %v2104 = vrot.slane %v2088, %v2103
    %v2106 = vunpack.c.l.s4 1966171168
    %v2107 = vunpack.c.0.s8 %v2106
    %v2108 = vlaneseq
    %v2109 = vshrl.u32 %v2108, 7
    %v2110 = vsub.s32 %v2107, %v2109
    %v2111 = vrot.slane %v2095, %v2110
    %v2113 = vunpack.c.l.s4 1966171168
    %v2114 = vunpack.c.0.s8 %v2113
    %v2115 = vlaneseq
    %v2116 = vshrl.u32 %v2115, 7
    %v2117 = vsub.s32 %v2114, %v2116
    %v2118 = vrot.slane %v2096, %v2117
    %v2120 = vunpack.c.l.s4 1966171168
    %v2121 = vunpack.c.0.s8 %v2120
    %v2122 = vlaneseq
    %v2123 = vshrl.u32 %v2122, 7
    %v2124 = vsub.s32 %v2121, %v2123
    %v2125 = vrot.slane %v2097, %v2124
    %v2126 = vcombine.high %v2104, %v2104
    %v2127 = vcombine.high %v2111, %v2111
    %v2128 = vcombine.high %v2118, %v2118
    %v2129 = vcombine.high %v2125, %v2125
    %v2130 = vlaneseq
    %v2131 = vshrl.u32 %v2130, 7
    %v2132 = vsub.s32 0, %v2131
    %v2133 = vrot.slane %v2055, %v2132
    %v2134 = vlaneseq
    %v2135 = vshrl.u32 %v2134, 7
    %v2136 = vsub.s32 0, %v2135
    %v2137 = vrot.slane %v2069, %v2136
    %v2138 = vlaneseq
    %v2139 = vshrl.u32 %v2138, 7
    %v2140 = vsub.s32 0, %v2139
    %v2141 = vrot.slane %v2077, %v2140
    %v2142 = vlaneseq
    %v2143 = vshrl.u32 %v2142, 7
    %v2144 = vsub.s32 0, %v2143
    %v2145 = vrot.slane %v2079, %v2144
    %v2146 = vlaneseq
    %v2147 = vshrl.u32 %v2146, 7
    %v2148 = vsub.s32 0, %v2147
    %v2149 = vrot.slane %v2062, %v2148
    %v2150 = vlaneseq
    %v2151 = vshrl.u32 %v2150, 7
    %v2152 = vsub.s32 0, %v2151
    %v2153 = vrot.slane %v2076, %v2152
    %v2154 = vlaneseq
    %v2155 = vshrl.u32 %v2154, 7
    %v2156 = vsub.s32 0, %v2155
    %v2157 = vrot.slane %v2078, %v2156
    %v2158 = vlaneseq
    %v2159 = vshrl.u32 %v2158, 7
    %v2160 = vsub.s32 0, %v2159
    %v2161 = vrot.slane %v2080, %v2160
    %v2162 = vlaneseq
    %v2163 = vshrl.u32 %v2162, 7
    %v2164 = vsub.s32 0, %v2163
    %v2165 = vrot.slane %v2104, %v2164
    %v2166 = vlaneseq
    %v2167 = vshrl.u32 %v2166, 7
    %v2168 = vsub.s32 0, %v2167
    %v2169 = vrot.slane %v2118, %v2168
    %v2170 = vlaneseq
    %v2171 = vshrl.u32 %v2170, 7
    %v2172 = vsub.s32 0, %v2171
    %v2173 = vrot.slane %v2126, %v2172
    %v2174 = vlaneseq
    %v2175 = vshrl.u32 %v2174, 7
    %v2176 = vsub.s32 0, %v2175
    %v2177 = vrot.slane %v2128, %v2176
    %v2178 = vlaneseq
    %v2179 = vshrl.u32 %v2178, 7
    %v2180 = vsub.s32 0, %v2179
    %v2181 = vrot.slane %v2111, %v2180
    %v2182 = vlaneseq
    %v2183 = vshrl.u32 %v2182, 7
    %v2184 = vsub.s32 0, %v2183
    %v2185 = vrot.slane %v2125, %v2184
    %v2186 = vlaneseq
    %v2187 = vshrl.u32 %v2186, 7
    %v2188 = vsub.s32 0, %v2187
    %v2189 = vrot.slane %v2127, %v2188
    %v2190 = vlaneseq
    %v2191 = vshrl.u32 %v2190, 7
    %v2192 = vsub.s32 0, %v2191
    %v2193 = vrot.slane %v2129, %v2192
    %v2210 = vmul.f32 %v2133, %v1992
    %v2211 = vmul.f32 %v2133, %v1993
    %v2212 = vmul.f32 %v2137, %v1992
    %v2213 = vmul.f32 %v2137, %v1993
    %v2214 = vmul.f32 %v2141, %v1992
    %v2215 = vmul.f32 %v2141, %v1993
    %v2216 = vmul.f32 %v2145, %v1992
    %v2217 = vmul.f32 %v2145, %v1993
    %v2218 = vmul.f32 %v2149, %v1992
    %v2219 = vmul.f32 %v2149, %v1993
    %v2220 = vmul.f32 %v2153, %v1992
    %v2221 = vmul.f32 %v2153, %v1993
    %v2222 = vmul.f32 %v2157, %v1992
    %v2223 = vmul.f32 %v2157, %v1993
    %v2224 = vmul.f32 %v2161, %v1992
    %v2225 = vmul.f32 %v2161, %v1993
    %v2226 = vmul.f32 %v2165, %v1992
    %v2227 = vmul.f32 %v2165, %v1993
    %v2228 = vmul.f32 %v2169, %v1992
    %v2229 = vmul.f32 %v2169, %v1993
    %v2230 = vmul.f32 %v2173, %v1992
    %v2231 = vmul.f32 %v2173, %v1993
    %v2232 = vmul.f32 %v2177, %v1992
    %v2233 = vmul.f32 %v2177, %v1993
    %v2234 = vmul.f32 %v2181, %v1992
    %v2235 = vmul.f32 %v2181, %v1993
    %v2236 = vmul.f32 %v2185, %v1992
    %v2237 = vmul.f32 %v2185, %v1993
    %v2238 = vmul.f32 %v2189, %v1992
    %v2239 = vmul.f32 %v2189, %v1993
    %v2240 = vmul.f32 %v2193, %v1992
    %v2241 = vmul.f32 %v2193, %v1993
    %2242 = vst [vmem:[#allocation2] sm:$0xff] %v2210
    %2243 = vst [vmem:[#allocation2 + $0x8] sm:$0xff] %v2211
    %2244 = vst [vmem:[#allocation2 + $0x10] sm:$0xff] %v2212
    %2245 = vst [vmem:[#allocation2 + $0x18] sm:$0xff] %v2213
    %2246 = vst [vmem:[#allocation2 + $0x20] sm:$0xff] %v2214
    %2247 = vst [vmem:[#allocation2 + $0x28] sm:$0xff] %v2215
    %2248 = vst [vmem:[#allocation2 + $0x30] sm:$0xff] %v2216
    %2249 = vst [vmem:[#allocation2 + $0x38] sm:$0xff] %v2217
    %2250 = vst [vmem:[#allocation2 + $0x40] sm:$0xff] %v2218
    %2251 = vst [vmem:[#allocation2 + $0x48] sm:$0xff] %v2219
    %2252 = vst [vmem:[#allocation2 + $0x50] sm:$0xff] %v2220
    %2253 = vst [vmem:[#allocation2 + $0x58] sm:$0xff] %v2221
    %2254 = vst [vmem:[#allocation2 + $0x60] sm:$0xff] %v2222
    %2255 = vst [vmem:[#allocation2 + $0x68] sm:$0xff] %v2223
    %2256 = vst [vmem:[#allocation2 + $0x70] sm:$0xff] %v2224
    %2257 = vst [vmem:[#allocation2 + $0x78] sm:$0xff] %v2225
    %2258 = vst [vmem:[#allocation2 + $0x80] sm:$0xff] %v2226
    %2259 = vst [vmem:[#allocation2 + $0x88] sm:$0xff] %v2227
    %2260 = vst [vmem:[#allocation2 + $0x90] sm:$0xff] %v2228
    %2261 = vst [vmem:[#allocation2 + $0x98] sm:$0xff] %v2229
    %2262 = vst [vmem:[#allocation2 + $0xa0] sm:$0xff] %v2230
    %2263 = vst [vmem:[#allocation2 + $0xa8] sm:$0xff] %v2231
    %2264 = vst [vmem:[#allocation2 + $0xb0] sm:$0xff] %v2232
    %2265 = vst [vmem:[#allocation2 + $0xb8] sm:$0xff] %v2233
    %2266 = vst [vmem:[#allocation2 + $0xc0] sm:$0xff] %v2234
    %2267 = vst [vmem:[#allocation2 + $0xc8] sm:$0xff] %v2235
    %2268 = vst [vmem:[#allocation2 + $0xd0] sm:$0xff] %v2236
    %2269 = vst [vmem:[#allocation2 + $0xd8] sm:$0xff] %v2237
    %2270 = vst [vmem:[#allocation2 + $0xe0] sm:$0xff] %v2238
    %2271 = vst [vmem:[#allocation2 + $0xe8] sm:$0xff] %v2239
    %2272 = vst [vmem:[#allocation2 + $0xf0] sm:$0xff] %v2240
    %2273 = vst [vmem:[#allocation2 + $0xf8] sm:$0xff] %v2241
    %v2274 = vmul.f32 %v1954, 8.0
    %v2275 = vsub.f32 %v2274, 0.5
    %v2276 = vfloor.f32 %v2275
    %v2277 = vsub.f32 %v2275, %v2276
    %v2278 = vmax.f32 %v2276, 0.0
    %v2279 = vmin.f32 %v2278, 7.0
    %v2280 = vadd.f32 %v2276, 1.0
    %v2281 = vmax.f32 %v2280, 0.0
    %v2282 = vmin.f32 %v2281, 7.0
    %v2283 = vlaneseq
    %v2284 = vshrl.u32 %v2283, 7
    %v2285 = vsub.s32 0, %v2284
    %v2286 = vrot.slane %v2279, %v2285
    %vm2287 = vcmp.eq.f32.partialorder %v47, %v2286
    %v2288 = vsub.f32 1.0, %v2277
    %v2289 = vlaneseq
    %v2290 = vshrl.u32 %v2289, 7
    %v2291 = vsub.s32 0, %v2290
    %v2292 = vrot.slane %v2288, %v2291
    %v2293 = vsel %vm2287, %v2292, 0.0
    %v2294 = vlaneseq
    %v2295 = vshrl.u32 %v2294, 7
    %v2296 = vsub.s32 0, %v2295
    %v2297 = vrot.slane %v2282, %v2296
    %vm2298 = vcmp.eq.f32.partialorder %v47, %v2297
    %v2299 = vlaneseq
    %v2300 = vshrl.u32 %v2299, 7
    %v2301 = vsub.s32 0, %v2300
    %v2302 = vrot.slane %v2277, %v2301
    %v2303 = vsel %vm2298, %v2302, 0.0
    %v2304 = vadd.f32 %v2293, %v2303
    %v2305 = vmul.f32 %v2304, %v419
    %v2306 = vmul.f32 %v1955, 8.0
    %v2307 = vsub.f32 %v2306, 0.5
    %v2308 = vfloor.f32 %v2307
    %v2309 = vsub.f32 %v2307, %v2308
    %v2310 = vmax.f32 %v2308, 0.0
    %v2311 = vmin.f32 %v2310, 7.0
    %v2312 = vadd.f32 %v2308, 1.0
    %v2313 = vmax.f32 %v2312, 0.0
    %v2314 = vmin.f32 %v2313, 7.0
    %v2315 = vlaneseq
    %v2316 = vshrl.u32 %v2315, 7
    %v2317 = vsub.s32 0, %v2316
    %v2318 = vrot.slane %v2311, %v2317
    %vm2319 = vcmp.eq.f32.partialorder %v47, %v2318
    %v2320 = vsub.f32 1.0, %v2309
    %v2321 = vlaneseq
    %v2322 = vshrl.u32 %v2321, 7
    %v2323 = vsub.s32 0, %v2322
    %v2324 = vrot.slane %v2320, %v2323
    %v2325 = vsel %vm2319, %v2324, 0.0
    %v2326 = vlaneseq
    %v2327 = vshrl.u32 %v2326, 7
    %v2328 = vsub.s32 0, %v2327
    %v2329 = vrot.slane %v2314, %v2328
    %vm2330 = vcmp.eq.f32.partialorder %v47, %v2329
    %v2331 = vlaneseq
    %v2332 = vshrl.u32 %v2331, 7
    %v2333 = vsub.s32 0, %v2332
    %v2334 = vrot.slane %v2309, %v2333
    %v2335 = vsel %vm2330, %v2334, 0.0
    %v2336 = vadd.f32 %v2325, %v2335
    %v2338 = vcombine.high %v2336, %v2336
    %v2340 = vunpack.c.l.s4 1966171168
    %v2341 = vunpack.c.0.s8 %v2340
    %v2342 = vlaneseq
    %v2343 = vshrl.u32 %v2342, 7
    %v2344 = vsub.s32 %v2341, %v2343
    %v2345 = vrot.slane %v2336, %v2344
    %v2347 = vunpack.c.l.s4 1966171168
    %v2348 = vunpack.c.0.s8 %v2347
    %v2349 = vlaneseq
    %v2350 = vshrl.u32 %v2349, 7
    %v2351 = vsub.s32 %v2348, %v2350
    %v2352 = vrot.slane %v2338, %v2351
    %v2353 = vcombine.high %v2345, %v2345
    %v2354 = vcombine.high %v2352, %v2352
    %v2356 = vunpack.c.l.s4 1966171168
    %v2357 = vunpack.c.0.s8 %v2356
    %v2358 = vlaneseq
    %v2359 = vshrl.u32 %v2358, 7
    %v2360 = vsub.s32 %v2357, %v2359
    %v2361 = vrot.slane %v2345, %v2360
    %v2363 = vunpack.c.l.s4 1966171168
    %v2364 = vunpack.c.0.s8 %v2363
    %v2365 = vlaneseq
    %v2366 = vshrl.u32 %v2365, 7
    %v2367 = vsub.s32 %v2364, %v2366
    %v2368 = vrot.slane %v2352, %v2367
    %v2370 = vunpack.c.l.s4 1966171168
    %v2371 = vunpack.c.0.s8 %v2370
    %v2372 = vlaneseq
    %v2373 = vshrl.u32 %v2372, 7
    %v2374 = vsub.s32 %v2371, %v2373
    %v2375 = vrot.slane %v2353, %v2374
    %v2377 = vunpack.c.l.s4 1966171168
    %v2378 = vunpack.c.0.s8 %v2377
    %v2379 = vlaneseq
    %v2380 = vshrl.u32 %v2379, 7
    %v2381 = vsub.s32 %v2378, %v2380
    %v2382 = vrot.slane %v2354, %v2381
    %v2383 = vcombine.high %v2361, %v2361
    %v2384 = vcombine.high %v2368, %v2368
    %v2385 = vcombine.high %v2375, %v2375
    %v2386 = vcombine.high %v2382, %v2382
    %v2387 = vlaneseq
    %v2388 = vshrl.u32 %v2387, 7
    %v2389 = vsub.s32 0, %v2388
    %v2390 = vrot.slane %v2361, %v2389
    %v2391 = vlaneseq
    %v2392 = vshrl.u32 %v2391, 7
    %v2393 = vsub.s32 0, %v2392
    %v2394 = vrot.slane %v2375, %v2393
    %v2395 = vlaneseq
    %v2396 = vshrl.u32 %v2395, 7
    %v2397 = vsub.s32 0, %v2396
    %v2398 = vrot.slane %v2383, %v2397
    %v2399 = vlaneseq
    %v2400 = vshrl.u32 %v2399, 7
    %v2401 = vsub.s32 0, %v2400
    %v2402 = vrot.slane %v2385, %v2401
    %v2403 = vlaneseq
    %v2404 = vshrl.u32 %v2403, 7
    %v2405 = vsub.s32 0, %v2404
    %v2406 = vrot.slane %v2368, %v2405
    %v2407 = vlaneseq
    %v2408 = vshrl.u32 %v2407, 7
    %v2409 = vsub.s32 0, %v2408
    %v2410 = vrot.slane %v2382, %v2409
    %v2411 = vlaneseq
    %v2412 = vshrl.u32 %v2411, 7
    %v2413 = vsub.s32 0, %v2412
    %v2414 = vrot.slane %v2384, %v2413
    %v2415 = vlaneseq
    %v2416 = vshrl.u32 %v2415, 7
    %v2417 = vsub.s32 0, %v2416
    %v2418 = vrot.slane %v2386, %v2417
    %v2427 = vmul.f32 %v2390, %v2305
    %v2428 = vmul.f32 %v2394, %v2305
    %v2429 = vmul.f32 %v2398, %v2305
    %v2430 = vmul.f32 %v2402, %v2305
    %v2431 = vmul.f32 %v2406, %v2305
    %v2432 = vmul.f32 %v2410, %v2305
    %v2433 = vmul.f32 %v2414, %v2305
    %v2434 = vmul.f32 %v2418, %v2305
    %2435 = vst [vmem:[#allocation2 + $0x100] sm:$0xff] %v2427
    %2436 = vst [vmem:[#allocation2 + $0x108] sm:$0xff] %v2428
    %2437 = vst [vmem:[#allocation2 + $0x110] sm:$0xff] %v2429
    %2438 = vst [vmem:[#allocation2 + $0x118] sm:$0xff] %v2430
    %2439 = vst [vmem:[#allocation2 + $0x120] sm:$0xff] %v2431
    %2440 = vst [vmem:[#allocation2 + $0x128] sm:$0xff] %v2432
    %2441 = vst [vmem:[#allocation2 + $0x130] sm:$0xff] %v2433
    %2442 = vst [vmem:[#allocation2 + $0x138] sm:$0xff] %v2434
    %v2443 = vmul.f32 %v1954, 4.0
    %v2444 = vsub.f32 %v2443, 0.5
    %v2445 = vfloor.f32 %v2444
    %v2446 = vsub.f32 %v2444, %v2445
    %v2447 = vmax.f32 %v2445, 0.0
    %v2448 = vmin.f32 %v2447, 3.0
    %v2449 = vadd.f32 %v2445, 1.0
    %v2450 = vmax.f32 %v2449, 0.0
    %v2451 = vmin.f32 %v2450, 3.0
    %v2452 = vlaneseq
    %v2453 = vshrl.u32 %v2452, 7
    %v2454 = vsub.s32 0, %v2453
    %v2455 = vrot.slane %v2448, %v2454
    %vm2456 = vcmp.eq.f32.partialorder %v47, %v2455
    %v2457 = vsub.f32 1.0, %v2446
    %v2458 = vlaneseq
    %v2459 = vshrl.u32 %v2458, 7
    %v2460 = vsub.s32 0, %v2459
    %v2461 = vrot.slane %v2457, %v2460
    %v2462 = vsel %vm2456, %v2461, 0.0
    %v2463 = vlaneseq
    %v2464 = vshrl.u32 %v2463, 7
    %v2465 = vsub.s32 0, %v2464
    %v2466 = vrot.slane %v2451, %v2465
    %vm2467 = vcmp.eq.f32.partialorder %v47, %v2466
    %v2468 = vlaneseq
    %v2469 = vshrl.u32 %v2468, 7
    %v2470 = vsub.s32 0, %v2469
    %v2471 = vrot.slane %v2446, %v2470
    %v2472 = vsel %vm2467, %v2471, 0.0
    %v2473 = vadd.f32 %v2462, %v2472
    %v2474 = vmul.f32 %v2473, %v592
    %v2475 = vmul.f32 %v1955, 4.0
    %v2476 = vsub.f32 %v2475, 0.5
    %v2477 = vfloor.f32 %v2476
    %v2478 = vsub.f32 %v2476, %v2477
    %v2479 = vmax.f32 %v2477, 0.0
    %v2480 = vmin.f32 %v2479, 3.0
    %v2481 = vadd.f32 %v2477, 1.0
    %v2482 = vmax.f32 %v2481, 0.0
    %v2483 = vmin.f32 %v2482, 3.0
    %v2484 = vlaneseq
    %v2485 = vshrl.u32 %v2484, 7
    %v2486 = vsub.s32 0, %v2485
    %v2487 = vrot.slane %v2480, %v2486
    %vm2488 = vcmp.eq.f32.partialorder %v47, %v2487
    %v2489 = vsub.f32 1.0, %v2478
    %v2490 = vlaneseq
    %v2491 = vshrl.u32 %v2490, 7
    %v2492 = vsub.s32 0, %v2491
    %v2493 = vrot.slane %v2489, %v2492
    %v2494 = vsel %vm2488, %v2493, 0.0
    %v2495 = vlaneseq
    %v2496 = vshrl.u32 %v2495, 7
    %v2497 = vsub.s32 0, %v2496
    %v2498 = vrot.slane %v2483, %v2497
    %vm2499 = vcmp.eq.f32.partialorder %v47, %v2498
    %v2500 = vlaneseq
    %v2501 = vshrl.u32 %v2500, 7
    %v2502 = vsub.s32 0, %v2501
    %v2503 = vrot.slane %v2478, %v2502
    %v2504 = vsel %vm2499, %v2503, 0.0
    %v2505 = vadd.f32 %v2494, %v2504
    %v2508 = vunpack.c.l.s4 1966171168
    %v2509 = vunpack.c.0.s8 %v2508
    %v2510 = vlaneseq
    %v2511 = vshrl.u32 %v2510, 7
    %v2512 = vsub.s32 %v2509, %v2511
    %v2513 = vrot.slane %v2505, %v2512
    %v2514 = vcombine.high %v2513, %v2513
    %v2516 = vunpack.c.l.s4 1966171168
    %v2517 = vunpack.c.0.s8 %v2516
    %v2518 = vlaneseq
    %v2519 = vshrl.u32 %v2518, 7
    %v2520 = vsub.s32 %v2517, %v2519
    %v2521 = vrot.slane %v2513, %v2520
    %v2523 = vunpack.c.l.s4 1966171168
    %v2524 = vunpack.c.0.s8 %v2523
    %v2525 = vlaneseq
    %v2526 = vshrl.u32 %v2525, 7
    %v2527 = vsub.s32 %v2524, %v2526
    %v2528 = vrot.slane %v2514, %v2527
    %v2529 = vcombine.high %v2521, %v2521
    %v2530 = vcombine.high %v2528, %v2528
    %v2531 = vlaneseq
    %v2532 = vshrl.u32 %v2531, 7
    %v2533 = vsub.s32 0, %v2532
    %v2534 = vrot.slane %v2521, %v2533
    %v2535 = vlaneseq
    %v2536 = vshrl.u32 %v2535, 7
    %v2537 = vsub.s32 0, %v2536
    %v2538 = vrot.slane %v2528, %v2537
    %v2539 = vlaneseq
    %v2540 = vshrl.u32 %v2539, 7
    %v2541 = vsub.s32 0, %v2540
    %v2542 = vrot.slane %v2529, %v2541
    %v2543 = vlaneseq
    %v2544 = vshrl.u32 %v2543, 7
    %v2545 = vsub.s32 0, %v2544
    %v2546 = vrot.slane %v2530, %v2545
    %v2551 = vmul.f32 %v2534, %v2474
    %v2552 = vmul.f32 %v2538, %v2474
    %v2553 = vmul.f32 %v2542, %v2474
    %v2554 = vmul.f32 %v2546, %v2474
    %v2559 = vcombine.low %v2551, %v2552
    %v2560 = vcombine.low %v2553, %v2554
    %2563 = vst [vmem:[#allocation2 + $0x140] sm:$0xff] %v2559
    %2564 = vst [vmem:[#allocation2 + $0x148] sm:$0xff] %v2560
    %v2565 = vmul.f32 %v1954, 2.0
    %v2566 = vsub.f32 %v2565, 0.5
    %v2567 = vfloor.f32 %v2566
    %v2568 = vsub.f32 %v2566, %v2567
    %v2569 = vmax.f32 %v2567, 0.0
    %v2570 = vmin.f32 %v2569, 1.0
    %v2571 = vadd.f32 %v2567, 1.0
    %v2572 = vmax.f32 %v2571, 0.0
    %v2573 = vmin.f32 %v2572, 1.0
    %v2574 = vlaneseq
    %v2575 = vshrl.u32 %v2574, 7
    %v2576 = vsub.s32 0, %v2575
    %v2577 = vrot.slane %v2570, %v2576
    %vm2578 = vcmp.eq.f32.partialorder %v47, %v2577
    %v2579 = vsub.f32 1.0, %v2568
    %v2580 = vlaneseq
    %v2581 = vshrl.u32 %v2580, 7
    %v2582 = vsub.s32 0, %v2581
    %v2583 = vrot.slane %v2579, %v2582
    %v2584 = vsel %vm2578, %v2583, 0.0
    %v2585 = vlaneseq
    %v2586 = vshrl.u32 %v2585, 7
    %v2587 = vsub.s32 0, %v2586
    %v2588 = vrot.slane %v2573, %v2587
    %vm2589 = vcmp.eq.f32.partialorder %v47, %v2588
    %v2590 = vlaneseq
    %v2591 = vshrl.u32 %v2590, 7
    %v2592 = vsub.s32 0, %v2591
    %v2593 = vrot.slane %v2568, %v2592
    %v2594 = vsel %vm2589, %v2593, 0.0
    %v2595 = vadd.f32 %v2584, %v2594
    %v2596 = vmul.f32 %v2595, %v718
    %v2597 = vmul.f32 %v1955, 2.0
    %v2598 = vsub.f32 %v2597, 0.5
    %v2599 = vfloor.f32 %v2598
    %v2600 = vsub.f32 %v2598, %v2599
    %v2601 = vmax.f32 %v2599, 0.0
    %v2602 = vmin.f32 %v2601, 1.0
    %v2603 = vadd.f32 %v2599, 1.0
    %v2604 = vmax.f32 %v2603, 0.0
    %v2605 = vmin.f32 %v2604, 1.0
    %v2606 = vlaneseq
    %v2607 = vshrl.u32 %v2606, 7
    %v2608 = vsub.s32 0, %v2607
    %v2609 = vrot.slane %v2602, %v2608
    %vm2610 = vcmp.eq.f32.partialorder %v47, %v2609
    %v2611 = vsub.f32 1.0, %v2600
    %v2612 = vlaneseq
    %v2613 = vshrl.u32 %v2612, 7
    %v2614 = vsub.s32 0, %v2613
    %v2615 = vrot.slane %v2611, %v2614
    %v2616 = vsel %vm2610, %v2615, 0.0
    %v2617 = vlaneseq
    %v2618 = vshrl.u32 %v2617, 7
    %v2619 = vsub.s32 0, %v2618
    %v2620 = vrot.slane %v2605, %v2619
    %vm2621 = vcmp.eq.f32.partialorder %v47, %v2620
    %v2622 = vlaneseq
    %v2623 = vshrl.u32 %v2622, 7
    %v2624 = vsub.s32 0, %v2623
    %v2625 = vrot.slane %v2600, %v2624
    %v2626 = vsel %vm2621, %v2625, 0.0
    %v2627 = vadd.f32 %v2616, %v2626
    %v2628 = vsel %vm751, %v2627, 0.0
    %v2631 = vunpack.c.l.s4 1966171168
    %v2632 = vunpack.c.0.s8 %v2631
    %v2633 = vlaneseq
    %v2634 = vshrl.u32 %v2633, 7
    %v2635 = vsub.s32 %v2632, %v2634
    %v2636 = vrot.slane %v2628, %v2635
    %v2637 = vcombine.high %v2636, %v2636
    %v2639 = vunpack.c.l.s4 1966171168
    %v2640 = vunpack.c.0.s8 %v2639
    %v2641 = vlaneseq
    %v2642 = vshrl.u32 %v2641, 7
    %v2643 = vsub.s32 %v2640, %v2642
    %v2644 = vrot.slane %v2636, %v2643
    %v2646 = vunpack.c.l.s4 1966171168
    %v2647 = vunpack.c.0.s8 %v2646
    %v2648 = vlaneseq
    %v2649 = vshrl.u32 %v2648, 7
    %v2650 = vsub.s32 %v2647, %v2649
    %v2651 = vrot.slane %v2637, %v2650
    %v2652 = vcombine.high %v2644, %v2644
    %v2653 = vcombine.high %v2651, %v2651
    %v2654 = vlaneseq
    %v2655 = vshrl.u32 %v2654, 7
    %v2656 = vsub.s32 0, %v2655
    %v2657 = vrot.slane %v2644, %v2656
    %v2658 = vlaneseq
    %v2659 = vshrl.u32 %v2658, 7
    %v2660 = vsub.s32 0, %v2659
    %v2661 = vrot.slane %v2651, %v2660
    %v2662 = vlaneseq
    %v2663 = vshrl.u32 %v2662, 7
    %v2664 = vsub.s32 0, %v2663
    %v2665 = vrot.slane %v2652, %v2664
    %v2666 = vlaneseq
    %v2667 = vshrl.u32 %v2666, 7
    %v2668 = vsub.s32 0, %v2667
    %v2669 = vrot.slane %v2653, %v2668
    %v2674 = vmul.f32 %v2657, %v2596
    %v2675 = vmul.f32 %v2661, %v2596
    %v2676 = vmul.f32 %v2665, %v2596
    %v2677 = vmul.f32 %v2669, %v2596
    %v2682 = vcombine.low %v2674, %v2675
    %v2683 = vcombine.low %v2676, %v2677
    %v2685 = vunpack.c.l.s4 1983009808
    %v2686 = vunpack.c.0.s8 %v2685
    %v2687 = vlaneseq
    %v2688 = vshrl.u32 %v2687, 7
    %v2689 = vsub.s32 %v2686, %v2688
    %v2690 = vrot.slane %v2682, %v2689
    %v2692 = vunpack.c.l.s4 1983009808
    %v2693 = vunpack.c.0.s8 %v2692
    %v2694 = vlaneseq
    %v2695 = vshrl.u32 %v2694, 7
    %v2696 = vsub.s32 %v2693, %v2695
    %v2697 = vrot.slane %v2683, %v2696
    %v2698 = vcombine.low %v2690, %v2697
    %2700 = vst [vmem:[#allocation2 + $0x150] sm:$0xff] %v2698
    %s2701 = scalar_lea.vmem [#allocation6], 48
    %v2702 = vld [vmem:[%s2701] sm:$0xff]
    %v2703 = vld [vmem:[%s2701 + $0x8] sm:$0xff]
    %v2704 = vld [vmem:[%s2701 + $0x10] sm:$0xff]
    %v2705 = vld [vmem:[#allocation2] sm:$0xff]
    %v2706 = vld [vmem:[#allocation2 + $0x8] sm:$0xff]
    %v2707 = vld [vmem:[#allocation2 + $0x10] sm:$0xff]
    %v2708 = vld [vmem:[#allocation2 + $0x18] sm:$0xff]
    %v2709 = vld [vmem:[#allocation2 + $0x20] sm:$0xff]
    %v2710 = vld [vmem:[#allocation2 + $0x28] sm:$0xff]
    %v2711 = vld [vmem:[#allocation2 + $0x30] sm:$0xff]
    %v2712 = vld [vmem:[#allocation2 + $0x38] sm:$0xff]
    %v2713 = vld [vmem:[#allocation2 + $0x40] sm:$0xff]
    %v2714 = vld [vmem:[#allocation2 + $0x48] sm:$0xff]
    %v2715 = vld [vmem:[#allocation2 + $0x50] sm:$0xff]
    %v2716 = vld [vmem:[#allocation2 + $0x58] sm:$0xff]
    %v2717 = vld [vmem:[#allocation2 + $0x60] sm:$0xff]
    %v2718 = vld [vmem:[#allocation2 + $0x68] sm:$0xff]
    %v2719 = vld [vmem:[#allocation2 + $0x70] sm:$0xff]
    %v2720 = vld [vmem:[#allocation2 + $0x78] sm:$0xff]
    %v2721 = vld [vmem:[#allocation2 + $0x80] sm:$0xff]
    %v2722 = vld [vmem:[#allocation2 + $0x88] sm:$0xff]
    %v2723 = vld [vmem:[#allocation2 + $0x90] sm:$0xff]
    %v2724 = vld [vmem:[#allocation2 + $0x98] sm:$0xff]
    %v2725 = vld [vmem:[#allocation2 + $0xa0] sm:$0xff]
    %v2726 = vld [vmem:[#allocation2 + $0xa8] sm:$0xff]
    %v2727 = vld [vmem:[#allocation2 + $0xb0] sm:$0xff]
    %v2728 = vld [vmem:[#allocation2 + $0xb8] sm:$0xff]
    %v2729 = vld [vmem:[#allocation2 + $0xc0] sm:$0xff]
    %v2730 = vld [vmem:[#allocation2 + $0xc8] sm:$0xff]
    %v2731 = vld [vmem:[#allocation2 + $0xd0] sm:$0xff]
    %v2732 = vld [vmem:[#allocation2 + $0xd8] sm:$0xff]
    %v2733 = vld [vmem:[#allocation2 + $0xe0] sm:$0xff]
    %v2734 = vld [vmem:[#allocation2 + $0xe8] sm:$0xff]
    %v2735 = vld [vmem:[#allocation2 + $0xf0] sm:$0xff]
    %v2736 = vld [vmem:[#allocation2 + $0xf8] sm:$0xff]
    %v2737 = vld [vmem:[#allocation2 + $0x100] sm:$0xff]
    %v2738 = vld [vmem:[#allocation2 + $0x108] sm:$0xff]
    %v2739 = vld [vmem:[#allocation2 + $0x110] sm:$0xff]
    %v2740 = vld [vmem:[#allocation2 + $0x118] sm:$0xff]
    %v2741 = vld [vmem:[#allocation2 + $0x120] sm:$0xff]
    %v2742 = vld [vmem:[#allocation2 + $0x128] sm:$0xff]
    %v2743 = vld [vmem:[#allocation2 + $0x130] sm:$0xff]
    %v2744 = vld [vmem:[#allocation2 + $0x138] sm:$0xff]
    %v2745 = vld [vmem:[#allocation2 + $0x140] sm:$0xff]
    %v2746 = vld [vmem:[#allocation2 + $0x148] sm:$0xff]
    %v2747 = vld [vmem:[#allocation2 + $0x150] sm:$0xff]
    %v2749 = vsel %vm871, %v2704, 0
    %2751 = vmatprep.subr.mxu0 0.0
    %2752 = vmatpush1.msra.mxu0 %v2705
    %2753 = vmatprep.subr.mxu0 0.0
    %2754 = vmatpush1.msra.mxu0 %v2706
    %2755 = vmatprep.subr.mxu0 0.0
    %2756 = vmatpush1.msra.mxu0 %v2707
    %2757 = vmatprep.subr.mxu0 0.0
    %2758 = vmatpush1.msra.mxu0 %v2708
    %2759 = vmatprep.subr.mxu0 0.0
    %2760 = vmatpush1.msra.mxu0 %v2709
    %2761 = vmatprep.subr.mxu0 0.0
    %2762 = vmatpush1.msra.mxu0 %v2710
    %2763 = vmatprep.subr.mxu0 0.0
    %2764 = vmatpush1.msra.mxu0 %v2711
    %2765 = vmatprep.subr.mxu0 0.0
    %2766 = vmatpush1.msra.mxu0 %v2712
    %2767 = vmatprep.subr.mxu0 0.0
    %2768 = vmatpush1.msra.mxu0 %v2713
    %2769 = vmatprep.subr.mxu0 0.0
    %2770 = vmatpush1.msra.mxu0 %v2714
    %2771 = vmatprep.subr.mxu0 0.0
    %2772 = vmatpush1.msra.mxu0 %v2715
    %2773 = vmatprep.subr.mxu0 0.0
    %2774 = vmatpush1.msra.mxu0 %v2716
    %2775 = vmatprep.subr.mxu0 0.0
    %2776 = vmatpush1.msra.mxu0 %v2717
    %2777 = vmatprep.subr.mxu0 0.0
    %2778 = vmatpush1.msra.mxu0 %v2718
    %2779 = vmatprep.subr.mxu0 0.0
    %2780 = vmatpush1.msra.mxu0 %v2719
    %2781 = vmatprep.subr.mxu0 0.0
    %2782 = vmatpush1.msra.mxu0 %v2720
    %2783 = vmatprep.subr.mxu0 0.0
    %2784 = vmatpush1.msra.mxu0 %v2721
    %2785 = vmatprep.subr.mxu0 0.0
    %2786 = vmatpush1.msra.mxu0 %v2722
    %2787 = vmatprep.subr.mxu0 0.0
    %2788 = vmatpush1.msra.mxu0 %v2723
    %2789 = vmatprep.subr.mxu0 0.0
    %2790 = vmatpush1.msra.mxu0 %v2724
    %2791 = vmatprep.subr.mxu0 0.0
    %2792 = vmatpush1.msra.mxu0 %v2725
    %2793 = vmatprep.subr.mxu0 0.0
    %2794 = vmatpush1.msra.mxu0 %v2726
    %2795 = vmatprep.subr.mxu0 0.0
    %2796 = vmatpush1.msra.mxu0 %v2727
    %2797 = vmatprep.subr.mxu0 0.0
    %2798 = vmatpush1.msra.mxu0 %v2728
    %2799 = vmatprep.subr.mxu0 0.0
    %2800 = vmatpush1.msra.mxu0 %v2729
    %2801 = vmatprep.subr.mxu0 0.0
    %2802 = vmatpush1.msra.mxu0 %v2730
    %2803 = vmatprep.subr.mxu0 0.0
    %2804 = vmatpush1.msra.mxu0 %v2731
    %2805 = vmatprep.subr.mxu0 0.0
    %2806 = vmatpush1.msra.mxu0 %v2732
    %2807 = vmatprep.subr.mxu0 0.0
    %2808 = vmatpush1.msra.mxu0 %v2733
    %2809 = vmatprep.subr.mxu0 0.0
    %2810 = vmatpush1.msra.mxu0 %v2734
    %2811 = vmatprep.subr.mxu0 0.0
    %2812 = vmatpush1.msra.mxu0 %v2735
    %2813 = vmatprep.subr.mxu0 0.0
    %2814 = vmatpush1.msra.mxu0 %v2736
    %2815 = vmatprep.mubr.f32.mxu0 %v2703
    %2816 = vmatmul.mubr.f32.gmra.mrb[0].mxu0 %v2702
    %v2817 = vpop.f32.mrb[0].mxu0
    %v2818 = vadd.f32 0.0, %v2817
    %v2819 = vpop.f32.mrb[0].mxu0
    %2820 = vdwg.mxu0
    %2821 = vmatprep.subr.mxu0 0.0
    %2822 = vmatpush1.msra.mxu0 %v2737
    %2823 = vmatprep.subr.mxu0 0.0
    %2824 = vmatpush1.msra.mxu0 %v2738
    %2825 = vmatprep.subr.mxu0 0.0
    %2826 = vmatpush1.msra.mxu0 %v2739
    %2827 = vmatprep.subr.mxu0 0.0
    %2828 = vmatpush1.msra.mxu0 %v2740
    %2829 = vmatprep.subr.mxu0 0.0
    %2830 = vmatpush1.msra.mxu0 %v2741
    %2831 = vmatprep.subr.mxu0 0.0
    %2832 = vmatpush1.msra.mxu0 %v2742
    %2833 = vmatprep.subr.mxu0 0.0
    %2834 = vmatpush1.msra.mxu0 %v2743
    %2835 = vmatprep.subr.mxu0 0.0
    %2836 = vmatpush1.msra.mxu0 %v2744
    %2837 = vmatprep.subr.mxu0 0.0
    %2838 = vmatpush1.msra.mxu0 %v2745
    %2839 = vmatprep.subr.mxu0 0.0
    %2840 = vmatpush1.msra.mxu0 %v2746
    %2841 = vmatprep.subr.mxu0 0.0
    %2842 = vmatpush1.msra.mxu0 %v2747
    %2843 = vmatprep.subr.mxu0 0.0
    %2844 = vmatpush1.msra.mxu0 0.0
    %2845 = vmatprep.subr.mxu0 0.0
    %2846 = vmatpush1.msra.mxu0 0.0
    %2847 = vmatprep.subr.mxu0 0.0
    %2848 = vmatpush1.msra.mxu0 0.0
    %2849 = vmatprep.subr.mxu0 0.0
    %2850 = vmatpush1.msra.mxu0 0.0
    %2851 = vmatprep.subr.mxu0 0.0
    %2852 = vmatpush1.msra.mxu0 0.0
    %2853 = vmatprep.subr.mxu0 0.0
    %2854 = vmatpush1.msra.mxu0 0.0
    %2855 = vmatprep.subr.mxu0 0.0
    %2856 = vmatpush1.msra.mxu0 0.0
    %2857 = vmatprep.subr.mxu0 0.0
    %2858 = vmatpush1.msra.mxu0 0.0
    %2859 = vmatprep.subr.mxu0 0.0
    %2860 = vmatpush1.msra.mxu0 0.0
    %2861 = vmatprep.subr.mxu0 0.0
    %2862 = vmatpush1.msra.mxu0 0.0
    %2863 = vmatprep.subr.mxu0 0.0
    %2864 = vmatpush1.msra.mxu0 0.0
    %2865 = vmatprep.subr.mxu0 0.0
    %2866 = vmatpush1.msra.mxu0 0.0
    %2867 = vmatprep.subr.mxu0 0.0
    %2868 = vmatpush1.msra.mxu0 0.0
    %2869 = vmatprep.subr.mxu0 0.0
    %2870 = vmatpush1.msra.mxu0 0.0
    %2871 = vmatprep.subr.mxu0 0.0
    %2872 = vmatpush1.msra.mxu0 0.0
    %2873 = vmatprep.subr.mxu0 0.0
    %2874 = vmatpush1.msra.mxu0 0.0
    %2875 = vmatprep.subr.mxu0 0.0
    %2876 = vmatpush1.msra.mxu0 0.0
    %2877 = vmatprep.subr.mxu0 0.0
    %2878 = vmatpush1.msra.mxu0 0.0
    %2879 = vmatprep.subr.mxu0 0.0
    %2880 = vmatpush1.msra.mxu0 0.0
    %2881 = vmatprep.subr.mxu0 0.0
    %2882 = vmatpush1.msra.mxu0 0.0
    %2883 = vmatprep.subr.mxu0 0.0
    %2884 = vmatpush1.msra.mxu0 0.0
    %2885 = vmatprep.mubr.f32.mxu0 0.0
    %2886 = vmatmul.mubr.f32.gmra.mrb[0].mxu0 %v2749
    %v2887 = vpop.f32.mrb[0].mxu0
    %v2888 = vadd.f32 %v2818, %v2887
    %v2889 = vpop.f32.mrb[0].mxu0
    %2890 = vdwg.mxu0
    %2891 = vst [vmem:[#allocation8 + $0x10] sm:$0xff] %v2888
    // Predicated region
    $region18: #{tpu_custom_call.1} parent=1 // pred_check
      _
    $region19: #{tpu_custom_call.1} parent=1 // pred_check_branch
      %2893 = sbr.rel (0) target = $region21
    $region20: #{tpu_custom_call.1} parent=1 // pred_region
      %s2895 = ssub.s32 384, 384
      %2896 = vsyncadd [#allocation5], %s2895
      %s2897 = sshll.u32 [#allocation8], 4
      %s2898 = int_to_ptr.vmem [resolvable:$true] %s2897
      %2903 = dma.vmem_to_hbm [thread:$0]  %s2898, 384, %s2, [#allocation5], 128, 128, 8
    $region21: #{tpu_custom_call.1} parent=1 // pred_fallthru
      _
    // Predicated region
    $region22: #{tpu_custom_call.1} parent=1 // pred_check
      _
    $region23: #{tpu_custom_call.1} parent=1 // pred_check_branch
      %2905 = sbr.rel (0) target = $region25
    $region24: #{tpu_custom_call.1} parent=1 // pred_region
      %2906 = dma.done [#allocation5], 384
    $region25: #{tpu_custom_call.1} parent=1 // pred_fallthru
      _
    %2907 = vsyncpa [#allocation4], 1
    %2908 = vsyncpa [#allocation7], 1
    %2909 = vsyncpa [#allocation5], 1

// kernel: tpu_custom_call.1
$region0: #{tpu_custom_call.1}
  #allocation0 [shape = 'u32[]', space=smem, size = 0x4, offset = 0x4, fixed_abs, tag = 'smem constant byte address 0x4 - core index']
  #allocation1 [shape = 'u32[144,128]{1,0:T(1,128)}', space=vmem, size = 0x12000, scoped, tag = 'internal scratch']
  #allocation2 [shape = 'f32[344,128]{1,0:T(8,128)}', space=vmem, size = 0x2b000, scoped, tag = 'scratch operand']
  %s0 = inlined_call_operand.hbm [shape: f32[8,128], index: 0, kind: input, shape index: {}]
  %s1 = inlined_call_operand.hbm [shape: f32[3,8,344], index: 1, kind: input, shape index: {}]
  %s2 = inlined_call_operand.hbm [shape: f32[24,128], index: 2, kind: output, shape index: {}]
  %s3 = sld [smem:[#allocation0]]
  $region26: #{tpu_custom_call.1} parent=0
    _
  %s5 = ssub.s32 1, %s3
  %s6 = scalar_select 0, %s5, %s3
  $region1: #{tpu_custom_call.1} parent=0
    #allocation3 [shape = 'u8[4096]{0}', space=vmem, size = 0x1000, scoped, tag = 'input window, operand 0, single buffered']
    #allocation4 [shape = 's32[1]{0}', space=sflag, size = 0x4, scoped, tag = 'scoped memory for tpu_custom_call.1']
    #allocation5 [shape = 's32[1]{0}', space=sflag, size = 0x4, scoped, tag = 'scoped memory for tpu_custom_call.1']
    #allocation6 [shape = 'u8[36864]{0}', space=vmem, size = 0x9000, scoped, tag = 'input window, operand 1, single buffered']
    #allocation7 [shape = 's32[1]{0}', space=sflag, size = 0x4, scoped, tag = 'scoped memory for tpu_custom_call.1']
    #allocation8 [shape = 'u8[12288]{0}', space=vmem, size = 0x3000, scoped, tag = 'output window, operand 0, single buffered']
    %7 = vsyncpa [#allocation4], 0
    %8 = vsyncpa [#allocation7], 0
    %9 = vsyncpa [#allocation5], 0
    // Predicated region
    $region2: #{tpu_custom_call.1} parent=1 // pred_check
      _
    $region3: #{tpu_custom_call.1} parent=1 // pred_check_branch
      %11 = sbr.rel (0) target = $region5
    $region4: #{tpu_custom_call.1} parent=1 // pred_region
      %s13 = ssub.s32 128, 128
      %14 = vsyncadd [#allocation4], %s13
      %s16 = sshll.u32 [#allocation3], 4
      %s17 = int_to_ptr.vmem [resolvable:$true] %s16
      %19 = dma.hbm_to_vmem [thread:$0]  %s0, 128, %s17, [#allocation4]
    $region5: #{tpu_custom_call.1} parent=1 // pred_fallthru
      _
    // Predicated region
    $region6: #{tpu_custom_call.1} parent=1 // pred_check
      _
    $region7: #{tpu_custom_call.1} parent=1 // pred_check_branch
      %21 = sbr.rel (0) target = $region9
    $region8: #{tpu_custom_call.1} parent=1 // pred_region
      %s23 = ssub.s32 1152, 1152
      %24 = vsyncadd [#allocation7], %s23
      %s25 = sshll.u32 [#allocation6], 4
      %s26 = int_to_ptr.vmem [resolvable:$true] %s25
      %31 = dma.hbm_to_vmem [thread:$0]  %s1, 1152, %s26, [#allocation7], 384, 384, 24
    $region9: #{tpu_custom_call.1} parent=1 // pred_fallthru
      _
    // Predicated region
    $region10: #{tpu_custom_call.1} parent=1 // pred_check
      _
    $region11: #{tpu_custom_call.1} parent=1 // pred_check_branch
      %33 = sbr.rel (0) target = $region13
    $region12: #{tpu_custom_call.1} parent=1 // pred_region
      %34 = dma.done [#allocation4], 128
    $region13: #{tpu_custom_call.1} parent=1 // pred_fallthru
      _
    // Predicated region
    $region14: #{tpu_custom_call.1} parent=1 // pred_check
      _
    $region15: #{tpu_custom_call.1} parent=1 // pred_check_branch
      %36 = sbr.rel (0) target = $region17
    $region16: #{tpu_custom_call.1} parent=1 // pred_region
      %37 = dma.done [#allocation7], 1152
    $region17: #{tpu_custom_call.1} parent=1 // pred_fallthru
      _
    %v38 = vld [vmem:[#allocation3 + $0x6] sm:$0x1]
    %v39 = vmax.f32 %v38, 0.0
    %v40 = vmin.f32 %v39, 3.0
    %v41 = vand.u32 2147483647, %v40
    %v42 = vsub.f32 1.0, %v41
    %v43 = vmax.f32 %v42, 0.0
    %v44 = vlaneseq
    %v45 = vshrl.u32 %v44, 7
    %v46 = vadd.s32 %v45, 8
    %v47 = vcvt.s32.f32 %v45
    %v48 = vcvt.s32.f32 %v46
    %v49 = vsub.f32 %v40, 1.0
    %v50 = vand.u32 2147483647, %v49
    %v51 = vsub.f32 1.0, %v50
    %v52 = vmax.f32 %v51, 0.0
    %v53 = vsub.f32 %v40, 2.0
    %v54 = vand.u32 2147483647, %v53
    %v55 = vsub.f32 1.0, %v54
    %v56 = vmax.f32 %v55, 0.0
    %v57 = vsub.f32 %v40, 3.0
    %v58 = vand.u32 2147483647, %v57
    %v59 = vsub.f32 1.0, %v58
    %v60 = vmax.f32 %v59, 0.0
    %v61 = vld [vmem:[#allocation3] sm:$0x1]
    %v62 = vld [vmem:[#allocation3 + $0x1] sm:$0x1]
    %v63 = vmul.f32 %v61, 16.0
    %v64 = vsub.f32 %v63, 0.5
    %v65 = vfloor.f32 %v64
    %v66 = vsub.f32 %v64, %v65
    %v67 = vmax.f32 %v65, 0.0
    %v68 = vmin.f32 %v67, 15.0
    %v69 = vadd.f32 %v65, 1.0
    %v70 = vmax.f32 %v69, 0.0
    %v71 = vmin.f32 %v70, 15.0
    %v72 = vlaneseq
    %v73 = vshrl.u32 %v72, 7
    %v74 = vsub.s32 0, %v73
    %v75 = vrot.slane %v68, %v74
    %vm76 = vcmp.eq.f32.partialorder %v47, %v75
    %vm77 = vcmp.eq.f32.partialorder %v48, %v75
    %v78 = vsub.f32 1.0, %v66
    %v79 = vlaneseq
    %v80 = vshrl.u32 %v79, 7
    %v81 = vsub.s32 0, %v80
    %v82 = vrot.slane %v78, %v81
    %v83 = vsel %vm76, %v82, 0.0
    %v84 = vsel %vm77, %v82, 0.0
    %v85 = vlaneseq
    %v86 = vshrl.u32 %v85, 7
    %v87 = vsub.s32 0, %v86
    %v88 = vrot.slane %v71, %v87
    %vm89 = vcmp.eq.f32.partialorder %v47, %v88
    %vm90 = vcmp.eq.f32.partialorder %v48, %v88
    %v91 = vlaneseq
    %v92 = vshrl.u32 %v91, 7
    %v93 = vsub.s32 0, %v92
    %v94 = vrot.slane %v66, %v93
    %v95 = vsel %vm89, %v94, 0.0
    %v96 = vsel %vm90, %v94, 0.0
    %v97 = vadd.f32 %v83, %v95
    %v98 = vadd.f32 %v84, %v96
    %v99 = vlaneseq
    %v100 = vshrl.u32 %v99, 7
    %v101 = vsub.s32 0, %v100
    %v102 = vrot.slane %v43, %v101
    %v103 = vmul.f32 %v97, %v102
    %v104 = vmul.f32 %v98, %v102
    %v105 = vmul.f32 %v62, 16.0
    %v106 = vsub.f32 %v105, 0.5
    %v107 = vfloor.f32 %v106
    %v108 = vsub.f32 %v106, %v107
    %v109 = vmax.f32 %v107, 0.0
    %v110 = vmin.f32 %v109, 15.0
    %v111 = vadd.f32 %v107, 1.0
    %v112 = vmax.f32 %v111, 0.0
    %v113 = vmin.f32 %v112, 15.0
    %v114 = vlaneseq
    %v115 = vshrl.u32 %v114, 7
    %v116 = vsub.s32 0, %v115
    %v117 = vrot.slane %v110, %v116
    %vm118 = vcmp.eq.f32.partialorder %v47, %v117
    %vm119 = vcmp.eq.f32.partialorder %v48, %v117
    %v120 = vsub.f32 1.0, %v108
    %v121 = vlaneseq
    %v122 = vshrl.u32 %v121, 7
    %v123 = vsub.s32 0, %v122
    %v124 = vrot.slane %v120, %v123
    %v125 = vsel %vm118, %v124, 0.0
    %v126 = vsel %vm119, %v124, 0.0
    %v127 = vlaneseq
    %v128 = vshrl.u32 %v127, 7
    %v129 = vsub.s32 0, %v128
    %v130 = vrot.slane %v113, %v129
    %vm131 = vcmp.eq.f32.partialorder %v47, %v130
    %vm132 = vcmp.eq.f32.partialorder %v48, %v130
    %v133 = vlaneseq
    %v134 = vshrl.u32 %v133, 7
    %v135 = vsub.s32 0, %v134
    %v136 = vrot.slane %v108, %v135
    %v137 = vsel %vm131, %v136, 0.0
    %v138 = vsel %vm132, %v136, 0.0
    %v139 = vadd.f32 %v125, %v137
    %v140 = vadd.f32 %v126, %v138
    %v143 = vcombine.high %v139, %v139
    %v145 = vunpack.c.l.s4 1966171168
    %v146 = vunpack.c.0.s8 %v145
    %v147 = vlaneseq
    %v148 = vshrl.u32 %v147, 7
    %v149 = vsub.s32 %v146, %v148
    %v150 = vrot.slane %v139, %v149
    %v152 = vunpack.c.l.s4 1966171168
    %v153 = vunpack.c.0.s8 %v152
    %v154 = vlaneseq
    %v155 = vshrl.u32 %v154, 7
    %v156 = vsub.s32 %v153, %v155
    %v157 = vrot.slane %v143, %v156
    %v158 = vcombine.high %v150, %v150
    %v159 = vcombine.high %v157, %v157
    %v161 = vunpack.c.l.s4 1966171168
    %v162 = vunpack.c.0.s8 %v161
    %v163 = vlaneseq
    %v164 = vshrl.u32 %v163, 7
    %v165 = vsub.s32 %v162, %v164
    %v166 = vrot.slane %v150, %v165
    %v168 = vunpack.c.l.s4 1966171168
    %v169 = vunpack.c.0.s8 %v168
    %v170 = vlaneseq
    %v171 = vshrl.u32 %v170, 7
    %v172 = vsub.s32 %v169, %v171
    %v173 = vrot.slane %v157, %v172
    %v175 = vunpack.c.l.s4 1966171168
    %v176 = vunpack.c.0.s8 %v175
    %v177 = vlaneseq
    %v178 = vshrl.u32 %v177, 7
    %v179 = vsub.s32 %v176, %v178
    %v180 = vrot.slane %v158, %v179
    %v182 = vunpack.c.l.s4 1966171168
    %v183 = vunpack.c.0.s8 %v182
    %v184 = vlaneseq
    %v185 = vshrl.u32 %v184, 7
    %v186 = vsub.s32 %v183, %v185
    %v187 = vrot.slane %v159, %v186
    %v188 = vcombine.high %v166, %v166
    %v189 = vcombine.high %v173, %v173
    %v190 = vcombine.high %v180, %v180
    %v191 = vcombine.high %v187, %v187
    %v192 = vcombine.high %v140, %v140
    %v194 = vunpack.c.l.s4 1966171168
    %v195 = vunpack.c.0.s8 %v194
    %v196 = vlaneseq
    %v197 = vshrl.u32 %v196, 7
    %v198 = vsub.s32 %v195, %v197
    %v199 = vrot.slane %v140, %v198
    %v201 = vunpack.c.l.s4 1966171168
    %v202 = vunpack.c.0.s8 %v201
    %v203 = vlaneseq
    %v204 = vshrl.u32 %v203, 7
    %v205 = vsub.s32 %v202, %v204
    %v206 = vrot.slane %v192, %v205
    %v207 = vcombine.high %v199, %v199
    %v208 = vcombine.high %v206, %v206
    %v210 = vunpack.c.l.s4 1966171168
    %v211 = vunpack.c.0.s8 %v210
    %v212 = vlaneseq
    %v213 = vshrl.u32 %v212, 7
    %v214 = vsub.s32 %v211, %v213
    %v215 = vrot.slane %v199, %v214
    %v217 = vunpack.c.l.s4 1966171168
    %v218 = vunpack.c.0.s8 %v217
    %v219 = vlaneseq
    %v220 = vshrl.u32 %v219, 7
    %v221 = vsub.s32 %v218, %v220
    %v222 = vrot.slane %v206, %v221
    %v224 = vunpack.c.l.s4 1966171168
    %v225 = vunpack.c.0.s8 %v224
    %v226 = vlaneseq
    %v227 = vshrl.u32 %v226, 7
    %v228 = vsub.s32 %v225, %v227
    %v229 = vrot.slane %v207, %v228
    %v231 = vunpack.c.l.s4 1966171168
    %v232 = vunpack.c.0.s8 %v231
    %v233 = vlaneseq
    %v234 = vshrl.u32 %v233, 7
    %v235 = vsub.s32 %v232, %v234
    %v236 = vrot.slane %v208, %v235
    %v237 = vcombine.high %v215, %v215
    %v238 = vcombine.high %v222, %v222
    %v239 = vcombine.high %v229, %v229
    %v240 = vcombine.high %v236, %v236
    %v241 = vlaneseq
    %v242 = vshrl.u32 %v241, 7
    %v243 = vsub.s32 0, %v242
    %v244 = vrot.slane %v166, %v243
    %v245 = vlaneseq
    %v246 = vshrl.u32 %v245, 7
    %v247 = vsub.s32 0, %v246
    %v248 = vrot.slane %v180, %v247
    %v249 = vlaneseq
    %v250 = vshrl.u32 %v249, 7
    %v251 = vsub.s32 0, %v250
    %v252 = vrot.slane %v188, %v251
    %v253 = vlaneseq
    %v254 = vshrl.u32 %v253, 7
    %v255 = vsub.s32 0, %v254
    %v256 = vrot.slane %v190, %v255
    %v257 = vlaneseq
    %v258 = vshrl.u32 %v257, 7
    %v259 = vsub.s32 0, %v258
    %v260 = vrot.slane %v173, %v259
    %v261 = vlaneseq
    %v262 = vshrl.u32 %v261, 7
    %v263 = vsub.s32 0, %v262
    %v264 = vrot.slane %v187, %v263
    %v265 = vlaneseq
    %v266 = vshrl.u32 %v265, 7
    %v267 = vsub.s32 0, %v266
    %v268 = vrot.slane %v189, %v267
    %v269 = vlaneseq
    %v270 = vshrl.u32 %v269, 7
    %v271 = vsub.s32 0, %v270
    %v272 = vrot.slane %v191, %v271
    %v273 = vlaneseq
    %v274 = vshrl.u32 %v273, 7
    %v275 = vsub.s32 0, %v274
    %v276 = vrot.slane %v215, %v275
    %v277 = vlaneseq
    %v278 = vshrl.u32 %v277, 7
    %v279 = vsub.s32 0, %v278
    %v280 = vrot.slane %v229, %v279
    %v281 = vlaneseq
    %v282 = vshrl.u32 %v281, 7
    %v283 = vsub.s32 0, %v282
    %v284 = vrot.slane %v237, %v283
    %v285 = vlaneseq
    %v286 = vshrl.u32 %v285, 7
    %v287 = vsub.s32 0, %v286
    %v288 = vrot.slane %v239, %v287
    %v289 = vlaneseq
    %v290 = vshrl.u32 %v289, 7
    %v291 = vsub.s32 0, %v290
    %v292 = vrot.slane %v222, %v291
    %v293 = vlaneseq
    %v294 = vshrl.u32 %v293, 7
    %v295 = vsub.s32 0, %v294
    %v296 = vrot.slane %v236, %v295
    %v297 = vlaneseq
    %v298 = vshrl.u32 %v297, 7
    %v299 = vsub.s32 0, %v298
    %v300 = vrot.slane %v238, %v299
    %v301 = vlaneseq
    %v302 = vshrl.u32 %v301, 7
    %v303 = vsub.s32 0, %v302
    %v304 = vrot.slane %v240, %v303
    %v321 = vmul.f32 %v244, %v103
    %v322 = vmul.f32 %v244, %v104
    %v323 = vmul.f32 %v248, %v103
    %v324 = vmul.f32 %v248, %v104
    %v325 = vmul.f32 %v252, %v103
    %v326 = vmul.f32 %v252, %v104
    %v327 = vmul.f32 %v256, %v103
    %v328 = vmul.f32 %v256, %v104
    %v329 = vmul.f32 %v260, %v103
    %v330 = vmul.f32 %v260, %v104
    %v331 = vmul.f32 %v264, %v103
    %v332 = vmul.f32 %v264, %v104
    %v333 = vmul.f32 %v268, %v103
    %v334 = vmul.f32 %v268, %v104
    %v335 = vmul.f32 %v272, %v103
    %v336 = vmul.f32 %v272, %v104
    %v337 = vmul.f32 %v276, %v103
    %v338 = vmul.f32 %v276, %v104
    %v339 = vmul.f32 %v280, %v103
    %v340 = vmul.f32 %v280, %v104
    %v341 = vmul.f32 %v284, %v103
    %v342 = vmul.f32 %v284, %v104
    %v343 = vmul.f32 %v288, %v103
    %v344 = vmul.f32 %v288, %v104
    %v345 = vmul.f32 %v292, %v103
    %v346 = vmul.f32 %v292, %v104
    %v347 = vmul.f32 %v296, %v103
    %v348 = vmul.f32 %v296, %v104
    %v349 = vmul.f32 %v300, %v103
    %v350 = vmul.f32 %v300, %v104
    %v351 = vmul.f32 %v304, %v103
    %v352 = vmul.f32 %v304, %v104
    %353 = vst [vmem:[#allocation2] sm:$0xff] %v321
    %354 = vst [vmem:[#allocation2 + $0x8] sm:$0xff] %v322
    %355 = vst [vmem:[#allocation2 + $0x10] sm:$0xff] %v323
    %356 = vst [vmem:[#allocation2 + $0x18] sm:$0xff] %v324
    %357 = vst [vmem:[#allocation2 + $0x20] sm:$0xff] %v325
    %358 = vst [vmem:[#allocation2 + $0x28] sm:$0xff] %v326
    %359 = vst [vmem:[#allocation2 + $0x30] sm:$0xff] %v327
    %360 = vst [vmem:[#allocation2 + $0x38] sm:$0xff] %v328
    %361 = vst [vmem:[#allocation2 + $0x40] sm:$0xff] %v329
    %362 = vst [vmem:[#allocation2 + $0x48] sm:$0xff] %v330
    %363 = vst [vmem:[#allocation2 + $0x50] sm:$0xff] %v331
    %364 = vst [vmem:[#allocation2 + $0x58] sm:$0xff] %v332
    %365 = vst [vmem:[#allocation2 + $0x60] sm:$0xff] %v333
    %366 = vst [vmem:[#allocation2 + $0x68] sm:$0xff] %v334
    %367 = vst [vmem:[#allocation2 + $0x70] sm:$0xff] %v335
    %368 = vst [vmem:[#allocation2 + $0x78] sm:$0xff] %v336
    %369 = vst [vmem:[#allocation2 + $0x80] sm:$0xff] %v337
    %370 = vst [vmem:[#allocation2 + $0x88] sm:$0xff] %v338
    %371 = vst [vmem:[#allocation2 + $0x90] sm:$0xff] %v339
    %372 = vst [vmem:[#allocation2 + $0x98] sm:$0xff] %v340
    %373 = vst [vmem:[#allocation2 + $0xa0] sm:$0xff] %v341
    %374 = vst [vmem:[#allocation2 + $0xa8] sm:$0xff] %v342
    %375 = vst [vmem:[#allocation2 + $0xb0] sm:$0xff] %v343
    %376 = vst [vmem:[#allocation2 + $0xb8] sm:$0xff] %v344
    %377 = vst [vmem:[#allocation2 + $0xc0] sm:$0xff] %v345
    %378 = vst [vmem:[#allocation2 + $0xc8] sm:$0xff] %v346
    %379 = vst [vmem:[#allocation2 + $0xd0] sm:$0xff] %v347
    %380 = vst [vmem:[#allocation2 + $0xd8] sm:$0xff] %v348
    %381 = vst [vmem:[#allocation2 + $0xe0] sm:$0xff] %v349
    %382 = vst [vmem:[#allocation2 + $0xe8] sm:$0xff] %v350
    %383 = vst [vmem:[#allocation2 + $0xf0] sm:$0xff] %v351
    %384 = vst [vmem:[#allocation2 + $0xf8] sm:$0xff] %v352
    %v385 = vmul.f32 %v61, 8.0
    %v386 = vsub.f32 %v385, 0.5
    %v387 = vfloor.f32 %v386
    %v388 = vsub.f32 %v386, %v387
    %v389 = vmax.f32 %v387, 0.0
    %v390 = vmin.f32 %v389, 7.0
    %v391 = vadd.f32 %v387, 1.0
    %v392 = vmax.f32 %v391, 0.0
    %v393 = vmin.f32 %v392, 7.0
    %v394 = vlaneseq
    %v395 = vshrl.u32 %v394, 7
    %v396 = vsub.s32 0, %v395
    %v397 = vrot.slane %v390, %v396
    %vm398 = vcmp.eq.f32.partialorder %v47, %v397
    %v399 = vsub.f32 1.0, %v388
    %v400 = vlaneseq
    %v401 = vshrl.u32 %v400, 7
    %v402 = vsub.s32 0, %v401
    %v403 = vrot.slane %v399, %v402
    %v404 = vsel %vm398, %v403, 0.0
    %v405 = vlaneseq
    %v406 = vshrl.u32 %v405, 7
    %v407 = vsub.s32 0, %v406
    %v408 = vrot.slane %v393, %v407
    %vm409 = vcmp.eq.f32.partialorder %v47, %v408
    %v410 = vlaneseq
    %v411 = vshrl.u32 %v410, 7
    %v412 = vsub.s32 0, %v411
    %v413 = vrot.slane %v388, %v412
    %v414 = vsel %vm409, %v413, 0.0
    %v415 = vadd.f32 %v404, %v414
    %v416 = vlaneseq
    %v417 = vshrl.u32 %v416, 7
    %v418 = vsub.s32 0, %v417
    %v419 = vrot.slane %v52, %v418
    %v420 = vmul.f32 %v415, %v419
    %v421 = vmul.f32 %v62, 8.0
    %v422 = vsub.f32 %v421, 0.5
    %v423 = vfloor.f32 %v422
    %v424 = vsub.f32 %v422, %v423
    %v425 = vmax.f32 %v423, 0.0
    %v426 = vmin.f32 %v425, 7.0
    %v427 = vadd.f32 %v423, 1.0
    %v428 = vmax.f32 %v427, 0.0
    %v429 = vmin.f32 %v428, 7.0
    %v430 = vlaneseq
    %v431 = vshrl.u32 %v430, 7
    %v432 = vsub.s32 0, %v431
    %v433 = vrot.slane %v426, %v432
    %vm434 = vcmp.eq.f32.partialorder %v47, %v433
    %v435 = vsub.f32 1.0, %v424
    %v436 = vlaneseq
    %v437 = vshrl.u32 %v436, 7
    %v438 = vsub.s32 0, %v437
    %v439 = vrot.slane %v435, %v438
    %v440 = vsel %vm434, %v439, 0.0
    %v441 = vlaneseq
    %v442 = vshrl.u32 %v441, 7
    %v443 = vsub.s32 0, %v442
    %v444 = vrot.slane %v429, %v443
    %vm445 = vcmp.eq.f32.partialorder %v47, %v444
    %v446 = vlaneseq
    %v447 = vshrl.u32 %v446, 7
    %v448 = vsub.s32 0, %v447
    %v449 = vrot.slane %v424, %v448
    %v450 = vsel %vm445, %v449, 0.0
    %v451 = vadd.f32 %v440, %v450
    %v453 = vcombine.high %v451, %v451
    %v455 = vunpack.c.l.s4 1966171168
    %v456 = vunpack.c.0.s8 %v455
    %v457 = vlaneseq
    %v458 = vshrl.u32 %v457, 7
    %v459 = vsub.s32 %v456, %v458
    %v460 = vrot.slane %v451, %v459
    %v462 = vunpack.c.l.s4 1966171168
    %v463 = vunpack.c.0.s8 %v462
    %v464 = vlaneseq
    %v465 = vshrl.u32 %v464, 7
    %v466 = vsub.s32 %v463, %v465
    %v467 = vrot.slane %v453, %v466
    %v468 = vcombine.high %v460, %v460
    %v469 = vcombine.high %v467, %v467
    %v471 = vunpack.c.l.s4 1966171168
    %v472 = vunpack.c.0.s8 %v471
    %v473 = vlaneseq
    %v474 = vshrl.u32 %v473, 7
    %v475 = vsub.s32 %v472, %v474
    %v476 = vrot.slane %v460, %v475
    %v478 = vunpack.c.l.s4 1966171168
    %v479 = vunpack.c.0.s8 %v478
    %v480 = vlaneseq
    %v481 = vshrl.u32 %v480, 7
    %v482 = vsub.s32 %v479, %v481
    %v483 = vrot.slane %v467, %v482
    %v485 = vunpack.c.l.s4 1966171168
    %v486 = vunpack.c.0.s8 %v485
    %v487 = vlaneseq
    %v488 = vshrl.u32 %v487, 7
    %v489 = vsub.s32 %v486, %v488
    %v490 = vrot.slane %v468, %v489
    %v492 = vunpack.c.l.s4 1966171168
    %v493 = vunpack.c.0.s8 %v492
    %v494 = vlaneseq
    %v495 = vshrl.u32 %v494, 7
    %v496 = vsub.s32 %v493, %v495
    %v497 = vrot.slane %v469, %v496
    %v498 = vcombine.high %v476, %v476
    %v499 = vcombine.high %v483, %v483
    %v500 = vcombine.high %v490, %v490
    %v501 = vcombine.high %v497, %v497
    %v502 = vlaneseq
    %v503 = vshrl.u32 %v502, 7
    %v504 = vsub.s32 0, %v503
    %v505 = vrot.slane %v476, %v504
    %v506 = vlaneseq
    %v507 = vshrl.u32 %v506, 7
    %v508 = vsub.s32 0, %v507
    %v509 = vrot.slane %v490, %v508
    %v510 = vlaneseq
    %v511 = vshrl.u32 %v510, 7
    %v512 = vsub.s32 0, %v511
    %v513 = vrot.slane %v498, %v512
    %v514 = vlaneseq
    %v515 = vshrl.u32 %v514, 7
    %v516 = vsub.s32 0, %v515
    %v517 = vrot.slane %v500, %v516
    %v518 = vlaneseq
    %v519 = vshrl.u32 %v518, 7
    %v520 = vsub.s32 0, %v519
    %v521 = vrot.slane %v483, %v520
    %v522 = vlaneseq
    %v523 = vshrl.u32 %v522, 7
    %v524 = vsub.s32 0, %v523
    %v525 = vrot.slane %v497, %v524
    %v526 = vlaneseq
    %v527 = vshrl.u32 %v526, 7
    %v528 = vsub.s32 0, %v527
    %v529 = vrot.slane %v499, %v528
    %v530 = vlaneseq
    %v531 = vshrl.u32 %v530, 7
    %v532 = vsub.s32 0, %v531
    %v533 = vrot.slane %v501, %v532
    %v542 = vmul.f32 %v505, %v420
    %v543 = vmul.f32 %v509, %v420
    %v544 = vmul.f32 %v513, %v420
    %v545 = vmul.f32 %v517, %v420
    %v546 = vmul.f32 %v521, %v420
    %v547 = vmul.f32 %v525, %v420
    %v548 = vmul.f32 %v529, %v420
    %v549 = vmul.f32 %v533, %v420
    %550 = vst [vmem:[#allocation2 + $0x100] sm:$0xff] %v542
    %551 = vst [vmem:[#allocation2 + $0x108] sm:$0xff] %v543
    %552 = vst [vmem:[#allocation2 + $0x110] sm:$0xff] %v544
    %553 = vst [vmem:[#allocation2 + $0x118] sm:$0xff] %v545
    %554 = vst [vmem:[#allocation2 + $0x120] sm:$0xff] %v546
    %555 = vst [vmem:[#allocation2 + $0x128] sm:$0xff] %v547
    %556 = vst [vmem:[#allocation2 + $0x130] sm:$0xff] %v548
    %557 = vst [vmem:[#allocation2 + $0x138] sm:$0xff] %v549
    %v558 = vmul.f32 %v61, 4.0
    %v559 = vsub.f32 %v558, 0.5
    %v560 = vfloor.f32 %v559
    %v561 = vsub.f32 %v559, %v560
    %v562 = vmax.f32 %v560, 0.0
    %v563 = vmin.f32 %v562, 3.0
    %v564 = vadd.f32 %v560, 1.0
    %v565 = vmax.f32 %v564, 0.0
    %v566 = vmin.f32 %v565, 3.0
    %v567 = vlaneseq
    %v568 = vshrl.u32 %v567, 7
    %v569 = vsub.s32 0, %v568
    %v570 = vrot.slane %v563, %v569
    %vm571 = vcmp.eq.f32.partialorder %v47, %v570
    %v572 = vsub.f32 1.0, %v561
    %v573 = vlaneseq
    %v574 = vshrl.u32 %v573, 7
    %v575 = vsub.s32 0, %v574
    %v576 = vrot.slane %v572, %v575
    %v577 = vsel %vm571, %v576, 0.0
    %v578 = vlaneseq
    %v579 = vshrl.u32 %v578, 7
    %v580 = vsub.s32 0, %v579
    %v581 = vrot.slane %v566, %v580
    %vm582 = vcmp.eq.f32.partialorder %v47, %v581
    %v583 = vlaneseq
    %v584 = vshrl.u32 %v583, 7
    %v585 = vsub.s32 0, %v584
    %v586 = vrot.slane %v561, %v585
    %v587 = vsel %vm582, %v586, 0.0
    %v588 = vadd.f32 %v577, %v587
    %v589 = vlaneseq
    %v590 = vshrl.u32 %v589, 7
    %v591 = vsub.s32 0, %v590
    %v592 = vrot.slane %v56, %v591
    %v593 = vmul.f32 %v588, %v592
    %v594 = vmul.f32 %v62, 4.0
    %v595 = vsub.f32 %v594, 0.5
    %v596 = vfloor.f32 %v595
    %v597 = vsub.f32 %v595, %v596
    %v598 = vmax.f32 %v596, 0.0
    %v599 = vmin.f32 %v598, 3.0
    %v600 = vadd.f32 %v596, 1.0
    %v601 = vmax.f32 %v600, 0.0
    %v602 = vmin.f32 %v601, 3.0
    %v603 = vlaneseq
    %v604 = vshrl.u32 %v603, 7
    %v605 = vsub.s32 0, %v604
    %v606 = vrot.slane %v599, %v605
    %vm607 = vcmp.eq.f32.partialorder %v47, %v606
    %v608 = vsub.f32 1.0, %v597
    %v609 = vlaneseq
    %v610 = vshrl.u32 %v609, 7
    %v611 = vsub.s32 0, %v610
    %v612 = vrot.slane %v608, %v611
    %v613 = vsel %vm607, %v612, 0.0
    %v614 = vlaneseq
    %v615 = vshrl.u32 %v614, 7
    %v616 = vsub.s32 0, %v615
    %v617 = vrot.slane %v602, %v616
    %vm618 = vcmp.eq.f32.partialorder %v47, %v617
    %v619 = vlaneseq
    %v620 = vshrl.u32 %v619, 7
    %v621 = vsub.s32 0, %v620
    %v622 = vrot.slane %v597, %v621
    %v623 = vsel %vm618, %v622, 0.0
    %v624 = vadd.f32 %v613, %v623
    %v627 = vunpack.c.l.s4 1966171168
    %v628 = vunpack.c.0.s8 %v627
    %v629 = vlaneseq
    %v630 = vshrl.u32 %v629, 7
    %v631 = vsub.s32 %v628, %v630
    %v632 = vrot.slane %v624, %v631
    %v633 = vcombine.high %v632, %v632
    %v635 = vunpack.c.l.s4 1966171168
    %v636 = vunpack.c.0.s8 %v635
    %v637 = vlaneseq
    %v638 = vshrl.u32 %v637, 7
    %v639 = vsub.s32 %v636, %v638
    %v640 = vrot.slane %v632, %v639
    %v642 = vunpack.c.l.s4 1966171168
    %v643 = vunpack.c.0.s8 %v642
    %v644 = vlaneseq
    %v645 = vshrl.u32 %v644, 7
    %v646 = vsub.s32 %v643, %v645
    %v647 = vrot.slane %v633, %v646
    %v648 = vcombine.high %v640, %v640
    %v649 = vcombine.high %v647, %v647
    %v650 = vlaneseq
    %v651 = vshrl.u32 %v650, 7
    %v652 = vsub.s32 0, %v651
    %v653 = vrot.slane %v640, %v652
    %v654 = vlaneseq
    %v655 = vshrl.u32 %v654, 7
    %v656 = vsub.s32 0, %v655
    %v657 = vrot.slane %v647, %v656
    %v658 = vlaneseq
    %v659 = vshrl.u32 %v658, 7
    %v660 = vsub.s32 0, %v659
    %v661 = vrot.slane %v648, %v660
    %v662 = vlaneseq
    %v663 = vshrl.u32 %v662, 7
    %v664 = vsub.s32 0, %v663
    %v665 = vrot.slane %v649, %v664
    %v670 = vmul.f32 %v653, %v593
    %v671 = vmul.f32 %v657, %v593
    %v672 = vmul.f32 %v661, %v593
    %v673 = vmul.f32 %v665, %v593
    %v678 = vcombine.low %v670, %v671
    %v679 = vcombine.low %v672, %v673
    %682 = vst [vmem:[#allocation2 + $0x140] sm:$0xff] %v678
    %683 = vst [vmem:[#allocation2 + $0x148] sm:$0xff] %v679
    %v684 = vmul.f32 %v61, 2.0
    %v685 = vsub.f32 %v684, 0.5
    %v686 = vfloor.f32 %v685
    %v687 = vsub.f32 %v685, %v686
    %v688 = vmax.f32 %v686, 0.0
    %v689 = vmin.f32 %v688, 1.0
    %v690 = vadd.f32 %v686, 1.0
    %v691 = vmax.f32 %v690, 0.0
    %v692 = vmin.f32 %v691, 1.0
    %v693 = vlaneseq
    %v694 = vshrl.u32 %v693, 7
    %v695 = vsub.s32 0, %v694
    %v696 = vrot.slane %v689, %v695
    %vm697 = vcmp.eq.f32.partialorder %v47, %v696
    %v698 = vsub.f32 1.0, %v687
    %v699 = vlaneseq
    %v700 = vshrl.u32 %v699, 7
    %v701 = vsub.s32 0, %v700
    %v702 = vrot.slane %v698, %v701
    %v703 = vsel %vm697, %v702, 0.0
    %v704 = vlaneseq
    %v705 = vshrl.u32 %v704, 7
    %v706 = vsub.s32 0, %v705
    %v707 = vrot.slane %v692, %v706
    %vm708 = vcmp.eq.f32.partialorder %v47, %v707
    %v709 = vlaneseq
    %v710 = vshrl.u32 %v709, 7
    %v711 = vsub.s32 0, %v710
    %v712 = vrot.slane %v687, %v711
    %v713 = vsel %vm708, %v712, 0.0
    %v714 = vadd.f32 %v703, %v713
    %v715 = vlaneseq
    %v716 = vshrl.u32 %v715, 7
    %v717 = vsub.s32 0, %v716
    %v718 = vrot.slane %v60, %v717
    %v719 = vmul.f32 %v714, %v718
    %v720 = vmul.f32 %v62, 2.0
    %v721 = vsub.f32 %v720, 0.5
    %v722 = vfloor.f32 %v721
    %v723 = vsub.f32 %v721, %v722
    %v724 = vmax.f32 %v722, 0.0
    %v725 = vmin.f32 %v724, 1.0
    %v726 = vadd.f32 %v722, 1.0
    %v727 = vmax.f32 %v726, 0.0
    %v728 = vmin.f32 %v727, 1.0
    %v729 = vlaneseq
    %v730 = vshrl.u32 %v729, 7
    %v731 = vsub.s32 0, %v730
    %v732 = vrot.slane %v725, %v731
    %vm733 = vcmp.eq.f32.partialorder %v47, %v732
    %v734 = vsub.f32 1.0, %v723
    %v735 = vlaneseq
    %v736 = vshrl.u32 %v735, 7
    %v737 = vsub.s32 0, %v736
    %v738 = vrot.slane %v734, %v737
    %v739 = vsel %vm733, %v738, 0.0
    %v740 = vlaneseq
    %v741 = vshrl.u32 %v740, 7
    %v742 = vsub.s32 0, %v741
    %v743 = vrot.slane %v728, %v742
    %vm744 = vcmp.eq.f32.partialorder %v47, %v743
    %v745 = vlaneseq
    %v746 = vshrl.u32 %v745, 7
    %v747 = vsub.s32 0, %v746
    %v748 = vrot.slane %v723, %v747
    %v749 = vsel %vm744, %v748, 0.0
    %v750 = vadd.f32 %v739, %v749
    %vm751 = vcmask 1041408
    %v752 = vsel %vm751, %v750, 0.0
    %v755 = vunpack.c.l.s4 1966171168
    %v756 = vunpack.c.0.s8 %v755
    %v757 = vlaneseq
    %v758 = vshrl.u32 %v757, 7
    %v759 = vsub.s32 %v756, %v758
    %v760 = vrot.slane %v752, %v759
    %v761 = vcombine.high %v760, %v760
    %v763 = vunpack.c.l.s4 1966171168
    %v764 = vunpack.c.0.s8 %v763
    %v765 = vlaneseq
    %v766 = vshrl.u32 %v765, 7
    %v767 = vsub.s32 %v764, %v766
    %v768 = vrot.slane %v760, %v767
    %v770 = vunpack.c.l.s4 1966171168
    %v771 = vunpack.c.0.s8 %v770
    %v772 = vlaneseq
    %v773 = vshrl.u32 %v772, 7
    %v774 = vsub.s32 %v771, %v773
    %v775 = vrot.slane %v761, %v774
    %v776 = vcombine.high %v768, %v768
    %v777 = vcombine.high %v775, %v775
    %v778 = vlaneseq
    %v779 = vshrl.u32 %v778, 7
    %v780 = vsub.s32 0, %v779
    %v781 = vrot.slane %v768, %v780
    %v782 = vlaneseq
    %v783 = vshrl.u32 %v782, 7
    %v784 = vsub.s32 0, %v783
    %v785 = vrot.slane %v775, %v784
    %v786 = vlaneseq
    %v787 = vshrl.u32 %v786, 7
    %v788 = vsub.s32 0, %v787
    %v789 = vrot.slane %v776, %v788
    %v790 = vlaneseq
    %v791 = vshrl.u32 %v790, 7
    %v792 = vsub.s32 0, %v791
    %v793 = vrot.slane %v777, %v792
    %v798 = vmul.f32 %v781, %v719
    %v799 = vmul.f32 %v785, %v719
    %v800 = vmul.f32 %v789, %v719
    %v801 = vmul.f32 %v793, %v719
    %v806 = vcombine.low %v798, %v799
    %v807 = vcombine.low %v800, %v801
    %v809 = vunpack.c.l.s4 1983009808
    %v810 = vunpack.c.0.s8 %v809
    %v811 = vlaneseq
    %v812 = vshrl.u32 %v811, 7
    %v813 = vsub.s32 %v810, %v812
    %v814 = vrot.slane %v806, %v813
    %v816 = vunpack.c.l.s4 1983009808
    %v817 = vunpack.c.0.s8 %v816
    %v818 = vlaneseq
    %v819 = vshrl.u32 %v818, 7
    %v820 = vsub.s32 %v817, %v819
    %v821 = vrot.slane %v807, %v820
    %v822 = vcombine.low %v814, %v821
    %824 = vst [vmem:[#allocation2 + $0x150] sm:$0xff] %v822
    %v825 = vld [vmem:[#allocation6] sm:$0xff]
    %v826 = vld [vmem:[#allocation6 + $0x8] sm:$0xff]
    %v827 = vld [vmem:[#allocation6 + $0x10] sm:$0xff]
    %v828 = vld [vmem:[#allocation2] sm:$0xff]
    %v829 = vld [vmem:[#allocation2 + $0x8] sm:$0xff]
    %v830 = vld [vmem:[#allocation2 + $0x10] sm:$0xff]
    %v831 = vld [vmem:[#allocation2 + $0x18] sm:$0xff]
    %v832 = vld [vmem:[#allocation2 + $0x20] sm:$0xff]
    %v833 = vld [vmem:[#allocation2 + $0x28] sm:$0xff]
    %v834 = vld [vmem:[#allocation2 + $0x30] sm:$0xff]
    %v835 = vld [vmem:[#allocation2 + $0x38] sm:$0xff]
    %v836 = vld [vmem:[#allocation2 + $0x40] sm:$0xff]
    %v837 = vld [vmem:[#allocation2 + $0x48] sm:$0xff]
    %v838 = vld [vmem:[#allocation2 + $0x50] sm:$0xff]
    %v839 = vld [vmem:[#allocation2 + $0x58] sm:$0xff]
    %v840 = vld [vmem:[#allocation2 + $0x60] sm:$0xff]
    %v841 = vld [vmem:[#allocation2 + $0x68] sm:$0xff]
    %v842 = vld [vmem:[#allocation2 + $0x70] sm:$0xff]
    %v843 = vld [vmem:[#allocation2 + $0x78] sm:$0xff]
    %v844 = vld [vmem:[#allocation2 + $0x80] sm:$0xff]
    %v845 = vld [vmem:[#allocation2 + $0x88] sm:$0xff]
    %v846 = vld [vmem:[#allocation2 + $0x90] sm:$0xff]
    %v847 = vld [vmem:[#allocation2 + $0x98] sm:$0xff]
    %v848 = vld [vmem:[#allocation2 + $0xa0] sm:$0xff]
    %v849 = vld [vmem:[#allocation2 + $0xa8] sm:$0xff]
    %v850 = vld [vmem:[#allocation2 + $0xb0] sm:$0xff]
    %v851 = vld [vmem:[#allocation2 + $0xb8] sm:$0xff]
    %v852 = vld [vmem:[#allocation2 + $0xc0] sm:$0xff]
    %v853 = vld [vmem:[#allocation2 + $0xc8] sm:$0xff]
    %v854 = vld [vmem:[#allocation2 + $0xd0] sm:$0xff]
    %v855 = vld [vmem:[#allocation2 + $0xd8] sm:$0xff]
    %v856 = vld [vmem:[#allocation2 + $0xe0] sm:$0xff]
    %v857 = vld [vmem:[#allocation2 + $0xe8] sm:$0xff]
    %v858 = vld [vmem:[#allocation2 + $0xf0] sm:$0xff]
    %v859 = vld [vmem:[#allocation2 + $0xf8] sm:$0xff]
    %v860 = vld [vmem:[#allocation2 + $0x100] sm:$0xff]
    %v861 = vld [vmem:[#allocation2 + $0x108] sm:$0xff]
    %v862 = vld [vmem:[#allocation2 + $0x110] sm:$0xff]
    %v863 = vld [vmem:[#allocation2 + $0x118] sm:$0xff]
    %v864 = vld [vmem:[#allocation2 + $0x120] sm:$0xff]
    %v865 = vld [vmem:[#allocation2 + $0x128] sm:$0xff]
    %v866 = vld [vmem:[#allocation2 + $0x130] sm:$0xff]
    %v867 = vld [vmem:[#allocation2 + $0x138] sm:$0xff]
    %v868 = vld [vmem:[#allocation2 + $0x140] sm:$0xff]
    %v869 = vld [vmem:[#allocation2 + $0x148] sm:$0xff]
    %v870 = vld [vmem:[#allocation2 + $0x150] sm:$0xff]
    %vm871 = vcmask 719872
    %v873 = vsel %vm871, %v827, 0
    %875 = vmatprep.subr.mxu0 0.0
    %876 = vmatpush1.msra.mxu0 %v828
    %877 = vmatprep.subr.mxu0 0.0
    %878 = vmatpush1.msra.mxu0 %v829
    %879 = vmatprep.subr.mxu0 0.0
    %880 = vmatpush1.msra.mxu0 %v830
    %881 = vmatprep.subr.mxu0 0.0
    %882 = vmatpush1.msra.mxu0 %v831
    %883 = vmatprep.subr.mxu0 0.0
    %884 = vmatpush1.msra.mxu0 %v832
    %885 = vmatprep.subr.mxu0 0.0
    %886 = vmatpush1.msra.mxu0 %v833
    %887 = vmatprep.subr.mxu0 0.0
    %888 = vmatpush1.msra.mxu0 %v834
    %889 = vmatprep.subr.mxu0 0.0
    %890 = vmatpush1.msra.mxu0 %v835
    %891 = vmatprep.subr.mxu0 0.0
    %892 = vmatpush1.msra.mxu0 %v836
    %893 = vmatprep.subr.mxu0 0.0
    %894 = vmatpush1.msra.mxu0 %v837
    %895 = vmatprep.subr.mxu0 0.0
    %896 = vmatpush1.msra.mxu0 %v838
    %897 = vmatprep.subr.mxu0 0.0
    %898 = vmatpush1.msra.mxu0 %v839
    %899 = vmatprep.subr.mxu0 0.0
    %900 = vmatpush1.msra.mxu0 %v840
    %901 = vmatprep.subr.mxu0 0.0
    %902 = vmatpush1.msra.mxu0 %v841
    %903 = vmatprep.subr.mxu0 0.0
    %904 = vmatpush1.msra.mxu0 %v842
    %905 = vmatprep.subr.mxu0 0.0
    %906 = vmatpush1.msra.mxu0 %v843
    %907 = vmatprep.subr.mxu0 0.0
    %908 = vmatpush1.msra.mxu0 %v844
    %909 = vmatprep.subr.mxu0 0.0
    %910 = vmatpush1.msra.mxu0 %v845
    %911 = vmatprep.subr.mxu0 0.0
    %912 = vmatpush1.msra.mxu0 %v846
    %913 = vmatprep.subr.mxu0 0.0
    %914 = vmatpush1.msra.mxu0 %v847
    %915 = vmatprep.subr.mxu0 0.0
    %916 = vmatpush1.msra.mxu0 %v848
    %917 = vmatprep.subr.mxu0 0.0
    %918 = vmatpush1.msra.mxu0 %v849
    %919 = vmatprep.subr.mxu0 0.0
    %920 = vmatpush1.msra.mxu0 %v850
    %921 = vmatprep.subr.mxu0 0.0
    %922 = vmatpush1.msra.mxu0 %v851
    %923 = vmatprep.subr.mxu0 0.0
    %924 = vmatpush1.msra.mxu0 %v852
    %925 = vmatprep.subr.mxu0 0.0
    %926 = vmatpush1.msra.mxu0 %v853
    %927 = vmatprep.subr.mxu0 0.0
    %928 = vmatpush1.msra.mxu0 %v854
    %929 = vmatprep.subr.mxu0 0.0
    %930 = vmatpush1.msra.mxu0 %v855
    %931 = vmatprep.subr.mxu0 0.0
    %932 = vmatpush1.msra.mxu0 %v856
    %933 = vmatprep.subr.mxu0 0.0
    %934 = vmatpush1.msra.mxu0 %v857
    %935 = vmatprep.subr.mxu0 0.0
    %936 = vmatpush1.msra.mxu0 %v858
    %937 = vmatprep.subr.mxu0 0.0
    %938 = vmatpush1.msra.mxu0 %v859
    %939 = vmatprep.mubr.f32.mxu0 %v826
    %940 = vmatmul.mubr.f32.gmra.mrb[0].mxu0 %v825
    %v941 = vpop.f32.mrb[0].mxu0
    %v942 = vadd.f32 0.0, %v941
    %v943 = vpop.f32.mrb[0].mxu0
    %944 = vdwg.mxu0
    %945 = vmatprep.subr.mxu0 0.0
    %946 = vmatpush1.msra.mxu0 %v860
    %947 = vmatprep.subr.mxu0 0.0
    %948 = vmatpush1.msra.mxu0 %v861
    %949 = vmatprep.subr.mxu0 0.0
    %950 = vmatpush1.msra.mxu0 %v862
    %951 = vmatprep.subr.mxu0 0.0
    %952 = vmatpush1.msra.mxu0 %v863
    %953 = vmatprep.subr.mxu0 0.0
    %954 = vmatpush1.msra.mxu0 %v864
    %955 = vmatprep.subr.mxu0 0.0
    %956 = vmatpush1.msra.mxu0 %v865
    %957 = vmatprep.subr.mxu0 0.0
    %958 = vmatpush1.msra.mxu0 %v866
    %959 = vmatprep.subr.mxu0 0.0
    %960 = vmatpush1.msra.mxu0 %v867
    %961 = vmatprep.subr.mxu0 0.0
    %962 = vmatpush1.msra.mxu0 %v868
    %963 = vmatprep.subr.mxu0 0.0
    %964 = vmatpush1.msra.mxu0 %v869
    %965 = vmatprep.subr.mxu0 0.0
    %966 = vmatpush1.msra.mxu0 %v870
    %967 = vmatprep.subr.mxu0 0.0
    %968 = vmatpush1.msra.mxu0 0.0
    %969 = vmatprep.subr.mxu0 0.0
    %970 = vmatpush1.msra.mxu0 0.0
    %971 = vmatprep.subr.mxu0 0.0
    %972 = vmatpush1.msra.mxu0 0.0
    %973 = vmatprep.subr.mxu0 0.0
    %974 = vmatpush1.msra.mxu0 0.0
    %975 = vmatprep.subr.mxu0 0.0
    %976 = vmatpush1.msra.mxu0 0.0
    %977 = vmatprep.subr.mxu0 0.0
    %978 = vmatpush1.msra.mxu0 0.0
    %979 = vmatprep.subr.mxu0 0.0
    %980 = vmatpush1.msra.mxu0 0.0
    %981 = vmatprep.subr.mxu0 0.0
    %982 = vmatpush1.msra.mxu0 0.0
    %983 = vmatprep.subr.mxu0 0.0
    %984 = vmatpush1.msra.mxu0 0.0
    %985 = vmatprep.subr.mxu0 0.0
    %986 = vmatpush1.msra.mxu0 0.0
    %987 = vmatprep.subr.mxu0 0.0
    %988 = vmatpush1.msra.mxu0 0.0
    %989 = vmatprep.subr.mxu0 0.0
    %990 = vmatpush1.msra.mxu0 0.0
    %991 = vmatprep.subr.mxu0 0.0
    %992 = vmatpush1.msra.mxu0 0.0
    %993 = vmatprep.subr.mxu0 0.0
    %994 = vmatpush1.msra.mxu0 0.0
    %995 = vmatprep.subr.mxu0 0.0
    %996 = vmatpush1.msra.mxu0 0.0
    %997 = vmatprep.subr.mxu0 0.0
    %998 = vmatpush1.msra.mxu0 0.0
    %999 = vmatprep.subr.mxu0 0.0
    %1000 = vmatpush1.msra.mxu0 0.0
    %1001 = vmatprep.subr.mxu0 0.0
    %1002 = vmatpush1.msra.mxu0 0.0
    %1003 = vmatprep.subr.mxu0 0.0
    %1004 = vmatpush1.msra.mxu0 0.0
    %1005 = vmatprep.subr.mxu0 0.0
    %1006 = vmatpush1.msra.mxu0 0.0
    %1007 = vmatprep.subr.mxu0 0.0
    %1008 = vmatpush1.msra.mxu0 0.0
    %1009 = vmatprep.mubr.f32.mxu0 0.0
    %1010 = vmatmul.mubr.f32.gmra.mrb[0].mxu0 %v873
    %v1011 = vpop.f32.mrb[0].mxu0
    %v1012 = vadd.f32 %v942, %v1011
    %v1013 = vpop.f32.mrb[0].mxu0
    %1014 = vdwg.mxu0
    %1015 = vst [vmem:[#allocation8] sm:$0xff] %v1012
    %v1016 = vld [vmem:[#allocation3 + $0x2] sm:$0x1]
    %v1017 = vld [vmem:[#allocation3 + $0x3] sm:$0x1]
    %v1018 = vmul.f32 %v1016, 16.0
    %v1019 = vsub.f32 %v1018, 0.5
    %v1020 = vfloor.f32 %v1019
    %v1021 = vsub.f32 %v1019, %v1020
    %v1022 = vmax.f32 %v1020, 0.0
    %v1023 = vmin.f32 %v1022, 15.0
    %v1024 = vadd.f32 %v1020, 1.0
    %v1025 = vmax.f32 %v1024, 0.0
    %v1026 = vmin.f32 %v1025, 15.0
    %v1027 = vlaneseq
    %v1028 = vshrl.u32 %v1027, 7
    %v1029 = vsub.s32 0, %v1028
    %v1030 = vrot.slane %v1023, %v1029
    %vm1031 = vcmp.eq.f32.partialorder %v47, %v1030
    %vm1032 = vcmp.eq.f32.partialorder %v48, %v1030
    %v1033 = vsub.f32 1.0, %v1021
    %v1034 = vlaneseq
    %v1035 = vshrl.u32 %v1034, 7
    %v1036 = vsub.s32 0, %v1035
    %v1037 = vrot.slane %v1033, %v1036
    %v1038 = vsel %vm1031, %v1037, 0.0
    %v1039 = vsel %vm1032, %v1037, 0.0
    %v1040 = vlaneseq
    %v1041 = vshrl.u32 %v1040, 7
    %v1042 = vsub.s32 0, %v1041
    %v1043 = vrot.slane %v1026, %v1042
    %vm1044 = vcmp.eq.f32.partialorder %v47, %v1043
    %vm1045 = vcmp.eq.f32.partialorder %v48, %v1043
    %v1046 = vlaneseq
    %v1047 = vshrl.u32 %v1046, 7
    %v1048 = vsub.s32 0, %v1047
    %v1049 = vrot.slane %v1021, %v1048
    %v1050 = vsel %vm1044, %v1049, 0.0
    %v1051 = vsel %vm1045, %v1049, 0.0
    %v1052 = vadd.f32 %v1038, %v1050
    %v1053 = vadd.f32 %v1039, %v1051
    %v1054 = vmul.f32 %v1052, %v102
    %v1055 = vmul.f32 %v1053, %v102
    %v1056 = vmul.f32 %v1017, 16.0
    %v1057 = vsub.f32 %v1056, 0.5
    %v1058 = vfloor.f32 %v1057
    %v1059 = vsub.f32 %v1057, %v1058
    %v1060 = vmax.f32 %v1058, 0.0
    %v1061 = vmin.f32 %v1060, 15.0
    %v1062 = vadd.f32 %v1058, 1.0
    %v1063 = vmax.f32 %v1062, 0.0
    %v1064 = vmin.f32 %v1063, 15.0
    %v1065 = vlaneseq
    %v1066 = vshrl.u32 %v1065, 7
    %v1067 = vsub.s32 0, %v1066
    %v1068 = vrot.slane %v1061, %v1067
    %vm1069 = vcmp.eq.f32.partialorder %v47, %v1068
    %vm1070 = vcmp.eq.f32.partialorder %v48, %v1068
    %v1071 = vsub.f32 1.0, %v1059
    %v1072 = vlaneseq
    %v1073 = vshrl.u32 %v1072, 7
    %v1074 = vsub.s32 0, %v1073
    %v1075 = vrot.slane %v1071, %v1074
    %v1076 = vsel %vm1069, %v1075, 0.0
    %v1077 = vsel %vm1070, %v1075, 0.0
    %v1078 = vlaneseq
    %v1079 = vshrl.u32 %v1078, 7
    %v1080 = vsub.s32 0, %v1079
    %v1081 = vrot.slane %v1064, %v1080
    %vm1082 = vcmp.eq.f32.partialorder %v47, %v1081
    %vm1083 = vcmp.eq.f32.partialorder %v48, %v1081
    %v1084 = vlaneseq
    %v1085 = vshrl.u32 %v1084, 7
    %v1086 = vsub.s32 0, %v1085
    %v1087 = vrot.slane %v1059, %v1086
    %v1088 = vsel %vm1082, %v1087, 0.0
    %v1089 = vsel %vm1083, %v1087, 0.0
    %v1090 = vadd.f32 %v1076, %v1088
    %v1091 = vadd.f32 %v1077, %v1089
    %v1094 = vcombine.high %v1090, %v1090
    %v1096 = vunpack.c.l.s4 1966171168
    %v1097 = vunpack.c.0.s8 %v1096
    %v1098 = vlaneseq
    %v1099 = vshrl.u32 %v1098, 7
    %v1100 = vsub.s32 %v1097, %v1099
    %v1101 = vrot.slane %v1090, %v1100
    %v1103 = vunpack.c.l.s4 1966171168
    %v1104 = vunpack.c.0.s8 %v1103
    %v1105 = vlaneseq
    %v1106 = vshrl.u32 %v1105, 7
    %v1107 = vsub.s32 %v1104, %v1106
    %v1108 = vrot.slane %v1094, %v1107
    %v1109 = vcombine.high %v1101, %v1101
    %v1110 = vcombine.high %v1108, %v1108
    %v1112 = vunpack.c.l.s4 1966171168
    %v1113 = vunpack.c.0.s8 %v1112
    %v1114 = vlaneseq
    %v1115 = vshrl.u32 %v1114, 7
    %v1116 = vsub.s32 %v1113, %v1115
    %v1117 = vrot.slane %v1101, %v1116
    %v1119 = vunpack.c.l.s4 1966171168
    %v1120 = vunpack.c.0.s8 %v1119
    %v1121 = vlaneseq
    %v1122 = vshrl.u32 %v1121, 7
    %v1123 = vsub.s32 %v1120, %v1122
    %v1124 = vrot.slane %v1108, %v1123
    %v1126 = vunpack.c.l.s4 1966171168
    %v1127 = vunpack.c.0.s8 %v1126
    %v1128 = vlaneseq
    %v1129 = vshrl.u32 %v1128, 7
    %v1130 = vsub.s32 %v1127, %v1129
    %v1131 = vrot.slane %v1109, %v1130
    %v1133 = vunpack.c.l.s4 1966171168
    %v1134 = vunpack.c.0.s8 %v1133
    %v1135 = vlaneseq
    %v1136 = vshrl.u32 %v1135, 7
    %v1137 = vsub.s32 %v1134, %v1136
    %v1138 = vrot.slane %v1110, %v1137
    %v1139 = vcombine.high %v1117, %v1117
    %v1140 = vcombine.high %v1124, %v1124
    %v1141 = vcombine.high %v1131, %v1131
    %v1142 = vcombine.high %v1138, %v1138
    %v1143 = vcombine.high %v1091, %v1091
    %v1145 = vunpack.c.l.s4 1966171168
    %v1146 = vunpack.c.0.s8 %v1145
    %v1147 = vlaneseq
    %v1148 = vshrl.u32 %v1147, 7
    %v1149 = vsub.s32 %v1146, %v1148
    %v1150 = vrot.slane %v1091, %v1149
    %v1152 = vunpack.c.l.s4 1966171168
    %v1153 = vunpack.c.0.s8 %v1152
    %v1154 = vlaneseq
    %v1155 = vshrl.u32 %v1154, 7
    %v1156 = vsub.s32 %v1153, %v1155
    %v1157 = vrot.slane %v1143, %v1156
    %v1158 = vcombine.high %v1150, %v1150
    %v1159 = vcombine.high %v1157, %v1157
    %v1161 = vunpack.c.l.s4 1966171168
    %v1162 = vunpack.c.0.s8 %v1161
    %v1163 = vlaneseq
    %v1164 = vshrl.u32 %v1163, 7
    %v1165 = vsub.s32 %v1162, %v1164
    %v1166 = vrot.slane %v1150, %v1165
    %v1168 = vunpack.c.l.s4 1966171168
    %v1169 = vunpack.c.0.s8 %v1168
    %v1170 = vlaneseq
    %v1171 = vshrl.u32 %v1170, 7
    %v1172 = vsub.s32 %v1169, %v1171
    %v1173 = vrot.slane %v1157, %v1172
    %v1175 = vunpack.c.l.s4 1966171168
    %v1176 = vunpack.c.0.s8 %v1175
    %v1177 = vlaneseq
    %v1178 = vshrl.u32 %v1177, 7
    %v1179 = vsub.s32 %v1176, %v1178
    %v1180 = vrot.slane %v1158, %v1179
    %v1182 = vunpack.c.l.s4 1966171168
    %v1183 = vunpack.c.0.s8 %v1182
    %v1184 = vlaneseq
    %v1185 = vshrl.u32 %v1184, 7
    %v1186 = vsub.s32 %v1183, %v1185
    %v1187 = vrot.slane %v1159, %v1186
    %v1188 = vcombine.high %v1166, %v1166
    %v1189 = vcombine.high %v1173, %v1173
    %v1190 = vcombine.high %v1180, %v1180
    %v1191 = vcombine.high %v1187, %v1187
    %v1192 = vlaneseq
    %v1193 = vshrl.u32 %v1192, 7
    %v1194 = vsub.s32 0, %v1193
    %v1195 = vrot.slane %v1117, %v1194
    %v1196 = vlaneseq
    %v1197 = vshrl.u32 %v1196, 7
    %v1198 = vsub.s32 0, %v1197
    %v1199 = vrot.slane %v1131, %v1198
    %v1200 = vlaneseq
    %v1201 = vshrl.u32 %v1200, 7
    %v1202 = vsub.s32 0, %v1201
    %v1203 = vrot.slane %v1139, %v1202
    %v1204 = vlaneseq
    %v1205 = vshrl.u32 %v1204, 7
    %v1206 = vsub.s32 0, %v1205
    %v1207 = vrot.slane %v1141, %v1206
    %v1208 = vlaneseq
    %v1209 = vshrl.u32 %v1208, 7
    %v1210 = vsub.s32 0, %v1209
    %v1211 = vrot.slane %v1124, %v1210
    %v1212 = vlaneseq
    %v1213 = vshrl.u32 %v1212, 7
    %v1214 = vsub.s32 0, %v1213
    %v1215 = vrot.slane %v1138, %v1214
    %v1216 = vlaneseq
    %v1217 = vshrl.u32 %v1216, 7
    %v1218 = vsub.s32 0, %v1217
    %v1219 = vrot.slane %v1140, %v1218
    %v1220 = vlaneseq
    %v1221 = vshrl.u32 %v1220, 7
    %v1222 = vsub.s32 0, %v1221
    %v1223 = vrot.slane %v1142, %v1222
    %v1224 = vlaneseq
    %v1225 = vshrl.u32 %v1224, 7
    %v1226 = vsub.s32 0, %v1225
    %v1227 = vrot.slane %v1166, %v1226
    %v1228 = vlaneseq
    %v1229 = vshrl.u32 %v1228, 7
    %v1230 = vsub.s32 0, %v1229
    %v1231 = vrot.slane %v1180, %v1230
    %v1232 = vlaneseq
    %v1233 = vshrl.u32 %v1232, 7
    %v1234 = vsub.s32 0, %v1233
    %v1235 = vrot.slane %v1188, %v1234
    %v1236 = vlaneseq
    %v1237 = vshrl.u32 %v1236, 7
    %v1238 = vsub.s32 0, %v1237
    %v1239 = vrot.slane %v1190, %v1238
    %v1240 = vlaneseq
    %v1241 = vshrl.u32 %v1240, 7
    %v1242 = vsub.s32 0, %v1241
    %v1243 = vrot.slane %v1173, %v1242
    %v1244 = vlaneseq
    %v1245 = vshrl.u32 %v1244, 7
    %v1246 = vsub.s32 0, %v1245
    %v1247 = vrot.slane %v1187, %v1246
    %v1248 = vlaneseq
    %v1249 = vshrl.u32 %v1248, 7
    %v1250 = vsub.s32 0, %v1249
    %v1251 = vrot.slane %v1189, %v1250
    %v1252 = vlaneseq
    %v1253 = vshrl.u32 %v1252, 7
    %v1254 = vsub.s32 0, %v1253
    %v1255 = vrot.slane %v1191, %v1254
    %v1272 = vmul.f32 %v1195, %v1054
    %v1273 = vmul.f32 %v1195, %v1055
    %v1274 = vmul.f32 %v1199, %v1054
    %v1275 = vmul.f32 %v1199, %v1055
    %v1276 = vmul.f32 %v1203, %v1054
    %v1277 = vmul.f32 %v1203, %v1055
    %v1278 = vmul.f32 %v1207, %v1054
    %v1279 = vmul.f32 %v1207, %v1055
    %v1280 = vmul.f32 %v1211, %v1054
    %v1281 = vmul.f32 %v1211, %v1055
    %v1282 = vmul.f32 %v1215, %v1054
    %v1283 = vmul.f32 %v1215, %v1055
    %v1284 = vmul.f32 %v1219, %v1054
    %v1285 = vmul.f32 %v1219, %v1055
    %v1286 = vmul.f32 %v1223, %v1054
    %v1287 = vmul.f32 %v1223, %v1055
    %v1288 = vmul.f32 %v1227, %v1054
    %v1289 = vmul.f32 %v1227, %v1055
    %v1290 = vmul.f32 %v1231, %v1054
    %v1291 = vmul.f32 %v1231, %v1055
    %v1292 = vmul.f32 %v1235, %v1054
    %v1293 = vmul.f32 %v1235, %v1055
    %v1294 = vmul.f32 %v1239, %v1054
    %v1295 = vmul.f32 %v1239, %v1055
    %v1296 = vmul.f32 %v1243, %v1054
    %v1297 = vmul.f32 %v1243, %v1055
    %v1298 = vmul.f32 %v1247, %v1054
    %v1299 = vmul.f32 %v1247, %v1055
    %v1300 = vmul.f32 %v1251, %v1054
    %v1301 = vmul.f32 %v1251, %v1055
    %v1302 = vmul.f32 %v1255, %v1054
    %v1303 = vmul.f32 %v1255, %v1055
    %1304 = vst [vmem:[#allocation2] sm:$0xff] %v1272
    %1305 = vst [vmem:[#allocation2 + $0x8] sm:$0xff] %v1273
    %1306 = vst [vmem:[#allocation2 + $0x10] sm:$0xff] %v1274
    %1307 = vst [vmem:[#allocation2 + $0x18] sm:$0xff] %v1275
    %1308 = vst [vmem:[#allocation2 + $0x20] sm:$0xff] %v1276
    %1309 = vst [vmem:[#allocation2 + $0x28] sm:$0xff] %v1277
    %1310 = vst [vmem:[#allocation2 + $0x30] sm:$0xff] %v1278
    %1311 = vst [vmem:[#allocation2 + $0x38] sm:$0xff] %v1279
    %1312 = vst [vmem:[#allocation2 + $0x40] sm:$0xff] %v1280
    %1313 = vst [vmem:[#allocation2 + $0x48] sm:$0xff] %v1281
    %1314 = vst [vmem:[#allocation2 + $0x50] sm:$0xff] %v1282
    %1315 = vst [vmem:[#allocation2 + $0x58] sm:$0xff] %v1283
    %1316 = vst [vmem:[#allocation2 + $0x60] sm:$0xff] %v1284
    %1317 = vst [vmem:[#allocation2 + $0x68] sm:$0xff] %v1285
    %1318 = vst [vmem:[#allocation2 + $0x70] sm:$0xff] %v1286
    %1319 = vst [vmem:[#allocation2 + $0x78] sm:$0xff] %v1287
    %1320 = vst [vmem:[#allocation2 + $0x80] sm:$0xff] %v1288
    %1321 = vst [vmem:[#allocation2 + $0x88] sm:$0xff] %v1289
    %1322 = vst [vmem:[#allocation2 + $0x90] sm:$0xff] %v1290
    %1323 = vst [vmem:[#allocation2 + $0x98] sm:$0xff] %v1291
    %1324 = vst [vmem:[#allocation2 + $0xa0] sm:$0xff] %v1292
    %1325 = vst [vmem:[#allocation2 + $0xa8] sm:$0xff] %v1293
    %1326 = vst [vmem:[#allocation2 + $0xb0] sm:$0xff] %v1294
    %1327 = vst [vmem:[#allocation2 + $0xb8] sm:$0xff] %v1295
    %1328 = vst [vmem:[#allocation2 + $0xc0] sm:$0xff] %v1296
    %1329 = vst [vmem:[#allocation2 + $0xc8] sm:$0xff] %v1297
    %1330 = vst [vmem:[#allocation2 + $0xd0] sm:$0xff] %v1298
    %1331 = vst [vmem:[#allocation2 + $0xd8] sm:$0xff] %v1299
    %1332 = vst [vmem:[#allocation2 + $0xe0] sm:$0xff] %v1300
    %1333 = vst [vmem:[#allocation2 + $0xe8] sm:$0xff] %v1301
    %1334 = vst [vmem:[#allocation2 + $0xf0] sm:$0xff] %v1302
    %1335 = vst [vmem:[#allocation2 + $0xf8] sm:$0xff] %v1303
    %v1336 = vmul.f32 %v1016, 8.0
    %v1337 = vsub.f32 %v1336, 0.5
    %v1338 = vfloor.f32 %v1337
    %v1339 = vsub.f32 %v1337, %v1338
    %v1340 = vmax.f32 %v1338, 0.0
    %v1341 = vmin.f32 %v1340, 7.0
    %v1342 = vadd.f32 %v1338, 1.0
    %v1343 = vmax.f32 %v1342, 0.0
    %v1344 = vmin.f32 %v1343, 7.0
    %v1345 = vlaneseq
    %v1346 = vshrl.u32 %v1345, 7
    %v1347 = vsub.s32 0, %v1346
    %v1348 = vrot.slane %v1341, %v1347
    %vm1349 = vcmp.eq.f32.partialorder %v47, %v1348
    %v1350 = vsub.f32 1.0, %v1339
    %v1351 = vlaneseq
    %v1352 = vshrl.u32 %v1351, 7
    %v1353 = vsub.s32 0, %v1352
    %v1354 = vrot.slane %v1350, %v1353
    %v1355 = vsel %vm1349, %v1354, 0.0
    %v1356 = vlaneseq
    %v1357 = vshrl.u32 %v1356, 7
    %v1358 = vsub.s32 0, %v1357
    %v1359 = vrot.slane %v1344, %v1358
    %vm1360 = vcmp.eq.f32.partialorder %v47, %v1359
    %v1361 = vlaneseq
    %v1362 = vshrl.u32 %v1361, 7
    %v1363 = vsub.s32 0, %v1362
    %v1364 = vrot.slane %v1339, %v1363
    %v1365 = vsel %vm1360, %v1364, 0.0
    %v1366 = vadd.f32 %v1355, %v1365
    %v1367 = vmul.f32 %v1366, %v419
    %v1368 = vmul.f32 %v1017, 8.0
    %v1369 = vsub.f32 %v1368, 0.5
    %v1370 = vfloor.f32 %v1369
    %v1371 = vsub.f32 %v1369, %v1370
    %v1372 = vmax.f32 %v1370, 0.0
    %v1373 = vmin.f32 %v1372, 7.0
    %v1374 = vadd.f32 %v1370, 1.0
    %v1375 = vmax.f32 %v1374, 0.0
    %v1376 = vmin.f32 %v1375, 7.0
    %v1377 = vlaneseq
    %v1378 = vshrl.u32 %v1377, 7
    %v1379 = vsub.s32 0, %v1378
    %v1380 = vrot.slane %v1373, %v1379
    %vm1381 = vcmp.eq.f32.partialorder %v47, %v1380
    %v1382 = vsub.f32 1.0, %v1371
    %v1383 = vlaneseq
    %v1384 = vshrl.u32 %v1383, 7
    %v1385 = vsub.s32 0, %v1384
    %v1386 = vrot.slane %v1382, %v1385
    %v1387 = vsel %vm1381, %v1386, 0.0
    %v1388 = vlaneseq
    %v1389 = vshrl.u32 %v1388, 7
    %v1390 = vsub.s32 0, %v1389
    %v1391 = vrot.slane %v1376, %v1390
    %vm1392 = vcmp.eq.f32.partialorder %v47, %v1391
    %v1393 = vlaneseq
    %v1394 = vshrl.u32 %v1393, 7
    %v1395 = vsub.s32 0, %v1394
    %v1396 = vrot.slane %v1371, %v1395
    %v1397 = vsel %vm1392, %v1396, 0.0
    %v1398 = vadd.f32 %v1387, %v1397
    %v1400 = vcombine.high %v1398, %v1398
    %v1402 = vunpack.c.l.s4 1966171168
    %v1403 = vunpack.c.0.s8 %v1402
    %v1404 = vlaneseq
    %v1405 = vshrl.u32 %v1404, 7
    %v1406 = vsub.s32 %v1403, %v1405
    %v1407 = vrot.slane %v1398, %v1406
    %v1409 = vunpack.c.l.s4 1966171168
    %v1410 = vunpack.c.0.s8 %v1409
    %v1411 = vlaneseq
    %v1412 = vshrl.u32 %v1411, 7
    %v1413 = vsub.s32 %v1410, %v1412
    %v1414 = vrot.slane %v1400, %v1413
    %v1415 = vcombine.high %v1407, %v1407
    %v1416 = vcombine.high %v1414, %v1414
    %v1418 = vunpack.c.l.s4 1966171168
    %v1419 = vunpack.c.0.s8 %v1418
    %v1420 = vlaneseq
    %v1421 = vshrl.u32 %v1420, 7
    %v1422 = vsub.s32 %v1419, %v1421
    %v1423 = vrot.slane %v1407, %v1422
    %v1425 = vunpack.c.l.s4 1966171168
    %v1426 = vunpack.c.0.s8 %v1425
    %v1427 = vlaneseq
    %v1428 = vshrl.u32 %v1427, 7
    %v1429 = vsub.s32 %v1426, %v1428
    %v1430 = vrot.slane %v1414, %v1429
    %v1432 = vunpack.c.l.s4 1966171168
    %v1433 = vunpack.c.0.s8 %v1432
    %v1434 = vlaneseq
    %v1435 = vshrl.u32 %v1434, 7
    %v1436 = vsub.s32 %v1433, %v1435
    %v1437 = vrot.slane %v1415, %v1436
    %v1439 = vunpack.c.l.s4 1966171168
    %v1440 = vunpack.c.0.s8 %v1439
    %v1441 = vlaneseq
    %v1442 = vshrl.u32 %v1441, 7
    %v1443 = vsub.s32 %v1440, %v1442
    %v1444 = vrot.slane %v1416, %v1443
    %v1445 = vcombine.high %v1423, %v1423
    %v1446 = vcombine.high %v1430, %v1430
    %v1447 = vcombine.high %v1437, %v1437
    %v1448 = vcombine.high %v1444, %v1444
    %v1449 = vlaneseq
    %v1450 = vshrl.u32 %v1449, 7
    %v1451 = vsub.s32 0, %v1450
    %v1452 = vrot.slane %v1423, %v1451
    %v1453 = vlaneseq
    %v1454 = vshrl.u32 %v1453, 7
    %v1455 = vsub.s32 0, %v1454
    %v1456 = vrot.slane %v1437, %v1455
    %v1457 = vlaneseq
    %v1458 = vshrl.u32 %v1457, 7
    %v1459 = vsub.s32 0, %v1458
    %v1460 = vrot.slane %v1445, %v1459
    %v1461 = vlaneseq
    %v1462 = vshrl.u32 %v1461, 7
    %v1463 = vsub.s32 0, %v1462
    %v1464 = vrot.slane %v1447, %v1463
    %v1465 = vlaneseq
    %v1466 = vshrl.u32 %v1465, 7
    %v1467 = vsub.s32 0, %v1466
    %v1468 = vrot.slane %v1430, %v1467
    %v1469 = vlaneseq
    %v1470 = vshrl.u32 %v1469, 7
    %v1471 = vsub.s32 0, %v1470
    %v1472 = vrot.slane %v1444, %v1471
    %v1473 = vlaneseq
    %v1474 = vshrl.u32 %v1473, 7
    %v1475 = vsub.s32 0, %v1474
    %v1476 = vrot.slane %v1446, %v1475
    %v1477 = vlaneseq
    %v1478 = vshrl.u32 %v1477, 7
    %v1479 = vsub.s32 0, %v1478
    %v1480 = vrot.slane %v1448, %v1479
    %v1489 = vmul.f32 %v1452, %v1367
    %v1490 = vmul.f32 %v1456, %v1367
    %v1491 = vmul.f32 %v1460, %v1367
    %v1492 = vmul.f32 %v1464, %v1367
    %v1493 = vmul.f32 %v1468, %v1367
    %v1494 = vmul.f32 %v1472, %v1367
    %v1495 = vmul.f32 %v1476, %v1367
    %v1496 = vmul.f32 %v1480, %v1367
    %1497 = vst [vmem:[#allocation2 + $0x100] sm:$0xff] %v1489
    %1498 = vst [vmem:[#allocation2 + $0x108] sm:$0xff] %v1490
    %1499 = vst [vmem:[#allocation2 + $0x110] sm:$0xff] %v1491
    %1500 = vst [vmem:[#allocation2 + $0x118] sm:$0xff] %v1492
    %1501 = vst [vmem:[#allocation2 + $0x120] sm:$0xff] %v1493
    %1502 = vst [vmem:[#allocation2 + $0x128] sm:$0xff] %v1494
    %1503 = vst [vmem:[#allocation2 + $0x130] sm:$0xff] %v1495
    %1504 = vst [vmem:[#allocation2 + $0x138] sm:$0xff] %v1496
    %v1505 = vmul.f32 %v1016, 4.0
    %v1506 = vsub.f32 %v1505, 0.5
    %v1507 = vfloor.f32 %v1506
    %v1508 = vsub.f32 %v1506, %v1507
    %v1509 = vmax.f32 %v1507, 0.0
    %v1510 = vmin.f32 %v1509, 3.0
    %v1511 = vadd.f32 %v1507, 1.0
    %v1512 = vmax.f32 %v1511, 0.0
    %v1513 = vmin.f32 %v1512, 3.0
    %v1514 = vlaneseq
    %v1515 = vshrl.u32 %v1514, 7
    %v1516 = vsub.s32 0, %v1515
    %v1517 = vrot.slane %v1510, %v1516
    %vm1518 = vcmp.eq.f32.partialorder %v47, %v1517
    %v1519 = vsub.f32 1.0, %v1508
    %v1520 = vlaneseq
    %v1521 = vshrl.u32 %v1520, 7
    %v1522 = vsub.s32 0, %v1521
    %v1523 = vrot.slane %v1519, %v1522
    %v1524 = vsel %vm1518, %v1523, 0.0
    %v1525 = vlaneseq
    %v1526 = vshrl.u32 %v1525, 7
    %v1527 = vsub.s32 0, %v1526
    %v1528 = vrot.slane %v1513, %v1527
    %vm1529 = vcmp.eq.f32.partialorder %v47, %v1528
    %v1530 = vlaneseq
    %v1531 = vshrl.u32 %v1530, 7
    %v1532 = vsub.s32 0, %v1531
    %v1533 = vrot.slane %v1508, %v1532
    %v1534 = vsel %vm1529, %v1533, 0.0
    %v1535 = vadd.f32 %v1524, %v1534
    %v1536 = vmul.f32 %v1535, %v592
    %v1537 = vmul.f32 %v1017, 4.0
    %v1538 = vsub.f32 %v1537, 0.5
    %v1539 = vfloor.f32 %v1538
    %v1540 = vsub.f32 %v1538, %v1539
    %v1541 = vmax.f32 %v1539, 0.0
    %v1542 = vmin.f32 %v1541, 3.0
    %v1543 = vadd.f32 %v1539, 1.0
    %v1544 = vmax.f32 %v1543, 0.0
    %v1545 = vmin.f32 %v1544, 3.0
    %v1546 = vlaneseq
    %v1547 = vshrl.u32 %v1546, 7
    %v1548 = vsub.s32 0, %v1547
    %v1549 = vrot.slane %v1542, %v1548
    %vm1550 = vcmp.eq.f32.partialorder %v47, %v1549
    %v1551 = vsub.f32 1.0, %v1540
    %v1552 = vlaneseq
    %v1553 = vshrl.u32 %v1552, 7
    %v1554 = vsub.s32 0, %v1553
    %v1555 = vrot.slane %v1551, %v1554
    %v1556 = vsel %vm1550, %v1555, 0.0
    %v1557 = vlaneseq
    %v1558 = vshrl.u32 %v1557, 7
    %v1559 = vsub.s32 0, %v1558
    %v1560 = vrot.slane %v1545, %v1559
    %vm1561 = vcmp.eq.f32.partialorder %v47, %v1560
    %v1562 = vlaneseq
    %v1563 = vshrl.u32 %v1562, 7
    %v1564 = vsub.s32 0, %v1563
    %v1565 = vrot.slane %v1540, %v1564
    %v1566 = vsel %vm1561, %v1565, 0.0
    %v1567 = vadd.f32 %v1556, %v1566
    %v1570 = vunpack.c.l.s4 1966171168
    %v1571 = vunpack.c.0.s8 %v1570
    %v1572 = vlaneseq
    %v1573 = vshrl.u32 %v1572, 7
    %v1574 = vsub.s32 %v1571, %v1573
    %v1575 = vrot.slane %v1567, %v1574
    %v1576 = vcombine.high %v1575, %v1575
    %v1578 = vunpack.c.l.s4 1966171168
    %v1579 = vunpack.c.0.s8 %v1578
    %v1580 = vlaneseq
    %v1581 = vshrl.u32 %v1580, 7
    %v1582 = vsub.s32 %v1579, %v1581
    %v1583 = vrot.slane %v1575, %v1582
    %v1585 = vunpack.c.l.s4 1966171168
    %v1586 = vunpack.c.0.s8 %v1585
    %v1587 = vlaneseq
    %v1588 = vshrl.u32 %v1587, 7
    %v1589 = vsub.s32 %v1586, %v1588
    %v1590 = vrot.slane %v1576, %v1589
    %v1591 = vcombine.high %v1583, %v1583
    %v1592 = vcombine.high %v1590, %v1590
    %v1593 = vlaneseq
    %v1594 = vshrl.u32 %v1593, 7
    %v1595 = vsub.s32 0, %v1594
    %v1596 = vrot.slane %v1583, %v1595
    %v1597 = vlaneseq
    %v1598 = vshrl.u32 %v1597, 7
    %v1599 = vsub.s32 0, %v1598
    %v1600 = vrot.slane %v1590, %v1599
    %v1601 = vlaneseq
    %v1602 = vshrl.u32 %v1601, 7
    %v1603 = vsub.s32 0, %v1602
    %v1604 = vrot.slane %v1591, %v1603
    %v1605 = vlaneseq
    %v1606 = vshrl.u32 %v1605, 7
    %v1607 = vsub.s32 0, %v1606
    %v1608 = vrot.slane %v1592, %v1607
    %v1613 = vmul.f32 %v1596, %v1536
    %v1614 = vmul.f32 %v1600, %v1536
    %v1615 = vmul.f32 %v1604, %v1536
    %v1616 = vmul.f32 %v1608, %v1536
    %v1621 = vcombine.low %v1613, %v1614
    %v1622 = vcombine.low %v1615, %v1616
    %1625 = vst [vmem:[#allocation2 + $0x140] sm:$0xff] %v1621
    %1626 = vst [vmem:[#allocation2 + $0x148] sm:$0xff] %v1622
    %v1627 = vmul.f32 %v1016, 2.0
    %v1628 = vsub.f32 %v1627, 0.5
    %v1629 = vfloor.f32 %v1628
    %v1630 = vsub.f32 %v1628, %v1629
    %v1631 = vmax.f32 %v1629, 0.0
    %v1632 = vmin.f32 %v1631, 1.0
    %v1633 = vadd.f32 %v1629, 1.0
    %v1634 = vmax.f32 %v1633, 0.0
    %v1635 = vmin.f32 %v1634, 1.0
    %v1636 = vlaneseq
    %v1637 = vshrl.u32 %v1636, 7
    %v1638 = vsub.s32 0, %v1637
    %v1639 = vrot.slane %v1632, %v1638
    %vm1640 = vcmp.eq.f32.partialorder %v47, %v1639
    %v1641 = vsub.f32 1.0, %v1630
    %v1642 = vlaneseq
    %v1643 = vshrl.u32 %v1642, 7
    %v1644 = vsub.s32 0, %v1643
    %v1645 = vrot.slane %v1641, %v1644
    %v1646 = vsel %vm1640, %v1645, 0.0
    %v1647 = vlaneseq
    %v1648 = vshrl.u32 %v1647, 7
    %v1649 = vsub.s32 0, %v1648
    %v1650 = vrot.slane %v1635, %v1649
    %vm1651 = vcmp.eq.f32.partialorder %v47, %v1650
    %v1652 = vlaneseq
    %v1653 = vshrl.u32 %v1652, 7
    %v1654 = vsub.s32 0, %v1653
    %v1655 = vrot.slane %v1630, %v1654
    %v1656 = vsel %vm1651, %v1655, 0.0
    %v1657 = vadd.f32 %v1646, %v1656
    %v1658 = vmul.f32 %v1657, %v718
    %v1659 = vmul.f32 %v1017, 2.0
    %v1660 = vsub.f32 %v1659, 0.5
    %v1661 = vfloor.f32 %v1660
    %v1662 = vsub.f32 %v1660, %v1661
    %v1663 = vmax.f32 %v1661, 0.0
    %v1664 = vmin.f32 %v1663, 1.0
    %v1665 = vadd.f32 %v1661, 1.0
    %v1666 = vmax.f32 %v1665, 0.0
    %v1667 = vmin.f32 %v1666, 1.0
    %v1668 = vlaneseq
    %v1669 = vshrl.u32 %v1668, 7
    %v1670 = vsub.s32 0, %v1669
    %v1671 = vrot.slane %v1664, %v1670
    %vm1672 = vcmp.eq.f32.partialorder %v47, %v1671
    %v1673 = vsub.f32 1.0, %v1662
    %v1674 = vlaneseq
    %v1675 = vshrl.u32 %v1674, 7
    %v1676 = vsub.s32 0, %v1675
    %v1677 = vrot.slane %v1673, %v1676
    %v1678 = vsel %vm1672, %v1677, 0.0
    %v1679 = vlaneseq
    %v1680 = vshrl.u32 %v1679, 7
    %v1681 = vsub.s32 0, %v1680
    %v1682 = vrot.slane %v1667, %v1681
    %vm1683 = vcmp.eq.f32.partialorder %v47, %v1682
    %v1684 = vlaneseq
    %v1685 = vshrl.u32 %v1684, 7
    %v1686 = vsub.s32 0, %v1685
    %v1687 = vrot.slane %v1662, %v1686
    %v1688 = vsel %vm1683, %v1687, 0.0
    %v1689 = vadd.f32 %v1678, %v1688
    %v1690 = vsel %vm751, %v1689, 0.0
    %v1693 = vunpack.c.l.s4 1966171168
    %v1694 = vunpack.c.0.s8 %v1693
    %v1695 = vlaneseq
    %v1696 = vshrl.u32 %v1695, 7
    %v1697 = vsub.s32 %v1694, %v1696
    %v1698 = vrot.slane %v1690, %v1697
    %v1699 = vcombine.high %v1698, %v1698
    %v1701 = vunpack.c.l.s4 1966171168
    %v1702 = vunpack.c.0.s8 %v1701
    %v1703 = vlaneseq
    %v1704 = vshrl.u32 %v1703, 7
    %v1705 = vsub.s32 %v1702, %v1704
    %v1706 = vrot.slane %v1698, %v1705
    %v1708 = vunpack.c.l.s4 1966171168
    %v1709 = vunpack.c.0.s8 %v1708
    %v1710 = vlaneseq
    %v1711 = vshrl.u32 %v1710, 7
    %v1712 = vsub.s32 %v1709, %v1711
    %v1713 = vrot.slane %v1699, %v1712
    %v1714 = vcombine.high %v1706, %v1706
    %v1715 = vcombine.high %v1713, %v1713
    %v1716 = vlaneseq
    %v1717 = vshrl.u32 %v1716, 7
    %v1718 = vsub.s32 0, %v1717
    %v1719 = vrot.slane %v1706, %v1718
    %v1720 = vlaneseq
    %v1721 = vshrl.u32 %v1720, 7
    %v1722 = vsub.s32 0, %v1721
    %v1723 = vrot.slane %v1713, %v1722
    %v1724 = vlaneseq
    %v1725 = vshrl.u32 %v1724, 7
    %v1726 = vsub.s32 0, %v1725
    %v1727 = vrot.slane %v1714, %v1726
    %v1728 = vlaneseq
    %v1729 = vshrl.u32 %v1728, 7
    %v1730 = vsub.s32 0, %v1729
    %v1731 = vrot.slane %v1715, %v1730
    %v1736 = vmul.f32 %v1719, %v1658
    %v1737 = vmul.f32 %v1723, %v1658
    %v1738 = vmul.f32 %v1727, %v1658
    %v1739 = vmul.f32 %v1731, %v1658
    %v1744 = vcombine.low %v1736, %v1737
    %v1745 = vcombine.low %v1738, %v1739
    %v1747 = vunpack.c.l.s4 1983009808
    %v1748 = vunpack.c.0.s8 %v1747
    %v1749 = vlaneseq
    %v1750 = vshrl.u32 %v1749, 7
    %v1751 = vsub.s32 %v1748, %v1750
    %v1752 = vrot.slane %v1744, %v1751
    %v1754 = vunpack.c.l.s4 1983009808
    %v1755 = vunpack.c.0.s8 %v1754
    %v1756 = vlaneseq
    %v1757 = vshrl.u32 %v1756, 7
    %v1758 = vsub.s32 %v1755, %v1757
    %v1759 = vrot.slane %v1745, %v1758
    %v1760 = vcombine.low %v1752, %v1759
    %1762 = vst [vmem:[#allocation2 + $0x150] sm:$0xff] %v1760
    %s1763 = scalar_lea.vmem [#allocation6], 24
    %v1764 = vld [vmem:[%s1763] sm:$0xff]
    %v1765 = vld [vmem:[%s1763 + $0x8] sm:$0xff]
    %v1766 = vld [vmem:[%s1763 + $0x10] sm:$0xff]
    %v1767 = vld [vmem:[#allocation2] sm:$0xff]
    %v1768 = vld [vmem:[#allocation2 + $0x8] sm:$0xff]
    %v1769 = vld [vmem:[#allocation2 + $0x10] sm:$0xff]
    %v1770 = vld [vmem:[#allocation2 + $0x18] sm:$0xff]
    %v1771 = vld [vmem:[#allocation2 + $0x20] sm:$0xff]
    %v1772 = vld [vmem:[#allocation2 + $0x28] sm:$0xff]
    %v1773 = vld [vmem:[#allocation2 + $0x30] sm:$0xff]
    %v1774 = vld [vmem:[#allocation2 + $0x38] sm:$0xff]
    %v1775 = vld [vmem:[#allocation2 + $0x40] sm:$0xff]
    %v1776 = vld [vmem:[#allocation2 + $0x48] sm:$0xff]
    %v1777 = vld [vmem:[#allocation2 + $0x50] sm:$0xff]
    %v1778 = vld [vmem:[#allocation2 + $0x58] sm:$0xff]
    %v1779 = vld [vmem:[#allocation2 + $0x60] sm:$0xff]
    %v1780 = vld [vmem:[#allocation2 + $0x68] sm:$0xff]
    %v1781 = vld [vmem:[#allocation2 + $0x70] sm:$0xff]
    %v1782 = vld [vmem:[#allocation2 + $0x78] sm:$0xff]
    %v1783 = vld [vmem:[#allocation2 + $0x80] sm:$0xff]
    %v1784 = vld [vmem:[#allocation2 + $0x88] sm:$0xff]
    %v1785 = vld [vmem:[#allocation2 + $0x90] sm:$0xff]
    %v1786 = vld [vmem:[#allocation2 + $0x98] sm:$0xff]
    %v1787 = vld [vmem:[#allocation2 + $0xa0] sm:$0xff]
    %v1788 = vld [vmem:[#allocation2 + $0xa8] sm:$0xff]
    %v1789 = vld [vmem:[#allocation2 + $0xb0] sm:$0xff]
    %v1790 = vld [vmem:[#allocation2 + $0xb8] sm:$0xff]
    %v1791 = vld [vmem:[#allocation2 + $0xc0] sm:$0xff]
    %v1792 = vld [vmem:[#allocation2 + $0xc8] sm:$0xff]
    %v1793 = vld [vmem:[#allocation2 + $0xd0] sm:$0xff]
    %v1794 = vld [vmem:[#allocation2 + $0xd8] sm:$0xff]
    %v1795 = vld [vmem:[#allocation2 + $0xe0] sm:$0xff]
    %v1796 = vld [vmem:[#allocation2 + $0xe8] sm:$0xff]
    %v1797 = vld [vmem:[#allocation2 + $0xf0] sm:$0xff]
    %v1798 = vld [vmem:[#allocation2 + $0xf8] sm:$0xff]
    %v1799 = vld [vmem:[#allocation2 + $0x100] sm:$0xff]
    %v1800 = vld [vmem:[#allocation2 + $0x108] sm:$0xff]
    %v1801 = vld [vmem:[#allocation2 + $0x110] sm:$0xff]
    %v1802 = vld [vmem:[#allocation2 + $0x118] sm:$0xff]
    %v1803 = vld [vmem:[#allocation2 + $0x120] sm:$0xff]
    %v1804 = vld [vmem:[#allocation2 + $0x128] sm:$0xff]
    %v1805 = vld [vmem:[#allocation2 + $0x130] sm:$0xff]
    %v1806 = vld [vmem:[#allocation2 + $0x138] sm:$0xff]
    %v1807 = vld [vmem:[#allocation2 + $0x140] sm:$0xff]
    %v1808 = vld [vmem:[#allocation2 + $0x148] sm:$0xff]
    %v1809 = vld [vmem:[#allocation2 + $0x150] sm:$0xff]
    %v1811 = vsel %vm871, %v1766, 0
    %1813 = vmatprep.subr.mxu0 0.0
    %1814 = vmatpush1.msra.mxu0 %v1767
    %1815 = vmatprep.subr.mxu0 0.0
    %1816 = vmatpush1.msra.mxu0 %v1768
    %1817 = vmatprep.subr.mxu0 0.0
    %1818 = vmatpush1.msra.mxu0 %v1769
    %1819 = vmatprep.subr.mxu0 0.0
    %1820 = vmatpush1.msra.mxu0 %v1770
    %1821 = vmatprep.subr.mxu0 0.0
    %1822 = vmatpush1.msra.mxu0 %v1771
    %1823 = vmatprep.subr.mxu0 0.0
    %1824 = vmatpush1.msra.mxu0 %v1772
    %1825 = vmatprep.subr.mxu0 0.0
    %1826 = vmatpush1.msra.mxu0 %v1773
    %1827 = vmatprep.subr.mxu0 0.0
    %1828 = vmatpush1.msra.mxu0 %v1774
    %1829 = vmatprep.subr.mxu0 0.0
    %1830 = vmatpush1.msra.mxu0 %v1775
    %1831 = vmatprep.subr.mxu0 0.0
    %1832 = vmatpush1.msra.mxu0 %v1776
    %1833 = vmatprep.subr.mxu0 0.0
    %1834 = vmatpush1.msra.mxu0 %v1777
    %1835 = vmatprep.subr.mxu0 0.0
    %1836 = vmatpush1.msra.mxu0 %v1778
    %1837 = vmatprep.subr.mxu0 0.0
    %1838 = vmatpush1.msra.mxu0 %v1779
    %1839 = vmatprep.subr.mxu0 0.0
    %1840 = vmatpush1.msra.mxu0 %v1780
    %1841 = vmatprep.subr.mxu0 0.0
    %1842 = vmatpush1.msra.mxu0 %v1781
    %1843 = vmatprep.subr.mxu0 0.0
    %1844 = vmatpush1.msra.mxu0 %v1782
    %1845 = vmatprep.subr.mxu0 0.0
    %1846 = vmatpush1.msra.mxu0 %v1783
    %1847 = vmatprep.subr.mxu0 0.0
    %1848 = vmatpush1.msra.mxu0 %v1784
    %1849 = vmatprep.subr.mxu0 0.0
    %1850 = vmatpush1.msra.mxu0 %v1785
    %1851 = vmatprep.subr.mxu0 0.0
    %1852 = vmatpush1.msra.mxu0 %v1786
    %1853 = vmatprep.subr.mxu0 0.0
    %1854 = vmatpush1.msra.mxu0 %v1787
    %1855 = vmatprep.subr.mxu0 0.0
    %1856 = vmatpush1.msra.mxu0 %v1788
    %1857 = vmatprep.subr.mxu0 0.0
    %1858 = vmatpush1.msra.mxu0 %v1789
    %1859 = vmatprep.subr.mxu0 0.0
    %1860 = vmatpush1.msra.mxu0 %v1790
    %1861 = vmatprep.subr.mxu0 0.0
    %1862 = vmatpush1.msra.mxu0 %v1791
    %1863 = vmatprep.subr.mxu0 0.0
    %1864 = vmatpush1.msra.mxu0 %v1792
    %1865 = vmatprep.subr.mxu0 0.0
    %1866 = vmatpush1.msra.mxu0 %v1793
    %1867 = vmatprep.subr.mxu0 0.0
    %1868 = vmatpush1.msra.mxu0 %v1794
    %1869 = vmatprep.subr.mxu0 0.0
    %1870 = vmatpush1.msra.mxu0 %v1795
    %1871 = vmatprep.subr.mxu0 0.0
    %1872 = vmatpush1.msra.mxu0 %v1796
    %1873 = vmatprep.subr.mxu0 0.0
    %1874 = vmatpush1.msra.mxu0 %v1797
    %1875 = vmatprep.subr.mxu0 0.0
    %1876 = vmatpush1.msra.mxu0 %v1798
    %1877 = vmatprep.mubr.f32.mxu0 %v1765
    %1878 = vmatmul.mubr.f32.gmra.mrb[0].mxu0 %v1764
    %v1879 = vpop.f32.mrb[0].mxu0
    %v1880 = vadd.f32 0.0, %v1879
    %v1881 = vpop.f32.mrb[0].mxu0
    %1882 = vdwg.mxu0
    %1883 = vmatprep.subr.mxu0 0.0
    %1884 = vmatpush1.msra.mxu0 %v1799
    %1885 = vmatprep.subr.mxu0 0.0
    %1886 = vmatpush1.msra.mxu0 %v1800
    %1887 = vmatprep.subr.mxu0 0.0
    %1888 = vmatpush1.msra.mxu0 %v1801
    %1889 = vmatprep.subr.mxu0 0.0
    %1890 = vmatpush1.msra.mxu0 %v1802
    %1891 = vmatprep.subr.mxu0 0.0
    %1892 = vmatpush1.msra.mxu0 %v1803
    %1893 = vmatprep.subr.mxu0 0.0
    %1894 = vmatpush1.msra.mxu0 %v1804
    %1895 = vmatprep.subr.mxu0 0.0
    %1896 = vmatpush1.msra.mxu0 %v1805
    %1897 = vmatprep.subr.mxu0 0.0
    %1898 = vmatpush1.msra.mxu0 %v1806
    %1899 = vmatprep.subr.mxu0 0.0
    %1900 = vmatpush1.msra.mxu0 %v1807
    %1901 = vmatprep.subr.mxu0 0.0
    %1902 = vmatpush1.msra.mxu0 %v1808
    %1903 = vmatprep.subr.mxu0 0.0
    %1904 = vmatpush1.msra.mxu0 %v1809
    %1905 = vmatprep.subr.mxu0 0.0
    %1906 = vmatpush1.msra.mxu0 0.0
    %1907 = vmatprep.subr.mxu0 0.0
    %1908 = vmatpush1.msra.mxu0 0.0
    %1909 = vmatprep.subr.mxu0 0.0
    %1910 = vmatpush1.msra.mxu0 0.0
    %1911 = vmatprep.subr.mxu0 0.0
    %1912 = vmatpush1.msra.mxu0 0.0
    %1913 = vmatprep.subr.mxu0 0.0
    %1914 = vmatpush1.msra.mxu0 0.0
    %1915 = vmatprep.subr.mxu0 0.0
    %1916 = vmatpush1.msra.mxu0 0.0
    %1917 = vmatprep.subr.mxu0 0.0
    %1918 = vmatpush1.msra.mxu0 0.0
    %1919 = vmatprep.subr.mxu0 0.0
    %1920 = vmatpush1.msra.mxu0 0.0
    %1921 = vmatprep.subr.mxu0 0.0
    %1922 = vmatpush1.msra.mxu0 0.0
    %1923 = vmatprep.subr.mxu0 0.0
    %1924 = vmatpush1.msra.mxu0 0.0
    %1925 = vmatprep.subr.mxu0 0.0
    %1926 = vmatpush1.msra.mxu0 0.0
    %1927 = vmatprep.subr.mxu0 0.0
    %1928 = vmatpush1.msra.mxu0 0.0
    %1929 = vmatprep.subr.mxu0 0.0
    %1930 = vmatpush1.msra.mxu0 0.0
    %1931 = vmatprep.subr.mxu0 0.0
    %1932 = vmatpush1.msra.mxu0 0.0
    %1933 = vmatprep.subr.mxu0 0.0
    %1934 = vmatpush1.msra.mxu0 0.0
    %1935 = vmatprep.subr.mxu0 0.0
    %1936 = vmatpush1.msra.mxu0 0.0
    %1937 = vmatprep.subr.mxu0 0.0
    %1938 = vmatpush1.msra.mxu0 0.0
    %1939 = vmatprep.subr.mxu0 0.0
    %1940 = vmatpush1.msra.mxu0 0.0
    %1941 = vmatprep.subr.mxu0 0.0
    %1942 = vmatpush1.msra.mxu0 0.0
    %1943 = vmatprep.subr.mxu0 0.0
    %1944 = vmatpush1.msra.mxu0 0.0
    %1945 = vmatprep.subr.mxu0 0.0
    %1946 = vmatpush1.msra.mxu0 0.0
    %1947 = vmatprep.mubr.f32.mxu0 0.0
    %1948 = vmatmul.mubr.f32.gmra.mrb[0].mxu0 %v1811
    %v1949 = vpop.f32.mrb[0].mxu0
    %v1950 = vadd.f32 %v1880, %v1949
    %v1951 = vpop.f32.mrb[0].mxu0
    %1952 = vdwg.mxu0
    %1953 = vst [vmem:[#allocation8 + $0x8] sm:$0xff] %v1950
    %v1954 = vld [vmem:[#allocation3 + $0x4] sm:$0x1]
    %v1955 = vld [vmem:[#allocation3 + $0x5] sm:$0x1]
    %v1956 = vmul.f32 %v1954, 16.0
    %v1957 = vsub.f32 %v1956, 0.5
    %v1958 = vfloor.f32 %v1957
    %v1959 = vsub.f32 %v1957, %v1958
    %v1960 = vmax.f32 %v1958, 0.0
    %v1961 = vmin.f32 %v1960, 15.0
    %v1962 = vadd.f32 %v1958, 1.0
    %v1963 = vmax.f32 %v1962, 0.0
    %v1964 = vmin.f32 %v1963, 15.0
    %v1965 = vlaneseq
    %v1966 = vshrl.u32 %v1965, 7
    %v1967 = vsub.s32 0, %v1966
    %v1968 = vrot.slane %v1961, %v1967
    %vm1969 = vcmp.eq.f32.partialorder %v47, %v1968
    %vm1970 = vcmp.eq.f32.partialorder %v48, %v1968
    %v1971 = vsub.f32 1.0, %v1959
    %v1972 = vlaneseq
    %v1973 = vshrl.u32 %v1972, 7
    %v1974 = vsub.s32 0, %v1973
    %v1975 = vrot.slane %v1971, %v1974
    %v1976 = vsel %vm1969, %v1975, 0.0
    %v1977 = vsel %vm1970, %v1975, 0.0
    %v1978 = vlaneseq
    %v1979 = vshrl.u32 %v1978, 7
    %v1980 = vsub.s32 0, %v1979
    %v1981 = vrot.slane %v1964, %v1980
    %vm1982 = vcmp.eq.f32.partialorder %v47, %v1981
    %vm1983 = vcmp.eq.f32.partialorder %v48, %v1981
    %v1984 = vlaneseq
    %v1985 = vshrl.u32 %v1984, 7
    %v1986 = vsub.s32 0, %v1985
    %v1987 = vrot.slane %v1959, %v1986
    %v1988 = vsel %vm1982, %v1987, 0.0
    %v1989 = vsel %vm1983, %v1987, 0.0
    %v1990 = vadd.f32 %v1976, %v1988
    %v1991 = vadd.f32 %v1977, %v1989
    %v1992 = vmul.f32 %v1990, %v102
    %v1993 = vmul.f32 %v1991, %v102
    %v1994 = vmul.f32 %v1955, 16.0
    %v1995 = vsub.f32 %v1994, 0.5
    %v1996 = vfloor.f32 %v1995
    %v1997 = vsub.f32 %v1995, %v1996
    %v1998 = vmax.f32 %v1996, 0.0
    %v1999 = vmin.f32 %v1998, 15.0
    %v2000 = vadd.f32 %v1996, 1.0
    %v2001 = vmax.f32 %v2000, 0.0
    %v2002 = vmin.f32 %v2001, 15.0
    %v2003 = vlaneseq
    %v2004 = vshrl.u32 %v2003, 7
    %v2005 = vsub.s32 0, %v2004
    %v2006 = vrot.slane %v1999, %v2005
    %vm2007 = vcmp.eq.f32.partialorder %v47, %v2006
    %vm2008 = vcmp.eq.f32.partialorder %v48, %v2006
    %v2009 = vsub.f32 1.0, %v1997
    %v2010 = vlaneseq
    %v2011 = vshrl.u32 %v2010, 7
    %v2012 = vsub.s32 0, %v2011
    %v2013 = vrot.slane %v2009, %v2012
    %v2014 = vsel %vm2007, %v2013, 0.0
    %v2015 = vsel %vm2008, %v2013, 0.0
    %v2016 = vlaneseq
    %v2017 = vshrl.u32 %v2016, 7
    %v2018 = vsub.s32 0, %v2017
    %v2019 = vrot.slane %v2002, %v2018
    %vm2020 = vcmp.eq.f32.partialorder %v47, %v2019
    %vm2021 = vcmp.eq.f32.partialorder %v48, %v2019
    %v2022 = vlaneseq
    %v2023 = vshrl.u32 %v2022, 7
    %v2024 = vsub.s32 0, %v2023
    %v2025 = vrot.slane %v1997, %v2024
    %v2026 = vsel %vm2020, %v2025, 0.0
    %v2027 = vsel %vm2021, %v2025, 0.0
    %v2028 = vadd.f32 %v2014, %v2026
    %v2029 = vadd.f32 %v2015, %v2027
    %v2032 = vcombine.high %v2028, %v2028
    %v2034 = vunpack.c.l.s4 1966171168
    %v2035 = vunpack.c.0.s8 %v2034
    %v2036 = vlaneseq
    %v2037 = vshrl.u32 %v2036, 7
    %v2038 = vsub.s32 %v2035, %v2037
    %v2039 = vrot.slane %v2028, %v2038
    %v2041 = vunpack.c.l.s4 1966171168
    %v2042 = vunpack.c.0.s8 %v2041
    %v2043 = vlaneseq
    %v2044 = vshrl.u32 %v2043, 7
    %v2045 = vsub.s32 %v2042, %v2044
    %v2046 = vrot.slane %v2032, %v2045
    %v2047 = vcombine.high %v2039, %v2039
    %v2048 = vcombine.high %v2046, %v2046
    %v2050 = vunpack.c.l.s4 1966171168
    %v2051 = vunpack.c.0.s8 %v2050
    %v2052 = vlaneseq
    %v2053 = vshrl.u32 %v2052, 7
    %v2054 = vsub.s32 %v2051, %v2053
    %v2055 = vrot.slane %v2039, %v2054
    %v2057 = vunpack.c.l.s4 1966171168
    %v2058 = vunpack.c.0.s8 %v2057
    %v2059 = vlaneseq
    %v2060 = vshrl.u32 %v2059, 7
    %v2061 = vsub.s32 %v2058, %v2060
    %v2062 = vrot.slane %v2046, %v2061
    %v2064 = vunpack.c.l.s4 1966171168
    %v2065 = vunpack.c.0.s8 %v2064
    %v2066 = vlaneseq
    %v2067 = vshrl.u32 %v2066, 7
    %v2068 = vsub.s32 %v2065, %v2067
    %v2069 = vrot.slane %v2047, %v2068
    %v2071 = vunpack.c.l.s4 1966171168
    %v2072 = vunpack.c.0.s8 %v2071
    %v2073 = vlaneseq
    %v2074 = vshrl.u32 %v2073, 7
    %v2075 = vsub.s32 %v2072, %v2074
    %v2076 = vrot.slane %v2048, %v2075
    %v2077 = vcombine.high %v2055, %v2055
    %v2078 = vcombine.high %v2062, %v2062
    %v2079 = vcombine.high %v2069, %v2069
    %v2080 = vcombine.high %v2076, %v2076
    %v2081 = vcombine.high %v2029, %v2029
    %v2083 = vunpack.c.l.s4 1966171168
    %v2084 = vunpack.c.0.s8 %v2083
    %v2085 = vlaneseq
    %v2086 = vshrl.u32 %v2085, 7
    %v2087 = vsub.s32 %v2084, %v2086
    %v2088 = vrot.slane %v2029, %v2087
    %v2090 = vunpack.c.l.s4 1966171168
    %v2091 = vunpack.c.0.s8 %v2090
    %v2092 = vlaneseq
    %v2093 = vshrl.u32 %v2092, 7
    %v2094 = vsub.s32 %v2091, %v2093
    %v2095 = vrot.slane %v2081, %v2094
    %v2096 = vcombine.high %v2088, %v2088
    %v2097 = vcombine.high %v2095, %v2095
    %v2099 = vunpack.c.l.s4 1966171168
    %v2100 = vunpack.c.0.s8 %v2099
    %v2101 = vlaneseq
    %v2102 = vshrl.u32 %v2101, 7
    %v2103 = vsub.s32 %v2100, %v2102
    %v2104 = vrot.slane %v2088, %v2103
    %v2106 = vunpack.c.l.s4 1966171168
    %v2107 = vunpack.c.0.s8 %v2106
    %v2108 = vlaneseq
    %v2109 = vshrl.u32 %v2108, 7
    %v2110 = vsub.s32 %v2107, %v2109
    %v2111 = vrot.slane %v2095, %v2110
    %v2113 = vunpack.c.l.s4 1966171168
    %v2114 = vunpack.c.0.s8 %v2113
    %v2115 = vlaneseq
    %v2116 = vshrl.u32 %v2115, 7
    %v2117 = vsub.s32 %v2114, %v2116
    %v2118 = vrot.slane %v2096, %v2117
    %v2120 = vunpack.c.l.s4 1966171168
    %v2121 = vunpack.c.0.s8 %v2120
    %v2122 = vlaneseq
    %v2123 = vshrl.u32 %v2122, 7
    %v2124 = vsub.s32 %v2121, %v2123
    %v2125 = vrot.slane %v2097, %v2124
    %v2126 = vcombine.high %v2104, %v2104
    %v2127 = vcombine.high %v2111, %v2111
    %v2128 = vcombine.high %v2118, %v2118
    %v2129 = vcombine.high %v2125, %v2125
    %v2130 = vlaneseq
    %v2131 = vshrl.u32 %v2130, 7
    %v2132 = vsub.s32 0, %v2131
    %v2133 = vrot.slane %v2055, %v2132
    %v2134 = vlaneseq
    %v2135 = vshrl.u32 %v2134, 7
    %v2136 = vsub.s32 0, %v2135
    %v2137 = vrot.slane %v2069, %v2136
    %v2138 = vlaneseq
    %v2139 = vshrl.u32 %v2138, 7
    %v2140 = vsub.s32 0, %v2139
    %v2141 = vrot.slane %v2077, %v2140
    %v2142 = vlaneseq
    %v2143 = vshrl.u32 %v2142, 7
    %v2144 = vsub.s32 0, %v2143
    %v2145 = vrot.slane %v2079, %v2144
    %v2146 = vlaneseq
    %v2147 = vshrl.u32 %v2146, 7
    %v2148 = vsub.s32 0, %v2147
    %v2149 = vrot.slane %v2062, %v2148
    %v2150 = vlaneseq
    %v2151 = vshrl.u32 %v2150, 7
    %v2152 = vsub.s32 0, %v2151
    %v2153 = vrot.slane %v2076, %v2152
    %v2154 = vlaneseq
    %v2155 = vshrl.u32 %v2154, 7
    %v2156 = vsub.s32 0, %v2155
    %v2157 = vrot.slane %v2078, %v2156
    %v2158 = vlaneseq
    %v2159 = vshrl.u32 %v2158, 7
    %v2160 = vsub.s32 0, %v2159
    %v2161 = vrot.slane %v2080, %v2160
    %v2162 = vlaneseq
    %v2163 = vshrl.u32 %v2162, 7
    %v2164 = vsub.s32 0, %v2163
    %v2165 = vrot.slane %v2104, %v2164
    %v2166 = vlaneseq
    %v2167 = vshrl.u32 %v2166, 7
    %v2168 = vsub.s32 0, %v2167
    %v2169 = vrot.slane %v2118, %v2168
    %v2170 = vlaneseq
    %v2171 = vshrl.u32 %v2170, 7
    %v2172 = vsub.s32 0, %v2171
    %v2173 = vrot.slane %v2126, %v2172
    %v2174 = vlaneseq
    %v2175 = vshrl.u32 %v2174, 7
    %v2176 = vsub.s32 0, %v2175
    %v2177 = vrot.slane %v2128, %v2176
    %v2178 = vlaneseq
    %v2179 = vshrl.u32 %v2178, 7
    %v2180 = vsub.s32 0, %v2179
    %v2181 = vrot.slane %v2111, %v2180
    %v2182 = vlaneseq
    %v2183 = vshrl.u32 %v2182, 7
    %v2184 = vsub.s32 0, %v2183
    %v2185 = vrot.slane %v2125, %v2184
    %v2186 = vlaneseq
    %v2187 = vshrl.u32 %v2186, 7
    %v2188 = vsub.s32 0, %v2187
    %v2189 = vrot.slane %v2127, %v2188
    %v2190 = vlaneseq
    %v2191 = vshrl.u32 %v2190, 7
    %v2192 = vsub.s32 0, %v2191
    %v2193 = vrot.slane %v2129, %v2192
    %v2210 = vmul.f32 %v2133, %v1992
    %v2211 = vmul.f32 %v2133, %v1993
    %v2212 = vmul.f32 %v2137, %v1992
    %v2213 = vmul.f32 %v2137, %v1993
    %v2214 = vmul.f32 %v2141, %v1992
    %v2215 = vmul.f32 %v2141, %v1993
    %v2216 = vmul.f32 %v2145, %v1992
    %v2217 = vmul.f32 %v2145, %v1993
    %v2218 = vmul.f32 %v2149, %v1992
    %v2219 = vmul.f32 %v2149, %v1993
    %v2220 = vmul.f32 %v2153, %v1992
    %v2221 = vmul.f32 %v2153, %v1993
    %v2222 = vmul.f32 %v2157, %v1992
    %v2223 = vmul.f32 %v2157, %v1993
    %v2224 = vmul.f32 %v2161, %v1992
    %v2225 = vmul.f32 %v2161, %v1993
    %v2226 = vmul.f32 %v2165, %v1992
    %v2227 = vmul.f32 %v2165, %v1993
    %v2228 = vmul.f32 %v2169, %v1992
    %v2229 = vmul.f32 %v2169, %v1993
    %v2230 = vmul.f32 %v2173, %v1992
    %v2231 = vmul.f32 %v2173, %v1993
    %v2232 = vmul.f32 %v2177, %v1992
    %v2233 = vmul.f32 %v2177, %v1993
    %v2234 = vmul.f32 %v2181, %v1992
    %v2235 = vmul.f32 %v2181, %v1993
    %v2236 = vmul.f32 %v2185, %v1992
    %v2237 = vmul.f32 %v2185, %v1993
    %v2238 = vmul.f32 %v2189, %v1992
    %v2239 = vmul.f32 %v2189, %v1993
    %v2240 = vmul.f32 %v2193, %v1992
    %v2241 = vmul.f32 %v2193, %v1993
    %2242 = vst [vmem:[#allocation2] sm:$0xff] %v2210
    %2243 = vst [vmem:[#allocation2 + $0x8] sm:$0xff] %v2211
    %2244 = vst [vmem:[#allocation2 + $0x10] sm:$0xff] %v2212
    %2245 = vst [vmem:[#allocation2 + $0x18] sm:$0xff] %v2213
    %2246 = vst [vmem:[#allocation2 + $0x20] sm:$0xff] %v2214
    %2247 = vst [vmem:[#allocation2 + $0x28] sm:$0xff] %v2215
    %2248 = vst [vmem:[#allocation2 + $0x30] sm:$0xff] %v2216
    %2249 = vst [vmem:[#allocation2 + $0x38] sm:$0xff] %v2217
    %2250 = vst [vmem:[#allocation2 + $0x40] sm:$0xff] %v2218
    %2251 = vst [vmem:[#allocation2 + $0x48] sm:$0xff] %v2219
    %2252 = vst [vmem:[#allocation2 + $0x50] sm:$0xff] %v2220
    %2253 = vst [vmem:[#allocation2 + $0x58] sm:$0xff] %v2221
    %2254 = vst [vmem:[#allocation2 + $0x60] sm:$0xff] %v2222
    %2255 = vst [vmem:[#allocation2 + $0x68] sm:$0xff] %v2223
    %2256 = vst [vmem:[#allocation2 + $0x70] sm:$0xff] %v2224
    %2257 = vst [vmem:[#allocation2 + $0x78] sm:$0xff] %v2225
    %2258 = vst [vmem:[#allocation2 + $0x80] sm:$0xff] %v2226
    %2259 = vst [vmem:[#allocation2 + $0x88] sm:$0xff] %v2227
    %2260 = vst [vmem:[#allocation2 + $0x90] sm:$0xff] %v2228
    %2261 = vst [vmem:[#allocation2 + $0x98] sm:$0xff] %v2229
    %2262 = vst [vmem:[#allocation2 + $0xa0] sm:$0xff] %v2230
    %2263 = vst [vmem:[#allocation2 + $0xa8] sm:$0xff] %v2231
    %2264 = vst [vmem:[#allocation2 + $0xb0] sm:$0xff] %v2232
    %2265 = vst [vmem:[#allocation2 + $0xb8] sm:$0xff] %v2233
    %2266 = vst [vmem:[#allocation2 + $0xc0] sm:$0xff] %v2234
    %2267 = vst [vmem:[#allocation2 + $0xc8] sm:$0xff] %v2235
    %2268 = vst [vmem:[#allocation2 + $0xd0] sm:$0xff] %v2236
    %2269 = vst [vmem:[#allocation2 + $0xd8] sm:$0xff] %v2237
    %2270 = vst [vmem:[#allocation2 + $0xe0] sm:$0xff] %v2238
    %2271 = vst [vmem:[#allocation2 + $0xe8] sm:$0xff] %v2239
    %2272 = vst [vmem:[#allocation2 + $0xf0] sm:$0xff] %v2240
    %2273 = vst [vmem:[#allocation2 + $0xf8] sm:$0xff] %v2241
    %v2274 = vmul.f32 %v1954, 8.0
    %v2275 = vsub.f32 %v2274, 0.5
    %v2276 = vfloor.f32 %v2275
    %v2277 = vsub.f32 %v2275, %v2276
    %v2278 = vmax.f32 %v2276, 0.0
    %v2279 = vmin.f32 %v2278, 7.0
    %v2280 = vadd.f32 %v2276, 1.0
    %v2281 = vmax.f32 %v2280, 0.0
    %v2282 = vmin.f32 %v2281, 7.0
    %v2283 = vlaneseq
    %v2284 = vshrl.u32 %v2283, 7
    %v2285 = vsub.s32 0, %v2284
    %v2286 = vrot.slane %v2279, %v2285
    %vm2287 = vcmp.eq.f32.partialorder %v47, %v2286
    %v2288 = vsub.f32 1.0, %v2277
    %v2289 = vlaneseq
    %v2290 = vshrl.u32 %v2289, 7
    %v2291 = vsub.s32 0, %v2290
    %v2292 = vrot.slane %v2288, %v2291
    %v2293 = vsel %vm2287, %v2292, 0.0
    %v2294 = vlaneseq
    %v2295 = vshrl.u32 %v2294, 7
    %v2296 = vsub.s32 0, %v2295
    %v2297 = vrot.slane %v2282, %v2296
    %vm2298 = vcmp.eq.f32.partialorder %v47, %v2297
    %v2299 = vlaneseq
    %v2300 = vshrl.u32 %v2299, 7
    %v2301 = vsub.s32 0, %v2300
    %v2302 = vrot.slane %v2277, %v2301
    %v2303 = vsel %vm2298, %v2302, 0.0
    %v2304 = vadd.f32 %v2293, %v2303
    %v2305 = vmul.f32 %v2304, %v419
    %v2306 = vmul.f32 %v1955, 8.0
    %v2307 = vsub.f32 %v2306, 0.5
    %v2308 = vfloor.f32 %v2307
    %v2309 = vsub.f32 %v2307, %v2308
    %v2310 = vmax.f32 %v2308, 0.0
    %v2311 = vmin.f32 %v2310, 7.0
    %v2312 = vadd.f32 %v2308, 1.0
    %v2313 = vmax.f32 %v2312, 0.0
    %v2314 = vmin.f32 %v2313, 7.0
    %v2315 = vlaneseq
    %v2316 = vshrl.u32 %v2315, 7
    %v2317 = vsub.s32 0, %v2316
    %v2318 = vrot.slane %v2311, %v2317
    %vm2319 = vcmp.eq.f32.partialorder %v47, %v2318
    %v2320 = vsub.f32 1.0, %v2309
    %v2321 = vlaneseq
    %v2322 = vshrl.u32 %v2321, 7
    %v2323 = vsub.s32 0, %v2322
    %v2324 = vrot.slane %v2320, %v2323
    %v2325 = vsel %vm2319, %v2324, 0.0
    %v2326 = vlaneseq
    %v2327 = vshrl.u32 %v2326, 7
    %v2328 = vsub.s32 0, %v2327
    %v2329 = vrot.slane %v2314, %v2328
    %vm2330 = vcmp.eq.f32.partialorder %v47, %v2329
    %v2331 = vlaneseq
    %v2332 = vshrl.u32 %v2331, 7
    %v2333 = vsub.s32 0, %v2332
    %v2334 = vrot.slane %v2309, %v2333
    %v2335 = vsel %vm2330, %v2334, 0.0
    %v2336 = vadd.f32 %v2325, %v2335
    %v2338 = vcombine.high %v2336, %v2336
    %v2340 = vunpack.c.l.s4 1966171168
    %v2341 = vunpack.c.0.s8 %v2340
    %v2342 = vlaneseq
    %v2343 = vshrl.u32 %v2342, 7
    %v2344 = vsub.s32 %v2341, %v2343
    %v2345 = vrot.slane %v2336, %v2344
    %v2347 = vunpack.c.l.s4 1966171168
    %v2348 = vunpack.c.0.s8 %v2347
    %v2349 = vlaneseq
    %v2350 = vshrl.u32 %v2349, 7
    %v2351 = vsub.s32 %v2348, %v2350
    %v2352 = vrot.slane %v2338, %v2351
    %v2353 = vcombine.high %v2345, %v2345
    %v2354 = vcombine.high %v2352, %v2352
    %v2356 = vunpack.c.l.s4 1966171168
    %v2357 = vunpack.c.0.s8 %v2356
    %v2358 = vlaneseq
    %v2359 = vshrl.u32 %v2358, 7
    %v2360 = vsub.s32 %v2357, %v2359
    %v2361 = vrot.slane %v2345, %v2360
    %v2363 = vunpack.c.l.s4 1966171168
    %v2364 = vunpack.c.0.s8 %v2363
    %v2365 = vlaneseq
    %v2366 = vshrl.u32 %v2365, 7
    %v2367 = vsub.s32 %v2364, %v2366
    %v2368 = vrot.slane %v2352, %v2367
    %v2370 = vunpack.c.l.s4 1966171168
    %v2371 = vunpack.c.0.s8 %v2370
    %v2372 = vlaneseq
    %v2373 = vshrl.u32 %v2372, 7
    %v2374 = vsub.s32 %v2371, %v2373
    %v2375 = vrot.slane %v2353, %v2374
    %v2377 = vunpack.c.l.s4 1966171168
    %v2378 = vunpack.c.0.s8 %v2377
    %v2379 = vlaneseq
    %v2380 = vshrl.u32 %v2379, 7
    %v2381 = vsub.s32 %v2378, %v2380
    %v2382 = vrot.slane %v2354, %v2381
    %v2383 = vcombine.high %v2361, %v2361
    %v2384 = vcombine.high %v2368, %v2368
    %v2385 = vcombine.high %v2375, %v2375
    %v2386 = vcombine.high %v2382, %v2382
    %v2387 = vlaneseq
    %v2388 = vshrl.u32 %v2387, 7
    %v2389 = vsub.s32 0, %v2388
    %v2390 = vrot.slane %v2361, %v2389
    %v2391 = vlaneseq
    %v2392 = vshrl.u32 %v2391, 7
    %v2393 = vsub.s32 0, %v2392
    %v2394 = vrot.slane %v2375, %v2393
    %v2395 = vlaneseq
    %v2396 = vshrl.u32 %v2395, 7
    %v2397 = vsub.s32 0, %v2396
    %v2398 = vrot.slane %v2383, %v2397
    %v2399 = vlaneseq
    %v2400 = vshrl.u32 %v2399, 7
    %v2401 = vsub.s32 0, %v2400
    %v2402 = vrot.slane %v2385, %v2401
    %v2403 = vlaneseq
    %v2404 = vshrl.u32 %v2403, 7
    %v2405 = vsub.s32 0, %v2404
    %v2406 = vrot.slane %v2368, %v2405
    %v2407 = vlaneseq
    %v2408 = vshrl.u32 %v2407, 7
    %v2409 = vsub.s32 0, %v2408
    %v2410 = vrot.slane %v2382, %v2409
    %v2411 = vlaneseq
    %v2412 = vshrl.u32 %v2411, 7
    %v2413 = vsub.s32 0, %v2412
    %v2414 = vrot.slane %v2384, %v2413
    %v2415 = vlaneseq
    %v2416 = vshrl.u32 %v2415, 7
    %v2417 = vsub.s32 0, %v2416
    %v2418 = vrot.slane %v2386, %v2417
    %v2427 = vmul.f32 %v2390, %v2305
    %v2428 = vmul.f32 %v2394, %v2305
    %v2429 = vmul.f32 %v2398, %v2305
    %v2430 = vmul.f32 %v2402, %v2305
    %v2431 = vmul.f32 %v2406, %v2305
    %v2432 = vmul.f32 %v2410, %v2305
    %v2433 = vmul.f32 %v2414, %v2305
    %v2434 = vmul.f32 %v2418, %v2305
    %2435 = vst [vmem:[#allocation2 + $0x100] sm:$0xff] %v2427
    %2436 = vst [vmem:[#allocation2 + $0x108] sm:$0xff] %v2428
    %2437 = vst [vmem:[#allocation2 + $0x110] sm:$0xff] %v2429
    %2438 = vst [vmem:[#allocation2 + $0x118] sm:$0xff] %v2430
    %2439 = vst [vmem:[#allocation2 + $0x120] sm:$0xff] %v2431
    %2440 = vst [vmem:[#allocation2 + $0x128] sm:$0xff] %v2432
    %2441 = vst [vmem:[#allocation2 + $0x130] sm:$0xff] %v2433
    %2442 = vst [vmem:[#allocation2 + $0x138] sm:$0xff] %v2434
    %v2443 = vmul.f32 %v1954, 4.0
    %v2444 = vsub.f32 %v2443, 0.5
    %v2445 = vfloor.f32 %v2444
    %v2446 = vsub.f32 %v2444, %v2445
    %v2447 = vmax.f32 %v2445, 0.0
    %v2448 = vmin.f32 %v2447, 3.0
    %v2449 = vadd.f32 %v2445, 1.0
    %v2450 = vmax.f32 %v2449, 0.0
    %v2451 = vmin.f32 %v2450, 3.0
    %v2452 = vlaneseq
    %v2453 = vshrl.u32 %v2452, 7
    %v2454 = vsub.s32 0, %v2453
    %v2455 = vrot.slane %v2448, %v2454
    %vm2456 = vcmp.eq.f32.partialorder %v47, %v2455
    %v2457 = vsub.f32 1.0, %v2446
    %v2458 = vlaneseq
    %v2459 = vshrl.u32 %v2458, 7
    %v2460 = vsub.s32 0, %v2459
    %v2461 = vrot.slane %v2457, %v2460
    %v2462 = vsel %vm2456, %v2461, 0.0
    %v2463 = vlaneseq
    %v2464 = vshrl.u32 %v2463, 7
    %v2465 = vsub.s32 0, %v2464
    %v2466 = vrot.slane %v2451, %v2465
    %vm2467 = vcmp.eq.f32.partialorder %v47, %v2466
    %v2468 = vlaneseq
    %v2469 = vshrl.u32 %v2468, 7
    %v2470 = vsub.s32 0, %v2469
    %v2471 = vrot.slane %v2446, %v2470
    %v2472 = vsel %vm2467, %v2471, 0.0
    %v2473 = vadd.f32 %v2462, %v2472
    %v2474 = vmul.f32 %v2473, %v592
    %v2475 = vmul.f32 %v1955, 4.0
    %v2476 = vsub.f32 %v2475, 0.5
    %v2477 = vfloor.f32 %v2476
    %v2478 = vsub.f32 %v2476, %v2477
    %v2479 = vmax.f32 %v2477, 0.0
    %v2480 = vmin.f32 %v2479, 3.0
    %v2481 = vadd.f32 %v2477, 1.0
    %v2482 = vmax.f32 %v2481, 0.0
    %v2483 = vmin.f32 %v2482, 3.0
    %v2484 = vlaneseq
    %v2485 = vshrl.u32 %v2484, 7
    %v2486 = vsub.s32 0, %v2485
    %v2487 = vrot.slane %v2480, %v2486
    %vm2488 = vcmp.eq.f32.partialorder %v47, %v2487
    %v2489 = vsub.f32 1.0, %v2478
    %v2490 = vlaneseq
    %v2491 = vshrl.u32 %v2490, 7
    %v2492 = vsub.s32 0, %v2491
    %v2493 = vrot.slane %v2489, %v2492
    %v2494 = vsel %vm2488, %v2493, 0.0
    %v2495 = vlaneseq
    %v2496 = vshrl.u32 %v2495, 7
    %v2497 = vsub.s32 0, %v2496
    %v2498 = vrot.slane %v2483, %v2497
    %vm2499 = vcmp.eq.f32.partialorder %v47, %v2498
    %v2500 = vlaneseq
    %v2501 = vshrl.u32 %v2500, 7
    %v2502 = vsub.s32 0, %v2501
    %v2503 = vrot.slane %v2478, %v2502
    %v2504 = vsel %vm2499, %v2503, 0.0
    %v2505 = vadd.f32 %v2494, %v2504
    %v2508 = vunpack.c.l.s4 1966171168
    %v2509 = vunpack.c.0.s8 %v2508
    %v2510 = vlaneseq
    %v2511 = vshrl.u32 %v2510, 7
    %v2512 = vsub.s32 %v2509, %v2511
    %v2513 = vrot.slane %v2505, %v2512
    %v2514 = vcombine.high %v2513, %v2513
    %v2516 = vunpack.c.l.s4 1966171168
    %v2517 = vunpack.c.0.s8 %v2516
    %v2518 = vlaneseq
    %v2519 = vshrl.u32 %v2518, 7
    %v2520 = vsub.s32 %v2517, %v2519
    %v2521 = vrot.slane %v2513, %v2520
    %v2523 = vunpack.c.l.s4 1966171168
    %v2524 = vunpack.c.0.s8 %v2523
    %v2525 = vlaneseq
    %v2526 = vshrl.u32 %v2525, 7
    %v2527 = vsub.s32 %v2524, %v2526
    %v2528 = vrot.slane %v2514, %v2527
    %v2529 = vcombine.high %v2521, %v2521
    %v2530 = vcombine.high %v2528, %v2528
    %v2531 = vlaneseq
    %v2532 = vshrl.u32 %v2531, 7
    %v2533 = vsub.s32 0, %v2532
    %v2534 = vrot.slane %v2521, %v2533
    %v2535 = vlaneseq
    %v2536 = vshrl.u32 %v2535, 7
    %v2537 = vsub.s32 0, %v2536
    %v2538 = vrot.slane %v2528, %v2537
    %v2539 = vlaneseq
    %v2540 = vshrl.u32 %v2539, 7
    %v2541 = vsub.s32 0, %v2540
    %v2542 = vrot.slane %v2529, %v2541
    %v2543 = vlaneseq
    %v2544 = vshrl.u32 %v2543, 7
    %v2545 = vsub.s32 0, %v2544
    %v2546 = vrot.slane %v2530, %v2545
    %v2551 = vmul.f32 %v2534, %v2474
    %v2552 = vmul.f32 %v2538, %v2474
    %v2553 = vmul.f32 %v2542, %v2474
    %v2554 = vmul.f32 %v2546, %v2474
    %v2559 = vcombine.low %v2551, %v2552
    %v2560 = vcombine.low %v2553, %v2554
    %2563 = vst [vmem:[#allocation2 + $0x140] sm:$0xff] %v2559
    %2564 = vst [vmem:[#allocation2 + $0x148] sm:$0xff] %v2560
    %v2565 = vmul.f32 %v1954, 2.0
    %v2566 = vsub.f32 %v2565, 0.5
    %v2567 = vfloor.f32 %v2566
    %v2568 = vsub.f32 %v2566, %v2567
    %v2569 = vmax.f32 %v2567, 0.0
    %v2570 = vmin.f32 %v2569, 1.0
    %v2571 = vadd.f32 %v2567, 1.0
    %v2572 = vmax.f32 %v2571, 0.0
    %v2573 = vmin.f32 %v2572, 1.0
    %v2574 = vlaneseq
    %v2575 = vshrl.u32 %v2574, 7
    %v2576 = vsub.s32 0, %v2575
    %v2577 = vrot.slane %v2570, %v2576
    %vm2578 = vcmp.eq.f32.partialorder %v47, %v2577
    %v2579 = vsub.f32 1.0, %v2568
    %v2580 = vlaneseq
    %v2581 = vshrl.u32 %v2580, 7
    %v2582 = vsub.s32 0, %v2581
    %v2583 = vrot.slane %v2579, %v2582
    %v2584 = vsel %vm2578, %v2583, 0.0
    %v2585 = vlaneseq
    %v2586 = vshrl.u32 %v2585, 7
    %v2587 = vsub.s32 0, %v2586
    %v2588 = vrot.slane %v2573, %v2587
    %vm2589 = vcmp.eq.f32.partialorder %v47, %v2588
    %v2590 = vlaneseq
    %v2591 = vshrl.u32 %v2590, 7
    %v2592 = vsub.s32 0, %v2591
    %v2593 = vrot.slane %v2568, %v2592
    %v2594 = vsel %vm2589, %v2593, 0.0
    %v2595 = vadd.f32 %v2584, %v2594
    %v2596 = vmul.f32 %v2595, %v718
    %v2597 = vmul.f32 %v1955, 2.0
    %v2598 = vsub.f32 %v2597, 0.5
    %v2599 = vfloor.f32 %v2598
    %v2600 = vsub.f32 %v2598, %v2599
    %v2601 = vmax.f32 %v2599, 0.0
    %v2602 = vmin.f32 %v2601, 1.0
    %v2603 = vadd.f32 %v2599, 1.0
    %v2604 = vmax.f32 %v2603, 0.0
    %v2605 = vmin.f32 %v2604, 1.0
    %v2606 = vlaneseq
    %v2607 = vshrl.u32 %v2606, 7
    %v2608 = vsub.s32 0, %v2607
    %v2609 = vrot.slane %v2602, %v2608
    %vm2610 = vcmp.eq.f32.partialorder %v47, %v2609
    %v2611 = vsub.f32 1.0, %v2600
    %v2612 = vlaneseq
    %v2613 = vshrl.u32 %v2612, 7
    %v2614 = vsub.s32 0, %v2613
    %v2615 = vrot.slane %v2611, %v2614
    %v2616 = vsel %vm2610, %v2615, 0.0
    %v2617 = vlaneseq
    %v2618 = vshrl.u32 %v2617, 7
    %v2619 = vsub.s32 0, %v2618
    %v2620 = vrot.slane %v2605, %v2619
    %vm2621 = vcmp.eq.f32.partialorder %v47, %v2620
    %v2622 = vlaneseq
    %v2623 = vshrl.u32 %v2622, 7
    %v2624 = vsub.s32 0, %v2623
    %v2625 = vrot.slane %v2600, %v2624
    %v2626 = vsel %vm2621, %v2625, 0.0
    %v2627 = vadd.f32 %v2616, %v2626
    %v2628 = vsel %vm751, %v2627, 0.0
    %v2631 = vunpack.c.l.s4 1966171168
    %v2632 = vunpack.c.0.s8 %v2631
    %v2633 = vlaneseq
    %v2634 = vshrl.u32 %v2633, 7
    %v2635 = vsub.s32 %v2632, %v2634
    %v2636 = vrot.slane %v2628, %v2635
    %v2637 = vcombine.high %v2636, %v2636
    %v2639 = vunpack.c.l.s4 1966171168
    %v2640 = vunpack.c.0.s8 %v2639
    %v2641 = vlaneseq
    %v2642 = vshrl.u32 %v2641, 7
    %v2643 = vsub.s32 %v2640, %v2642
    %v2644 = vrot.slane %v2636, %v2643
    %v2646 = vunpack.c.l.s4 1966171168
    %v2647 = vunpack.c.0.s8 %v2646
    %v2648 = vlaneseq
    %v2649 = vshrl.u32 %v2648, 7
    %v2650 = vsub.s32 %v2647, %v2649
    %v2651 = vrot.slane %v2637, %v2650
    %v2652 = vcombine.high %v2644, %v2644
    %v2653 = vcombine.high %v2651, %v2651
    %v2654 = vlaneseq
    %v2655 = vshrl.u32 %v2654, 7
    %v2656 = vsub.s32 0, %v2655
    %v2657 = vrot.slane %v2644, %v2656
    %v2658 = vlaneseq
    %v2659 = vshrl.u32 %v2658, 7
    %v2660 = vsub.s32 0, %v2659
    %v2661 = vrot.slane %v2651, %v2660
    %v2662 = vlaneseq
    %v2663 = vshrl.u32 %v2662, 7
    %v2664 = vsub.s32 0, %v2663
    %v2665 = vrot.slane %v2652, %v2664
    %v2666 = vlaneseq
    %v2667 = vshrl.u32 %v2666, 7
    %v2668 = vsub.s32 0, %v2667
    %v2669 = vrot.slane %v2653, %v2668
    %v2674 = vmul.f32 %v2657, %v2596
    %v2675 = vmul.f32 %v2661, %v2596
    %v2676 = vmul.f32 %v2665, %v2596
    %v2677 = vmul.f32 %v2669, %v2596
    %v2682 = vcombine.low %v2674, %v2675
    %v2683 = vcombine.low %v2676, %v2677
    %v2685 = vunpack.c.l.s4 1983009808
    %v2686 = vunpack.c.0.s8 %v2685
    %v2687 = vlaneseq
    %v2688 = vshrl.u32 %v2687, 7
    %v2689 = vsub.s32 %v2686, %v2688
    %v2690 = vrot.slane %v2682, %v2689
    %v2692 = vunpack.c.l.s4 1983009808
    %v2693 = vunpack.c.0.s8 %v2692
    %v2694 = vlaneseq
    %v2695 = vshrl.u32 %v2694, 7
    %v2696 = vsub.s32 %v2693, %v2695
    %v2697 = vrot.slane %v2683, %v2696
    %v2698 = vcombine.low %v2690, %v2697
    %2700 = vst [vmem:[#allocation2 + $0x150] sm:$0xff] %v2698
    %s2701 = scalar_lea.vmem [#allocation6], 48
    %v2702 = vld [vmem:[%s2701] sm:$0xff]
    %v2703 = vld [vmem:[%s2701 + $0x8] sm:$0xff]
    %v2704 = vld [vmem:[%s2701 + $0x10] sm:$0xff]
    %v2705 = vld [vmem:[#allocation2] sm:$0xff]
    %v2706 = vld [vmem:[#allocation2 + $0x8] sm:$0xff]
    %v2707 = vld [vmem:[#allocation2 + $0x10] sm:$0xff]
    %v2708 = vld [vmem:[#allocation2 + $0x18] sm:$0xff]
    %v2709 = vld [vmem:[#allocation2 + $0x20] sm:$0xff]
    %v2710 = vld [vmem:[#allocation2 + $0x28] sm:$0xff]
    %v2711 = vld [vmem:[#allocation2 + $0x30] sm:$0xff]
    %v2712 = vld [vmem:[#allocation2 + $0x38] sm:$0xff]
    %v2713 = vld [vmem:[#allocation2 + $0x40] sm:$0xff]
    %v2714 = vld [vmem:[#allocation2 + $0x48] sm:$0xff]
    %v2715 = vld [vmem:[#allocation2 + $0x50] sm:$0xff]
    %v2716 = vld [vmem:[#allocation2 + $0x58] sm:$0xff]
    %v2717 = vld [vmem:[#allocation2 + $0x60] sm:$0xff]
    %v2718 = vld [vmem:[#allocation2 + $0x68] sm:$0xff]
    %v2719 = vld [vmem:[#allocation2 + $0x70] sm:$0xff]
    %v2720 = vld [vmem:[#allocation2 + $0x78] sm:$0xff]
    %v2721 = vld [vmem:[#allocation2 + $0x80] sm:$0xff]
    %v2722 = vld [vmem:[#allocation2 + $0x88] sm:$0xff]
    %v2723 = vld [vmem:[#allocation2 + $0x90] sm:$0xff]
    %v2724 = vld [vmem:[#allocation2 + $0x98] sm:$0xff]
    %v2725 = vld [vmem:[#allocation2 + $0xa0] sm:$0xff]
    %v2726 = vld [vmem:[#allocation2 + $0xa8] sm:$0xff]
    %v2727 = vld [vmem:[#allocation2 + $0xb0] sm:$0xff]
    %v2728 = vld [vmem:[#allocation2 + $0xb8] sm:$0xff]
    %v2729 = vld [vmem:[#allocation2 + $0xc0] sm:$0xff]
    %v2730 = vld [vmem:[#allocation2 + $0xc8] sm:$0xff]
    %v2731 = vld [vmem:[#allocation2 + $0xd0] sm:$0xff]
    %v2732 = vld [vmem:[#allocation2 + $0xd8] sm:$0xff]
    %v2733 = vld [vmem:[#allocation2 + $0xe0] sm:$0xff]
    %v2734 = vld [vmem:[#allocation2 + $0xe8] sm:$0xff]
    %v2735 = vld [vmem:[#allocation2 + $0xf0] sm:$0xff]
    %v2736 = vld [vmem:[#allocation2 + $0xf8] sm:$0xff]
    %v2737 = vld [vmem:[#allocation2 + $0x100] sm:$0xff]
    %v2738 = vld [vmem:[#allocation2 + $0x108] sm:$0xff]
    %v2739 = vld [vmem:[#allocation2 + $0x110] sm:$0xff]
    %v2740 = vld [vmem:[#allocation2 + $0x118] sm:$0xff]
    %v2741 = vld [vmem:[#allocation2 + $0x120] sm:$0xff]
    %v2742 = vld [vmem:[#allocation2 + $0x128] sm:$0xff]
    %v2743 = vld [vmem:[#allocation2 + $0x130] sm:$0xff]
    %v2744 = vld [vmem:[#allocation2 + $0x138] sm:$0xff]
    %v2745 = vld [vmem:[#allocation2 + $0x140] sm:$0xff]
    %v2746 = vld [vmem:[#allocation2 + $0x148] sm:$0xff]
    %v2747 = vld [vmem:[#allocation2 + $0x150] sm:$0xff]
    %v2749 = vsel %vm871, %v2704, 0
    %2751 = vmatprep.subr.mxu0 0.0
    %2752 = vmatpush1.msra.mxu0 %v2705
    %2753 = vmatprep.subr.mxu0 0.0
    %2754 = vmatpush1.msra.mxu0 %v2706
    %2755 = vmatprep.subr.mxu0 0.0
    %2756 = vmatpush1.msra.mxu0 %v2707
    %2757 = vmatprep.subr.mxu0 0.0
    %2758 = vmatpush1.msra.mxu0 %v2708
    %2759 = vmatprep.subr.mxu0 0.0
    %2760 = vmatpush1.msra.mxu0 %v2709
    %2761 = vmatprep.subr.mxu0 0.0
    %2762 = vmatpush1.msra.mxu0 %v2710
    %2763 = vmatprep.subr.mxu0 0.0
    %2764 = vmatpush1.msra.mxu0 %v2711
    %2765 = vmatprep.subr.mxu0 0.0
    %2766 = vmatpush1.msra.mxu0 %v2712
    %2767 = vmatprep.subr.mxu0 0.0
    %2768 = vmatpush1.msra.mxu0 %v2713
    %2769 = vmatprep.subr.mxu0 0.0
    %2770 = vmatpush1.msra.mxu0 %v2714
    %2771 = vmatprep.subr.mxu0 0.0
    %2772 = vmatpush1.msra.mxu0 %v2715
    %2773 = vmatprep.subr.mxu0 0.0
    %2774 = vmatpush1.msra.mxu0 %v2716
    %2775 = vmatprep.subr.mxu0 0.0
    %2776 = vmatpush1.msra.mxu0 %v2717
    %2777 = vmatprep.subr.mxu0 0.0
    %2778 = vmatpush1.msra.mxu0 %v2718
    %2779 = vmatprep.subr.mxu0 0.0
    %2780 = vmatpush1.msra.mxu0 %v2719
    %2781 = vmatprep.subr.mxu0 0.0
    %2782 = vmatpush1.msra.mxu0 %v2720
    %2783 = vmatprep.subr.mxu0 0.0
    %2784 = vmatpush1.msra.mxu0 %v2721
    %2785 = vmatprep.subr.mxu0 0.0
    %2786 = vmatpush1.msra.mxu0 %v2722
    %2787 = vmatprep.subr.mxu0 0.0
    %2788 = vmatpush1.msra.mxu0 %v2723
    %2789 = vmatprep.subr.mxu0 0.0
    %2790 = vmatpush1.msra.mxu0 %v2724
    %2791 = vmatprep.subr.mxu0 0.0
    %2792 = vmatpush1.msra.mxu0 %v2725
    %2793 = vmatprep.subr.mxu0 0.0
    %2794 = vmatpush1.msra.mxu0 %v2726
    %2795 = vmatprep.subr.mxu0 0.0
    %2796 = vmatpush1.msra.mxu0 %v2727
    %2797 = vmatprep.subr.mxu0 0.0
    %2798 = vmatpush1.msra.mxu0 %v2728
    %2799 = vmatprep.subr.mxu0 0.0
    %2800 = vmatpush1.msra.mxu0 %v2729
    %2801 = vmatprep.subr.mxu0 0.0
    %2802 = vmatpush1.msra.mxu0 %v2730
    %2803 = vmatprep.subr.mxu0 0.0
    %2804 = vmatpush1.msra.mxu0 %v2731
    %2805 = vmatprep.subr.mxu0 0.0
    %2806 = vmatpush1.msra.mxu0 %v2732
    %2807 = vmatprep.subr.mxu0 0.0
    %2808 = vmatpush1.msra.mxu0 %v2733
    %2809 = vmatprep.subr.mxu0 0.0
    %2810 = vmatpush1.msra.mxu0 %v2734
    %2811 = vmatprep.subr.mxu0 0.0
    %2812 = vmatpush1.msra.mxu0 %v2735
    %2813 = vmatprep.subr.mxu0 0.0
    %2814 = vmatpush1.msra.mxu0 %v2736
    %2815 = vmatprep.mubr.f32.mxu0 %v2703
    %2816 = vmatmul.mubr.f32.gmra.mrb[0].mxu0 %v2702
    %v2817 = vpop.f32.mrb[0].mxu0
    %v2818 = vadd.f32 0.0, %v2817
    %v2819 = vpop.f32.mrb[0].mxu0
    %2820 = vdwg.mxu0
    %2821 = vmatprep.subr.mxu0 0.0
    %2822 = vmatpush1.msra.mxu0 %v2737
    %2823 = vmatprep.subr.mxu0 0.0
    %2824 = vmatpush1.msra.mxu0 %v2738
    %2825 = vmatprep.subr.mxu0 0.0
    %2826 = vmatpush1.msra.mxu0 %v2739
    %2827 = vmatprep.subr.mxu0 0.0
    %2828 = vmatpush1.msra.mxu0 %v2740
    %2829 = vmatprep.subr.mxu0 0.0
    %2830 = vmatpush1.msra.mxu0 %v2741
    %2831 = vmatprep.subr.mxu0 0.0
    %2832 = vmatpush1.msra.mxu0 %v2742
    %2833 = vmatprep.subr.mxu0 0.0
    %2834 = vmatpush1.msra.mxu0 %v2743
    %2835 = vmatprep.subr.mxu0 0.0
    %2836 = vmatpush1.msra.mxu0 %v2744
    %2837 = vmatprep.subr.mxu0 0.0
    %2838 = vmatpush1.msra.mxu0 %v2745
    %2839 = vmatprep.subr.mxu0 0.0
    %2840 = vmatpush1.msra.mxu0 %v2746
    %2841 = vmatprep.subr.mxu0 0.0
    %2842 = vmatpush1.msra.mxu0 %v2747
    %2843 = vmatprep.subr.mxu0 0.0
    %2844 = vmatpush1.msra.mxu0 0.0
    %2845 = vmatprep.subr.mxu0 0.0
    %2846 = vmatpush1.msra.mxu0 0.0
    %2847 = vmatprep.subr.mxu0 0.0
    %2848 = vmatpush1.msra.mxu0 0.0
    %2849 = vmatprep.subr.mxu0 0.0
    %2850 = vmatpush1.msra.mxu0 0.0
    %2851 = vmatprep.subr.mxu0 0.0
    %2852 = vmatpush1.msra.mxu0 0.0
    %2853 = vmatprep.subr.mxu0 0.0
    %2854 = vmatpush1.msra.mxu0 0.0
    %2855 = vmatprep.subr.mxu0 0.0
    %2856 = vmatpush1.msra.mxu0 0.0
    %2857 = vmatprep.subr.mxu0 0.0
    %2858 = vmatpush1.msra.mxu0 0.0
    %2859 = vmatprep.subr.mxu0 0.0
    %2860 = vmatpush1.msra.mxu0 0.0
    %2861 = vmatprep.subr.mxu0 0.0
    %2862 = vmatpush1.msra.mxu0 0.0
    %2863 = vmatprep.subr.mxu0 0.0
    %2864 = vmatpush1.msra.mxu0 0.0
    %2865 = vmatprep.subr.mxu0 0.0
    %2866 = vmatpush1.msra.mxu0 0.0
    %2867 = vmatprep.subr.mxu0 0.0
    %2868 = vmatpush1.msra.mxu0 0.0
    %2869 = vmatprep.subr.mxu0 0.0
    %2870 = vmatpush1.msra.mxu0 0.0
    %2871 = vmatprep.subr.mxu0 0.0
    %2872 = vmatpush1.msra.mxu0 0.0
    %2873 = vmatprep.subr.mxu0 0.0
    %2874 = vmatpush1.msra.mxu0 0.0
    %2875 = vmatprep.subr.mxu0 0.0
    %2876 = vmatpush1.msra.mxu0 0.0
    %2877 = vmatprep.subr.mxu0 0.0
    %2878 = vmatpush1.msra.mxu0 0.0
    %2879 = vmatprep.subr.mxu0 0.0
    %2880 = vmatpush1.msra.mxu0 0.0
    %2881 = vmatprep.subr.mxu0 0.0
    %2882 = vmatpush1.msra.mxu0 0.0
    %2883 = vmatprep.subr.mxu0 0.0
    %2884 = vmatpush1.msra.mxu0 0.0
    %2885 = vmatprep.mubr.f32.mxu0 0.0
    %2886 = vmatmul.mubr.f32.gmra.mrb[0].mxu0 %v2749
    %v2887 = vpop.f32.mrb[0].mxu0
    %v2888 = vadd.f32 %v2818, %v2887
    %v2889 = vpop.f32.mrb[0].mxu0
    %2890 = vdwg.mxu0
    %2891 = vst [vmem:[#allocation8 + $0x10] sm:$0xff] %v2888
    // Predicated region
    $region18: #{tpu_custom_call.1} parent=1 // pred_check
      _
    $region19: #{tpu_custom_call.1} parent=1 // pred_check_branch
      %2893 = sbr.rel (0) target = $region21
    $region20: #{tpu_custom_call.1} parent=1 // pred_region
      %s2895 = ssub.s32 384, 384
      %2896 = vsyncadd [#allocation5], %s2895
      %s2897 = sshll.u32 [#allocation8], 4
      %s2898 = int_to_ptr.vmem [resolvable:$true] %s2897
      %2903 = dma.vmem_to_hbm [thread:$0]  %s2898, 384, %s2, [#allocation5], 128, 128, 8
    $region21: #{tpu_custom_call.1} parent=1 // pred_fallthru
      _
    // Predicated region
    $region22: #{tpu_custom_call.1} parent=1 // pred_check
      _
    $region23: #{tpu_custom_call.1} parent=1 // pred_check_branch
      %2905 = sbr.rel (0) target = $region25
    $region24: #{tpu_custom_call.1} parent=1 // pred_region
      %2906 = dma.done [#allocation5], 384
    $region25: #{tpu_custom_call.1} parent=1 // pred_fallthru
      _
    %2907 = vsyncpa [#allocation4], 1
    %2908 = vsyncpa [#allocation7], 1
    %2909 = vsyncpa [#allocation5], 1

</llo_original>
